<compile_context>
chip_gen: v7x
topology: tpu7x:2x2x1
jax: 0.10.0
libtpu: 0.0.40
codegen_flags: <defaults>
</compile_context>

<pallas_src>
import numpy as np
import jax
import jax.numpy as jnp
from jax import lax
from jax.experimental import pallas as pl
from jax.experimental.pallas import tpu as pltpu  # noqa: F401  (TPU backend)

LANE = 128

# ----------------------------- config (small) -------------------------------
ENCODER_PARAMS = dict(
    encoder_attention_heads=2,
    encoder_gnn_dropout_rate=0.0,      # dropout == identity (p = 0)
    encoder_gnn_embedding_dim=32,
    encoder_conv_layers=2,
    encoder_dirgnn_alpha=0.5,
    encoder_column_num=6,
    encoder_table_num=3,
    encoder_node_type_embedding_dim=16,
    encoder_column_embedding_dim=8,
)
ESTIMATOR_PARAMS = dict(
    estimator_fcn_layers=3,
    estimator_estimation_embedding_dim=32,
    estimator_fcn_dropout_rate=0.0,
)
EXPLAINER_PARAMS = dict(
    explainer_fcn_layers=3,
    explainer_explanation_embedding_dim=32,
    explainer_fcn_dropout_rate=0.0,
)
NODE_TYPE_NUM = 26

# ----------------------------- activations ----------------------------------
def _relu(v):
    return jnp.maximum(v, 0.0)

def _sigmoid(v):
    return 1.0 / (1.0 + jnp.exp(-v))

def _softplus(v):  # torch.nn.Softplus(beta=1, threshold=20), overflow-safe form
    safe = jnp.maximum(v, 0.0) + jnp.log(1.0 + jnp.exp(-jnp.abs(v)))
    return jnp.where(v > 20.0, v, safe)

def _ceil_to(a, b):
    return ((a + b - 1) // b) * b

def _segment_layout():
    """Encoder output segments and their 8-row-aligned offsets in the layer-0
    projection weight (rows are the contraction dim of the first GNN matmul)."""
    ep = ENCODER_PARAMS
    widths = ([ep['encoder_node_type_embedding_dim'], 2, ep['encoder_table_num']]
              + [ep['encoder_column_embedding_dim']] * ep['encoder_table_num'])
    offs, off = [], 0
    for w in widths:
        offs.append(off)
        off += _ceil_to(w, 8)
    return tuple(widths), tuple(offs), off

# =============================================================================
# The single fused kernel
# =============================================================================
def _reqo_fused_kernel(table_cols, heads, emb, alpha, n_layers, t_steps,
                       n_fcn, n_exp):
    nt = NODE_TYPE_NUM
    tnum = ENCODER_PARAMS['encoder_table_num']
    cemb = ENCODER_PARAMS['encoder_column_embedding_dim']
    scale = 1.0 / np.sqrt(float(emb))
    seg_widths, seg_offs, _ = _segment_layout()
    blocks_per_dir = 3 * heads            # q/k/v, one 128-lane block per head
    root_block = 2 * blocks_per_dir

    def attention(proj, base, mask):
        # Each head's q/k/v occupies its own 128-lane block; the padded lanes
        # hold exact zeros, so feeding the full block to the MXU is exact.
        n = mask.shape[0]
        acc = jnp.zeros((n, LANE), jnp.float32)
        for h in range(heads):
            q = proj[:, (base + h) * LANE:(base + h + 1) * LANE]
            k = proj[:, (base + heads + h) * LANE:(base + heads + h + 1) * LANE]
            v = proj[:, (base + 2 * heads + h) * LANE:
                        (base + 2 * heads + h + 1) * LANE]
            s = jnp.dot(q, k.T, preferred_element_type=jnp.float32) * scale
            s = jnp.where(mask > 0.0, s, -1e30)
            mx = jnp.max(s, axis=-1, keepdims=True)
            e = jnp.exp(s - mx) * mask
            denom = jnp.maximum(jnp.sum(e, axis=-1, keepdims=True), 1e-20)
            inv = pl.reciprocal(denom, approx=False)      # exact (review item)
            acc = acc + jnp.dot(e, v, preferred_element_type=jnp.float32) * inv
        return acc * (1.0 / float(heads))                 # concat=False -> mean

    def kernel(*refs):
        it = iter(refs)
        x_ref, adj_in_ref, adj_out_ref = next(it), next(it), next(it)
        ntw_ref, ntb_ref, colw_ref = next(it), next(it), next(it)
        gnn_refs = [tuple(next(it) for _ in range(4)) for _ in range(n_layers)]
        wih_ref, whh_ref, bih_ref, bhh_ref = next(it), next(it), next(it), next(it)
        scat_ref, gy_ref, gm_ref = next(it), next(it), next(it)
        fcn_refs = [(next(it), next(it)) for _ in range(n_fcn)]
        e_refs = [(next(it), next(it)) for _ in range(3)]
        v_refs = [(next(it), next(it)) for _ in range(3)]
        fs_refs = [(next(it), next(it)) for _ in range(2)]
        xa_w, xb_w, x0_b = next(it), next(it), next(it)
        xmid_refs = [(next(it), next(it)) for _ in range(n_exp - 2)]
        xlast_ref = (next(it), next(it))
        est_ref, expl_ref = next(it), next(it)

        # ------------------------- feature encoder ---------------------------
        x = x_ref[...]
        node_type = x[:, :nt]
        stats = x[:, nt:nt + 2]
        tbl_used = x[:, nt + 2:nt + 2 + tnum]
        cols = x[:, nt + 2 + tnum:]
        nt_enc = _relu(jnp.dot(node_type, ntw_ref[...],
                               preferred_element_type=jnp.float32) + ntb_ref[...])
        # all column projections in ONE matmul against a block-diagonal weight
        col_enc = _relu(jnp.dot(cols, colw_ref[...],
                                preferred_element_type=jnp.float32))
        pooled = []
        off = 0
        for tc in table_cols:                        # per-table max pooling
            p = col_enc[:, off * cemb:(off + 1) * cemb]
            for j in range(1, tc):
                p = jnp.maximum(p, col_enc[:, (off + j) * cemb:(off + j + 1) * cemb])
            pooled.append(p)
            off += tc
        segments = [nt_enc, stats, tbl_used] + pooled

        # ----------------- DirGNN(TransformerConv)+BN+ReLU stack -------------
        adj_in, adj_out = adj_in_ref[...], adj_out_ref[...]
        h = None
        for li in range(n_layers):
            w_ref, b_ref, g_ref, bb_ref = gnn_refs[li]
            if li == 0:
                # concat(segments) @ W == sum_seg seg @ W[row_block]
                # (8-row-aligned row blocks; avoids an in-kernel lane concat).
                proj = b_ref[...]
                for seg, soff, swd in zip(segments, seg_offs, seg_widths):
                    proj = proj + jnp.dot(seg, w_ref[soff:soff + swd, :],
                                          preferred_element_type=jnp.float32)
            else:
                proj = jnp.dot(h, w_ref[...],
                               preferred_element_type=jnp.float32) + b_ref[...]
            x_in = attention(proj, 0, adj_in)
            x_out = attention(proj, blocks_per_dir, adj_out)
            # single shared root linear, added once (PyG DirGNNConv semantics)
            y = (alpha * x_out + (1.0 - alpha) * x_in
                 + proj[:, root_block * LANE:(root_block + 1) * LANE])
            # BatchNorm1d with batch statistics (training-mode BN) + ReLU, fused.
            mean = jnp.mean(y, axis=0, keepdims=True)
            var = jnp.mean((y - mean) ** 2, axis=0, keepdims=True)
            yn = (y - mean) * lax.rsqrt(var + 1e-5)
            h = jnp.maximum(yn * g_ref[...] + bb_ref[...], 0.0)

        # -------------- dense-batch scatter + GRU aggregation ----------------
        g_pad = scat_ref.shape[0] // t_steps
        # scatter nodes into the zero-padded dense batch with one MXU pass
        x_dense = jnp.dot(scat_ref[...], h, preferred_element_type=jnp.float32)
        # input projection for ALL time steps hoisted out of the recurrence
        gi_all = jnp.dot(x_dense, wih_ref[...],
                         preferred_element_type=jnp.float32) + bih_ref[...]
        whh, bhh = whh_ref[...], bhh_ref[...]
        hs = jnp.zeros((g_pad, LANE), jnp.float32)
        # TODO(synk): switch to lax.fori_loop over a VMEM-staged gi_all once T
        #             exceeds a handful of steps (vreg pressure / code bloat).
        for t in range(t_steps):
            gi = gi_all[t * g_pad:(t + 1) * g_pad, :]
            gh = jnp.dot(hs, whh, preferred_element_type=jnp.float32) + bhh
            # each gate (r|z|n) lives in its own 128-lane block -> aligned slices
            r = _sigmoid(gi[:, 0:LANE] + gh[:, 0:LANE])
            z = _sigmoid(gi[:, LANE:2 * LANE] + gh[:, LANE:2 * LANE])
            nn = jnp.tanh(gi[:, 2 * LANE:3 * LANE] + r * gh[:, 2 * LANE:3 * LANE])
            hs = (1.0 - z) * nn + z * hs                  # == gru(x)[0][:, -1]

        # ----------------------------- gathers --------------------------------
        yv = jnp.dot(gy_ref[...], hs, preferred_element_type=jnp.float32)
        m_other = jnp.dot(gm_ref[...], hs, preferred_element_type=jnp.float32)

        def lin(hh, wb, act):
            w, b = wb
            return act(jnp.dot(hh, w[...],
                               preferred_element_type=jnp.float32) + b[...])

        def lin1(hh, wb, act):
            # Linear(K, 1) as VPU multiply + lane reduction (w is a (1,K) row).
            w, b = wb
            return act(jnp.sum(hh * w[...], axis=-1, keepdims=True) + b[...])

        # ----------------------------- estimator ------------------------------
        he = yv
        for wb in fcn_refs:                    # dropout(p=0) == identity
            he = lin(he, wb, _relu)
        xe = lin(he, e_refs[0], _relu)
        xe = lin1(xe, e_refs[1], _relu)
        xe = lin1(xe, e_refs[2], _sigmoid)
        xv = lin(he, v_refs[0], _relu)
        xv = lin1(xv, v_refs[1], _relu)
        xv = lin1(xv, v_refs[2], _softplus)
        # fs = Sequential(Linear(2,8), Linear(8,1), Sigmoid()):
        # concat([xe,xv],1) @ W0 == xe @ W0[0:1] + xv @ W0[1:2]
        fs0_w, fs0_b = fs_refs[0]
        xiv = xe * fs0_w[0:1, :] + xv * fs0_w[1:2, :] + fs0_b[...]
        xiv = lin1(xiv, fs_refs[1], _sigmoid)

        # lane-dense packed outputs (lane 0 = xe, 1 = xv, 2 = xiv)
        lane = lax.broadcasted_iota(jnp.int32, (1, LANE), 1)
        l0 = (lane == 0).astype(jnp.float32)
        l1 = (lane == 1).astype(jnp.float32)
        l2 = (lane == 2).astype(jnp.float32)
        est_ref[...] = xe * l0 + xv * l1 + xiv * l2

        # ----------------------------- explainer ------------------------------
        # M = [h | h[global_idx]]  ->  split the first layer's weight rows
        hm = _relu(jnp.dot(hs, xa_w[...], preferred_element_type=jnp.float32)
                   + jnp.dot(m_other, xb_w[...], preferred_element_type=jnp.float32)
                   + x0_b[...])
        for wb in xmid_refs:
            hm = lin(hm, wb, _relu)
        ex = lin1(hm, xlast_ref, _sigmoid)
        expl_ref[...] = ex * l0
    return kernel


def reqo_fused_forward(params, x_raw, adj_in, adj_out, scat, gath_y, gath_m,
                       table_columns_number, t_steps):
    ep = ENCODER_PARAMS
    heads = ep['encoder_attention_heads']
    emb = ep['encoder_gnn_embedding_dim']
    alpha = ep['encoder_dirgnn_alpha']
    n_layers = ep['encoder_conv_layers']
    n_fcn = ESTIMATOR_PARAMS['estimator_fcn_layers']
    n_exp = EXPLAINER_PARAMS['explainer_fcn_layers']

    fe = params['fe']
    args = [x_raw, adj_in, adj_out, fe['nt_w'], fe['nt_b'], fe['col_w_blk']]
    for lp in params['gnn']:
        args += [lp['w_cat'], lp['b_cat'], lp['bn_g'], lp['bn_b']]
    gp = params['gru']
    args += [gp['wih'], gp['whh'], gp['bih'], gp['bhh']]
    args += [scat, gath_y, gath_m]
    est = params['est']
    for w, b in est['fcn'] + est['e'] + est['v'] + est['fs']:
        args += [w, b]
    expl = params['expl']
    args += [expl['wa'], expl['wb'], expl['b0']]
    for w, b in expl['mids']:
        args += [w, b]
    args += [expl['last'][0], expl['last'][1]]

    b_pad, g_pad = gath_y.shape[0], gath_m.shape[0]
    out_shape = (jax.ShapeDtypeStruct((b_pad, LANE), jnp.float32),
                 jax.ShapeDtypeStruct((g_pad, LANE), jnp.float32))
    return pl.pallas_call(
        _reqo_fused_kernel(tuple(table_columns_number), heads, emb, alpha,
                           n_layers, t_steps, n_fcn, n_exp),
        out_shape=out_shape,
    )(*args)

# ----------------------------- parameter init --------------------------------
class _KeyGen:
    def __init__(self, key):
        self._key = key
    def __call__(self):
        self._key, sub = jax.random.split(self._key)
        return sub


def _init_linear(kg, fan_in, fan_out, bias=True):
    bound = 1.0 / np.sqrt(fan_in)
    w = jax.random.uniform(kg(), (fan_in, fan_out), jnp.float32, -bound, bound)
    b = (jax.random.uniform(kg(), (1, fan_out), jnp.float32, -bound, bound)
         if bias else None)
    return w, b


def init_reqo_params(key):
    kg = _KeyGen(key)
    ep = ENCODER_PARAMS
    heads = ep['encoder_attention_heads']
    emb = ep['encoder_gnn_embedding_dim']
    col_num = ep['encoder_column_num']
    col_emb = ep['encoder_column_embedding_dim']
    nt_emb = ep['encoder_node_type_embedding_dim']
    hd = heads * emb
    nblk = 6 * heads + 1
    seg_widths, seg_offs, l0_rows = _segment_layout()
    node_feature_dim = sum(seg_widths)

    # Feature encoder (column weights packed into one block-diagonal matrix)
    nt_w, nt_b = _init_linear(kg, NODE_TYPE_NUM, nt_emb)
    col_ws = [np.asarray(_init_linear(kg, 8, col_emb, bias=False)[0])
              for _ in range(col_num)]
    col_w_blk = np.zeros((col_num * 8, col_num * col_emb), np.float32)
    for c, w in enumerate(col_ws):
        col_w_blk[c * 8:(c + 1) * 8, c * col_emb:(c + 1) * col_emb] = w
    fe = dict(nt_w=nt_w, nt_b=nt_b, col_w_blk=jnp.asarray(col_w_blk))

    # BiGG GNN layers.  Every per-head q/k/v projection (both directions) and
    # the shared root linear get their own 128-lane block in w_cat/b_cat; the
    # unused lanes are exact zeros so full-block MXU operands stay exact.
    gnn = []
    for li in range(ep['encoder_conv_layers']):
        if li == 0:
            in_dim = node_feature_dim
            n_rows = l0_rows
            src_offs = [0] + list(np.cumsum(seg_widths)[:-1])
            row_map = list(zip(src_offs, seg_offs, seg_widths))
        else:
            in_dim = emb
            n_rows = LANE                      # hidden h is 128-lane padded
            row_map = [(0, 0, emb)]
        w_cat = np.zeros((n_rows, nblk * LANE), np.float32)
        b_cat = np.zeros((1, nblk * LANE), np.float32)

        def place(blk, w, b):
            for (s, d, wd) in row_map:
                w_cat[d:d + wd, blk * LANE:blk * LANE + w.shape[1]] = w[s:s + wd]
            b_cat[0, blk * LANE:blk * LANE + b.shape[1]] = b[0]

        for direction in range(2):             # 0 = "in" conv, 1 = "out" conv
            base = direction * 3 * heads
            for p in range(3):                 # q, k, v
                w, b = _init_linear(kg, in_dim, hd)
                w, b = np.asarray(w), np.asarray(b)
                for hh in range(heads):
                    place(base + p * heads + hh,
                          w[:, hh * emb:(hh + 1) * emb],
                          b[:, hh * emb:(hh + 1) * emb])
        root_w, root_b = _init_linear(kg, in_dim, emb)
        place(6 * heads, np.asarray(root_w), np.asarray(root_b))
        bn_g = np.zeros((1, LANE), np.float32)
        bn_g[0, :emb] = 1.0
        bn_b = np.zeros((1, LANE), np.float32)
        gnn.append(dict(w_cat=jnp.asarray(w_cat), b_cat=jnp.asarray(b_cat),
                        bn_g=jnp.asarray(bn_g), bn_b=jnp.asarray(bn_b)))

    # GRU aggregation (gate order r,z,n); each gate in its own 128-lane block.
    gb = 1.0 / np.sqrt(emb)
    def _gru_u(shape):
        return np.asarray(jax.random.uniform(kg(), shape, jnp.float32, -gb, gb))
    wih_r, whh_r = _gru_u((emb, 3 * emb)), _gru_u((emb, 3 * emb))
    bih_r, bhh_r = _gru_u((1, 3 * emb)), _gru_u((1, 3 * emb))
    wih = np.zeros((LANE, 3 * LANE), np.float32)
    whh = np.zeros((LANE, 3 * LANE), np.float32)
    bih = np.zeros((1, 3 * LANE), np.float32)
    bhh = np.zeros((1, 3 * LANE), np.float32)
    for gate in range(3):
        wih[:emb, gate * LANE:gate * LANE + emb] = wih_r[:, gate * emb:(gate + 1) * emb]
        whh[:emb, gate * LANE:gate * LANE + emb] = whh_r[:, gate * emb:(gate + 1) * emb]
        bih[0, gate * LANE:gate * LANE + emb] = bih_r[0, gate * emb:(gate + 1) * emb]
        bhh[0, gate * LANE:gate * LANE + emb] = bhh_r[0, gate * emb:(gate + 1) * emb]
    gru = dict(wih=jnp.asarray(wih), whh=jnp.asarray(whh),
               bih=jnp.asarray(bih), bhh=jnp.asarray(bhh))

    def _rowify(wb):                 # Linear(K,1) weight as a (1,K) row vector
        w, b = wb
        return (jnp.transpose(w), b)

    # Estimator
    sp = ESTIMATOR_PARAMS
    est_dim = sp['estimator_estimation_embedding_dim']
    n_fcn = sp['estimator_fcn_layers']
    w0, b0 = _init_linear(kg, emb, est_dim)
    fcn0_w = np.zeros((LANE, est_dim), np.float32)   # input y is 128-lane padded
    fcn0_w[:emb] = np.asarray(w0)
    fcn = [(jnp.asarray(fcn0_w), b0)]
    cur_d = est_dim
    for div in [4] + [2] * (n_fcn - 2):
        out_dim = cur_d // div
        fcn.append(_init_linear(kg, cur_d, out_dim))
        cur_d = out_dim
    dims = [cur_d // 2 ** i for i in range(3)]
    e_layers, v_layers = [], []
    for in_dim, out_dim in zip(dims, dims[1:] + [1]):
        e_layers.append(_init_linear(kg, in_dim, out_dim))
        v_layers.append(_init_linear(kg, in_dim, out_dim))
    e_layers = [e_layers[0], _rowify(e_layers[1]), _rowify(e_layers[2])]
    v_layers = [v_layers[0], _rowify(v_layers[1]), _rowify(v_layers[2])]
    fs = [_init_linear(kg, 2, 8), _rowify(_init_linear(kg, 8, 1))]
    est = dict(fcn=fcn, e=e_layers, v=v_layers, fs=fs)

    # Explainer (first layer's weight split into the h / h[global] row halves)
    xp = EXPLAINER_PARAMS
    exp_dim = xp['explainer_explanation_embedding_dim']
    n_exp = xp['explainer_fcn_layers']
    w0, b0 = _init_linear(kg, 2 * emb, exp_dim)
    w0 = np.asarray(w0)
    wa = np.zeros((LANE, exp_dim), np.float32)
    wa[:emb] = w0[:emb]
    wb = np.zeros((LANE, exp_dim), np.float32)
    wb[:emb] = w0[emb:2 * emb]
    out_dims = [exp_dim // 2 ** (i + 1) for i in range(n_exp - 2)] + [1]
    cur_x = exp_dim
    layers = []
    for out_dim in out_dims:
        layers.append(_init_linear(kg, cur_x, out_dim))
        cur_x = out_dim
    expl = dict(wa=jnp.asarray(wa), wb=jnp.asarray(wb), b0=b0,
                mids=layers[:-1], last=_rowify(layers[-1]))

    return dict(fe=fe, gnn=gnn, gru=gru, est=est, expl=expl)

# ----------------------------- host bookkeeping -------------------------------
def prepare_batches_for_subtrees(batch_subtree_index, subtree_index, subtree_labels):
    labels_list = [np.asarray(subtree_labels[i], np.float32) for i in batch_subtree_index]
    index_list = [np.asarray(subtree_index[i], np.int64) for i in batch_subtree_index]
    all_labels = np.concatenate(labels_list)
    all_index = np.concatenate(index_list)
    b = len(batch_subtree_index)
    label_counts = np.array([len(l) for l in labels_list])
    tree_ids = np.repeat(np.arange(b), label_counts)
    global_labels = np.full(b, -np.inf, np.float32)
    np.maximum.at(global_labels, tree_ids, all_labels)               # scatter amax
    local_labels = all_labels / global_labels[tree_ids]
    index_counts = np.array([len(i) for i in index_list])
    sizes = np.array([int(idx.max()) + 1 for idx in index_list])
    ends = np.cumsum(sizes)
    starts = ends - sizes
    batched_index = all_index + np.repeat(starts, index_counts)
    global_tree_index = (ends - 1).tolist()
    return batched_index, global_tree_index, global_labels, local_labels

# ----------------------------- full forward -----------------------------------
def reqo_forward(params, batch_x, edge_index, batch_y, table_columns_number,
                 subtree_index, subtree_labels):
    num = sum(len(subtree_index[i]) for i in batch_y)
    assert num == batch_x.shape[0], 'Number of nodes mismatch!'

    batched_index, global_tree_index, global_labels, local_labels = \
        prepare_batches_for_subtrees(batch_y, subtree_index, subtree_labels)

    n = batch_x.shape[0]
    adj_in = np.zeros((n, n), np.float32)
    adj_in[np.asarray(edge_index[1]), np.asarray(edge_index[0])] = 1.0  # j -> i
    adj_out = np.ascontiguousarray(adj_in.T)                            # flipped

    # Dense-batch scatter + row gathers as tiny one-hot matrices; they become
    # single MXU passes inside the fused kernel (no extra launches / indexing).
    bidx = np.asarray(batched_index, np.int64)
    n_groups = int(bidx.max()) + 1
    counts = np.bincount(bidx, minlength=n_groups)
    t_steps = int(counts.max())
    g_pad = max(8, _ceil_to(n_groups, 8))
    starts = np.cumsum(counts) - counts
    pos = np.arange(len(bidx)) - starts[bidx]
    scat = np.zeros((t_steps * g_pad, n), np.float32)
    scat[pos * g_pad + bidx, np.arange(n)] = 1.0

    gti = np.asarray(global_tree_index, np.int64)
    n_trees = len(gti)
    b_pad = max(8, _ceil_to(n_trees, 8))
    gath_y = np.zeros((b_pad, g_pad), np.float32)
    gath_y[np.arange(n_trees), gti] = 1.0
    starts_t = np.concatenate([np.array([-1], np.int64), gti[:-1]])
    tree_ids = np.repeat(np.arange(n_trees), gti - starts_t)
    global_idx = gti[tree_ids]
    gath_m = np.zeros((g_pad, g_pad), np.float32)
    gath_m[np.arange(n_groups), global_idx] = 1.0

    est_slab, expl_slab = reqo_fused_forward(
        params, batch_x.astype(jnp.float32), jnp.asarray(adj_in),
        jnp.asarray(adj_out), jnp.asarray(scat), jnp.asarray(gath_y),
        jnp.asarray(gath_m), table_columns_number, t_steps)

    pred = est_slab[:n_trees, 0:1]
    va = est_slab[:n_trees, 1:2]
    iv = est_slab[:n_trees, 2:3]
    expl = expl_slab[:n_groups, 0:1]
    return (pred, va, iv, expl,
            jnp.asarray(global_labels), jnp.asarray(local_labels))

# ----------------------------------- main -------------------------------------
if __name__ == "__main__":
    key = jax.random.PRNGKey(0)
    pkey, xkey = jax.random.split(key)
    params = init_reqo_params(pkey)

    # Synthetic batch: 2 plan trees, 9 nodes total (5 + 4), 5 subtrees total.
    raw_dim = (NODE_TYPE_NUM + 2 + ENCODER_PARAMS['encoder_table_num']
               + ENCODER_PARAMS['encoder_column_num'] * 8)           # 79
    n_nodes = 9
    batch_x = jax.random.normal(xkey, (n_nodes, raw_dim), jnp.float32)
    edge_index = np.array([[0, 1, 2, 3, 5, 6, 7],
                           [1, 4, 3, 4, 6, 8, 8]], dtype=np.int64)
    batch_y = [0, 1]                                  # batch.y.long()
    subtree_index = [np.array([0, 0, 1, 2, 2], np.int64),
                     np.array([0, 1, 1, 1], np.int64)]
    subtree_labels = [np.array([1.0, 2.0, 4.0], np.float32),
                      np.array([3.0, 6.0], np.float32)]
    table_columns_number = (2, 3, 1)                  # sums to encoder_column_num

    outs = reqo_forward(params, batch_x, edge_index, batch_y,
                        table_columns_number, subtree_index, subtree_labels)
    outs = jax.block_until_ready(outs)
    pred, va, iv, expl, global_labels, local_labels = outs
    assert pred.shape == (2, 1) and va.shape == (2, 1) and iv.shape == (2, 1)
    assert expl.shape == (5, 1)
    assert global_labels.shape == (2,) and local_labels.shape == (5,)
    assert all(bool(jnp.all(jnp.isfinite(o))) for o in
               (pred, va, iv, expl, global_labels, local_labels))
    print("KERNEL_OK")
</pallas_src>

<mosaic_0001>
module attributes {stable_mosaic.version = 11 : i64} {
  func.func @kernel(%arg0: memref<9x79xf32, #tpu.memory_space<vmem>>, %arg1: memref<9x9xf32, #tpu.memory_space<vmem>>, %arg2: memref<9x9xf32, #tpu.memory_space<vmem>>, %arg3: memref<26x16xf32, #tpu.memory_space<vmem>>, %arg4: memref<1x16xf32, #tpu.memory_space<vmem>>, %arg5: memref<48x48xf32, #tpu.memory_space<vmem>>, %arg6: memref<56x1664xf32, #tpu.memory_space<vmem>>, %arg7: memref<1x1664xf32, #tpu.memory_space<vmem>>, %arg8: memref<1x128xf32, #tpu.memory_space<vmem>>, %arg9: memref<1x128xf32, #tpu.memory_space<vmem>>, %arg10: memref<128x1664xf32, #tpu.memory_space<vmem>>, %arg11: memref<1x1664xf32, #tpu.memory_space<vmem>>, %arg12: memref<1x128xf32, #tpu.memory_space<vmem>>, %arg13: memref<1x128xf32, #tpu.memory_space<vmem>>, %arg14: memref<128x384xf32, #tpu.memory_space<vmem>>, %arg15: memref<128x384xf32, #tpu.memory_space<vmem>>, %arg16: memref<1x384xf32, #tpu.memory_space<vmem>>, %arg17: memref<1x384xf32, #tpu.memory_space<vmem>>, %arg18: memref<24x9xf32, #tpu.memory_space<vmem>>, %arg19: memref<8x8xf32, #tpu.memory_space<vmem>>, %arg20: memref<8x8xf32, #tpu.memory_space<vmem>>, %arg21: memref<128x32xf32, #tpu.memory_space<vmem>>, %arg22: memref<1x32xf32, #tpu.memory_space<vmem>>, %arg23: memref<32x8xf32, #tpu.memory_space<vmem>>, %arg24: memref<1x8xf32, #tpu.memory_space<vmem>>, %arg25: memref<8x4xf32, #tpu.memory_space<vmem>>, %arg26: memref<1x4xf32, #tpu.memory_space<vmem>>, %arg27: memref<4x2xf32, #tpu.memory_space<vmem>>, %arg28: memref<1x2xf32, #tpu.memory_space<vmem>>, %arg29: memref<1x2xf32, #tpu.memory_space<vmem>>, %arg30: memref<1x1xf32, #tpu.memory_space<vmem>>, %arg31: memref<1x1xf32, #tpu.memory_space<vmem>>, %arg32: memref<1x1xf32, #tpu.memory_space<vmem>>, %arg33: memref<4x2xf32, #tpu.memory_space<vmem>>, %arg34: memref<1x2xf32, #tpu.memory_space<vmem>>, %arg35: memref<1x2xf32, #tpu.memory_space<vmem>>, %arg36: memref<1x1xf32, #tpu.memory_space<vmem>>, %arg37: memref<1x1xf32, #tpu.memory_space<vmem>>, %arg38: memref<1x1xf32, #tpu.memory_space<vmem>>, %arg39: memref<2x8xf32, #tpu.memory_space<vmem>>, %arg40: memref<1x8xf32, #tpu.memory_space<vmem>>, %arg41: memref<1x8xf32, #tpu.memory_space<vmem>>, %arg42: memref<1x1xf32, #tpu.memory_space<vmem>>, %arg43: memref<128x32xf32, #tpu.memory_space<vmem>>, %arg44: memref<128x32xf32, #tpu.memory_space<vmem>>, %arg45: memref<1x32xf32, #tpu.memory_space<vmem>>, %arg46: memref<32x16xf32, #tpu.memory_space<vmem>>, %arg47: memref<1x16xf32, #tpu.memory_space<vmem>>, %arg48: memref<1x16xf32, #tpu.memory_space<vmem>>, %arg49: memref<1x1xf32, #tpu.memory_space<vmem>>, %arg50: memref<8x128xf32, #tpu.memory_space<vmem>>, %arg51: memref<8x128xf32, #tpu.memory_space<vmem>>) attributes {dimension_semantics = [], scalar_prefetch = 0 : i64, scratch_operands = 0 : i64, tpu.core_type = #tpu.core_type<tc>} {
    %c0 = arith.constant 0 : index
    %c0_0 = arith.constant 0 : index
    %0 = vector.load %arg0[%c0, %c0_0] : memref<9x79xf32, #tpu.memory_space<vmem>>, vector<9x79xf32>
    %1 = vector.extract_strided_slice %0 {offsets = [0, 0], sizes = [9, 26], strides = [1, 1]} : vector<9x79xf32> to vector<9x26xf32>
    %2 = vector.extract_strided_slice %0 {offsets = [0, 26], sizes = [9, 2], strides = [1, 1]} : vector<9x79xf32> to vector<9x2xf32>
    %3 = vector.extract_strided_slice %0 {offsets = [0, 28], sizes = [9, 3], strides = [1, 1]} : vector<9x79xf32> to vector<9x3xf32>
    %4 = vector.extract_strided_slice %0 {offsets = [0, 31], sizes = [9, 48], strides = [1, 1]} : vector<9x79xf32> to vector<9x48xf32>
    %c0_1 = arith.constant 0 : index
    %c0_2 = arith.constant 0 : index
    %5 = vector.load %arg3[%c0_1, %c0_2] : memref<26x16xf32, #tpu.memory_space<vmem>>, vector<26x16xf32>
    %cst = arith.constant dense<0.000000e+00> : vector<9x16xf32>
    %6 = tpu.matmul %1, %5, %cst {dimension_numbers = #tpu.dot_dimension_numbers<[1], [0], [0], [1], [0, 0, 1, 1], [], []>} : vector<9x26xf32>, vector<26x16xf32>, vector<9x16xf32> -> vector<9x16xf32>
    %c0_3 = arith.constant 0 : index
    %c0_4 = arith.constant 0 : index
    %7 = vector.load %arg4[%c0_3, %c0_4] : memref<1x16xf32, #tpu.memory_space<vmem>>, vector<1x16xf32>
    %8 = vector.broadcast %7 : vector<1x16xf32> to vector<9x16xf32>
    %9 = arith.addf %6, %8 : vector<9x16xf32>
    %cst_5 = arith.constant 0.000000e+00 : f32
    %10 = vector.broadcast %cst_5 : f32 to vector<9x16xf32>
    %11 = arith.maximumf %9, %10 : vector<9x16xf32>
    %c0_6 = arith.constant 0 : index
    %c0_7 = arith.constant 0 : index
    %12 = vector.load %arg5[%c0_6, %c0_7] : memref<48x48xf32, #tpu.memory_space<vmem>>, vector<48x48xf32>
    %cst_8 = arith.constant dense<0.000000e+00> : vector<9x48xf32>
    %13 = tpu.matmul %4, %12, %cst_8 {dimension_numbers = #tpu.dot_dimension_numbers<[1], [0], [0], [1], [0, 0, 1, 1], [], []>} : vector<9x48xf32>, vector<48x48xf32>, vector<9x48xf32> -> vector<9x48xf32>
    %cst_9 = arith.constant 0.000000e+00 : f32
    %14 = vector.broadcast %cst_9 : f32 to vector<9x48xf32>
    %15 = arith.maximumf %13, %14 : vector<9x48xf32>
    %16 = vector.extract_strided_slice %15 {offsets = [0, 0], sizes = [9, 8], strides = [1, 1]} : vector<9x48xf32> to vector<9x8xf32>
    %17 = vector.extract_strided_slice %15 {offsets = [0, 8], sizes = [9, 8], strides = [1, 1]} : vector<9x48xf32> to vector<9x8xf32>
    %18 = arith.maximumf %16, %17 : vector<9x8xf32>
    %19 = vector.extract_strided_slice %15 {offsets = [0, 16], sizes = [9, 8], strides = [1, 1]} : vector<9x48xf32> to vector<9x8xf32>
    %20 = vector.extract_strided_slice %15 {offsets = [0, 24], sizes = [9, 8], strides = [1, 1]} : vector<9x48xf32> to vector<9x8xf32>
    %21 = arith.maximumf %19, %20 : vector<9x8xf32>
    %22 = vector.extract_strided_slice %15 {offsets = [0, 32], sizes = [9, 8], strides = [1, 1]} : vector<9x48xf32> to vector<9x8xf32>
    %23 = arith.maximumf %21, %22 : vector<9x8xf32>
    %24 = vector.extract_strided_slice %15 {offsets = [0, 40], sizes = [9, 8], strides = [1, 1]} : vector<9x48xf32> to vector<9x8xf32>
    %c0_10 = arith.constant 0 : index
    %c0_11 = arith.constant 0 : index
    %25 = vector.load %arg1[%c0_10, %c0_11] : memref<9x9xf32, #tpu.memory_space<vmem>>, vector<9x9xf32>
    %c0_12 = arith.constant 0 : index
    %c0_13 = arith.constant 0 : index
    %26 = vector.load %arg2[%c0_12, %c0_13] : memref<9x9xf32, #tpu.memory_space<vmem>>, vector<9x9xf32>
    %c0_14 = arith.constant 0 : index
    %c0_15 = arith.constant 0 : index
    %27 = vector.load %arg7[%c0_14, %c0_15] : memref<1x1664xf32, #tpu.memory_space<vmem>>, vector<1x1664xf32>
    %c0_16 = arith.constant 0 : index
    %c0_17 = arith.constant 0 : index
    %28 = vector.load %arg6[%c0_16, %c0_17] : memref<56x1664xf32, #tpu.memory_space<vmem>>, vector<16x1664xf32>
    %cst_18 = arith.constant dense<0.000000e+00> : vector<9x1664xf32>
    %29 = tpu.matmul %11, %28, %cst_18 {dimension_numbers = #tpu.dot_dimension_numbers<[1], [0], [0], [1], [0, 0, 1, 1], [], []>} : vector<9x16xf32>, vector<16x1664xf32>, vector<9x1664xf32> -> vector<9x1664xf32>
    %30 = vector.broadcast %27 : vector<1x1664xf32> to vector<9x1664xf32>
    %31 = arith.addf %30, %29 : vector<9x1664xf32>
    %c16 = arith.constant 16 : index
    %c0_19 = arith.constant 0 : index
    %32 = vector.load %arg6[%c16, %c0_19] : memref<56x1664xf32, #tpu.memory_space<vmem>>, vector<2x1664xf32>
    %cst_20 = arith.constant dense<0.000000e+00> : vector<9x1664xf32>
    %33 = tpu.matmul %2, %32, %cst_20 {dimension_numbers = #tpu.dot_dimension_numbers<[1], [0], [0], [1], [0, 0, 1, 1], [], []>} : vector<9x2xf32>, vector<2x1664xf32>, vector<9x1664xf32> -> vector<9x1664xf32>
    %34 = arith.addf %31, %33 : vector<9x1664xf32>
    %c24 = arith.constant 24 : index
    %c0_21 = arith.constant 0 : index
    %35 = vector.load %arg6[%c24, %c0_21] : memref<56x1664xf32, #tpu.memory_space<vmem>>, vector<3x1664xf32>
    %cst_22 = arith.constant dense<0.000000e+00> : vector<9x1664xf32>
    %36 = tpu.matmul %3, %35, %cst_22 {dimension_numbers = #tpu.dot_dimension_numbers<[1], [0], [0], [1], [0, 0, 1, 1], [], []>} : vector<9x3xf32>, vector<3x1664xf32>, vector<9x1664xf32> -> vector<9x1664xf32>
    %37 = arith.addf %34, %36 : vector<9x1664xf32>
    %c32 = arith.constant 32 : index
    %c0_23 = arith.constant 0 : index
    %38 = vector.load %arg6[%c32, %c0_23] : memref<56x1664xf32, #tpu.memory_space<vmem>>, vector<8x1664xf32>
    %cst_24 = arith.constant dense<0.000000e+00> : vector<9x1664xf32>
    %39 = tpu.matmul %18, %38, %cst_24 {dimension_numbers = #tpu.dot_dimension_numbers<[1], [0], [0], [1], [0, 0, 1, 1], [], []>} : vector<9x8xf32>, vector<8x1664xf32>, vector<9x1664xf32> -> vector<9x1664xf32>
    %40 = arith.addf %37, %39 : vector<9x1664xf32>
    %c40 = arith.constant 40 : index
    %c0_25 = arith.constant 0 : index
    %41 = vector.load %arg6[%c40, %c0_25] : memref<56x1664xf32, #tpu.memory_space<vmem>>, vector<8x1664xf32>
    %cst_26 = arith.constant dense<0.000000e+00> : vector<9x1664xf32>
    %42 = tpu.matmul %23, %41, %cst_26 {dimension_numbers = #tpu.dot_dimension_numbers<[1], [0], [0], [1], [0, 0, 1, 1], [], []>} : vector<9x8xf32>, vector<8x1664xf32>, vector<9x1664xf32> -> vector<9x1664xf32>
    %43 = arith.addf %40, %42 : vector<9x1664xf32>
    %c48 = arith.constant 48 : index
    %c0_27 = arith.constant 0 : index
    %44 = vector.load %arg6[%c48, %c0_27] : memref<56x1664xf32, #tpu.memory_space<vmem>>, vector<8x1664xf32>
    %cst_28 = arith.constant dense<0.000000e+00> : vector<9x1664xf32>
    %45 = tpu.matmul %24, %44, %cst_28 {dimension_numbers = #tpu.dot_dimension_numbers<[1], [0], [0], [1], [0, 0, 1, 1], [], []>} : vector<9x8xf32>, vector<8x1664xf32>, vector<9x1664xf32> -> vector<9x1664xf32>
    %46 = arith.addf %43, %45 : vector<9x1664xf32>
    %cst_29 = arith.constant 0.000000e+00 : f32
    %47 = vector.broadcast %cst_29 : f32 to vector<9x128xf32>
    %48 = vector.extract_strided_slice %46 {offsets = [0, 0], sizes = [9, 128], strides = [1, 1]} : vector<9x1664xf32> to vector<9x128xf32>
    %49 = vector.extract_strided_slice %46 {offsets = [0, 256], sizes = [9, 128], strides = [1, 1]} : vector<9x1664xf32> to vector<9x128xf32>
    %50 = vector.extract_strided_slice %46 {offsets = [0, 512], sizes = [9, 128], strides = [1, 1]} : vector<9x1664xf32> to vector<9x128xf32>
    %51 = tpu.transpose %49, [1, 0] : vector<9x128xf32> -> vector<128x9xf32>
    %cst_30 = arith.constant dense<0.000000e+00> : vector<9x9xf32>
    %52 = tpu.matmul %48, %51, %cst_30 {dimension_numbers = #tpu.dot_dimension_numbers<[1], [0], [0], [1], [0, 0, 1, 1], [], []>} : vector<9x128xf32>, vector<128x9xf32>, vector<9x9xf32> -> vector<9x9xf32>
    %cst_31 = arith.constant 0.176776692 : f32
    %53 = vector.broadcast %cst_31 : f32 to vector<9x9xf32>
    %54 = arith.mulf %52, %53 : vector<9x9xf32>
    %cst_32 = arith.constant 0.000000e+00 : f32
    %55 = vector.broadcast %cst_32 : f32 to vector<9x9xf32>
    %56 = arith.cmpf ogt, %25, %55 : vector<9x9xf32>
    %cst_33 = arith.constant -1.000000e+30 : f32
    %57 = vector.broadcast %cst_33 : f32 to vector<9x9xf32>
    %58 = arith.select %56, %54, %57 : vector<9x9xi1>, vector<9x9xf32>
    %cst_34 = arith.constant dense<0xFF800000> : vector<9xf32>
    %59 = vector.multi_reduction <maximumf>, %58, %cst_34 [1] : vector<9x9xf32> to vector<9xf32>
    %60 = vector.shape_cast %59 : vector<9xf32> to vector<9x1xf32>
    %61 = vector.broadcast %60 : vector<9x1xf32> to vector<9x9xf32>
    %62 = arith.subf %58, %61 : vector<9x9xf32>
    %63 = math.exp %62 : vector<9x9xf32>
    %64 = arith.mulf %63, %25 : vector<9x9xf32>
    %cst_35 = arith.constant dense<0.000000e+00> : vector<9xf32>
    %65 = vector.multi_reduction <add>, %64, %cst_35 [1] : vector<9x9xf32> to vector<9xf32>
    %66 = vector.shape_cast %65 : vector<9xf32> to vector<9x1xf32>
    %cst_36 = arith.constant 9.99999968E-21 : f32
    %67 = vector.broadcast %cst_36 : f32 to vector<9x1xf32>
    %68 = arith.maximumf %66, %67 : vector<9x1xf32>
    %69 = tpu.reciprocal %68 : vector<9x1xf32> -> vector<9x1xf32>
    %cst_37 = arith.constant dense<0.000000e+00> : vector<9x128xf32>
    %70 = tpu.matmul %64, %50, %cst_37 {dimension_numbers = #tpu.dot_dimension_numbers<[1], [0], [0], [1], [0, 0, 1, 1], [], []>} : vector<9x9xf32>, vector<9x128xf32>, vector<9x128xf32> -> vector<9x128xf32>
    %71 = vector.broadcast %69 : vector<9x1xf32> to vector<9x128xf32>
    %72 = arith.mulf %70, %71 : vector<9x128xf32>
    %73 = arith.addf %47, %72 : vector<9x128xf32>
    %74 = vector.extract_strided_slice %46 {offsets = [0, 128], sizes = [9, 128], strides = [1, 1]} : vector<9x1664xf32> to vector<9x128xf32>
    %75 = vector.extract_strided_slice %46 {offsets = [0, 384], sizes = [9, 128], strides = [1, 1]} : vector<9x1664xf32> to vector<9x128xf32>
    %76 = vector.extract_strided_slice %46 {offsets = [0, 640], sizes = [9, 128], strides = [1, 1]} : vector<9x1664xf32> to vector<9x128xf32>
    %77 = tpu.transpose %75, [1, 0] : vector<9x128xf32> -> vector<128x9xf32>
    %cst_38 = arith.constant dense<0.000000e+00> : vector<9x9xf32>
    %78 = tpu.matmul %74, %77, %cst_38 {dimension_numbers = #tpu.dot_dimension_numbers<[1], [0], [0], [1], [0, 0, 1, 1], [], []>} : vector<9x128xf32>, vector<128x9xf32>, vector<9x9xf32> -> vector<9x9xf32>
    %cst_39 = arith.constant 0.176776692 : f32
    %79 = vector.broadcast %cst_39 : f32 to vector<9x9xf32>
    %80 = arith.mulf %78, %79 : vector<9x9xf32>
    %cst_40 = arith.constant 0.000000e+00 : f32
    %81 = vector.broadcast %cst_40 : f32 to vector<9x9xf32>
    %82 = arith.cmpf ogt, %25, %81 : vector<9x9xf32>
    %cst_41 = arith.constant -1.000000e+30 : f32
    %83 = vector.broadcast %cst_41 : f32 to vector<9x9xf32>
    %84 = arith.select %82, %80, %83 : vector<9x9xi1>, vector<9x9xf32>
    %cst_42 = arith.constant dense<0xFF800000> : vector<9xf32>
    %85 = vector.multi_reduction <maximumf>, %84, %cst_42 [1] : vector<9x9xf32> to vector<9xf32>
    %86 = vector.shape_cast %85 : vector<9xf32> to vector<9x1xf32>
    %87 = vector.broadcast %86 : vector<9x1xf32> to vector<9x9xf32>
    %88 = arith.subf %84, %87 : vector<9x9xf32>
    %89 = math.exp %88 : vector<9x9xf32>
    %90 = arith.mulf %89, %25 : vector<9x9xf32>
    %cst_43 = arith.constant dense<0.000000e+00> : vector<9xf32>
    %91 = vector.multi_reduction <add>, %90, %cst_43 [1] : vector<9x9xf32> to vector<9xf32>
    %92 = vector.shape_cast %91 : vector<9xf32> to vector<9x1xf32>
    %cst_44 = arith.constant 9.99999968E-21 : f32
    %93 = vector.broadcast %cst_44 : f32 to vector<9x1xf32>
    %94 = arith.maximumf %92, %93 : vector<9x1xf32>
    %95 = tpu.reciprocal %94 : vector<9x1xf32> -> vector<9x1xf32>
    %cst_45 = arith.constant dense<0.000000e+00> : vector<9x128xf32>
    %96 = tpu.matmul %90, %76, %cst_45 {dimension_numbers = #tpu.dot_dimension_numbers<[1], [0], [0], [1], [0, 0, 1, 1], [], []>} : vector<9x9xf32>, vector<9x128xf32>, vector<9x128xf32> -> vector<9x128xf32>
    %97 = vector.broadcast %95 : vector<9x1xf32> to vector<9x128xf32>
    %98 = arith.mulf %96, %97 : vector<9x128xf32>
    %99 = arith.addf %73, %98 : vector<9x128xf32>
    %cst_46 = arith.constant 5.000000e-01 : f32
    %100 = vector.broadcast %cst_46 : f32 to vector<9x128xf32>
    %101 = arith.mulf %99, %100 : vector<9x128xf32>
    %cst_47 = arith.constant 0.000000e+00 : f32
    %102 = vector.broadcast %cst_47 : f32 to vector<9x128xf32>
    %103 = vector.extract_strided_slice %46 {offsets = [0, 768], sizes = [9, 128], strides = [1, 1]} : vector<9x1664xf32> to vector<9x128xf32>
    %104 = vector.extract_strided_slice %46 {offsets = [0, 1024], sizes = [9, 128], strides = [1, 1]} : vector<9x1664xf32> to vector<9x128xf32>
    %105 = vector.extract_strided_slice %46 {offsets = [0, 1280], sizes = [9, 128], strides = [1, 1]} : vector<9x1664xf32> to vector<9x128xf32>
    %106 = tpu.transpose %104, [1, 0] : vector<9x128xf32> -> vector<128x9xf32>
    %cst_48 = arith.constant dense<0.000000e+00> : vector<9x9xf32>
    %107 = tpu.matmul %103, %106, %cst_48 {dimension_numbers = #tpu.dot_dimension_numbers<[1], [0], [0], [1], [0, 0, 1, 1], [], []>} : vector<9x128xf32>, vector<128x9xf32>, vector<9x9xf32> -> vector<9x9xf32>
    %cst_49 = arith.constant 0.176776692 : f32
    %108 = vector.broadcast %cst_49 : f32 to vector<9x9xf32>
    %109 = arith.mulf %107, %108 : vector<9x9xf32>
    %cst_50 = arith.constant 0.000000e+00 : f32
    %110 = vector.broadcast %cst_50 : f32 to vector<9x9xf32>
    %111 = arith.cmpf ogt, %26, %110 : vector<9x9xf32>
    %cst_51 = arith.constant -1.000000e+30 : f32
    %112 = vector.broadcast %cst_51 : f32 to vector<9x9xf32>
    %113 = arith.select %111, %109, %112 : vector<9x9xi1>, vector<9x9xf32>
    %cst_52 = arith.constant dense<0xFF800000> : vector<9xf32>
    %114 = vector.multi_reduction <maximumf>, %113, %cst_52 [1] : vector<9x9xf32> to vector<9xf32>
    %115 = vector.shape_cast %114 : vector<9xf32> to vector<9x1xf32>
    %116 = vector.broadcast %115 : vector<9x1xf32> to vector<9x9xf32>
    %117 = arith.subf %113, %116 : vector<9x9xf32>
    %118 = math.exp %117 : vector<9x9xf32>
    %119 = arith.mulf %118, %26 : vector<9x9xf32>
    %cst_53 = arith.constant dense<0.000000e+00> : vector<9xf32>
    %120 = vector.multi_reduction <add>, %119, %cst_53 [1] : vector<9x9xf32> to vector<9xf32>
    %121 = vector.shape_cast %120 : vector<9xf32> to vector<9x1xf32>
    %cst_54 = arith.constant 9.99999968E-21 : f32
    %122 = vector.broadcast %cst_54 : f32 to vector<9x1xf32>
    %123 = arith.maximumf %121, %122 : vector<9x1xf32>
    %124 = tpu.reciprocal %123 : vector<9x1xf32> -> vector<9x1xf32>
    %cst_55 = arith.constant dense<0.000000e+00> : vector<9x128xf32>
    %125 = tpu.matmul %119, %105, %cst_55 {dimension_numbers = #tpu.dot_dimension_numbers<[1], [0], [0], [1], [0, 0, 1, 1], [], []>} : vector<9x9xf32>, vector<9x128xf32>, vector<9x128xf32> -> vector<9x128xf32>
    %126 = vector.broadcast %124 : vector<9x1xf32> to vector<9x128xf32>
    %127 = arith.mulf %125, %126 : vector<9x128xf32>
    %128 = arith.addf %102, %127 : vector<9x128xf32>
    %129 = vector.extract_strided_slice %46 {offsets = [0, 896], sizes = [9, 128], strides = [1, 1]} : vector<9x1664xf32> to vector<9x128xf32>
    %130 = vector.extract_strided_slice %46 {offsets = [0, 1152], sizes = [9, 128], strides = [1, 1]} : vector<9x1664xf32> to vector<9x128xf32>
    %131 = vector.extract_strided_slice %46 {offsets = [0, 1408], sizes = [9, 128], strides = [1, 1]} : vector<9x1664xf32> to vector<9x128xf32>
    %132 = tpu.transpose %130, [1, 0] : vector<9x128xf32> -> vector<128x9xf32>
    %cst_56 = arith.constant dense<0.000000e+00> : vector<9x9xf32>
    %133 = tpu.matmul %129, %132, %cst_56 {dimension_numbers = #tpu.dot_dimension_numbers<[1], [0], [0], [1], [0, 0, 1, 1], [], []>} : vector<9x128xf32>, vector<128x9xf32>, vector<9x9xf32> -> vector<9x9xf32>
    %cst_57 = arith.constant 0.176776692 : f32
    %134 = vector.broadcast %cst_57 : f32 to vector<9x9xf32>
    %135 = arith.mulf %133, %134 : vector<9x9xf32>
    %cst_58 = arith.constant 0.000000e+00 : f32
    %136 = vector.broadcast %cst_58 : f32 to vector<9x9xf32>
    %137 = arith.cmpf ogt, %26, %136 : vector<9x9xf32>
    %cst_59 = arith.constant -1.000000e+30 : f32
    %138 = vector.broadcast %cst_59 : f32 to vector<9x9xf32>
    %139 = arith.select %137, %135, %138 : vector<9x9xi1>, vector<9x9xf32>
    %cst_60 = arith.constant dense<0xFF800000> : vector<9xf32>
    %140 = vector.multi_reduction <maximumf>, %139, %cst_60 [1] : vector<9x9xf32> to vector<9xf32>
    %141 = vector.shape_cast %140 : vector<9xf32> to vector<9x1xf32>
    %142 = vector.broadcast %141 : vector<9x1xf32> to vector<9x9xf32>
    %143 = arith.subf %139, %142 : vector<9x9xf32>
    %144 = math.exp %143 : vector<9x9xf32>
    %145 = arith.mulf %144, %26 : vector<9x9xf32>
    %cst_61 = arith.constant dense<0.000000e+00> : vector<9xf32>
    %146 = vector.multi_reduction <add>, %145, %cst_61 [1] : vector<9x9xf32> to vector<9xf32>
    %147 = vector.shape_cast %146 : vector<9xf32> to vector<9x1xf32>
    %cst_62 = arith.constant 9.99999968E-21 : f32
    %148 = vector.broadcast %cst_62 : f32 to vector<9x1xf32>
    %149 = arith.maximumf %147, %148 : vector<9x1xf32>
    %150 = tpu.reciprocal %149 : vector<9x1xf32> -> vector<9x1xf32>
    %cst_63 = arith.constant dense<0.000000e+00> : vector<9x128xf32>
    %151 = tpu.matmul %145, %131, %cst_63 {dimension_numbers = #tpu.dot_dimension_numbers<[1], [0], [0], [1], [0, 0, 1, 1], [], []>} : vector<9x9xf32>, vector<9x128xf32>, vector<9x128xf32> -> vector<9x128xf32>
    %152 = vector.broadcast %150 : vector<9x1xf32> to vector<9x128xf32>
    %153 = arith.mulf %151, %152 : vector<9x128xf32>
    %154 = arith.addf %128, %153 : vector<9x128xf32>
    %cst_64 = arith.constant 5.000000e-01 : f32
    %155 = vector.broadcast %cst_64 : f32 to vector<9x128xf32>
    %156 = arith.mulf %154, %155 : vector<9x128xf32>
    %cst_65 = arith.constant 5.000000e-01 : f32
    %157 = vector.broadcast %cst_65 : f32 to vector<9x128xf32>
    %158 = arith.mulf %157, %156 : vector<9x128xf32>
    %cst_66 = arith.constant 5.000000e-01 : f32
    %159 = vector.broadcast %cst_66 : f32 to vector<9x128xf32>
    %160 = arith.mulf %159, %101 : vector<9x128xf32>
    %161 = arith.addf %158, %160 : vector<9x128xf32>
    %162 = vector.extract_strided_slice %46 {offsets = [0, 1536], sizes = [9, 128], strides = [1, 1]} : vector<9x1664xf32> to vector<9x128xf32>
    %163 = arith.addf %161, %162 : vector<9x128xf32>
    %cst_67 = arith.constant dense<0.000000e+00> : vector<128xf32>
    %164 = vector.multi_reduction <add>, %163, %cst_67 [0] : vector<9x128xf32> to vector<128xf32>
    %165 = vector.shape_cast %164 : vector<128xf32> to vector<1x128xf32>
    %cst_68 = arith.constant 9.000000e+00 : f32
    %166 = vector.broadcast %cst_68 : f32 to vector<1x128xf32>
    %167 = arith.divf %165, %166 : vector<1x128xf32>
    %168 = vector.broadcast %167 : vector<1x128xf32> to vector<9x128xf32>
    %169 = arith.subf %163, %168 : vector<9x128xf32>
    %170 = arith.mulf %169, %169 : vector<9x128xf32>
    %cst_69 = arith.constant dense<0.000000e+00> : vector<128xf32>
    %171 = vector.multi_reduction <add>, %170, %cst_69 [0] : vector<9x128xf32> to vector<128xf32>
    %172 = vector.shape_cast %171 : vector<128xf32> to vector<1x128xf32>
    %cst_70 = arith.constant 9.000000e+00 : f32
    %173 = vector.broadcast %cst_70 : f32 to vector<1x128xf32>
    %174 = arith.divf %172, %173 : vector<1x128xf32>
    %175 = vector.broadcast %167 : vector<1x128xf32> to vector<9x128xf32>
    %176 = arith.subf %163, %175 : vector<9x128xf32>
    %cst_71 = arith.constant 9.99999974E-6 : f32
    %177 = vector.broadcast %cst_71 : f32 to vector<1x128xf32>
    %178 = arith.addf %174, %177 : vector<1x128xf32>
    %179 = math.rsqrt %178 : vector<1x128xf32>
    %180 = vector.broadcast %179 : vector<1x128xf32> to vector<9x128xf32>
    %181 = arith.mulf %176, %180 : vector<9x128xf32>
    %c0_72 = arith.constant 0 : index
    %c0_73 = arith.constant 0 : index
    %182 = vector.load %arg8[%c0_72, %c0_73] : memref<1x128xf32, #tpu.memory_space<vmem>>, vector<1x128xf32>
    %183 = vector.broadcast %182 : vector<1x128xf32> to vector<9x128xf32>
    %184 = arith.mulf %181, %183 : vector<9x128xf32>
    %c0_74 = arith.constant 0 : index
    %c0_75 = arith.constant 0 : index
    %185 = vector.load %arg9[%c0_74, %c0_75] : memref<1x128xf32, #tpu.memory_space<vmem>>, vector<1x128xf32>
    %186 = vector.broadcast %185 : vector<1x128xf32> to vector<9x128xf32>
    %187 = arith.addf %184, %186 : vector<9x128xf32>
    %cst_76 = arith.constant 0.000000e+00 : f32
    %188 = vector.broadcast %cst_76 : f32 to vector<9x128xf32>
    %189 = arith.maximumf %187, %188 : vector<9x128xf32>
    %c0_77 = arith.constant 0 : index
    %c0_78 = arith.constant 0 : index
    %190 = vector.load %arg10[%c0_77, %c0_78] : memref<128x1664xf32, #tpu.memory_space<vmem>>, vector<128x1664xf32>
    %cst_79 = arith.constant dense<0.000000e+00> : vector<9x1664xf32>
    %191 = tpu.matmul %189, %190, %cst_79 {dimension_numbers = #tpu.dot_dimension_numbers<[1], [0], [0], [1], [0, 0, 1, 1], [], []>} : vector<9x128xf32>, vector<128x1664xf32>, vector<9x1664xf32> -> vector<9x1664xf32>
    %c0_80 = arith.constant 0 : index
    %c0_81 = arith.constant 0 : index
    %192 = vector.load %arg11[%c0_80, %c0_81] : memref<1x1664xf32, #tpu.memory_space<vmem>>, vector<1x1664xf32>
    %193 = vector.broadcast %192 : vector<1x1664xf32> to vector<9x1664xf32>
    %194 = arith.addf %191, %193 : vector<9x1664xf32>
    %cst_82 = arith.constant 0.000000e+00 : f32
    %195 = vector.broadcast %cst_82 : f32 to vector<9x128xf32>
    %196 = vector.extract_strided_slice %194 {offsets = [0, 0], sizes = [9, 128], strides = [1, 1]} : vector<9x1664xf32> to vector<9x128xf32>
    %197 = vector.extract_strided_slice %194 {offsets = [0, 256], sizes = [9, 128], strides = [1, 1]} : vector<9x1664xf32> to vector<9x128xf32>
    %198 = vector.extract_strided_slice %194 {offsets = [0, 512], sizes = [9, 128], strides = [1, 1]} : vector<9x1664xf32> to vector<9x128xf32>
    %199 = tpu.transpose %197, [1, 0] : vector<9x128xf32> -> vector<128x9xf32>
    %cst_83 = arith.constant dense<0.000000e+00> : vector<9x9xf32>
    %200 = tpu.matmul %196, %199, %cst_83 {dimension_numbers = #tpu.dot_dimension_numbers<[1], [0], [0], [1], [0, 0, 1, 1], [], []>} : vector<9x128xf32>, vector<128x9xf32>, vector<9x9xf32> -> vector<9x9xf32>
    %cst_84 = arith.constant 0.176776692 : f32
    %201 = vector.broadcast %cst_84 : f32 to vector<9x9xf32>
    %202 = arith.mulf %200, %201 : vector<9x9xf32>
    %cst_85 = arith.constant 0.000000e+00 : f32
    %203 = vector.broadcast %cst_85 : f32 to vector<9x9xf32>
    %204 = arith.cmpf ogt, %25, %203 : vector<9x9xf32>
    %cst_86 = arith.constant -1.000000e+30 : f32
    %205 = vector.broadcast %cst_86 : f32 to vector<9x9xf32>
    %206 = arith.select %204, %202, %205 : vector<9x9xi1>, vector<9x9xf32>
    %cst_87 = arith.constant dense<0xFF800000> : vector<9xf32>
    %207 = vector.multi_reduction <maximumf>, %206, %cst_87 [1] : vector<9x9xf32> to vector<9xf32>
    %208 = vector.shape_cast %207 : vector<9xf32> to vector<9x1xf32>
    %209 = vector.broadcast %208 : vector<9x1xf32> to vector<9x9xf32>
    %210 = arith.subf %206, %209 : vector<9x9xf32>
    %211 = math.exp %210 : vector<9x9xf32>
    %212 = arith.mulf %211, %25 : vector<9x9xf32>
    %cst_88 = arith.constant dense<0.000000e+00> : vector<9xf32>
    %213 = vector.multi_reduction <add>, %212, %cst_88 [1] : vector<9x9xf32> to vector<9xf32>
    %214 = vector.shape_cast %213 : vector<9xf32> to vector<9x1xf32>
    %cst_89 = arith.constant 9.99999968E-21 : f32
    %215 = vector.broadcast %cst_89 : f32 to vector<9x1xf32>
    %216 = arith.maximumf %214, %215 : vector<9x1xf32>
    %217 = tpu.reciprocal %216 : vector<9x1xf32> -> vector<9x1xf32>
    %cst_90 = arith.constant dense<0.000000e+00> : vector<9x128xf32>
    %218 = tpu.matmul %212, %198, %cst_90 {dimension_numbers = #tpu.dot_dimension_numbers<[1], [0], [0], [1], [0, 0, 1, 1], [], []>} : vector<9x9xf32>, vector<9x128xf32>, vector<9x128xf32> -> vector<9x128xf32>
    %219 = vector.broadcast %217 : vector<9x1xf32> to vector<9x128xf32>
    %220 = arith.mulf %218, %219 : vector<9x128xf32>
    %221 = arith.addf %195, %220 : vector<9x128xf32>
    %222 = vector.extract_strided_slice %194 {offsets = [0, 128], sizes = [9, 128], strides = [1, 1]} : vector<9x1664xf32> to vector<9x128xf32>
    %223 = vector.extract_strided_slice %194 {offsets = [0, 384], sizes = [9, 128], strides = [1, 1]} : vector<9x1664xf32> to vector<9x128xf32>
    %224 = vector.extract_strided_slice %194 {offsets = [0, 640], sizes = [9, 128], strides = [1, 1]} : vector<9x1664xf32> to vector<9x128xf32>
    %225 = tpu.transpose %223, [1, 0] : vector<9x128xf32> -> vector<128x9xf32>
    %cst_91 = arith.constant dense<0.000000e+00> : vector<9x9xf32>
    %226 = tpu.matmul %222, %225, %cst_91 {dimension_numbers = #tpu.dot_dimension_numbers<[1], [0], [0], [1], [0, 0, 1, 1], [], []>} : vector<9x128xf32>, vector<128x9xf32>, vector<9x9xf32> -> vector<9x9xf32>
    %cst_92 = arith.constant 0.176776692 : f32
    %227 = vector.broadcast %cst_92 : f32 to vector<9x9xf32>
    %228 = arith.mulf %226, %227 : vector<9x9xf32>
    %cst_93 = arith.constant 0.000000e+00 : f32
    %229 = vector.broadcast %cst_93 : f32 to vector<9x9xf32>
    %230 = arith.cmpf ogt, %25, %229 : vector<9x9xf32>
    %cst_94 = arith.constant -1.000000e+30 : f32
    %231 = vector.broadcast %cst_94 : f32 to vector<9x9xf32>
    %232 = arith.select %230, %228, %231 : vector<9x9xi1>, vector<9x9xf32>
    %cst_95 = arith.constant dense<0xFF800000> : vector<9xf32>
    %233 = vector.multi_reduction <maximumf>, %232, %cst_95 [1] : vector<9x9xf32> to vector<9xf32>
    %234 = vector.shape_cast %233 : vector<9xf32> to vector<9x1xf32>
    %235 = vector.broadcast %234 : vector<9x1xf32> to vector<9x9xf32>
    %236 = arith.subf %232, %235 : vector<9x9xf32>
    %237 = math.exp %236 : vector<9x9xf32>
    %238 = arith.mulf %237, %25 : vector<9x9xf32>
    %cst_96 = arith.constant dense<0.000000e+00> : vector<9xf32>
    %239 = vector.multi_reduction <add>, %238, %cst_96 [1] : vector<9x9xf32> to vector<9xf32>
    %240 = vector.shape_cast %239 : vector<9xf32> to vector<9x1xf32>
    %cst_97 = arith.constant 9.99999968E-21 : f32
    %241 = vector.broadcast %cst_97 : f32 to vector<9x1xf32>
    %242 = arith.maximumf %240, %241 : vector<9x1xf32>
    %243 = tpu.reciprocal %242 : vector<9x1xf32> -> vector<9x1xf32>
    %cst_98 = arith.constant dense<0.000000e+00> : vector<9x128xf32>
    %244 = tpu.matmul %238, %224, %cst_98 {dimension_numbers = #tpu.dot_dimension_numbers<[1], [0], [0], [1], [0, 0, 1, 1], [], []>} : vector<9x9xf32>, vector<9x128xf32>, vector<9x128xf32> -> vector<9x128xf32>
    %245 = vector.broadcast %243 : vector<9x1xf32> to vector<9x128xf32>
    %246 = arith.mulf %244, %245 : vector<9x128xf32>
    %247 = arith.addf %221, %246 : vector<9x128xf32>
    %cst_99 = arith.constant 5.000000e-01 : f32
    %248 = vector.broadcast %cst_99 : f32 to vector<9x128xf32>
    %249 = arith.mulf %247, %248 : vector<9x128xf32>
    %cst_100 = arith.constant 0.000000e+00 : f32
    %250 = vector.broadcast %cst_100 : f32 to vector<9x128xf32>
    %251 = vector.extract_strided_slice %194 {offsets = [0, 768], sizes = [9, 128], strides = [1, 1]} : vector<9x1664xf32> to vector<9x128xf32>
    %252 = vector.extract_strided_slice %194 {offsets = [0, 1024], sizes = [9, 128], strides = [1, 1]} : vector<9x1664xf32> to vector<9x128xf32>
    %253 = vector.extract_strided_slice %194 {offsets = [0, 1280], sizes = [9, 128], strides = [1, 1]} : vector<9x1664xf32> to vector<9x128xf32>
    %254 = tpu.transpose %252, [1, 0] : vector<9x128xf32> -> vector<128x9xf32>
    %cst_101 = arith.constant dense<0.000000e+00> : vector<9x9xf32>
    %255 = tpu.matmul %251, %254, %cst_101 {dimension_numbers = #tpu.dot_dimension_numbers<[1], [0], [0], [1], [0, 0, 1, 1], [], []>} : vector<9x128xf32>, vector<128x9xf32>, vector<9x9xf32> -> vector<9x9xf32>
    %cst_102 = arith.constant 0.176776692 : f32
    %256 = vector.broadcast %cst_102 : f32 to vector<9x9xf32>
    %257 = arith.mulf %255, %256 : vector<9x9xf32>
    %cst_103 = arith.constant 0.000000e+00 : f32
    %258 = vector.broadcast %cst_103 : f32 to vector<9x9xf32>
    %259 = arith.cmpf ogt, %26, %258 : vector<9x9xf32>
    %cst_104 = arith.constant -1.000000e+30 : f32
    %260 = vector.broadcast %cst_104 : f32 to vector<9x9xf32>
    %261 = arith.select %259, %257, %260 : vector<9x9xi1>, vector<9x9xf32>
    %cst_105 = arith.constant dense<0xFF800000> : vector<9xf32>
    %262 = vector.multi_reduction <maximumf>, %261, %cst_105 [1] : vector<9x9xf32> to vector<9xf32>
    %263 = vector.shape_cast %262 : vector<9xf32> to vector<9x1xf32>
    %264 = vector.broadcast %263 : vector<9x1xf32> to vector<9x9xf32>
    %265 = arith.subf %261, %264 : vector<9x9xf32>
    %266 = math.exp %265 : vector<9x9xf32>
    %267 = arith.mulf %266, %26 : vector<9x9xf32>
    %cst_106 = arith.constant dense<0.000000e+00> : vector<9xf32>
    %268 = vector.multi_reduction <add>, %267, %cst_106 [1] : vector<9x9xf32> to vector<9xf32>
    %269 = vector.shape_cast %268 : vector<9xf32> to vector<9x1xf32>
    %cst_107 = arith.constant 9.99999968E-21 : f32
    %270 = vector.broadcast %cst_107 : f32 to vector<9x1xf32>
    %271 = arith.maximumf %269, %270 : vector<9x1xf32>
    %272 = tpu.reciprocal %271 : vector<9x1xf32> -> vector<9x1xf32>
    %cst_108 = arith.constant dense<0.000000e+00> : vector<9x128xf32>
    %273 = tpu.matmul %267, %253, %cst_108 {dimension_numbers = #tpu.dot_dimension_numbers<[1], [0], [0], [1], [0, 0, 1, 1], [], []>} : vector<9x9xf32>, vector<9x128xf32>, vector<9x128xf32> -> vector<9x128xf32>
    %274 = vector.broadcast %272 : vector<9x1xf32> to vector<9x128xf32>
    %275 = arith.mulf %273, %274 : vector<9x128xf32>
    %276 = arith.addf %250, %275 : vector<9x128xf32>
    %277 = vector.extract_strided_slice %194 {offsets = [0, 896], sizes = [9, 128], strides = [1, 1]} : vector<9x1664xf32> to vector<9x128xf32>
    %278 = vector.extract_strided_slice %194 {offsets = [0, 1152], sizes = [9, 128], strides = [1, 1]} : vector<9x1664xf32> to vector<9x128xf32>
    %279 = vector.extract_strided_slice %194 {offsets = [0, 1408], sizes = [9, 128], strides = [1, 1]} : vector<9x1664xf32> to vector<9x128xf32>
    %280 = tpu.transpose %278, [1, 0] : vector<9x128xf32> -> vector<128x9xf32>
    %cst_109 = arith.constant dense<0.000000e+00> : vector<9x9xf32>
    %281 = tpu.matmul %277, %280, %cst_109 {dimension_numbers = #tpu.dot_dimension_numbers<[1], [0], [0], [1], [0, 0, 1, 1], [], []>} : vector<9x128xf32>, vector<128x9xf32>, vector<9x9xf32> -> vector<9x9xf32>
    %cst_110 = arith.constant 0.176776692 : f32
    %282 = vector.broadcast %cst_110 : f32 to vector<9x9xf32>
    %283 = arith.mulf %281, %282 : vector<9x9xf32>
    %cst_111 = arith.constant 0.000000e+00 : f32
    %284 = vector.broadcast %cst_111 : f32 to vector<9x9xf32>
    %285 = arith.cmpf ogt, %26, %284 : vector<9x9xf32>
    %cst_112 = arith.constant -1.000000e+30 : f32
    %286 = vector.broadcast %cst_112 : f32 to vector<9x9xf32>
    %287 = arith.select %285, %283, %286 : vector<9x9xi1>, vector<9x9xf32>
    %cst_113 = arith.constant dense<0xFF800000> : vector<9xf32>
    %288 = vector.multi_reduction <maximumf>, %287, %cst_113 [1] : vector<9x9xf32> to vector<9xf32>
    %289 = vector.shape_cast %288 : vector<9xf32> to vector<9x1xf32>
    %290 = vector.broadcast %289 : vector<9x1xf32> to vector<9x9xf32>
    %291 = arith.subf %287, %290 : vector<9x9xf32>
    %292 = math.exp %291 : vector<9x9xf32>
    %293 = arith.mulf %292, %26 : vector<9x9xf32>
    %cst_114 = arith.constant dense<0.000000e+00> : vector<9xf32>
    %294 = vector.multi_reduction <add>, %293, %cst_114 [1] : vector<9x9xf32> to vector<9xf32>
    %295 = vector.shape_cast %294 : vector<9xf32> to vector<9x1xf32>
    %cst_115 = arith.constant 9.99999968E-21 : f32
    %296 = vector.broadcast %cst_115 : f32 to vector<9x1xf32>
    %297 = arith.maximumf %295, %296 : vector<9x1xf32>
    %298 = tpu.reciprocal %297 : vector<9x1xf32> -> vector<9x1xf32>
    %cst_116 = arith.constant dense<0.000000e+00> : vector<9x128xf32>
    %299 = tpu.matmul %293, %279, %cst_116 {dimension_numbers = #tpu.dot_dimension_numbers<[1], [0], [0], [1], [0, 0, 1, 1], [], []>} : vector<9x9xf32>, vector<9x128xf32>, vector<9x128xf32> -> vector<9x128xf32>
    %300 = vector.broadcast %298 : vector<9x1xf32> to vector<9x128xf32>
    %301 = arith.mulf %299, %300 : vector<9x128xf32>
    %302 = arith.addf %276, %301 : vector<9x128xf32>
    %cst_117 = arith.constant 5.000000e-01 : f32
    %303 = vector.broadcast %cst_117 : f32 to vector<9x128xf32>
    %304 = arith.mulf %302, %303 : vector<9x128xf32>
    %cst_118 = arith.constant 5.000000e-01 : f32
    %305 = vector.broadcast %cst_118 : f32 to vector<9x128xf32>
    %306 = arith.mulf %305, %304 : vector<9x128xf32>
    %cst_119 = arith.constant 5.000000e-01 : f32
    %307 = vector.broadcast %cst_119 : f32 to vector<9x128xf32>
    %308 = arith.mulf %307, %249 : vector<9x128xf32>
    %309 = arith.addf %306, %308 : vector<9x128xf32>
    %310 = vector.extract_strided_slice %194 {offsets = [0, 1536], sizes = [9, 128], strides = [1, 1]} : vector<9x1664xf32> to vector<9x128xf32>
    %311 = arith.addf %309, %310 : vector<9x128xf32>
    %cst_120 = arith.constant dense<0.000000e+00> : vector<128xf32>
    %312 = vector.multi_reduction <add>, %311, %cst_120 [0] : vector<9x128xf32> to vector<128xf32>
    %313 = vector.shape_cast %312 : vector<128xf32> to vector<1x128xf32>
    %cst_121 = arith.constant 9.000000e+00 : f32
    %314 = vector.broadcast %cst_121 : f32 to vector<1x128xf32>
    %315 = arith.divf %313, %314 : vector<1x128xf32>
    %316 = vector.broadcast %315 : vector<1x128xf32> to vector<9x128xf32>
    %317 = arith.subf %311, %316 : vector<9x128xf32>
    %318 = arith.mulf %317, %317 : vector<9x128xf32>
    %cst_122 = arith.constant dense<0.000000e+00> : vector<128xf32>
    %319 = vector.multi_reduction <add>, %318, %cst_122 [0] : vector<9x128xf32> to vector<128xf32>
    %320 = vector.shape_cast %319 : vector<128xf32> to vector<1x128xf32>
    %cst_123 = arith.constant 9.000000e+00 : f32
    %321 = vector.broadcast %cst_123 : f32 to vector<1x128xf32>
    %322 = arith.divf %320, %321 : vector<1x128xf32>
    %323 = vector.broadcast %315 : vector<1x128xf32> to vector<9x128xf32>
    %324 = arith.subf %311, %323 : vector<9x128xf32>
    %cst_124 = arith.constant 9.99999974E-6 : f32
    %325 = vector.broadcast %cst_124 : f32 to vector<1x128xf32>
    %326 = arith.addf %322, %325 : vector<1x128xf32>
    %327 = math.rsqrt %326 : vector<1x128xf32>
    %328 = vector.broadcast %327 : vector<1x128xf32> to vector<9x128xf32>
    %329 = arith.mulf %324, %328 : vector<9x128xf32>
    %c0_125 = arith.constant 0 : index
    %c0_126 = arith.constant 0 : index
    %330 = vector.load %arg12[%c0_125, %c0_126] : memref<1x128xf32, #tpu.memory_space<vmem>>, vector<1x128xf32>
    %331 = vector.broadcast %330 : vector<1x128xf32> to vector<9x128xf32>
    %332 = arith.mulf %329, %331 : vector<9x128xf32>
    %c0_127 = arith.constant 0 : index
    %c0_128 = arith.constant 0 : index
    %333 = vector.load %arg13[%c0_127, %c0_128] : memref<1x128xf32, #tpu.memory_space<vmem>>, vector<1x128xf32>
    %334 = vector.broadcast %333 : vector<1x128xf32> to vector<9x128xf32>
    %335 = arith.addf %332, %334 : vector<9x128xf32>
    %cst_129 = arith.constant 0.000000e+00 : f32
    %336 = vector.broadcast %cst_129 : f32 to vector<9x128xf32>
    %337 = arith.maximumf %335, %336 : vector<9x128xf32>
    %c0_130 = arith.constant 0 : index
    %c0_131 = arith.constant 0 : index
    %338 = vector.load %arg18[%c0_130, %c0_131] : memref<24x9xf32, #tpu.memory_space<vmem>>, vector<24x9xf32>
    %cst_132 = arith.constant dense<0.000000e+00> : vector<24x128xf32>
    %339 = tpu.matmul %338, %337, %cst_132 {dimension_numbers = #tpu.dot_dimension_numbers<[1], [0], [0], [1], [0, 0, 1, 1], [], []>} : vector<24x9xf32>, vector<9x128xf32>, vector<24x128xf32> -> vector<24x128xf32>
    %c0_133 = arith.constant 0 : index
    %c0_134 = arith.constant 0 : index
    %340 = vector.load %arg14[%c0_133, %c0_134] : memref<128x384xf32, #tpu.memory_space<vmem>>, vector<128x384xf32>
    %cst_135 = arith.constant dense<0.000000e+00> : vector<24x384xf32>
    %341 = tpu.matmul %339, %340, %cst_135 {dimension_numbers = #tpu.dot_dimension_numbers<[1], [0], [0], [1], [0, 0, 1, 1], [], []>} : vector<24x128xf32>, vector<128x384xf32>, vector<24x384xf32> -> vector<24x384xf32>
    %c0_136 = arith.constant 0 : index
    %c0_137 = arith.constant 0 : index
    %342 = vector.load %arg16[%c0_136, %c0_137] : memref<1x384xf32, #tpu.memory_space<vmem>>, vector<1x384xf32>
    %343 = vector.broadcast %342 : vector<1x384xf32> to vector<24x384xf32>
    %344 = arith.addf %341, %343 : vector<24x384xf32>
    %c0_138 = arith.constant 0 : index
    %c0_139 = arith.constant 0 : index
    %345 = vector.load %arg15[%c0_138, %c0_139] : memref<128x384xf32, #tpu.memory_space<vmem>>, vector<128x384xf32>
    %c0_140 = arith.constant 0 : index
    %c0_141 = arith.constant 0 : index
    %346 = vector.load %arg17[%c0_140, %c0_141] : memref<1x384xf32, #tpu.memory_space<vmem>>, vector<1x384xf32>
    %cst_142 = arith.constant 0.000000e+00 : f32
    %347 = vector.broadcast %cst_142 : f32 to vector<8x128xf32>
    %348 = vector.extract_strided_slice %344 {offsets = [0, 0], sizes = [8, 384], strides = [1, 1]} : vector<24x384xf32> to vector<8x384xf32>
    %cst_143 = arith.constant dense<0.000000e+00> : vector<8x384xf32>
    %349 = tpu.matmul %347, %345, %cst_143 {dimension_numbers = #tpu.dot_dimension_numbers<[1], [0], [0], [1], [0, 0, 1, 1], [], []>} : vector<8x128xf32>, vector<128x384xf32>, vector<8x384xf32> -> vector<8x384xf32>
    %350 = vector.broadcast %346 : vector<1x384xf32> to vector<8x384xf32>
    %351 = arith.addf %349, %350 : vector<8x384xf32>
    %352 = vector.extract_strided_slice %348 {offsets = [0, 0], sizes = [8, 128], strides = [1, 1]} : vector<8x384xf32> to vector<8x128xf32>
    %353 = vector.extract_strided_slice %351 {offsets = [0, 0], sizes = [8, 128], strides = [1, 1]} : vector<8x384xf32> to vector<8x128xf32>
    %354 = arith.addf %352, %353 : vector<8x128xf32>
    %cst_144 = arith.constant 0.000000e+00 : f32
    %355 = vector.broadcast %cst_144 : f32 to vector<8x128xf32>
    %356 = arith.subf %355, %354 : vector<8x128xf32>
    %357 = math.exp %356 : vector<8x128xf32>
    %cst_145 = arith.constant 1.000000e+00 : f32
    %358 = vector.broadcast %cst_145 : f32 to vector<8x128xf32>
    %359 = arith.addf %358, %357 : vector<8x128xf32>
    %cst_146 = arith.constant 1.000000e+00 : f32
    %360 = vector.broadcast %cst_146 : f32 to vector<8x128xf32>
    %361 = arith.divf %360, %359 : vector<8x128xf32>
    %362 = vector.extract_strided_slice %348 {offsets = [0, 128], sizes = [8, 128], strides = [1, 1]} : vector<8x384xf32> to vector<8x128xf32>
    %363 = vector.extract_strided_slice %351 {offsets = [0, 128], sizes = [8, 128], strides = [1, 1]} : vector<8x384xf32> to vector<8x128xf32>
    %364 = arith.addf %362, %363 : vector<8x128xf32>
    %cst_147 = arith.constant 0.000000e+00 : f32
    %365 = vector.broadcast %cst_147 : f32 to vector<8x128xf32>
    %366 = arith.subf %365, %364 : vector<8x128xf32>
    %367 = math.exp %366 : vector<8x128xf32>
    %cst_148 = arith.constant 1.000000e+00 : f32
    %368 = vector.broadcast %cst_148 : f32 to vector<8x128xf32>
    %369 = arith.addf %368, %367 : vector<8x128xf32>
    %cst_149 = arith.constant 1.000000e+00 : f32
    %370 = vector.broadcast %cst_149 : f32 to vector<8x128xf32>
    %371 = arith.divf %370, %369 : vector<8x128xf32>
    %372 = vector.extract_strided_slice %348 {offsets = [0, 256], sizes = [8, 128], strides = [1, 1]} : vector<8x384xf32> to vector<8x128xf32>
    %373 = vector.extract_strided_slice %351 {offsets = [0, 256], sizes = [8, 128], strides = [1, 1]} : vector<8x384xf32> to vector<8x128xf32>
    %374 = arith.mulf %361, %373 : vector<8x128xf32>
    %375 = arith.addf %372, %374 : vector<8x128xf32>
    %376 = math.tanh %375 : vector<8x128xf32>
    %cst_150 = arith.constant 1.000000e+00 : f32
    %377 = vector.broadcast %cst_150 : f32 to vector<8x128xf32>
    %378 = arith.subf %377, %371 : vector<8x128xf32>
    %379 = arith.mulf %378, %376 : vector<8x128xf32>
    %380 = arith.mulf %371, %347 : vector<8x128xf32>
    %381 = arith.addf %379, %380 : vector<8x128xf32>
    %382 = vector.extract_strided_slice %344 {offsets = [8, 0], sizes = [8, 384], strides = [1, 1]} : vector<24x384xf32> to vector<8x384xf32>
    %cst_151 = arith.constant dense<0.000000e+00> : vector<8x384xf32>
    %383 = tpu.matmul %381, %345, %cst_151 {dimension_numbers = #tpu.dot_dimension_numbers<[1], [0], [0], [1], [0, 0, 1, 1], [], []>} : vector<8x128xf32>, vector<128x384xf32>, vector<8x384xf32> -> vector<8x384xf32>
    %384 = vector.broadcast %346 : vector<1x384xf32> to vector<8x384xf32>
    %385 = arith.addf %383, %384 : vector<8x384xf32>
    %386 = vector.extract_strided_slice %382 {offsets = [0, 0], sizes = [8, 128], strides = [1, 1]} : vector<8x384xf32> to vector<8x128xf32>
    %387 = vector.extract_strided_slice %385 {offsets = [0, 0], sizes = [8, 128], strides = [1, 1]} : vector<8x384xf32> to vector<8x128xf32>
    %388 = arith.addf %386, %387 : vector<8x128xf32>
    %cst_152 = arith.constant 0.000000e+00 : f32
    %389 = vector.broadcast %cst_152 : f32 to vector<8x128xf32>
    %390 = arith.subf %389, %388 : vector<8x128xf32>
    %391 = math.exp %390 : vector<8x128xf32>
    %cst_153 = arith.constant 1.000000e+00 : f32
    %392 = vector.broadcast %cst_153 : f32 to vector<8x128xf32>
    %393 = arith.addf %392, %391 : vector<8x128xf32>
    %cst_154 = arith.constant 1.000000e+00 : f32
    %394 = vector.broadcast %cst_154 : f32 to vector<8x128xf32>
    %395 = arith.divf %394, %393 : vector<8x128xf32>
    %396 = vector.extract_strided_slice %382 {offsets = [0, 128], sizes = [8, 128], strides = [1, 1]} : vector<8x384xf32> to vector<8x128xf32>
    %397 = vector.extract_strided_slice %385 {offsets = [0, 128], sizes = [8, 128], strides = [1, 1]} : vector<8x384xf32> to vector<8x128xf32>
    %398 = arith.addf %396, %397 : vector<8x128xf32>
    %cst_155 = arith.constant 0.000000e+00 : f32
    %399 = vector.broadcast %cst_155 : f32 to vector<8x128xf32>
    %400 = arith.subf %399, %398 : vector<8x128xf32>
    %401 = math.exp %400 : vector<8x128xf32>
    %cst_156 = arith.constant 1.000000e+00 : f32
    %402 = vector.broadcast %cst_156 : f32 to vector<8x128xf32>
    %403 = arith.addf %402, %401 : vector<8x128xf32>
    %cst_157 = arith.constant 1.000000e+00 : f32
    %404 = vector.broadcast %cst_157 : f32 to vector<8x128xf32>
    %405 = arith.divf %404, %403 : vector<8x128xf32>
    %406 = vector.extract_strided_slice %382 {offsets = [0, 256], sizes = [8, 128], strides = [1, 1]} : vector<8x384xf32> to vector<8x128xf32>
    %407 = vector.extract_strided_slice %385 {offsets = [0, 256], sizes = [8, 128], strides = [1, 1]} : vector<8x384xf32> to vector<8x128xf32>
    %408 = arith.mulf %395, %407 : vector<8x128xf32>
    %409 = arith.addf %406, %408 : vector<8x128xf32>
    %410 = math.tanh %409 : vector<8x128xf32>
    %cst_158 = arith.constant 1.000000e+00 : f32
    %411 = vector.broadcast %cst_158 : f32 to vector<8x128xf32>
    %412 = arith.subf %411, %405 : vector<8x128xf32>
    %413 = arith.mulf %412, %410 : vector<8x128xf32>
    %414 = arith.mulf %405, %381 : vector<8x128xf32>
    %415 = arith.addf %413, %414 : vector<8x128xf32>
    %416 = vector.extract_strided_slice %344 {offsets = [16, 0], sizes = [8, 384], strides = [1, 1]} : vector<24x384xf32> to vector<8x384xf32>
    %cst_159 = arith.constant dense<0.000000e+00> : vector<8x384xf32>
    %417 = tpu.matmul %415, %345, %cst_159 {dimension_numbers = #tpu.dot_dimension_numbers<[1], [0], [0], [1], [0, 0, 1, 1], [], []>} : vector<8x128xf32>, vector<128x384xf32>, vector<8x384xf32> -> vector<8x384xf32>
    %418 = vector.broadcast %346 : vector<1x384xf32> to vector<8x384xf32>
    %419 = arith.addf %417, %418 : vector<8x384xf32>
    %420 = vector.extract_strided_slice %416 {offsets = [0, 0], sizes = [8, 128], strides = [1, 1]} : vector<8x384xf32> to vector<8x128xf32>
    %421 = vector.extract_strided_slice %419 {offsets = [0, 0], sizes = [8, 128], strides = [1, 1]} : vector<8x384xf32> to vector<8x128xf32>
    %422 = arith.addf %420, %421 : vector<8x128xf32>
    %cst_160 = arith.constant 0.000000e+00 : f32
    %423 = vector.broadcast %cst_160 : f32 to vector<8x128xf32>
    %424 = arith.subf %423, %422 : vector<8x128xf32>
    %425 = math.exp %424 : vector<8x128xf32>
    %cst_161 = arith.constant 1.000000e+00 : f32
    %426 = vector.broadcast %cst_161 : f32 to vector<8x128xf32>
    %427 = arith.addf %426, %425 : vector<8x128xf32>
    %cst_162 = arith.constant 1.000000e+00 : f32
    %428 = vector.broadcast %cst_162 : f32 to vector<8x128xf32>
    %429 = arith.divf %428, %427 : vector<8x128xf32>
    %430 = vector.extract_strided_slice %416 {offsets = [0, 128], sizes = [8, 128], strides = [1, 1]} : vector<8x384xf32> to vector<8x128xf32>
    %431 = vector.extract_strided_slice %419 {offsets = [0, 128], sizes = [8, 128], strides = [1, 1]} : vector<8x384xf32> to vector<8x128xf32>
    %432 = arith.addf %430, %431 : vector<8x128xf32>
    %cst_163 = arith.constant 0.000000e+00 : f32
    %433 = vector.broadcast %cst_163 : f32 to vector<8x128xf32>
    %434 = arith.subf %433, %432 : vector<8x128xf32>
    %435 = math.exp %434 : vector<8x128xf32>
    %cst_164 = arith.constant 1.000000e+00 : f32
    %436 = vector.broadcast %cst_164 : f32 to vector<8x128xf32>
    %437 = arith.addf %436, %435 : vector<8x128xf32>
    %cst_165 = arith.constant 1.000000e+00 : f32
    %438 = vector.broadcast %cst_165 : f32 to vector<8x128xf32>
    %439 = arith.divf %438, %437 : vector<8x128xf32>
    %440 = vector.extract_strided_slice %416 {offsets = [0, 256], sizes = [8, 128], strides = [1, 1]} : vector<8x384xf32> to vector<8x128xf32>
    %441 = vector.extract_strided_slice %419 {offsets = [0, 256], sizes = [8, 128], strides = [1, 1]} : vector<8x384xf32> to vector<8x128xf32>
    %442 = arith.mulf %429, %441 : vector<8x128xf32>
    %443 = arith.addf %440, %442 : vector<8x128xf32>
    %444 = math.tanh %443 : vector<8x128xf32>
    %cst_166 = arith.constant 1.000000e+00 : f32
    %445 = vector.broadcast %cst_166 : f32 to vector<8x128xf32>
    %446 = arith.subf %445, %439 : vector<8x128xf32>
    %447 = arith.mulf %446, %444 : vector<8x128xf32>
    %448 = arith.mulf %439, %415 : vector<8x128xf32>
    %449 = arith.addf %447, %448 : vector<8x128xf32>
    %c0_167 = arith.constant 0 : index
    %c0_168 = arith.constant 0 : index
    %450 = vector.load %arg19[%c0_167, %c0_168] : memref<8x8xf32, #tpu.memory_space<vmem>>, vector<8x8xf32>
    %cst_169 = arith.constant dense<0.000000e+00> : vector<8x128xf32>
    %451 = tpu.matmul %450, %449, %cst_169 {dimension_numbers = #tpu.dot_dimension_numbers<[1], [0], [0], [1], [0, 0, 1, 1], [], []>} : vector<8x8xf32>, vector<8x128xf32>, vector<8x128xf32> -> vector<8x128xf32>
    %c0_170 = arith.constant 0 : index
    %c0_171 = arith.constant 0 : index
    %452 = vector.load %arg20[%c0_170, %c0_171] : memref<8x8xf32, #tpu.memory_space<vmem>>, vector<8x8xf32>
    %cst_172 = arith.constant dense<0.000000e+00> : vector<8x128xf32>
    %453 = tpu.matmul %452, %449, %cst_172 {dimension_numbers = #tpu.dot_dimension_numbers<[1], [0], [0], [1], [0, 0, 1, 1], [], []>} : vector<8x8xf32>, vector<8x128xf32>, vector<8x128xf32> -> vector<8x128xf32>
    %c0_173 = arith.constant 0 : index
    %c0_174 = arith.constant 0 : index
    %454 = vector.load %arg21[%c0_173, %c0_174] : memref<128x32xf32, #tpu.memory_space<vmem>>, vector<128x32xf32>
    %cst_175 = arith.constant dense<0.000000e+00> : vector<8x32xf32>
    %455 = tpu.matmul %451, %454, %cst_175 {dimension_numbers = #tpu.dot_dimension_numbers<[1], [0], [0], [1], [0, 0, 1, 1], [], []>} : vector<8x128xf32>, vector<128x32xf32>, vector<8x32xf32> -> vector<8x32xf32>
    %c0_176 = arith.constant 0 : index
    %c0_177 = arith.constant 0 : index
    %456 = vector.load %arg22[%c0_176, %c0_177] : memref<1x32xf32, #tpu.memory_space<vmem>>, vector<1x32xf32>
    %457 = vector.broadcast %456 : vector<1x32xf32> to vector<8x32xf32>
    %458 = arith.addf %455, %457 : vector<8x32xf32>
    %cst_178 = arith.constant 0.000000e+00 : f32
    %459 = vector.broadcast %cst_178 : f32 to vector<8x32xf32>
    %460 = arith.maximumf %458, %459 : vector<8x32xf32>
    %c0_179 = arith.constant 0 : index
    %c0_180 = arith.constant 0 : index
    %461 = vector.load %arg23[%c0_179, %c0_180] : memref<32x8xf32, #tpu.memory_space<vmem>>, vector<32x8xf32>
    %cst_181 = arith.constant dense<0.000000e+00> : vector<8x8xf32>
    %462 = tpu.matmul %460, %461, %cst_181 {dimension_numbers = #tpu.dot_dimension_numbers<[1], [0], [0], [1], [0, 0, 1, 1], [], []>} : vector<8x32xf32>, vector<32x8xf32>, vector<8x8xf32> -> vector<8x8xf32>
    %c0_182 = arith.constant 0 : index
    %c0_183 = arith.constant 0 : index
    %463 = vector.load %arg24[%c0_182, %c0_183] : memref<1x8xf32, #tpu.memory_space<vmem>>, vector<1x8xf32>
    %464 = vector.broadcast %463 : vector<1x8xf32> to vector<8x8xf32>
    %465 = arith.addf %462, %464 : vector<8x8xf32>
    %cst_184 = arith.constant 0.000000e+00 : f32
    %466 = vector.broadcast %cst_184 : f32 to vector<8x8xf32>
    %467 = arith.maximumf %465, %466 : vector<8x8xf32>
    %c0_185 = arith.constant 0 : index
    %c0_186 = arith.constant 0 : index
    %468 = vector.load %arg25[%c0_185, %c0_186] : memref<8x4xf32, #tpu.memory_space<vmem>>, vector<8x4xf32>
    %cst_187 = arith.constant dense<0.000000e+00> : vector<8x4xf32>
    %469 = tpu.matmul %467, %468, %cst_187 {dimension_numbers = #tpu.dot_dimension_numbers<[1], [0], [0], [1], [0, 0, 1, 1], [], []>} : vector<8x8xf32>, vector<8x4xf32>, vector<8x4xf32> -> vector<8x4xf32>
    %c0_188 = arith.constant 0 : index
    %c0_189 = arith.constant 0 : index
    %470 = vector.load %arg26[%c0_188, %c0_189] : memref<1x4xf32, #tpu.memory_space<vmem>>, vector<1x4xf32>
    %471 = vector.broadcast %470 : vector<1x4xf32> to vector<8x4xf32>
    %472 = arith.addf %469, %471 : vector<8x4xf32>
    %cst_190 = arith.constant 0.000000e+00 : f32
    %473 = vector.broadcast %cst_190 : f32 to vector<8x4xf32>
    %474 = arith.maximumf %472, %473 : vector<8x4xf32>
    %c0_191 = arith.constant 0 : index
    %c0_192 = arith.constant 0 : index
    %475 = vector.load %arg27[%c0_191, %c0_192] : memref<4x2xf32, #tpu.memory_space<vmem>>, vector<4x2xf32>
    %cst_193 = arith.constant dense<0.000000e+00> : vector<8x2xf32>
    %476 = tpu.matmul %474, %475, %cst_193 {dimension_numbers = #tpu.dot_dimension_numbers<[1], [0], [0], [1], [0, 0, 1, 1], [], []>} : vector<8x4xf32>, vector<4x2xf32>, vector<8x2xf32> -> vector<8x2xf32>
    %c0_194 = arith.constant 0 : index
    %c0_195 = arith.constant 0 : index
    %477 = vector.load %arg28[%c0_194, %c0_195] : memref<1x2xf32, #tpu.memory_space<vmem>>, vector<1x2xf32>
    %478 = vector.broadcast %477 : vector<1x2xf32> to vector<8x2xf32>
    %479 = arith.addf %476, %478 : vector<8x2xf32>
    %cst_196 = arith.constant 0.000000e+00 : f32
    %480 = vector.broadcast %cst_196 : f32 to vector<8x2xf32>
    %481 = arith.maximumf %479, %480 : vector<8x2xf32>
    %c0_197 = arith.constant 0 : index
    %c0_198 = arith.constant 0 : index
    %482 = vector.load %arg29[%c0_197, %c0_198] : memref<1x2xf32, #tpu.memory_space<vmem>>, vector<1x2xf32>
    %483 = vector.broadcast %482 : vector<1x2xf32> to vector<8x2xf32>
    %484 = arith.mulf %481, %483 : vector<8x2xf32>
    %cst_199 = arith.constant dense<0.000000e+00> : vector<8xf32>
    %485 = vector.multi_reduction <add>, %484, %cst_199 [1] : vector<8x2xf32> to vector<8xf32>
    %486 = vector.shape_cast %485 : vector<8xf32> to vector<8x1xf32>
    %c0_200 = arith.constant 0 : index
    %c0_201 = arith.constant 0 : index
    %487 = vector.load %arg30[%c0_200, %c0_201] : memref<1x1xf32, #tpu.memory_space<vmem>>, vector<1x1xf32>
    %488 = vector.broadcast %487 : vector<1x1xf32> to vector<8x1xf32>
    %489 = arith.addf %486, %488 : vector<8x1xf32>
    %cst_202 = arith.constant 0.000000e+00 : f32
    %490 = vector.broadcast %cst_202 : f32 to vector<8x1xf32>
    %491 = arith.maximumf %489, %490 : vector<8x1xf32>
    %c0_203 = arith.constant 0 : index
    %c0_204 = arith.constant 0 : index
    %492 = vector.load %arg31[%c0_203, %c0_204] : memref<1x1xf32, #tpu.memory_space<vmem>>, vector<1x1xf32>
    %493 = vector.broadcast %492 : vector<1x1xf32> to vector<8x1xf32>
    %494 = arith.mulf %491, %493 : vector<8x1xf32>
    %cst_205 = arith.constant dense<0.000000e+00> : vector<8xf32>
    %495 = vector.multi_reduction <add>, %494, %cst_205 [1] : vector<8x1xf32> to vector<8xf32>
    %496 = vector.shape_cast %495 : vector<8xf32> to vector<8x1xf32>
    %c0_206 = arith.constant 0 : index
    %c0_207 = arith.constant 0 : index
    %497 = vector.load %arg32[%c0_206, %c0_207] : memref<1x1xf32, #tpu.memory_space<vmem>>, vector<1x1xf32>
    %498 = vector.broadcast %497 : vector<1x1xf32> to vector<8x1xf32>
    %499 = arith.addf %496, %498 : vector<8x1xf32>
    %cst_208 = arith.constant 0.000000e+00 : f32
    %500 = vector.broadcast %cst_208 : f32 to vector<8x1xf32>
    %501 = arith.subf %500, %499 : vector<8x1xf32>
    %502 = math.exp %501 : vector<8x1xf32>
    %cst_209 = arith.constant 1.000000e+00 : f32
    %503 = vector.broadcast %cst_209 : f32 to vector<8x1xf32>
    %504 = arith.addf %503, %502 : vector<8x1xf32>
    %cst_210 = arith.constant 1.000000e+00 : f32
    %505 = vector.broadcast %cst_210 : f32 to vector<8x1xf32>
    %506 = arith.divf %505, %504 : vector<8x1xf32>
    %c0_211 = arith.constant 0 : index
    %c0_212 = arith.constant 0 : index
    %507 = vector.load %arg33[%c0_211, %c0_212] : memref<4x2xf32, #tpu.memory_space<vmem>>, vector<4x2xf32>
    %cst_213 = arith.constant dense<0.000000e+00> : vector<8x2xf32>
    %508 = tpu.matmul %474, %507, %cst_213 {dimension_numbers = #tpu.dot_dimension_numbers<[1], [0], [0], [1], [0, 0, 1, 1], [], []>} : vector<8x4xf32>, vector<4x2xf32>, vector<8x2xf32> -> vector<8x2xf32>
    %c0_214 = arith.constant 0 : index
    %c0_215 = arith.constant 0 : index
    %509 = vector.load %arg34[%c0_214, %c0_215] : memref<1x2xf32, #tpu.memory_space<vmem>>, vector<1x2xf32>
    %510 = vector.broadcast %509 : vector<1x2xf32> to vector<8x2xf32>
    %511 = arith.addf %508, %510 : vector<8x2xf32>
    %cst_216 = arith.constant 0.000000e+00 : f32
    %512 = vector.broadcast %cst_216 : f32 to vector<8x2xf32>
    %513 = arith.maximumf %511, %512 : vector<8x2xf32>
    %c0_217 = arith.constant 0 : index
    %c0_218 = arith.constant 0 : index
    %514 = vector.load %arg35[%c0_217, %c0_218] : memref<1x2xf32, #tpu.memory_space<vmem>>, vector<1x2xf32>
    %515 = vector.broadcast %514 : vector<1x2xf32> to vector<8x2xf32>
    %516 = arith.mulf %513, %515 : vector<8x2xf32>
    %cst_219 = arith.constant dense<0.000000e+00> : vector<8xf32>
    %517 = vector.multi_reduction <add>, %516, %cst_219 [1] : vector<8x2xf32> to vector<8xf32>
    %518 = vector.shape_cast %517 : vector<8xf32> to vector<8x1xf32>
    %c0_220 = arith.constant 0 : index
    %c0_221 = arith.constant 0 : index
    %519 = vector.load %arg36[%c0_220, %c0_221] : memref<1x1xf32, #tpu.memory_space<vmem>>, vector<1x1xf32>
    %520 = vector.broadcast %519 : vector<1x1xf32> to vector<8x1xf32>
    %521 = arith.addf %518, %520 : vector<8x1xf32>
    %cst_222 = arith.constant 0.000000e+00 : f32
    %522 = vector.broadcast %cst_222 : f32 to vector<8x1xf32>
    %523 = arith.maximumf %521, %522 : vector<8x1xf32>
    %c0_223 = arith.constant 0 : index
    %c0_224 = arith.constant 0 : index
    %524 = vector.load %arg37[%c0_223, %c0_224] : memref<1x1xf32, #tpu.memory_space<vmem>>, vector<1x1xf32>
    %525 = vector.broadcast %524 : vector<1x1xf32> to vector<8x1xf32>
    %526 = arith.mulf %523, %525 : vector<8x1xf32>
    %cst_225 = arith.constant dense<0.000000e+00> : vector<8xf32>
    %527 = vector.multi_reduction <add>, %526, %cst_225 [1] : vector<8x1xf32> to vector<8xf32>
    %528 = vector.shape_cast %527 : vector<8xf32> to vector<8x1xf32>
    %c0_226 = arith.constant 0 : index
    %c0_227 = arith.constant 0 : index
    %529 = vector.load %arg38[%c0_226, %c0_227] : memref<1x1xf32, #tpu.memory_space<vmem>>, vector<1x1xf32>
    %530 = vector.broadcast %529 : vector<1x1xf32> to vector<8x1xf32>
    %531 = arith.addf %528, %530 : vector<8x1xf32>
    %cst_228 = arith.constant 0.000000e+00 : f32
    %532 = vector.broadcast %cst_228 : f32 to vector<8x1xf32>
    %533 = arith.maximumf %531, %532 : vector<8x1xf32>
    %534 = math.absf %531 : vector<8x1xf32>
    %cst_229 = arith.constant 0.000000e+00 : f32
    %535 = vector.broadcast %cst_229 : f32 to vector<8x1xf32>
    %536 = arith.subf %535, %534 : vector<8x1xf32>
    %537 = math.exp %536 : vector<8x1xf32>
    %cst_230 = arith.constant 1.000000e+00 : f32
    %538 = vector.broadcast %cst_230 : f32 to vector<8x1xf32>
    %539 = arith.addf %538, %537 : vector<8x1xf32>
    %540 = math.log %539 : vector<8x1xf32>
    %541 = arith.addf %533, %540 : vector<8x1xf32>
    %cst_231 = arith.constant 2.000000e+01 : f32
    %542 = vector.broadcast %cst_231 : f32 to vector<8x1xf32>
    %543 = arith.cmpf ogt, %531, %542 : vector<8x1xf32>
    %544 = arith.select %543, %531, %541 : vector<8x1xi1>, vector<8x1xf32>
    %c0_232 = arith.constant 0 : index
    %c0_233 = arith.constant 0 : index
    %545 = vector.load %arg39[%c0_232, %c0_233] : memref<2x8xf32, #tpu.memory_space<vmem>>, vector<1x8xf32>
    %546 = vector.broadcast %506 : vector<8x1xf32> to vector<8x8xf32>
    %547 = vector.broadcast %545 : vector<1x8xf32> to vector<8x8xf32>
    %548 = arith.mulf %546, %547 : vector<8x8xf32>
    %c1 = arith.constant 1 : index
    %c0_234 = arith.constant 0 : index
    %549 = vector.load %arg39[%c1, %c0_234] : memref<2x8xf32, #tpu.memory_space<vmem>>, vector<1x8xf32>
    %550 = vector.broadcast %544 : vector<8x1xf32> to vector<8x8xf32>
    %551 = vector.broadcast %549 : vector<1x8xf32> to vector<8x8xf32>
    %552 = arith.mulf %550, %551 : vector<8x8xf32>
    %553 = arith.addf %548, %552 : vector<8x8xf32>
    %c0_235 = arith.constant 0 : index
    %c0_236 = arith.constant 0 : index
    %554 = vector.load %arg40[%c0_235, %c0_236] : memref<1x8xf32, #tpu.memory_space<vmem>>, vector<1x8xf32>
    %555 = vector.broadcast %554 : vector<1x8xf32> to vector<8x8xf32>
    %556 = arith.addf %553, %555 : vector<8x8xf32>
    %c0_237 = arith.constant 0 : index
    %c0_238 = arith.constant 0 : index
    %557 = vector.load %arg41[%c0_237, %c0_238] : memref<1x8xf32, #tpu.memory_space<vmem>>, vector<1x8xf32>
    %558 = vector.broadcast %557 : vector<1x8xf32> to vector<8x8xf32>
    %559 = arith.mulf %556, %558 : vector<8x8xf32>
    %cst_239 = arith.constant dense<0.000000e+00> : vector<8xf32>
    %560 = vector.multi_reduction <add>, %559, %cst_239 [1] : vector<8x8xf32> to vector<8xf32>
    %561 = vector.shape_cast %560 : vector<8xf32> to vector<8x1xf32>
    %c0_240 = arith.constant 0 : index
    %c0_241 = arith.constant 0 : index
    %562 = vector.load %arg42[%c0_240, %c0_241] : memref<1x1xf32, #tpu.memory_space<vmem>>, vector<1x1xf32>
    %563 = vector.broadcast %562 : vector<1x1xf32> to vector<8x1xf32>
    %564 = arith.addf %561, %563 : vector<8x1xf32>
    %cst_242 = arith.constant 0.000000e+00 : f32
    %565 = vector.broadcast %cst_242 : f32 to vector<8x1xf32>
    %566 = arith.subf %565, %564 : vector<8x1xf32>
    %567 = math.exp %566 : vector<8x1xf32>
    %cst_243 = arith.constant 1.000000e+00 : f32
    %568 = vector.broadcast %cst_243 : f32 to vector<8x1xf32>
    %569 = arith.addf %568, %567 : vector<8x1xf32>
    %cst_244 = arith.constant 1.000000e+00 : f32
    %570 = vector.broadcast %cst_244 : f32 to vector<8x1xf32>
    %571 = arith.divf %570, %569 : vector<8x1xf32>
    %572 = tpu.iota {dimensions = array<i32: 1>} : vector<1x128xi32>
    %c0_i32 = arith.constant 0 : i32
    %573 = vector.broadcast %c0_i32 : i32 to vector<1x128xi32>
    %574 = arith.cmpi eq, %572, %573 : vector<1x128xi32>
    %575 = arith.extui %574 : vector<1x128xi1> to vector<1x128xi32>
    %576 = arith.sitofp %575 : vector<1x128xi32> to vector<1x128xf32>
    %c1_i32 = arith.constant 1 : i32
    %577 = vector.broadcast %c1_i32 : i32 to vector<1x128xi32>
    %578 = arith.cmpi eq, %572, %577 : vector<1x128xi32>
    %579 = arith.extui %578 : vector<1x128xi1> to vector<1x128xi32>
    %580 = arith.sitofp %579 : vector<1x128xi32> to vector<1x128xf32>
    %c2_i32 = arith.constant 2 : i32
    %581 = vector.broadcast %c2_i32 : i32 to vector<1x128xi32>
    %582 = arith.cmpi eq, %572, %581 : vector<1x128xi32>
    %583 = arith.extui %582 : vector<1x128xi1> to vector<1x128xi32>
    %584 = arith.sitofp %583 : vector<1x128xi32> to vector<1x128xf32>
    %585 = vector.broadcast %506 : vector<8x1xf32> to vector<8x128xf32>
    %586 = vector.broadcast %576 : vector<1x128xf32> to vector<8x128xf32>
    %587 = arith.mulf %585, %586 : vector<8x128xf32>
    %588 = vector.broadcast %544 : vector<8x1xf32> to vector<8x128xf32>
    %589 = vector.broadcast %580 : vector<1x128xf32> to vector<8x128xf32>
    %590 = arith.mulf %588, %589 : vector<8x128xf32>
    %591 = arith.addf %587, %590 : vector<8x128xf32>
    %592 = vector.broadcast %571 : vector<8x1xf32> to vector<8x128xf32>
    %593 = vector.broadcast %584 : vector<1x128xf32> to vector<8x128xf32>
    %594 = arith.mulf %592, %593 : vector<8x128xf32>
    %595 = arith.addf %591, %594 : vector<8x128xf32>
    %c0_245 = arith.constant 0 : index
    %c0_246 = arith.constant 0 : index
    %596 = vector.load %arg50[%c0_245, %c0_246] : memref<8x128xf32, #tpu.memory_space<vmem>>, vector<8x128xf32>
    tpu.vector_store %arg50[%c0_245, %c0_246], %595 {strides = array<i32>} : memref<8x128xf32, #tpu.memory_space<vmem>>, vector<8x128xf32>,
    %c0_247 = arith.constant 0 : index
    %c0_248 = arith.constant 0 : index
    %597 = vector.load %arg43[%c0_247, %c0_248] : memref<128x32xf32, #tpu.memory_space<vmem>>, vector<128x32xf32>
    %cst_249 = arith.constant dense<0.000000e+00> : vector<8x32xf32>
    %598 = tpu.matmul %449, %597, %cst_249 {dimension_numbers = #tpu.dot_dimension_numbers<[1], [0], [0], [1], [0, 0, 1, 1], [], []>} : vector<8x128xf32>, vector<128x32xf32>, vector<8x32xf32> -> vector<8x32xf32>
    %c0_250 = arith.constant 0 : index
    %c0_251 = arith.constant 0 : index
    %599 = vector.load %arg44[%c0_250, %c0_251] : memref<128x32xf32, #tpu.memory_space<vmem>>, vector<128x32xf32>
    %cst_252 = arith.constant dense<0.000000e+00> : vector<8x32xf32>
    %600 = tpu.matmul %453, %599, %cst_252 {dimension_numbers = #tpu.dot_dimension_numbers<[1], [0], [0], [1], [0, 0, 1, 1], [], []>} : vector<8x128xf32>, vector<128x32xf32>, vector<8x32xf32> -> vector<8x32xf32>
    %601 = arith.addf %598, %600 : vector<8x32xf32>
    %c0_253 = arith.constant 0 : index
    %c0_254 = arith.constant 0 : index
    %602 = vector.load %arg45[%c0_253, %c0_254] : memref<1x32xf32, #tpu.memory_space<vmem>>, vector<1x32xf32>
    %603 = vector.broadcast %602 : vector<1x32xf32> to vector<8x32xf32>
    %604 = arith.addf %601, %603 : vector<8x32xf32>
    %cst_255 = arith.constant 0.000000e+00 : f32
    %605 = vector.broadcast %cst_255 : f32 to vector<8x32xf32>
    %606 = arith.maximumf %604, %605 : vector<8x32xf32>
    %c0_256 = arith.constant 0 : index
    %c0_257 = arith.constant 0 : index
    %607 = vector.load %arg46[%c0_256, %c0_257] : memref<32x16xf32, #tpu.memory_space<vmem>>, vector<32x16xf32>
    %cst_258 = arith.constant dense<0.000000e+00> : vector<8x16xf32>
    %608 = tpu.matmul %606, %607, %cst_258 {dimension_numbers = #tpu.dot_dimension_numbers<[1], [0], [0], [1], [0, 0, 1, 1], [], []>} : vector<8x32xf32>, vector<32x16xf32>, vector<8x16xf32> -> vector<8x16xf32>
    %c0_259 = arith.constant 0 : index
    %c0_260 = arith.constant 0 : index
    %609 = vector.load %arg47[%c0_259, %c0_260] : memref<1x16xf32, #tpu.memory_space<vmem>>, vector<1x16xf32>
    %610 = vector.broadcast %609 : vector<1x16xf32> to vector<8x16xf32>
    %611 = arith.addf %608, %610 : vector<8x16xf32>
    %cst_261 = arith.constant 0.000000e+00 : f32
    %612 = vector.broadcast %cst_261 : f32 to vector<8x16xf32>
    %613 = arith.maximumf %611, %612 : vector<8x16xf32>
    %c0_262 = arith.constant 0 : index
    %c0_263 = arith.constant 0 : index
    %614 = vector.load %arg48[%c0_262, %c0_263] : memref<1x16xf32, #tpu.memory_space<vmem>>, vector<1x16xf32>
    %615 = vector.broadcast %614 : vector<1x16xf32> to vector<8x16xf32>
    %616 = arith.mulf %613, %615 : vector<8x16xf32>
    %cst_264 = arith.constant dense<0.000000e+00> : vector<8xf32>
    %617 = vector.multi_reduction <add>, %616, %cst_264 [1] : vector<8x16xf32> to vector<8xf32>
    %618 = vector.shape_cast %617 : vector<8xf32> to vector<8x1xf32>
    %c0_265 = arith.constant 0 : index
    %c0_266 = arith.constant 0 : index
    %619 = vector.load %arg49[%c0_265, %c0_266] : memref<1x1xf32, #tpu.memory_space<vmem>>, vector<1x1xf32>
    %620 = vector.broadcast %619 : vector<1x1xf32> to vector<8x1xf32>
    %621 = arith.addf %618, %620 : vector<8x1xf32>
    %cst_267 = arith.constant 0.000000e+00 : f32
    %622 = vector.broadcast %cst_267 : f32 to vector<8x1xf32>
    %623 = arith.subf %622, %621 : vector<8x1xf32>
    %624 = math.exp %623 : vector<8x1xf32>
    %cst_268 = arith.constant 1.000000e+00 : f32
    %625 = vector.broadcast %cst_268 : f32 to vector<8x1xf32>
    %626 = arith.addf %625, %624 : vector<8x1xf32>
    %cst_269 = arith.constant 1.000000e+00 : f32
    %627 = vector.broadcast %cst_269 : f32 to vector<8x1xf32>
    %628 = arith.divf %627, %626 : vector<8x1xf32>
    %629 = vector.broadcast %628 : vector<8x1xf32> to vector<8x128xf32>
    %630 = vector.broadcast %576 : vector<1x128xf32> to vector<8x128xf32>
    %631 = arith.mulf %629, %630 : vector<8x128xf32>
    %c0_270 = arith.constant 0 : index
    %c0_271 = arith.constant 0 : index
    %632 = vector.load %arg51[%c0_270, %c0_271] : memref<8x128xf32, #tpu.memory_space<vmem>>, vector<8x128xf32>
    tpu.vector_store %arg51[%c0_270, %c0_271], %631 {strides = array<i32>} : memref<8x128xf32, #tpu.memory_space<vmem>>, vector<8x128xf32>,
    return
  }
}

</mosaic_0001>

<llo_original>
// kernel: tpu_custom_call.1
$region0: #{tpu_custom_call.1}
  #allocation0 [shape = 'u32[]', space=smem, size = 0x4, offset = 0x4, fixed_abs, tag = 'smem constant byte address 0x4 - core index']
  #allocation1 [shape = 'u32[144,128]{1,0:T(1,128)}', space=vmem, size = 0x12000, scoped, tag = 'internal scratch']
  #allocation2 [shape = 'f32[1,1]{1,0:T(1,128)S(1)}', space=vmem, size = 0x200, scoped, tag = 'scoped memory for tpu_custom_call.1']
  #allocation3 [shape = 'f32[1,1]{1,0:T(1,128)S(1)}', space=vmem, size = 0x200, scoped, tag = 'scoped memory for tpu_custom_call.1']
  #allocation4 [shape = 'f32[1,1]{1,0:T(1,128)S(1)}', space=vmem, size = 0x200, scoped, tag = 'scoped memory for tpu_custom_call.1']
  #allocation5 [shape = 'f32[1,1]{1,0:T(1,128)S(1)}', space=vmem, size = 0x200, scoped, tag = 'scoped memory for tpu_custom_call.1']
  #allocation6 [shape = 'f32[1,1]{1,0:T(1,128)S(1)}', space=vmem, size = 0x200, scoped, tag = 'scoped memory for tpu_custom_call.1']
  #allocation7 [shape = 'f32[1,1]{1,0:T(1,128)S(1)}', space=vmem, size = 0x200, scoped, tag = 'scoped memory for tpu_custom_call.1']
  #allocation8 [shape = 'f32[1,1]{1,0:T(1,128)S(1)}', space=vmem, size = 0x200, scoped, tag = 'scoped memory for tpu_custom_call.1']
  #allocation9 [shape = 'f32[1,1]{1,0:T(1,128)S(1)}', space=vmem, size = 0x200, scoped, tag = 'scoped memory for tpu_custom_call.1']
  %s0 = inlined_call_operand.smem [shape: u32[52], index: -1, kind: input, shape index: {}]
  %s1 = sld [smem:[%s0]]
  %s2 = scalar_lea.smem %s0, 1
  %s3 = sld [smem:[%s2]]
  %s4 = scalar_lea.smem %s0, 2
  %s5 = sld [smem:[%s4]]
  %s6 = scalar_lea.smem %s0, 3
  %s7 = sld [smem:[%s6]]
  %s8 = scalar_lea.smem %s0, 4
  %s9 = sld [smem:[%s8]]
  %s10 = scalar_lea.smem %s0, 5
  %s11 = sld [smem:[%s10]]
  %s12 = scalar_lea.smem %s0, 6
  %s13 = sld [smem:[%s12]]
  %s14 = scalar_lea.smem %s0, 7
  %s15 = sld [smem:[%s14]]
  %s16 = scalar_lea.smem %s0, 8
  %s17 = sld [smem:[%s16]]
  %s18 = scalar_lea.smem %s0, 9
  %s19 = sld [smem:[%s18]]
  %s20 = scalar_lea.smem %s0, 10
  %s21 = sld [smem:[%s20]]
  %s22 = scalar_lea.smem %s0, 11
  %s23 = sld [smem:[%s22]]
  %s24 = scalar_lea.smem %s0, 12
  %s25 = sld [smem:[%s24]]
  %s26 = scalar_lea.smem %s0, 13
  %s27 = sld [smem:[%s26]]
  %s28 = scalar_lea.smem %s0, 14
  %s29 = sld [smem:[%s28]]
  %s30 = scalar_lea.smem %s0, 15
  %s31 = sld [smem:[%s30]]
  %s32 = scalar_lea.smem %s0, 16
  %s33 = sld [smem:[%s32]]
  %s34 = scalar_lea.smem %s0, 17
  %s35 = sld [smem:[%s34]]
  %s36 = scalar_lea.smem %s0, 18
  %s37 = sld [smem:[%s36]]
  %s38 = scalar_lea.smem %s0, 19
  %s39 = sld [smem:[%s38]]
  %s40 = scalar_lea.smem %s0, 20
  %s41 = sld [smem:[%s40]]
  %s42 = scalar_lea.smem %s0, 21
  %s43 = sld [smem:[%s42]]
  %s44 = scalar_lea.smem %s0, 22
  %s45 = sld [smem:[%s44]]
  %s46 = scalar_lea.smem %s0, 23
  %s47 = sld [smem:[%s46]]
  %s48 = scalar_lea.smem %s0, 24
  %s49 = sld [smem:[%s48]]
  %s50 = scalar_lea.smem %s0, 25
  %s51 = sld [smem:[%s50]]
  %s52 = scalar_lea.smem %s0, 26
  %s53 = sld [smem:[%s52]]
  %s54 = scalar_lea.smem %s0, 27
  %s55 = sld [smem:[%s54]]
  %s56 = scalar_lea.smem %s0, 28
  %s57 = sld [smem:[%s56]]
  %s58 = scalar_lea.smem %s0, 29
  %s59 = sld [smem:[%s58]]
  %s60 = scalar_lea.smem %s0, 30
  %s61 = sld [smem:[%s60]]
  %s62 = scalar_lea.smem %s0, 31
  %s63 = sld [smem:[%s62]]
  %s64 = scalar_lea.smem %s0, 32
  %s65 = sld [smem:[%s64]]
  %s66 = scalar_lea.smem %s0, 33
  %s67 = sld [smem:[%s66]]
  %s68 = scalar_lea.smem %s0, 34
  %s69 = sld [smem:[%s68]]
  %s70 = scalar_lea.smem %s0, 35
  %s71 = sld [smem:[%s70]]
  %s72 = scalar_lea.smem %s0, 36
  %s73 = sld [smem:[%s72]]
  %s74 = scalar_lea.smem %s0, 37
  %s75 = sld [smem:[%s74]]
  %s76 = scalar_lea.smem %s0, 38
  %s77 = sld [smem:[%s76]]
  %s78 = scalar_lea.smem %s0, 39
  %s79 = sld [smem:[%s78]]
  %s80 = scalar_lea.smem %s0, 40
  %s81 = sld [smem:[%s80]]
  %s82 = scalar_lea.smem %s0, 41
  %s83 = sld [smem:[%s82]]
  %s84 = scalar_lea.smem %s0, 42
  %s85 = sld [smem:[%s84]]
  %s86 = scalar_lea.smem %s0, 43
  %s87 = sld [smem:[%s86]]
  %s88 = scalar_lea.smem %s0, 44
  %s89 = sld [smem:[%s88]]
  %s90 = scalar_lea.smem %s0, 45
  %s91 = sld [smem:[%s90]]
  %s92 = scalar_lea.smem %s0, 46
  %s93 = sld [smem:[%s92]]
  %s94 = scalar_lea.smem %s0, 47
  %s95 = sld [smem:[%s94]]
  %s96 = scalar_lea.smem %s0, 48
  %s97 = sld [smem:[%s96]]
  %s98 = scalar_lea.smem %s0, 49
  %s99 = sld [smem:[%s98]]
  %s100 = scalar_lea.smem %s0, 50
  %s101 = sld [smem:[%s100]]
  %s102 = scalar_lea.smem %s0, 51
  %s103 = sld [smem:[%s102]]
  %104 = xla_tuple %s101, %s103
  %s105 = sld [smem:[#allocation0]]
  $region326: #{tpu_custom_call.1} parent=0
    _
  %s107 = ssub.s32 1, %s105
  %s108 = scalar_select 0, %s107, %s105
  %v109 = vstv %s61
  %110 = vst [vmem:[#allocation2] sm:$0x1] %v109
  %v111 = vstv %s63
  %112 = vst [vmem:[#allocation3] sm:$0x1] %v111
  %v113 = vstv %s65
  %114 = vst [vmem:[#allocation4] sm:$0x1] %v113
  %v115 = vstv %s73
  %116 = vst [vmem:[#allocation5] sm:$0x1] %v115
  %v117 = vstv %s75
  %118 = vst [vmem:[#allocation6] sm:$0x1] %v117
  %v119 = vstv %s77
  %120 = vst [vmem:[#allocation7] sm:$0x1] %v119
  %v121 = vstv %s85
  %122 = vst [vmem:[#allocation8] sm:$0x1] %v121
  %v123 = vstv %s99
  %124 = vst [vmem:[#allocation9] sm:$0x1] %v123
  $region1: #{tpu_custom_call.1} parent=0
    #allocation10 [shape = 'u8[8192]{0}', space=vmem, size = 0x2000, scoped, tag = 'input window, operand 0, single buffered']
    #allocation11 [shape = 's32[1]{0}', space=sflag, size = 0x4, scoped, tag = 'scoped memory for tpu_custom_call.1']
    #allocation12 [shape = 's32[1]{0}', space=sflag, size = 0x4, scoped, tag = 'scoped memory for tpu_custom_call.1']
    #allocation13 [shape = 'u8[8192]{0}', space=vmem, size = 0x2000, scoped, tag = 'input window, operand 1, single buffered']
    #allocation14 [shape = 's32[1]{0}', space=sflag, size = 0x4, scoped, tag = 'scoped memory for tpu_custom_call.1']
    #allocation15 [shape = 'u8[8192]{0}', space=vmem, size = 0x2000, scoped, tag = 'input window, operand 2, single buffered']
    #allocation16 [shape = 'u8[512]{0}', space=vmem, size = 0x400, scoped, tag = 'input window, operand 4, single buffered']
    #allocation17 [shape = 's32[1]{0}', space=sflag, size = 0x4, scoped, tag = 'scoped memory for tpu_custom_call.1']
    #allocation18 [shape = 'u8[24576]{0}', space=vmem, size = 0x6000, scoped, tag = 'input window, operand 5, single buffered']
    #allocation19 [shape = 'u8[6656]{0}', space=vmem, size = 0x1c00, scoped, tag = 'input window, operand 7, single buffered']
    #allocation20 [shape = 's32[1]{0}', space=sflag, size = 0x4, scoped, tag = 'scoped memory for tpu_custom_call.1']
    #allocation21 [shape = 'u8[512]{0}', space=vmem, size = 0x400, scoped, tag = 'input window, operand 8, single buffered']
    #allocation22 [shape = 'u8[512]{0}', space=vmem, size = 0x400, scoped, tag = 'input window, operand 9, single buffered']
    #allocation23 [shape = 's32[1]{0}', space=sflag, size = 0x4, scoped, tag = 'scoped memory for tpu_custom_call.1']
    #allocation24 [shape = 'u8[851968]{0}', space=vmem, size = 0xd0000, scoped, tag = 'input window, operand 10, single buffered']
    #allocation25 [shape = 'u8[6656]{0}', space=vmem, size = 0x1c00, scoped, tag = 'input window, operand 11, single buffered']
    #allocation26 [shape = 's32[1]{0}', space=sflag, size = 0x4, scoped, tag = 'scoped memory for tpu_custom_call.1']
    #allocation27 [shape = 'u8[512]{0}', space=vmem, size = 0x400, scoped, tag = 'input window, operand 12, single buffered']
    #allocation28 [shape = 'u8[512]{0}', space=vmem, size = 0x400, scoped, tag = 'input window, operand 13, single buffered']
    #allocation29 [shape = 's32[1]{0}', space=sflag, size = 0x4, scoped, tag = 'scoped memory for tpu_custom_call.1']
    #allocation30 [shape = 'u8[196608]{0}', space=vmem, size = 0x30000, scoped, tag = 'input window, operand 14, single buffered']
    #allocation31 [shape = 'u8[196608]{0}', space=vmem, size = 0x30000, scoped, tag = 'input window, operand 15, single buffered']
    #allocation32 [shape = 's32[1]{0}', space=sflag, size = 0x4, scoped, tag = 'scoped memory for tpu_custom_call.1']
    #allocation33 [shape = 'u8[1536]{0}', space=vmem, size = 0x800, scoped, tag = 'input window, operand 16, single buffered']
    #allocation34 [shape = 'u8[1536]{0}', space=vmem, size = 0x800, scoped, tag = 'input window, operand 17, single buffered']
    #allocation35 [shape = 's32[1]{0}', space=sflag, size = 0x4, scoped, tag = 'scoped memory for tpu_custom_call.1']
    #allocation36 [shape = 'u8[4096]{0}', space=vmem, size = 0x1000, scoped, tag = 'input window, operand 19, single buffered']
    #allocation37 [shape = 'u8[4096]{0}', space=vmem, size = 0x1000, scoped, tag = 'input window, operand 20, single buffered']
    #allocation38 [shape = 's32[1]{0}', space=sflag, size = 0x4, scoped, tag = 'scoped memory for tpu_custom_call.1']
    #allocation39 [shape = 'u8[512]{0}', space=vmem, size = 0x400, scoped, tag = 'input window, operand 22, single buffered']
    #allocation40 [shape = 'u8[512]{0}', space=vmem, size = 0x400, scoped, tag = 'input window, operand 24, single buffered']
    #allocation41 [shape = 's32[1]{0}', space=sflag, size = 0x4, scoped, tag = 'scoped memory for tpu_custom_call.1']
    #allocation42 [shape = 'u8[512]{0}', space=vmem, size = 0x400, scoped, tag = 'input window, operand 26, single buffered']
    #allocation43 [shape = 'u8[512]{0}', space=vmem, size = 0x400, scoped, tag = 'input window, operand 28, single buffered']
    #allocation44 [shape = 's32[1]{0}', space=sflag, size = 0x4, scoped, tag = 'scoped memory for tpu_custom_call.1']
    #allocation45 [shape = 'u8[512]{0}', space=vmem, size = 0x400, scoped, tag = 'input window, operand 29, single buffered']
    #allocation46 [shape = 'u8[512]{0}', space=vmem, size = 0x400, scoped, tag = 'input window, operand 34, single buffered']
    #allocation47 [shape = 's32[1]{0}', space=sflag, size = 0x4, scoped, tag = 'scoped memory for tpu_custom_call.1']
    #allocation48 [shape = 'u8[512]{0}', space=vmem, size = 0x400, scoped, tag = 'input window, operand 35, single buffered']
    #allocation49 [shape = 'u8[512]{0}', space=vmem, size = 0x400, scoped, tag = 'input window, operand 40, single buffered']
    #allocation50 [shape = 's32[1]{0}', space=sflag, size = 0x4, scoped, tag = 'scoped memory for tpu_custom_call.1']
    #allocation51 [shape = 'u8[512]{0}', space=vmem, size = 0x400, scoped, tag = 'input window, operand 41, single buffered']
    #allocation52 [shape = 'u8[4096]{0}', space=vmem, size = 0x1000, scoped, tag = 'output window, operand 0, single buffered']
    #allocation53 [shape = 'u8[4096]{0}', space=vmem, size = 0x1000, scoped, tag = 'output window, operand 1, single buffered']
    #allocation54 [shape = 's32[1]{0}', space=sflag, size = 0x4, scoped, tag = 'scoped memory for tpu_custom_call.1']
    %125 = vsyncpa [#allocation11], 0
    %126 = vsyncpa [#allocation14], 0
    %127 = vsyncpa [#allocation17], 0
    %128 = vsyncpa [#allocation20], 0
    %129 = vsyncpa [#allocation23], 0
    %130 = vsyncpa [#allocation26], 0
    %131 = vsyncpa [#allocation29], 0
    %132 = vsyncpa [#allocation32], 0
    %133 = vsyncpa [#allocation35], 0
    %134 = vsyncpa [#allocation38], 0
    %135 = vsyncpa [#allocation41], 0
    %136 = vsyncpa [#allocation44], 0
    %137 = vsyncpa [#allocation47], 0
    %138 = vsyncpa [#allocation50], 0
    %139 = vsyncpa [#allocation12], 0
    %140 = vsyncpa [#allocation54], 0
    // Predicated region
    $region2: #{tpu_custom_call.1} parent=1 // pred_check
      _
    $region3: #{tpu_custom_call.1} parent=1 // pred_check_branch
      %142 = sbr.rel (0) target = $region5
    $region4: #{tpu_custom_call.1} parent=1 // pred_region
      %s144 = ssub.s32 256, 256
      %145 = vsyncadd [#allocation11], %s144
      %s146 = sshll.u32 [#allocation10], 4
      %s147 = int_to_ptr.vmem [resolvable:$true] %s146
      %152 = dma.hbm_to_vmem [thread:$0]  %s1, 256, %s147, [#allocation11], 128, 128, 8
    $region5: #{tpu_custom_call.1} parent=1 // pred_fallthru
      _
    // Predicated region
    $region6: #{tpu_custom_call.1} parent=1 // pred_check
      _
    $region7: #{tpu_custom_call.1} parent=1 // pred_check_branch
      %154 = sbr.rel (0) target = $region9
    $region8: #{tpu_custom_call.1} parent=1 // pred_region
      %s156 = ssub.s32 256, 256
      %157 = vsyncadd [#allocation14], %s156
      %s158 = sshll.u32 [#allocation13], 4
      %s159 = int_to_ptr.vmem [resolvable:$true] %s158
      %164 = dma.hbm_to_vmem [thread:$0]  %s3, 256, %s159, [#allocation14], 128, 128, 8
    $region9: #{tpu_custom_call.1} parent=1 // pred_fallthru
      _
    // Predicated region
    $region10: #{tpu_custom_call.1} parent=1 // pred_check
      _
    $region11: #{tpu_custom_call.1} parent=1 // pred_check_branch
      %166 = sbr.rel (0) target = $region13
    $region12: #{tpu_custom_call.1} parent=1 // pred_region
      %s168 = ssub.s32 256, 256
      %169 = vsyncadd [#allocation14], %s168
      %s170 = sshll.u32 [#allocation15], 4
      %s171 = int_to_ptr.vmem [resolvable:$true] %s170
      %176 = dma.hbm_to_vmem [thread:$0]  %s5, 256, %s171, [#allocation14], 128, 128, 8
    $region13: #{tpu_custom_call.1} parent=1 // pred_fallthru
      _
    // Predicated region
    $region14: #{tpu_custom_call.1} parent=1 // pred_check
      _
    $region15: #{tpu_custom_call.1} parent=1 // pred_check_branch
      %178 = sbr.rel (0) target = $region17
    $region16: #{tpu_custom_call.1} parent=1 // pred_region
      _
    $region17: #{tpu_custom_call.1} parent=1 // pred_fallthru
      _
    // Predicated region
    $region18: #{tpu_custom_call.1} parent=1 // pred_check
      _
    $region19: #{tpu_custom_call.1} parent=1 // pred_check_branch
      %180 = sbr.rel (0) target = $region21
    $region20: #{tpu_custom_call.1} parent=1 // pred_region
      %s182 = ssub.s32 16, 16
      %183 = vsyncadd [#allocation17], %s182
      %s185 = sshll.u32 [#allocation16], 4
      %s186 = int_to_ptr.vmem [resolvable:$true] %s185
      %188 = dma.hbm_to_vmem [thread:$0]  %s9, 16, %s186, [#allocation17]
    $region21: #{tpu_custom_call.1} parent=1 // pred_fallthru
      _
    // Predicated region
    $region22: #{tpu_custom_call.1} parent=1 // pred_check
      _
    $region23: #{tpu_custom_call.1} parent=1 // pred_check_branch
      %190 = sbr.rel (0) target = $region25
    $region24: #{tpu_custom_call.1} parent=1 // pred_region
      %s192 = ssub.s32 768, 768
      %193 = vsyncadd [#allocation17], %s192
      %s194 = sshll.u32 [#allocation18], 4
      %s195 = int_to_ptr.vmem [resolvable:$true] %s194
      %200 = dma.hbm_to_vmem [thread:$0]  %s11, 768, %s195, [#allocation17], 128, 128, 8
    $region25: #{tpu_custom_call.1} parent=1 // pred_fallthru
      _
    // Predicated region
    $region26: #{tpu_custom_call.1} parent=1 // pred_check
      _
    $region27: #{tpu_custom_call.1} parent=1 // pred_check_branch
      %202 = sbr.rel (0) target = $region29
    $region28: #{tpu_custom_call.1} parent=1 // pred_region
      _
    $region29: #{tpu_custom_call.1} parent=1 // pred_fallthru
      _
    // Predicated region
    $region30: #{tpu_custom_call.1} parent=1 // pred_check
      _
    $region31: #{tpu_custom_call.1} parent=1 // pred_check_branch
      %204 = sbr.rel (0) target = $region33
    $region32: #{tpu_custom_call.1} parent=1 // pred_region
      %s206 = ssub.s32 208, 208
      %207 = vsyncadd [#allocation20], %s206
      %s209 = sshll.u32 [#allocation19], 4
      %s210 = int_to_ptr.vmem [resolvable:$true] %s209
      %212 = dma.hbm_to_vmem [thread:$0]  %s15, 208, %s210, [#allocation20]
    $region33: #{tpu_custom_call.1} parent=1 // pred_fallthru
      _
    // Predicated region
    $region34: #{tpu_custom_call.1} parent=1 // pred_check
      _
    $region35: #{tpu_custom_call.1} parent=1 // pred_check_branch
      %214 = sbr.rel (0) target = $region37
    $region36: #{tpu_custom_call.1} parent=1 // pred_region
      %s216 = ssub.s32 16, 16
      %217 = vsyncadd [#allocation20], %s216
      %s219 = sshll.u32 [#allocation21], 4
      %s220 = int_to_ptr.vmem [resolvable:$true] %s219
      %222 = dma.hbm_to_vmem [thread:$0]  %s17, 16, %s220, [#allocation20]
    $region37: #{tpu_custom_call.1} parent=1 // pred_fallthru
      _
    // Predicated region
    $region38: #{tpu_custom_call.1} parent=1 // pred_check
      _
    $region39: #{tpu_custom_call.1} parent=1 // pred_check_branch
      %224 = sbr.rel (0) target = $region41
    $region40: #{tpu_custom_call.1} parent=1 // pred_region
      %s226 = ssub.s32 16, 16
      %227 = vsyncadd [#allocation23], %s226
      %s229 = sshll.u32 [#allocation22], 4
      %s230 = int_to_ptr.vmem [resolvable:$true] %s229
      %232 = dma.hbm_to_vmem [thread:$0]  %s19, 16, %s230, [#allocation23]
    $region41: #{tpu_custom_call.1} parent=1 // pred_fallthru
      _
    // Predicated region
    $region42: #{tpu_custom_call.1} parent=1 // pred_check
      _
    $region43: #{tpu_custom_call.1} parent=1 // pred_check_branch
      %234 = sbr.rel (0) target = $region45
    $region44: #{tpu_custom_call.1} parent=1 // pred_region
      %s236 = ssub.s32 26624, 26624
      %237 = vsyncadd [#allocation23], %s236
      %s238 = sshll.u32 [#allocation24], 4
      %s239 = int_to_ptr.vmem [resolvable:$true] %s238
      %244 = dma.hbm_to_vmem [thread:$0]  %s21, 26624, %s239, [#allocation23], 1664, 1664, 104
    $region45: #{tpu_custom_call.1} parent=1 // pred_fallthru
      _
    // Predicated region
    $region46: #{tpu_custom_call.1} parent=1 // pred_check
      _
    $region47: #{tpu_custom_call.1} parent=1 // pred_check_branch
      %246 = sbr.rel (0) target = $region49
    $region48: #{tpu_custom_call.1} parent=1 // pred_region
      %s248 = ssub.s32 208, 208
      %249 = vsyncadd [#allocation26], %s248
      %s251 = sshll.u32 [#allocation25], 4
      %s252 = int_to_ptr.vmem [resolvable:$true] %s251
      %254 = dma.hbm_to_vmem [thread:$0]  %s23, 208, %s252, [#allocation26]
    $region49: #{tpu_custom_call.1} parent=1 // pred_fallthru
      _
    // Predicated region
    $region50: #{tpu_custom_call.1} parent=1 // pred_check
      _
    $region51: #{tpu_custom_call.1} parent=1 // pred_check_branch
      %256 = sbr.rel (0) target = $region53
    $region52: #{tpu_custom_call.1} parent=1 // pred_region
      %s258 = ssub.s32 16, 16
      %259 = vsyncadd [#allocation26], %s258
      %s261 = sshll.u32 [#allocation27], 4
      %s262 = int_to_ptr.vmem [resolvable:$true] %s261
      %264 = dma.hbm_to_vmem [thread:$0]  %s25, 16, %s262, [#allocation26]
    $region53: #{tpu_custom_call.1} parent=1 // pred_fallthru
      _
    // Predicated region
    $region54: #{tpu_custom_call.1} parent=1 // pred_check
      _
    $region55: #{tpu_custom_call.1} parent=1 // pred_check_branch
      %266 = sbr.rel (0) target = $region57
    $region56: #{tpu_custom_call.1} parent=1 // pred_region
      %s268 = ssub.s32 16, 16
      %269 = vsyncadd [#allocation29], %s268
      %s271 = sshll.u32 [#allocation28], 4
      %s272 = int_to_ptr.vmem [resolvable:$true] %s271
      %274 = dma.hbm_to_vmem [thread:$0]  %s27, 16, %s272, [#allocation29]
    $region57: #{tpu_custom_call.1} parent=1 // pred_fallthru
      _
    // Predicated region
    $region58: #{tpu_custom_call.1} parent=1 // pred_check
      _
    $region59: #{tpu_custom_call.1} parent=1 // pred_check_branch
      %276 = sbr.rel (0) target = $region61
    $region60: #{tpu_custom_call.1} parent=1 // pred_region
      %s278 = ssub.s32 6144, 6144
      %279 = vsyncadd [#allocation29], %s278
      %s280 = sshll.u32 [#allocation30], 4
      %s281 = int_to_ptr.vmem [resolvable:$true] %s280
      %286 = dma.hbm_to_vmem [thread:$0]  %s29, 6144, %s281, [#allocation29], 384, 384, 24
    $region61: #{tpu_custom_call.1} parent=1 // pred_fallthru
      _
    // Predicated region
    $region62: #{tpu_custom_call.1} parent=1 // pred_check
      _
    $region63: #{tpu_custom_call.1} parent=1 // pred_check_branch
      %288 = sbr.rel (0) target = $region65
    $region64: #{tpu_custom_call.1} parent=1 // pred_region
      %s290 = ssub.s32 6144, 6144
      %291 = vsyncadd [#allocation32], %s290
      %s292 = sshll.u32 [#allocation31], 4
      %s293 = int_to_ptr.vmem [resolvable:$true] %s292
      %298 = dma.hbm_to_vmem [thread:$0]  %s31, 6144, %s293, [#allocation32], 384, 384, 24
    $region65: #{tpu_custom_call.1} parent=1 // pred_fallthru
      _
    // Predicated region
    $region66: #{tpu_custom_call.1} parent=1 // pred_check
      _
    $region67: #{tpu_custom_call.1} parent=1 // pred_check_branch
      %300 = sbr.rel (0) target = $region69
    $region68: #{tpu_custom_call.1} parent=1 // pred_region
      %s302 = ssub.s32 48, 48
      %303 = vsyncadd [#allocation32], %s302
      %s305 = sshll.u32 [#allocation33], 4
      %s306 = int_to_ptr.vmem [resolvable:$true] %s305
      %308 = dma.hbm_to_vmem [thread:$0]  %s33, 48, %s306, [#allocation32]
    $region69: #{tpu_custom_call.1} parent=1 // pred_fallthru
      _
    // Predicated region
    $region70: #{tpu_custom_call.1} parent=1 // pred_check
      _
    $region71: #{tpu_custom_call.1} parent=1 // pred_check_branch
      %310 = sbr.rel (0) target = $region73
    $region72: #{tpu_custom_call.1} parent=1 // pred_region
      %s312 = ssub.s32 48, 48
      %313 = vsyncadd [#allocation35], %s312
      %s315 = sshll.u32 [#allocation34], 4
      %s316 = int_to_ptr.vmem [resolvable:$true] %s315
      %318 = dma.hbm_to_vmem [thread:$0]  %s35, 48, %s316, [#allocation35]
    $region73: #{tpu_custom_call.1} parent=1 // pred_fallthru
      _
    // Predicated region
    $region74: #{tpu_custom_call.1} parent=1 // pred_check
      _
    $region75: #{tpu_custom_call.1} parent=1 // pred_check_branch
      %320 = sbr.rel (0) target = $region77
    $region76: #{tpu_custom_call.1} parent=1 // pred_region
      _
    $region77: #{tpu_custom_call.1} parent=1 // pred_fallthru
      _
    // Predicated region
    $region78: #{tpu_custom_call.1} parent=1 // pred_check
      _
    $region79: #{tpu_custom_call.1} parent=1 // pred_check_branch
      %322 = sbr.rel (0) target = $region81
    $region80: #{tpu_custom_call.1} parent=1 // pred_region
      %s324 = ssub.s32 128, 128
      %325 = vsyncadd [#allocation35], %s324
      %s327 = sshll.u32 [#allocation36], 4
      %s328 = int_to_ptr.vmem [resolvable:$true] %s327
      %330 = dma.hbm_to_vmem [thread:$0]  %s39, 128, %s328, [#allocation35]
    $region81: #{tpu_custom_call.1} parent=1 // pred_fallthru
      _
    // Predicated region
    $region82: #{tpu_custom_call.1} parent=1 // pred_check
      _
    $region83: #{tpu_custom_call.1} parent=1 // pred_check_branch
      %332 = sbr.rel (0) target = $region85
    $region84: #{tpu_custom_call.1} parent=1 // pred_region
      %s334 = ssub.s32 128, 128
      %335 = vsyncadd [#allocation38], %s334
      %s337 = sshll.u32 [#allocation37], 4
      %s338 = int_to_ptr.vmem [resolvable:$true] %s337
      %340 = dma.hbm_to_vmem [thread:$0]  %s41, 128, %s338, [#allocation38]
    $region85: #{tpu_custom_call.1} parent=1 // pred_fallthru
      _
    // Predicated region
    $region86: #{tpu_custom_call.1} parent=1 // pred_check
      _
    $region87: #{tpu_custom_call.1} parent=1 // pred_check_branch
      %342 = sbr.rel (0) target = $region89
    $region88: #{tpu_custom_call.1} parent=1 // pred_region
      _
    $region89: #{tpu_custom_call.1} parent=1 // pred_fallthru
      _
    // Predicated region
    $region90: #{tpu_custom_call.1} parent=1 // pred_check
      _
    $region91: #{tpu_custom_call.1} parent=1 // pred_check_branch
      %344 = sbr.rel (0) target = $region93
    $region92: #{tpu_custom_call.1} parent=1 // pred_region
      %s346 = ssub.s32 16, 16
      %347 = vsyncadd [#allocation38], %s346
      %s349 = sshll.u32 [#allocation39], 4
      %s350 = int_to_ptr.vmem [resolvable:$true] %s349
      %352 = dma.hbm_to_vmem [thread:$0]  %s45, 16, %s350, [#allocation38]
    $region93: #{tpu_custom_call.1} parent=1 // pred_fallthru
      _
    // Predicated region
    $region94: #{tpu_custom_call.1} parent=1 // pred_check
      _
    $region95: #{tpu_custom_call.1} parent=1 // pred_check_branch
      %354 = sbr.rel (0) target = $region97
    $region96: #{tpu_custom_call.1} parent=1 // pred_region
      _
    $region97: #{tpu_custom_call.1} parent=1 // pred_fallthru
      _
    // Predicated region
    $region98: #{tpu_custom_call.1} parent=1 // pred_check
      _
    $region99: #{tpu_custom_call.1} parent=1 // pred_check_branch
      %356 = sbr.rel (0) target = $region101
    $region100: #{tpu_custom_call.1} parent=1 // pred_region
      %s358 = ssub.s32 16, 16
      %359 = vsyncadd [#allocation41], %s358
      %s361 = sshll.u32 [#allocation40], 4
      %s362 = int_to_ptr.vmem [resolvable:$true] %s361
      %364 = dma.hbm_to_vmem [thread:$0]  %s49, 16, %s362, [#allocation41]
    $region101: #{tpu_custom_call.1} parent=1 // pred_fallthru
      _
    // Predicated region
    $region102: #{tpu_custom_call.1} parent=1 // pred_check
      _
    $region103: #{tpu_custom_call.1} parent=1 // pred_check_branch
      %366 = sbr.rel (0) target = $region105
    $region104: #{tpu_custom_call.1} parent=1 // pred_region
      _
    $region105: #{tpu_custom_call.1} parent=1 // pred_fallthru
      _
    // Predicated region
    $region106: #{tpu_custom_call.1} parent=1 // pred_check
      _
    $region107: #{tpu_custom_call.1} parent=1 // pred_check_branch
      %368 = sbr.rel (0) target = $region109
    $region108: #{tpu_custom_call.1} parent=1 // pred_region
      %s370 = ssub.s32 16, 16
      %371 = vsyncadd [#allocation41], %s370
      %s373 = sshll.u32 [#allocation42], 4
      %s374 = int_to_ptr.vmem [resolvable:$true] %s373
      %376 = dma.hbm_to_vmem [thread:$0]  %s53, 16, %s374, [#allocation41]
    $region109: #{tpu_custom_call.1} parent=1 // pred_fallthru
      _
    // Predicated region
    $region110: #{tpu_custom_call.1} parent=1 // pred_check
      _
    $region111: #{tpu_custom_call.1} parent=1 // pred_check_branch
      %378 = sbr.rel (0) target = $region113
    $region112: #{tpu_custom_call.1} parent=1 // pred_region
      _
    $region113: #{tpu_custom_call.1} parent=1 // pred_fallthru
      _
    // Predicated region
    $region114: #{tpu_custom_call.1} parent=1 // pred_check
      _
    $region115: #{tpu_custom_call.1} parent=1 // pred_check_branch
      %380 = sbr.rel (0) target = $region117
    $region116: #{tpu_custom_call.1} parent=1 // pred_region
      %s382 = ssub.s32 16, 16
      %383 = vsyncadd [#allocation44], %s382
      %s385 = sshll.u32 [#allocation43], 4
      %s386 = int_to_ptr.vmem [resolvable:$true] %s385
      %388 = dma.hbm_to_vmem [thread:$0]  %s57, 16, %s386, [#allocation44]
    $region117: #{tpu_custom_call.1} parent=1 // pred_fallthru
      _
    // Predicated region
    $region118: #{tpu_custom_call.1} parent=1 // pred_check
      _
    $region119: #{tpu_custom_call.1} parent=1 // pred_check_branch
      %390 = sbr.rel (0) target = $region121
    $region120: #{tpu_custom_call.1} parent=1 // pred_region
      %s392 = ssub.s32 16, 16
      %393 = vsyncadd [#allocation44], %s392
      %s395 = sshll.u32 [#allocation45], 4
      %s396 = int_to_ptr.vmem [resolvable:$true] %s395
      %398 = dma.hbm_to_vmem [thread:$0]  %s59, 16, %s396, [#allocation44]
    $region121: #{tpu_custom_call.1} parent=1 // pred_fallthru
      _
    // Predicated region
    $region122: #{tpu_custom_call.1} parent=1 // pred_check
      _
    $region123: #{tpu_custom_call.1} parent=1 // pred_check_branch
      %400 = sbr.rel (0) target = $region125
    $region124: #{tpu_custom_call.1} parent=1 // pred_region
      _
    $region125: #{tpu_custom_call.1} parent=1 // pred_fallthru
      _
    // Predicated region
    $region126: #{tpu_custom_call.1} parent=1 // pred_check
      _
    $region127: #{tpu_custom_call.1} parent=1 // pred_check_branch
      %402 = sbr.rel (0) target = $region129
    $region128: #{tpu_custom_call.1} parent=1 // pred_region
      _
    $region129: #{tpu_custom_call.1} parent=1 // pred_fallthru
      _
    // Predicated region
    $region130: #{tpu_custom_call.1} parent=1 // pred_check
      _
    $region131: #{tpu_custom_call.1} parent=1 // pred_check_branch
      %404 = sbr.rel (0) target = $region133
    $region132: #{tpu_custom_call.1} parent=1 // pred_region
      _
    $region133: #{tpu_custom_call.1} parent=1 // pred_fallthru
      _
    // Predicated region
    $region134: #{tpu_custom_call.1} parent=1 // pred_check
      _
    $region135: #{tpu_custom_call.1} parent=1 // pred_check_branch
      %406 = sbr.rel (0) target = $region137
    $region136: #{tpu_custom_call.1} parent=1 // pred_region
      _
    $region137: #{tpu_custom_call.1} parent=1 // pred_fallthru
      _
    // Predicated region
    $region138: #{tpu_custom_call.1} parent=1 // pred_check
      _
    $region139: #{tpu_custom_call.1} parent=1 // pred_check_branch
      %408 = sbr.rel (0) target = $region141
    $region140: #{tpu_custom_call.1} parent=1 // pred_region
      %s410 = ssub.s32 16, 16
      %411 = vsyncadd [#allocation47], %s410
      %s413 = sshll.u32 [#allocation46], 4
      %s414 = int_to_ptr.vmem [resolvable:$true] %s413
      %416 = dma.hbm_to_vmem [thread:$0]  %s69, 16, %s414, [#allocation47]
    $region141: #{tpu_custom_call.1} parent=1 // pred_fallthru
      _
    // Predicated region
    $region142: #{tpu_custom_call.1} parent=1 // pred_check
      _
    $region143: #{tpu_custom_call.1} parent=1 // pred_check_branch
      %418 = sbr.rel (0) target = $region145
    $region144: #{tpu_custom_call.1} parent=1 // pred_region
      %s420 = ssub.s32 16, 16
      %421 = vsyncadd [#allocation47], %s420
      %s423 = sshll.u32 [#allocation48], 4
      %s424 = int_to_ptr.vmem [resolvable:$true] %s423
      %426 = dma.hbm_to_vmem [thread:$0]  %s71, 16, %s424, [#allocation47]
    $region145: #{tpu_custom_call.1} parent=1 // pred_fallthru
      _
    // Predicated region
    $region146: #{tpu_custom_call.1} parent=1 // pred_check
      _
    $region147: #{tpu_custom_call.1} parent=1 // pred_check_branch
      %428 = sbr.rel (0) target = $region149
    $region148: #{tpu_custom_call.1} parent=1 // pred_region
      _
    $region149: #{tpu_custom_call.1} parent=1 // pred_fallthru
      _
    // Predicated region
    $region150: #{tpu_custom_call.1} parent=1 // pred_check
      _
    $region151: #{tpu_custom_call.1} parent=1 // pred_check_branch
      %430 = sbr.rel (0) target = $region153
    $region152: #{tpu_custom_call.1} parent=1 // pred_region
      _
    $region153: #{tpu_custom_call.1} parent=1 // pred_fallthru
      _
    // Predicated region
    $region154: #{tpu_custom_call.1} parent=1 // pred_check
      _
    $region155: #{tpu_custom_call.1} parent=1 // pred_check_branch
      %432 = sbr.rel (0) target = $region157
    $region156: #{tpu_custom_call.1} parent=1 // pred_region
      _
    $region157: #{tpu_custom_call.1} parent=1 // pred_fallthru
      _
    // Predicated region
    $region158: #{tpu_custom_call.1} parent=1 // pred_check
      _
    $region159: #{tpu_custom_call.1} parent=1 // pred_check_branch
      %434 = sbr.rel (0) target = $region161
    $region160: #{tpu_custom_call.1} parent=1 // pred_region
      _
    $region161: #{tpu_custom_call.1} parent=1 // pred_fallthru
      _
    // Predicated region
    $region162: #{tpu_custom_call.1} parent=1 // pred_check
      _
    $region163: #{tpu_custom_call.1} parent=1 // pred_check_branch
      %436 = sbr.rel (0) target = $region165
    $region164: #{tpu_custom_call.1} parent=1 // pred_region
      %s438 = ssub.s32 16, 16
      %439 = vsyncadd [#allocation50], %s438
      %s441 = sshll.u32 [#allocation49], 4
      %s442 = int_to_ptr.vmem [resolvable:$true] %s441
      %444 = dma.hbm_to_vmem [thread:$0]  %s81, 16, %s442, [#allocation50]
    $region165: #{tpu_custom_call.1} parent=1 // pred_fallthru
      _
    // Predicated region
    $region166: #{tpu_custom_call.1} parent=1 // pred_check
      _
    $region167: #{tpu_custom_call.1} parent=1 // pred_check_branch
      %446 = sbr.rel (0) target = $region169
    $region168: #{tpu_custom_call.1} parent=1 // pred_region
      %s448 = ssub.s32 16, 16
      %449 = vsyncadd [#allocation50], %s448
      %s451 = sshll.u32 [#allocation51], 4
      %s452 = int_to_ptr.vmem [resolvable:$true] %s451
      %454 = dma.hbm_to_vmem [thread:$0]  %s83, 16, %s452, [#allocation50]
    $region169: #{tpu_custom_call.1} parent=1 // pred_fallthru
      _
    // Predicated region
    $region170: #{tpu_custom_call.1} parent=1 // pred_check
      _
    $region171: #{tpu_custom_call.1} parent=1 // pred_check_branch
      %456 = sbr.rel (0) target = $region173
    $region172: #{tpu_custom_call.1} parent=1 // pred_region
      _
    $region173: #{tpu_custom_call.1} parent=1 // pred_fallthru
      _
    // Predicated region
    $region174: #{tpu_custom_call.1} parent=1 // pred_check
      _
    $region175: #{tpu_custom_call.1} parent=1 // pred_check_branch
      %458 = sbr.rel (0) target = $region177
    $region176: #{tpu_custom_call.1} parent=1 // pred_region
      _
    $region177: #{tpu_custom_call.1} parent=1 // pred_fallthru
      _
    // Predicated region
    $region178: #{tpu_custom_call.1} parent=1 // pred_check
      _
    $region179: #{tpu_custom_call.1} parent=1 // pred_check_branch
      %460 = sbr.rel (0) target = $region181
    $region180: #{tpu_custom_call.1} parent=1 // pred_region
      _
    $region181: #{tpu_custom_call.1} parent=1 // pred_fallthru
      _
    // Predicated region
    $region182: #{tpu_custom_call.1} parent=1 // pred_check
      _
    $region183: #{tpu_custom_call.1} parent=1 // pred_check_branch
      %462 = sbr.rel (0) target = $region185
    $region184: #{tpu_custom_call.1} parent=1 // pred_region
      _
    $region185: #{tpu_custom_call.1} parent=1 // pred_fallthru
      _
    // Predicated region
    $region186: #{tpu_custom_call.1} parent=1 // pred_check
      _
    $region187: #{tpu_custom_call.1} parent=1 // pred_check_branch
      %464 = sbr.rel (0) target = $region189
    $region188: #{tpu_custom_call.1} parent=1 // pred_region
      _
    $region189: #{tpu_custom_call.1} parent=1 // pred_fallthru
      _
    // Predicated region
    $region190: #{tpu_custom_call.1} parent=1 // pred_check
      _
    $region191: #{tpu_custom_call.1} parent=1 // pred_check_branch
      %466 = sbr.rel (0) target = $region193
    $region192: #{tpu_custom_call.1} parent=1 // pred_region
      _
    $region193: #{tpu_custom_call.1} parent=1 // pred_fallthru
      _
    // Predicated region
    $region194: #{tpu_custom_call.1} parent=1 // pred_check
      _
    $region195: #{tpu_custom_call.1} parent=1 // pred_check_branch
      %468 = sbr.rel (0) target = $region197
    $region196: #{tpu_custom_call.1} parent=1 // pred_region
      _
    $region197: #{tpu_custom_call.1} parent=1 // pred_fallthru
      _
    // Predicated region
    $region198: #{tpu_custom_call.1} parent=1 // pred_check
      _
    $region199: #{tpu_custom_call.1} parent=1 // pred_check_branch
      %470 = sbr.rel (0) target = $region201
    $region200: #{tpu_custom_call.1} parent=1 // pred_region
      _
    $region201: #{tpu_custom_call.1} parent=1 // pred_fallthru
      _
    // Predicated region
    $region202: #{tpu_custom_call.1} parent=1 // pred_check
      _
    $region203: #{tpu_custom_call.1} parent=1 // pred_check_branch
      %472 = sbr.rel (0) target = $region205
    $region204: #{tpu_custom_call.1} parent=1 // pred_region
      %473 = dma.done [#allocation11], 256
    $region205: #{tpu_custom_call.1} parent=1 // pred_fallthru
      _
    // Predicated region
    $region206: #{tpu_custom_call.1} parent=1 // pred_check
      _
    $region207: #{tpu_custom_call.1} parent=1 // pred_check_branch
      %475 = sbr.rel (0) target = $region209
    $region208: #{tpu_custom_call.1} parent=1 // pred_region
      %476 = dma.done [#allocation14], 256
    $region209: #{tpu_custom_call.1} parent=1 // pred_fallthru
      _
    // Predicated region
    $region210: #{tpu_custom_call.1} parent=1 // pred_check
      _
    $region211: #{tpu_custom_call.1} parent=1 // pred_check_branch
      %478 = sbr.rel (0) target = $region213
    $region212: #{tpu_custom_call.1} parent=1 // pred_region
      %479 = dma.done [#allocation14], 256
    $region213: #{tpu_custom_call.1} parent=1 // pred_fallthru
      _
    // Predicated region
    $region214: #{tpu_custom_call.1} parent=1 // pred_check
      _
    $region215: #{tpu_custom_call.1} parent=1 // pred_check_branch
      %481 = sbr.rel (0) target = $region217
    $region216: #{tpu_custom_call.1} parent=1 // pred_region
      %482 = dma.done [#allocation17], 16
    $region217: #{tpu_custom_call.1} parent=1 // pred_fallthru
      _
    // Predicated region
    $region218: #{tpu_custom_call.1} parent=1 // pred_check
      _
    $region219: #{tpu_custom_call.1} parent=1 // pred_check_branch
      %484 = sbr.rel (0) target = $region221
    $region220: #{tpu_custom_call.1} parent=1 // pred_region
      %485 = dma.done [#allocation17], 768
    $region221: #{tpu_custom_call.1} parent=1 // pred_fallthru
      _
    // Predicated region
    $region222: #{tpu_custom_call.1} parent=1 // pred_check
      _
    $region223: #{tpu_custom_call.1} parent=1 // pred_check_branch
      %487 = sbr.rel (0) target = $region225
    $region224: #{tpu_custom_call.1} parent=1 // pred_region
      %488 = dma.done [#allocation20], 208
    $region225: #{tpu_custom_call.1} parent=1 // pred_fallthru
      _
    // Predicated region
    $region226: #{tpu_custom_call.1} parent=1 // pred_check
      _
    $region227: #{tpu_custom_call.1} parent=1 // pred_check_branch
      %490 = sbr.rel (0) target = $region229
    $region228: #{tpu_custom_call.1} parent=1 // pred_region
      %491 = dma.done [#allocation20], 16
    $region229: #{tpu_custom_call.1} parent=1 // pred_fallthru
      _
    // Predicated region
    $region230: #{tpu_custom_call.1} parent=1 // pred_check
      _
    $region231: #{tpu_custom_call.1} parent=1 // pred_check_branch
      %493 = sbr.rel (0) target = $region233
    $region232: #{tpu_custom_call.1} parent=1 // pred_region
      %494 = dma.done [#allocation23], 16
    $region233: #{tpu_custom_call.1} parent=1 // pred_fallthru
      _
    // Predicated region
    $region234: #{tpu_custom_call.1} parent=1 // pred_check
      _
    $region235: #{tpu_custom_call.1} parent=1 // pred_check_branch
      %496 = sbr.rel (0) target = $region237
    $region236: #{tpu_custom_call.1} parent=1 // pred_region
      %497 = dma.done [#allocation23], 26624
    $region237: #{tpu_custom_call.1} parent=1 // pred_fallthru
      _
    // Predicated region
    $region238: #{tpu_custom_call.1} parent=1 // pred_check
      _
    $region239: #{tpu_custom_call.1} parent=1 // pred_check_branch
      %499 = sbr.rel (0) target = $region241
    $region240: #{tpu_custom_call.1} parent=1 // pred_region
      %500 = dma.done [#allocation26], 208
    $region241: #{tpu_custom_call.1} parent=1 // pred_fallthru
      _
    // Predicated region
    $region242: #{tpu_custom_call.1} parent=1 // pred_check
      _
    $region243: #{tpu_custom_call.1} parent=1 // pred_check_branch
      %502 = sbr.rel (0) target = $region245
    $region244: #{tpu_custom_call.1} parent=1 // pred_region
      %503 = dma.done [#allocation26], 16
    $region245: #{tpu_custom_call.1} parent=1 // pred_fallthru
      _
    // Predicated region
    $region246: #{tpu_custom_call.1} parent=1 // pred_check
      _
    $region247: #{tpu_custom_call.1} parent=1 // pred_check_branch
      %505 = sbr.rel (0) target = $region249
    $region248: #{tpu_custom_call.1} parent=1 // pred_region
      %506 = dma.done [#allocation29], 16
    $region249: #{tpu_custom_call.1} parent=1 // pred_fallthru
      _
    // Predicated region
    $region250: #{tpu_custom_call.1} parent=1 // pred_check
      _
    $region251: #{tpu_custom_call.1} parent=1 // pred_check_branch
      %508 = sbr.rel (0) target = $region253
    $region252: #{tpu_custom_call.1} parent=1 // pred_region
      %509 = dma.done [#allocation29], 6144
    $region253: #{tpu_custom_call.1} parent=1 // pred_fallthru
      _
    // Predicated region
    $region254: #{tpu_custom_call.1} parent=1 // pred_check
      _
    $region255: #{tpu_custom_call.1} parent=1 // pred_check_branch
      %511 = sbr.rel (0) target = $region257
    $region256: #{tpu_custom_call.1} parent=1 // pred_region
      %512 = dma.done [#allocation32], 6144
    $region257: #{tpu_custom_call.1} parent=1 // pred_fallthru
      _
    // Predicated region
    $region258: #{tpu_custom_call.1} parent=1 // pred_check
      _
    $region259: #{tpu_custom_call.1} parent=1 // pred_check_branch
      %514 = sbr.rel (0) target = $region261
    $region260: #{tpu_custom_call.1} parent=1 // pred_region
      %515 = dma.done [#allocation32], 48
    $region261: #{tpu_custom_call.1} parent=1 // pred_fallthru
      _
    // Predicated region
    $region262: #{tpu_custom_call.1} parent=1 // pred_check
      _
    $region263: #{tpu_custom_call.1} parent=1 // pred_check_branch
      %517 = sbr.rel (0) target = $region265
    $region264: #{tpu_custom_call.1} parent=1 // pred_region
      %518 = dma.done [#allocation35], 48
    $region265: #{tpu_custom_call.1} parent=1 // pred_fallthru
      _
    // Predicated region
    $region266: #{tpu_custom_call.1} parent=1 // pred_check
      _
    $region267: #{tpu_custom_call.1} parent=1 // pred_check_branch
      %520 = sbr.rel (0) target = $region269
    $region268: #{tpu_custom_call.1} parent=1 // pred_region
      %521 = dma.done [#allocation35], 128
    $region269: #{tpu_custom_call.1} parent=1 // pred_fallthru
      _
    // Predicated region
    $region270: #{tpu_custom_call.1} parent=1 // pred_check
      _
    $region271: #{tpu_custom_call.1} parent=1 // pred_check_branch
      %523 = sbr.rel (0) target = $region273
    $region272: #{tpu_custom_call.1} parent=1 // pred_region
      %524 = dma.done [#allocation38], 128
    $region273: #{tpu_custom_call.1} parent=1 // pred_fallthru
      _
    // Predicated region
    $region274: #{tpu_custom_call.1} parent=1 // pred_check
      _
    $region275: #{tpu_custom_call.1} parent=1 // pred_check_branch
      %526 = sbr.rel (0) target = $region277
    $region276: #{tpu_custom_call.1} parent=1 // pred_region
      %527 = dma.done [#allocation38], 16
    $region277: #{tpu_custom_call.1} parent=1 // pred_fallthru
      _
    // Predicated region
    $region278: #{tpu_custom_call.1} parent=1 // pred_check
      _
    $region279: #{tpu_custom_call.1} parent=1 // pred_check_branch
      %529 = sbr.rel (0) target = $region281
    $region280: #{tpu_custom_call.1} parent=1 // pred_region
      %530 = dma.done [#allocation41], 16
    $region281: #{tpu_custom_call.1} parent=1 // pred_fallthru
      _
    // Predicated region
    $region282: #{tpu_custom_call.1} parent=1 // pred_check
      _
    $region283: #{tpu_custom_call.1} parent=1 // pred_check_branch
      %532 = sbr.rel (0) target = $region285
    $region284: #{tpu_custom_call.1} parent=1 // pred_region
      %533 = dma.done [#allocation41], 16
    $region285: #{tpu_custom_call.1} parent=1 // pred_fallthru
      _
    // Predicated region
    $region286: #{tpu_custom_call.1} parent=1 // pred_check
      _
    $region287: #{tpu_custom_call.1} parent=1 // pred_check_branch
      %535 = sbr.rel (0) target = $region289
    $region288: #{tpu_custom_call.1} parent=1 // pred_region
      %536 = dma.done [#allocation44], 16
    $region289: #{tpu_custom_call.1} parent=1 // pred_fallthru
      _
    // Predicated region
    $region290: #{tpu_custom_call.1} parent=1 // pred_check
      _
    $region291: #{tpu_custom_call.1} parent=1 // pred_check_branch
      %538 = sbr.rel (0) target = $region293
    $region292: #{tpu_custom_call.1} parent=1 // pred_region
      %539 = dma.done [#allocation44], 16
    $region293: #{tpu_custom_call.1} parent=1 // pred_fallthru
      _
    // Predicated region
    $region294: #{tpu_custom_call.1} parent=1 // pred_check
      _
    $region295: #{tpu_custom_call.1} parent=1 // pred_check_branch
      %541 = sbr.rel (0) target = $region297
    $region296: #{tpu_custom_call.1} parent=1 // pred_region
      %542 = dma.done [#allocation47], 16
    $region297: #{tpu_custom_call.1} parent=1 // pred_fallthru
      _
    // Predicated region
    $region298: #{tpu_custom_call.1} parent=1 // pred_check
      _
    $region299: #{tpu_custom_call.1} parent=1 // pred_check_branch
      %544 = sbr.rel (0) target = $region301
    $region300: #{tpu_custom_call.1} parent=1 // pred_region
      %545 = dma.done [#allocation47], 16
    $region301: #{tpu_custom_call.1} parent=1 // pred_fallthru
      _
    // Predicated region
    $region302: #{tpu_custom_call.1} parent=1 // pred_check
      _
    $region303: #{tpu_custom_call.1} parent=1 // pred_check_branch
      %547 = sbr.rel (0) target = $region305
    $region304: #{tpu_custom_call.1} parent=1 // pred_region
      %548 = dma.done [#allocation50], 16
    $region305: #{tpu_custom_call.1} parent=1 // pred_fallthru
      _
    // Predicated region
    $region306: #{tpu_custom_call.1} parent=1 // pred_check
      _
    $region307: #{tpu_custom_call.1} parent=1 // pred_check_branch
      %550 = sbr.rel (0) target = $region309
    $region308: #{tpu_custom_call.1} parent=1 // pred_region
      %551 = dma.done [#allocation50], 16
    $region309: #{tpu_custom_call.1} parent=1 // pred_fallthru
      _
    %v552 = vld [vmem:[#allocation10] sm:$0xff]
    %v553 = vld [vmem:[#allocation10 + $0x8] sm:$0x1]
    %v554 = vld [vmem:[%s7] sm:$0xff]
    %v555 = vld [vmem:[%s7 + $0x8] sm:$0xff]
    %v556 = vld [vmem:[%s7 + $0x10] sm:$0xff]
    %v557 = vld [vmem:[%s7 + $0x18] sm:$0x3]
    %v558 = vld [vmem:[#allocation16] sm:$0x1]
    %v560 = vlaneseq
    %v561 = vshrl.u32 %v560, 7
    %v562 = vsub.s32 0, %v561
    %v563 = vrot.slane %v558, %v562
    %vm565 = vcmask 211968
    %v567 = vsel %vm565, %v552, 0
    %v570 = vsel %vm565, %v553, 0
    %vm572 = vcmask 1041408
    %v574 = vsel %vm572, %v557, 0
    %576 = vmatprep.subr.mxu0 0.0
    %577 = vmatpush1.msra.mxu0 %v554
    %578 = vmatprep.subr.mxu0 0.0
    %579 = vmatpush1.msra.mxu0 %v555
    %580 = vmatprep.subr.mxu0 0.0
    %581 = vmatpush1.msra.mxu0 %v556
    %582 = vmatprep.subr.mxu0 0.0
    %583 = vmatpush1.msra.mxu0 %v574
    %584 = vmatprep.subr.mxu0 0.0
    %585 = vmatpush1.msra.mxu0 0.0
    %586 = vmatprep.subr.mxu0 0.0
    %587 = vmatpush1.msra.mxu0 0.0
    %588 = vmatprep.subr.mxu0 0.0
    %589 = vmatpush1.msra.mxu0 0.0
    %590 = vmatprep.subr.mxu0 0.0
    %591 = vmatpush1.msra.mxu0 0.0
    %592 = vmatprep.subr.mxu0 0.0
    %593 = vmatpush1.msra.mxu0 0.0
    %594 = vmatprep.subr.mxu0 0.0
    %595 = vmatpush1.msra.mxu0 0.0
    %596 = vmatprep.subr.mxu0 0.0
    %597 = vmatpush1.msra.mxu0 0.0
    %598 = vmatprep.subr.mxu0 0.0
    %599 = vmatpush1.msra.mxu0 0.0
    %600 = vmatprep.subr.mxu0 0.0
    %601 = vmatpush1.msra.mxu0 0.0
    %602 = vmatprep.subr.mxu0 0.0
    %603 = vmatpush1.msra.mxu0 0.0
    %604 = vmatprep.subr.mxu0 0.0
    %605 = vmatpush1.msra.mxu0 0.0
    %606 = vmatprep.subr.mxu0 0.0
    %607 = vmatpush1.msra.mxu0 0.0
    %608 = vmatprep.subr.mxu0 0.0
    %609 = vmatpush1.msra.mxu0 0.0
    %610 = vmatprep.subr.mxu0 0.0
    %611 = vmatpush1.msra.mxu0 0.0
    %612 = vmatprep.subr.mxu0 0.0
    %613 = vmatpush1.msra.mxu0 0.0
    %614 = vmatprep.subr.mxu0 0.0
    %615 = vmatpush1.msra.mxu0 0.0
    %616 = vmatprep.subr.mxu0 0.0
    %617 = vmatpush1.msra.mxu0 0.0
    %618 = vmatprep.subr.mxu0 0.0
    %619 = vmatpush1.msra.mxu0 0.0
    %620 = vmatprep.subr.mxu0 0.0
    %621 = vmatpush1.msra.mxu0 0.0
    %622 = vmatprep.subr.mxu0 0.0
    %623 = vmatpush1.msra.mxu0 0.0
    %624 = vmatprep.subr.mxu0 0.0
    %625 = vmatpush1.msra.mxu0 0.0
    %626 = vmatprep.subr.mxu0 0.0
    %627 = vmatpush1.msra.mxu0 0.0
    %628 = vmatprep.subr.mxu0 0.0
    %629 = vmatpush1.msra.mxu0 0.0
    %630 = vmatprep.subr.mxu0 0.0
    %631 = vmatpush1.msra.mxu0 0.0
    %632 = vmatprep.subr.mxu0 0.0
    %633 = vmatpush1.msra.mxu0 0.0
    %634 = vmatprep.subr.mxu0 0.0
    %635 = vmatpush1.msra.mxu0 0.0
    %636 = vmatprep.subr.mxu0 0.0
    %637 = vmatpush1.msra.mxu0 0.0
    %638 = vmatprep.subr.mxu0 0.0
    %639 = vmatpush1.msra.mxu0 0.0
    %640 = vmatprep.mubr.f32.mxu0 0.0
    %641 = vmatmul.mubr.f32.gmra.mrb[0].mxu0 %v567
    %v642 = vpop.f32.mrb[0].mxu0
    %v643 = vadd.f32 %v563, %v642
    %v644 = vpop.f32.mrb[0].mxu0
    %645 = vmatprep.mubr.f32.mxu0 0.0
    %646 = vmatmul.mubr.f32.gmra.mrb[0].mxu0 %v570
    %v647 = vpop.f32.mrb[0].mxu0
    %v648 = vadd.f32 %v563, %v647
    %v649 = vpop.f32.mrb[0].mxu0
    %650 = vdwg.mxu0
    %v651 = vmax.f32 %v643, 0.0
    %v652 = vmax.f32 %v648, 0.0
    %v653 = vld [vmem:[#allocation18] sm:$0xff]
    %v654 = vld [vmem:[#allocation18 + $0x8] sm:$0xff]
    %v655 = vld [vmem:[#allocation18 + $0x10] sm:$0xff]
    %v656 = vld [vmem:[#allocation18 + $0x18] sm:$0xff]
    %v657 = vld [vmem:[#allocation18 + $0x20] sm:$0xff]
    %v658 = vld [vmem:[#allocation18 + $0x28] sm:$0xff]
    %659 = vrot.lane.b32.xlu0 %v552, 97
    %v660 = vpop.permute.xlu0 %659
    %661 = vrot.lane.b32.xlu0 %v553, 97
    %v662 = vpop.permute.xlu0 %661
    %vm663 = vcmask 392192
    %v664 = vsel %vm663, %v660, 0
    %v666 = vsel %vm663, %v662, 0
    %668 = vmatprep.subr.mxu0 0.0
    %669 = vmatpush1.msra.mxu0 %v653
    %670 = vmatprep.subr.mxu0 0.0
    %671 = vmatpush1.msra.mxu0 %v654
    %672 = vmatprep.subr.mxu0 0.0
    %673 = vmatpush1.msra.mxu0 %v655
    %674 = vmatprep.subr.mxu0 0.0
    %675 = vmatpush1.msra.mxu0 %v656
    %676 = vmatprep.subr.mxu0 0.0
    %677 = vmatpush1.msra.mxu0 %v657
    %678 = vmatprep.subr.mxu0 0.0
    %679 = vmatpush1.msra.mxu0 %v658
    %680 = vmatprep.subr.mxu0 0.0
    %681 = vmatpush1.msra.mxu0 0.0
    %682 = vmatprep.subr.mxu0 0.0
    %683 = vmatpush1.msra.mxu0 0.0
    %684 = vmatprep.subr.mxu0 0.0
    %685 = vmatpush1.msra.mxu0 0.0
    %686 = vmatprep.subr.mxu0 0.0
    %687 = vmatpush1.msra.mxu0 0.0
    %688 = vmatprep.subr.mxu0 0.0
    %689 = vmatpush1.msra.mxu0 0.0
    %690 = vmatprep.subr.mxu0 0.0
    %691 = vmatpush1.msra.mxu0 0.0
    %692 = vmatprep.subr.mxu0 0.0
    %693 = vmatpush1.msra.mxu0 0.0
    %694 = vmatprep.subr.mxu0 0.0
    %695 = vmatpush1.msra.mxu0 0.0
    %696 = vmatprep.subr.mxu0 0.0
    %697 = vmatpush1.msra.mxu0 0.0
    %698 = vmatprep.subr.mxu0 0.0
    %699 = vmatpush1.msra.mxu0 0.0
    %700 = vmatprep.subr.mxu0 0.0
    %701 = vmatpush1.msra.mxu0 0.0
    %702 = vmatprep.subr.mxu0 0.0
    %703 = vmatpush1.msra.mxu0 0.0
    %704 = vmatprep.subr.mxu0 0.0
    %705 = vmatpush1.msra.mxu0 0.0
    %706 = vmatprep.subr.mxu0 0.0
    %707 = vmatpush1.msra.mxu0 0.0
    %708 = vmatprep.subr.mxu0 0.0
    %709 = vmatpush1.msra.mxu0 0.0
    %710 = vmatprep.subr.mxu0 0.0
    %711 = vmatpush1.msra.mxu0 0.0
    %712 = vmatprep.subr.mxu0 0.0
    %713 = vmatpush1.msra.mxu0 0.0
    %714 = vmatprep.subr.mxu0 0.0
    %715 = vmatpush1.msra.mxu0 0.0
    %716 = vmatprep.subr.mxu0 0.0
    %717 = vmatpush1.msra.mxu0 0.0
    %718 = vmatprep.subr.mxu0 0.0
    %719 = vmatpush1.msra.mxu0 0.0
    %720 = vmatprep.subr.mxu0 0.0
    %721 = vmatpush1.msra.mxu0 0.0
    %722 = vmatprep.subr.mxu0 0.0
    %723 = vmatpush1.msra.mxu0 0.0
    %724 = vmatprep.subr.mxu0 0.0
    %725 = vmatpush1.msra.mxu0 0.0
    %726 = vmatprep.subr.mxu0 0.0
    %727 = vmatpush1.msra.mxu0 0.0
    %728 = vmatprep.subr.mxu0 0.0
    %729 = vmatpush1.msra.mxu0 0.0
    %730 = vmatprep.subr.mxu0 0.0
    %731 = vmatpush1.msra.mxu0 0.0
    %732 = vmatprep.mubr.f32.mxu0 0.0
    %733 = vmatmul.mubr.f32.gmra.mrb[0].mxu0 %v664
    %v734 = vpop.f32.mrb[0].mxu0
    %v735 = vadd.f32 0.0, %v734
    %v736 = vpop.f32.mrb[0].mxu0
    %737 = vmatprep.mubr.f32.mxu0 0.0
    %738 = vmatmul.mubr.f32.gmra.mrb[0].mxu0 %v666
    %v739 = vpop.f32.mrb[0].mxu0
    %v740 = vadd.f32 0.0, %v739
    %v741 = vpop.f32.mrb[0].mxu0
    %742 = vdwg.mxu0
    %v743 = vmax.f32 %v735, 0.0
    %v744 = vmax.f32 %v740, 0.0
    %747 = vrot.lane.b32.xlu0 %v743, 120
    %v748 = vpop.permute.xlu0 %747
    %749 = vrot.lane.b32.xlu0 %v744, 120
    %v750 = vpop.permute.xlu0 %749
    %v753 = vmax.f32 %v743, %v748
    %v754 = vmax.f32 %v744, %v750
    %755 = vrot.lane.b32.xlu0 %v743, 112
    %v756 = vpop.permute.xlu0 %755
    %757 = vrot.lane.b32.xlu0 %v744, 112
    %v758 = vpop.permute.xlu0 %757
    %v761 = vmax.f32 %v753, %v756
    %v762 = vmax.f32 %v754, %v758
    %v763 = vld [vmem:[#allocation13] sm:$0xff]
    %v764 = vld [vmem:[#allocation13 + $0x8] sm:$0x1]
    %v765 = vld [vmem:[#allocation15] sm:$0xff]
    %v766 = vld [vmem:[#allocation15 + $0x8] sm:$0x1]
    %v767 = vld [vmem:[#allocation19] sm:$0xff]
    %v768 = vld [vmem:[#allocation19 + $0x8] sm:$0x1f]
    %v769 = vld [vmem:[%s13] sm:$0xff]
    %v770 = vld [vmem:[%s13 + $0x8] sm:$0xff]
    %v771 = vld [vmem:[%s13 + $0x10] sm:$0xff]
    %v772 = vld [vmem:[%s13 + $0x18] sm:$0xff]
    %v773 = vld [vmem:[%s13 + $0x20] sm:$0xff]
    %v774 = vld [vmem:[%s13 + $0x28] sm:$0xff]
    %v775 = vld [vmem:[%s13 + $0x30] sm:$0xff]
    %v776 = vld [vmem:[%s13 + $0x38] sm:$0xff]
    %v777 = vld [vmem:[%s13 + $0x40] sm:$0xff]
    %v778 = vld [vmem:[%s13 + $0x48] sm:$0xff]
    %v779 = vld [vmem:[%s13 + $0x50] sm:$0xff]
    %v780 = vld [vmem:[%s13 + $0x58] sm:$0xff]
    %v781 = vld [vmem:[%s13 + $0x60] sm:$0xff]
    %v782 = vld [vmem:[%s13 + $0x68] sm:$0xff]
    %v783 = vld [vmem:[%s13 + $0x70] sm:$0xff]
    %v784 = vld [vmem:[%s13 + $0x78] sm:$0xff]
    %v785 = vld [vmem:[%s13 + $0x80] sm:$0xff]
    %v786 = vld [vmem:[%s13 + $0x88] sm:$0xff]
    %v787 = vld [vmem:[%s13 + $0x90] sm:$0xff]
    %v788 = vld [vmem:[%s13 + $0x98] sm:$0xff]
    %v789 = vld [vmem:[%s13 + $0xa0] sm:$0xff]
    %v790 = vld [vmem:[%s13 + $0xa8] sm:$0xff]
    %v791 = vld [vmem:[%s13 + $0xb0] sm:$0xff]
    %v792 = vld [vmem:[%s13 + $0xb8] sm:$0xff]
    %v793 = vld [vmem:[%s13 + $0xc0] sm:$0xff]
    %v794 = vld [vmem:[%s13 + $0xc8] sm:$0xff]
    %vm795 = vcmask 130048
    %v797 = vsel %vm795, %v651, 0
    %v800 = vsel %vm795, %v652, 0
    %802 = vmatprep.subr.mxu0 %v770
    %803 = vmatpush1.msra.mxu0 %v769
    %804 = vmatprep.subr.mxu0 %v783
    %805 = vmatpush1.msra.mxu0 %v782
    %806 = vmatprep.subr.mxu0 0.0
    %807 = vmatpush1.msra.mxu0 0.0
    %808 = vmatprep.subr.mxu0 0.0
    %809 = vmatpush1.msra.mxu0 0.0
    %810 = vmatprep.subr.mxu0 0.0
    %811 = vmatpush1.msra.mxu0 0.0
    %812 = vmatprep.subr.mxu0 0.0
    %813 = vmatpush1.msra.mxu0 0.0
    %814 = vmatprep.subr.mxu0 0.0
    %815 = vmatpush1.msra.mxu0 0.0
    %816 = vmatprep.subr.mxu0 0.0
    %817 = vmatpush1.msra.mxu0 0.0
    %818 = vmatprep.subr.mxu0 0.0
    %819 = vmatpush1.msra.mxu0 0.0
    %820 = vmatprep.subr.mxu0 0.0
    %821 = vmatpush1.msra.mxu0 0.0
    %822 = vmatprep.subr.mxu0 0.0
    %823 = vmatpush1.msra.mxu0 0.0
    %824 = vmatprep.subr.mxu0 0.0
    %825 = vmatpush1.msra.mxu0 0.0
    %826 = vmatprep.subr.mxu0 0.0
    %827 = vmatpush1.msra.mxu0 0.0
    %828 = vmatprep.subr.mxu0 0.0
    %829 = vmatpush1.msra.mxu0 0.0
    %830 = vmatprep.subr.mxu0 0.0
    %831 = vmatpush1.msra.mxu0 0.0
    %832 = vmatprep.subr.mxu0 0.0
    %833 = vmatpush1.msra.mxu0 0.0
    %834 = vmatprep.subr.mxu0 0.0
    %835 = vmatpush1.msra.mxu0 0.0
    %836 = vmatprep.subr.mxu0 0.0
    %837 = vmatpush1.msra.mxu0 0.0
    %838 = vmatprep.subr.mxu0 0.0
    %839 = vmatpush1.msra.mxu0 0.0
    %840 = vmatprep.subr.mxu0 0.0
    %841 = vmatpush1.msra.mxu0 0.0
    %842 = vmatprep.subr.mxu0 0.0
    %843 = vmatpush1.msra.mxu0 0.0
    %844 = vmatprep.subr.mxu0 0.0
    %845 = vmatpush1.msra.mxu0 0.0
    %846 = vmatprep.subr.mxu0 0.0
    %847 = vmatpush1.msra.mxu0 0.0
    %848 = vmatprep.subr.mxu0 0.0
    %849 = vmatpush1.msra.mxu0 0.0
    %850 = vmatprep.subr.mxu0 0.0
    %851 = vmatpush1.msra.mxu0 0.0
    %852 = vmatprep.subr.mxu0 0.0
    %853 = vmatpush1.msra.mxu0 0.0
    %854 = vmatprep.subr.mxu0 0.0
    %855 = vmatpush1.msra.mxu0 0.0
    %856 = vmatprep.subr.mxu0 0.0
    %857 = vmatpush1.msra.mxu0 0.0
    %858 = vmatprep.subr.mxu0 0.0
    %859 = vmatpush1.msra.mxu0 0.0
    %860 = vmatprep.subr.mxu0 0.0
    %861 = vmatpush1.msra.mxu0 0.0
    %862 = vmatprep.subr.mxu0 0.0
    %863 = vmatpush1.msra.mxu0 0.0
    %864 = vmatprep.subr.mxu0 0.0
    %865 = vmatpush1.msra.mxu0 0.0
    %866 = vmatprep.mubr.f32.mxu0 0.0
    %867 = vmatmul.mubr.f32.gmra.mrb[0].mxu0 %v797
    %v868 = vpop.f32.mrb[0].mxu0
    %v869 = vadd.f32 0.0, %v868
    %v870 = vpop.f32.mrb[0].mxu0
    %v871 = vadd.f32 0.0, %v870
    %872 = vmatprep.mubr.f32.mxu0 0.0
    %873 = vmatmul.mubr.f32.gmra.mrb[0].mxu0 %v800
    %v874 = vpop.f32.mrb[0].mxu0
    %v875 = vadd.f32 0.0, %v874
    %v876 = vpop.f32.mrb[0].mxu0
    %v877 = vadd.f32 0.0, %v876
    %878 = vdwg.mxu0
    %879 = vmatprep.subr.mxu0 %v772
    %880 = vmatpush1.msra.mxu0 %v771
    %881 = vmatprep.subr.mxu0 %v785
    %882 = vmatpush1.msra.mxu0 %v784
    %883 = vmatprep.subr.mxu0 0.0
    %884 = vmatpush1.msra.mxu0 0.0
    %885 = vmatprep.subr.mxu0 0.0
    %886 = vmatpush1.msra.mxu0 0.0
    %887 = vmatprep.subr.mxu0 0.0
    %888 = vmatpush1.msra.mxu0 0.0
    %889 = vmatprep.subr.mxu0 0.0
    %890 = vmatpush1.msra.mxu0 0.0
    %891 = vmatprep.subr.mxu0 0.0
    %892 = vmatpush1.msra.mxu0 0.0
    %893 = vmatprep.subr.mxu0 0.0
    %894 = vmatpush1.msra.mxu0 0.0
    %895 = vmatprep.subr.mxu0 0.0
    %896 = vmatpush1.msra.mxu0 0.0
    %897 = vmatprep.subr.mxu0 0.0
    %898 = vmatpush1.msra.mxu0 0.0
    %899 = vmatprep.subr.mxu0 0.0
    %900 = vmatpush1.msra.mxu0 0.0
    %901 = vmatprep.subr.mxu0 0.0
    %902 = vmatpush1.msra.mxu0 0.0
    %903 = vmatprep.subr.mxu0 0.0
    %904 = vmatpush1.msra.mxu0 0.0
    %905 = vmatprep.subr.mxu0 0.0
    %906 = vmatpush1.msra.mxu0 0.0
    %907 = vmatprep.subr.mxu0 0.0
    %908 = vmatpush1.msra.mxu0 0.0
    %909 = vmatprep.subr.mxu0 0.0
    %910 = vmatpush1.msra.mxu0 0.0
    %911 = vmatprep.subr.mxu0 0.0
    %912 = vmatpush1.msra.mxu0 0.0
    %913 = vmatprep.subr.mxu0 0.0
    %914 = vmatpush1.msra.mxu0 0.0
    %915 = vmatprep.subr.mxu0 0.0
    %916 = vmatpush1.msra.mxu0 0.0
    %917 = vmatprep.subr.mxu0 0.0
    %918 = vmatpush1.msra.mxu0 0.0
    %919 = vmatprep.subr.mxu0 0.0
    %920 = vmatpush1.msra.mxu0 0.0
    %921 = vmatprep.subr.mxu0 0.0
    %922 = vmatpush1.msra.mxu0 0.0
    %923 = vmatprep.subr.mxu0 0.0
    %924 = vmatpush1.msra.mxu0 0.0
    %925 = vmatprep.subr.mxu0 0.0
    %926 = vmatpush1.msra.mxu0 0.0
    %927 = vmatprep.subr.mxu0 0.0
    %928 = vmatpush1.msra.mxu0 0.0
    %929 = vmatprep.subr.mxu0 0.0
    %930 = vmatpush1.msra.mxu0 0.0
    %931 = vmatprep.subr.mxu0 0.0
    %932 = vmatpush1.msra.mxu0 0.0
    %933 = vmatprep.subr.mxu0 0.0
    %934 = vmatpush1.msra.mxu0 0.0
    %935 = vmatprep.subr.mxu0 0.0
    %936 = vmatpush1.msra.mxu0 0.0
    %937 = vmatprep.subr.mxu0 0.0
    %938 = vmatpush1.msra.mxu0 0.0
    %939 = vmatprep.subr.mxu0 0.0
    %940 = vmatpush1.msra.mxu0 0.0
    %941 = vmatprep.subr.mxu0 0.0
    %942 = vmatpush1.msra.mxu0 0.0
    %943 = vmatprep.mubr.f32.mxu0 0.0
    %944 = vmatmul.mubr.f32.gmra.mrb[0].mxu0 %v797
    %v945 = vpop.f32.mrb[0].mxu0
    %v946 = vadd.f32 0.0, %v945
    %v947 = vpop.f32.mrb[0].mxu0
    %v948 = vadd.f32 0.0, %v947
    %949 = vmatprep.mubr.f32.mxu0 0.0
    %950 = vmatmul.mubr.f32.gmra.mrb[0].mxu0 %v800
    %v951 = vpop.f32.mrb[0].mxu0
    %v952 = vadd.f32 0.0, %v951
    %v953 = vpop.f32.mrb[0].mxu0
    %v954 = vadd.f32 0.0, %v953
    %955 = vdwg.mxu0
    %956 = vmatprep.subr.mxu0 %v774
    %957 = vmatpush1.msra.mxu0 %v773
    %958 = vmatprep.subr.mxu0 %v787
    %959 = vmatpush1.msra.mxu0 %v786
    %960 = vmatprep.subr.mxu0 0.0
    %961 = vmatpush1.msra.mxu0 0.0
    %962 = vmatprep.subr.mxu0 0.0
    %963 = vmatpush1.msra.mxu0 0.0
    %964 = vmatprep.subr.mxu0 0.0
    %965 = vmatpush1.msra.mxu0 0.0
    %966 = vmatprep.subr.mxu0 0.0
    %967 = vmatpush1.msra.mxu0 0.0
    %968 = vmatprep.subr.mxu0 0.0
    %969 = vmatpush1.msra.mxu0 0.0
    %970 = vmatprep.subr.mxu0 0.0
    %971 = vmatpush1.msra.mxu0 0.0
    %972 = vmatprep.subr.mxu0 0.0
    %973 = vmatpush1.msra.mxu0 0.0
    %974 = vmatprep.subr.mxu0 0.0
    %975 = vmatpush1.msra.mxu0 0.0
    %976 = vmatprep.subr.mxu0 0.0
    %977 = vmatpush1.msra.mxu0 0.0
    %978 = vmatprep.subr.mxu0 0.0
    %979 = vmatpush1.msra.mxu0 0.0
    %980 = vmatprep.subr.mxu0 0.0
    %981 = vmatpush1.msra.mxu0 0.0
    %982 = vmatprep.subr.mxu0 0.0
    %983 = vmatpush1.msra.mxu0 0.0
    %984 = vmatprep.subr.mxu0 0.0
    %985 = vmatpush1.msra.mxu0 0.0
    %986 = vmatprep.subr.mxu0 0.0
    %987 = vmatpush1.msra.mxu0 0.0
    %988 = vmatprep.subr.mxu0 0.0
    %989 = vmatpush1.msra.mxu0 0.0
    %990 = vmatprep.subr.mxu0 0.0
    %991 = vmatpush1.msra.mxu0 0.0
    %992 = vmatprep.subr.mxu0 0.0
    %993 = vmatpush1.msra.mxu0 0.0
    %994 = vmatprep.subr.mxu0 0.0
    %995 = vmatpush1.msra.mxu0 0.0
    %996 = vmatprep.subr.mxu0 0.0
    %997 = vmatpush1.msra.mxu0 0.0
    %998 = vmatprep.subr.mxu0 0.0
    %999 = vmatpush1.msra.mxu0 0.0
    %1000 = vmatprep.subr.mxu0 0.0
    %1001 = vmatpush1.msra.mxu0 0.0
    %1002 = vmatprep.subr.mxu0 0.0
    %1003 = vmatpush1.msra.mxu0 0.0
    %1004 = vmatprep.subr.mxu0 0.0
    %1005 = vmatpush1.msra.mxu0 0.0
    %1006 = vmatprep.subr.mxu0 0.0
    %1007 = vmatpush1.msra.mxu0 0.0
    %1008 = vmatprep.subr.mxu0 0.0
    %1009 = vmatpush1.msra.mxu0 0.0
    %1010 = vmatprep.subr.mxu0 0.0
    %1011 = vmatpush1.msra.mxu0 0.0
    %1012 = vmatprep.subr.mxu0 0.0
    %1013 = vmatpush1.msra.mxu0 0.0
    %1014 = vmatprep.subr.mxu0 0.0
    %1015 = vmatpush1.msra.mxu0 0.0
    %1016 = vmatprep.subr.mxu0 0.0
    %1017 = vmatpush1.msra.mxu0 0.0
    %1018 = vmatprep.subr.mxu0 0.0
    %1019 = vmatpush1.msra.mxu0 0.0
    %1020 = vmatprep.mubr.f32.mxu0 0.0
    %1021 = vmatmul.mubr.f32.gmra.mrb[0].mxu0 %v797
    %v1022 = vpop.f32.mrb[0].mxu0
    %v1023 = vadd.f32 0.0, %v1022
    %v1024 = vpop.f32.mrb[0].mxu0
    %v1025 = vadd.f32 0.0, %v1024
    %1026 = vmatprep.mubr.f32.mxu0 0.0
    %1027 = vmatmul.mubr.f32.gmra.mrb[0].mxu0 %v800
    %v1028 = vpop.f32.mrb[0].mxu0
    %v1029 = vadd.f32 0.0, %v1028
    %v1030 = vpop.f32.mrb[0].mxu0
    %v1031 = vadd.f32 0.0, %v1030
    %1032 = vdwg.mxu0
    %1033 = vmatprep.subr.mxu0 %v776
    %1034 = vmatpush1.msra.mxu0 %v775
    %1035 = vmatprep.subr.mxu0 %v789
    %1036 = vmatpush1.msra.mxu0 %v788
    %1037 = vmatprep.subr.mxu0 0.0
    %1038 = vmatpush1.msra.mxu0 0.0
    %1039 = vmatprep.subr.mxu0 0.0
    %1040 = vmatpush1.msra.mxu0 0.0
    %1041 = vmatprep.subr.mxu0 0.0
    %1042 = vmatpush1.msra.mxu0 0.0
    %1043 = vmatprep.subr.mxu0 0.0
    %1044 = vmatpush1.msra.mxu0 0.0
    %1045 = vmatprep.subr.mxu0 0.0
    %1046 = vmatpush1.msra.mxu0 0.0
    %1047 = vmatprep.subr.mxu0 0.0
    %1048 = vmatpush1.msra.mxu0 0.0
    %1049 = vmatprep.subr.mxu0 0.0
    %1050 = vmatpush1.msra.mxu0 0.0
    %1051 = vmatprep.subr.mxu0 0.0
    %1052 = vmatpush1.msra.mxu0 0.0
    %1053 = vmatprep.subr.mxu0 0.0
    %1054 = vmatpush1.msra.mxu0 0.0
    %1055 = vmatprep.subr.mxu0 0.0
    %1056 = vmatpush1.msra.mxu0 0.0
    %1057 = vmatprep.subr.mxu0 0.0
    %1058 = vmatpush1.msra.mxu0 0.0
    %1059 = vmatprep.subr.mxu0 0.0
    %1060 = vmatpush1.msra.mxu0 0.0
    %1061 = vmatprep.subr.mxu0 0.0
    %1062 = vmatpush1.msra.mxu0 0.0
    %1063 = vmatprep.subr.mxu0 0.0
    %1064 = vmatpush1.msra.mxu0 0.0
    %1065 = vmatprep.subr.mxu0 0.0
    %1066 = vmatpush1.msra.mxu0 0.0
    %1067 = vmatprep.subr.mxu0 0.0
    %1068 = vmatpush1.msra.mxu0 0.0
    %1069 = vmatprep.subr.mxu0 0.0
    %1070 = vmatpush1.msra.mxu0 0.0
    %1071 = vmatprep.subr.mxu0 0.0
    %1072 = vmatpush1.msra.mxu0 0.0
    %1073 = vmatprep.subr.mxu0 0.0
    %1074 = vmatpush1.msra.mxu0 0.0
    %1075 = vmatprep.subr.mxu0 0.0
    %1076 = vmatpush1.msra.mxu0 0.0
    %1077 = vmatprep.subr.mxu0 0.0
    %1078 = vmatpush1.msra.mxu0 0.0
    %1079 = vmatprep.subr.mxu0 0.0
    %1080 = vmatpush1.msra.mxu0 0.0
    %1081 = vmatprep.subr.mxu0 0.0
    %1082 = vmatpush1.msra.mxu0 0.0
    %1083 = vmatprep.subr.mxu0 0.0
    %1084 = vmatpush1.msra.mxu0 0.0
    %1085 = vmatprep.subr.mxu0 0.0
    %1086 = vmatpush1.msra.mxu0 0.0
    %1087 = vmatprep.subr.mxu0 0.0
    %1088 = vmatpush1.msra.mxu0 0.0
    %1089 = vmatprep.subr.mxu0 0.0
    %1090 = vmatpush1.msra.mxu0 0.0
    %1091 = vmatprep.subr.mxu0 0.0
    %1092 = vmatpush1.msra.mxu0 0.0
    %1093 = vmatprep.subr.mxu0 0.0
    %1094 = vmatpush1.msra.mxu0 0.0
    %1095 = vmatprep.subr.mxu0 0.0
    %1096 = vmatpush1.msra.mxu0 0.0
    %1097 = vmatprep.mubr.f32.mxu0 0.0
    %1098 = vmatmul.mubr.f32.gmra.mrb[0].mxu0 %v797
    %v1099 = vpop.f32.mrb[0].mxu0
    %v1100 = vadd.f32 0.0, %v1099
    %v1101 = vpop.f32.mrb[0].mxu0
    %v1102 = vadd.f32 0.0, %v1101
    %1103 = vmatprep.mubr.f32.mxu0 0.0
    %1104 = vmatmul.mubr.f32.gmra.mrb[0].mxu0 %v800
    %v1105 = vpop.f32.mrb[0].mxu0
    %v1106 = vadd.f32 0.0, %v1105
    %v1107 = vpop.f32.mrb[0].mxu0
    %v1108 = vadd.f32 0.0, %v1107
    %1109 = vdwg.mxu0
    %1110 = vmatprep.subr.mxu0 %v778
    %1111 = vmatpush1.msra.mxu0 %v777
    %1112 = vmatprep.subr.mxu0 %v791
    %1113 = vmatpush1.msra.mxu0 %v790
    %1114 = vmatprep.subr.mxu0 0.0
    %1115 = vmatpush1.msra.mxu0 0.0
    %1116 = vmatprep.subr.mxu0 0.0
    %1117 = vmatpush1.msra.mxu0 0.0
    %1118 = vmatprep.subr.mxu0 0.0
    %1119 = vmatpush1.msra.mxu0 0.0
    %1120 = vmatprep.subr.mxu0 0.0
    %1121 = vmatpush1.msra.mxu0 0.0
    %1122 = vmatprep.subr.mxu0 0.0
    %1123 = vmatpush1.msra.mxu0 0.0
    %1124 = vmatprep.subr.mxu0 0.0
    %1125 = vmatpush1.msra.mxu0 0.0
    %1126 = vmatprep.subr.mxu0 0.0
    %1127 = vmatpush1.msra.mxu0 0.0
    %1128 = vmatprep.subr.mxu0 0.0
    %1129 = vmatpush1.msra.mxu0 0.0
    %1130 = vmatprep.subr.mxu0 0.0
    %1131 = vmatpush1.msra.mxu0 0.0
    %1132 = vmatprep.subr.mxu0 0.0
    %1133 = vmatpush1.msra.mxu0 0.0
    %1134 = vmatprep.subr.mxu0 0.0
    %1135 = vmatpush1.msra.mxu0 0.0
    %1136 = vmatprep.subr.mxu0 0.0
    %1137 = vmatpush1.msra.mxu0 0.0
    %1138 = vmatprep.subr.mxu0 0.0
    %1139 = vmatpush1.msra.mxu0 0.0
    %1140 = vmatprep.subr.mxu0 0.0
    %1141 = vmatpush1.msra.mxu0 0.0
    %1142 = vmatprep.subr.mxu0 0.0
    %1143 = vmatpush1.msra.mxu0 0.0
    %1144 = vmatprep.subr.mxu0 0.0
    %1145 = vmatpush1.msra.mxu0 0.0
    %1146 = vmatprep.subr.mxu0 0.0
    %1147 = vmatpush1.msra.mxu0 0.0
    %1148 = vmatprep.subr.mxu0 0.0
    %1149 = vmatpush1.msra.mxu0 0.0
    %1150 = vmatprep.subr.mxu0 0.0
    %1151 = vmatpush1.msra.mxu0 0.0
    %1152 = vmatprep.subr.mxu0 0.0
    %1153 = vmatpush1.msra.mxu0 0.0
    %1154 = vmatprep.subr.mxu0 0.0
    %1155 = vmatpush1.msra.mxu0 0.0
    %1156 = vmatprep.subr.mxu0 0.0
    %1157 = vmatpush1.msra.mxu0 0.0
    %1158 = vmatprep.subr.mxu0 0.0
    %1159 = vmatpush1.msra.mxu0 0.0
    %1160 = vmatprep.subr.mxu0 0.0
    %1161 = vmatpush1.msra.mxu0 0.0
    %1162 = vmatprep.subr.mxu0 0.0
    %1163 = vmatpush1.msra.mxu0 0.0
    %1164 = vmatprep.subr.mxu0 0.0
    %1165 = vmatpush1.msra.mxu0 0.0
    %1166 = vmatprep.subr.mxu0 0.0
    %1167 = vmatpush1.msra.mxu0 0.0
    %1168 = vmatprep.subr.mxu0 0.0
    %1169 = vmatpush1.msra.mxu0 0.0
    %1170 = vmatprep.subr.mxu0 0.0
    %1171 = vmatpush1.msra.mxu0 0.0
    %1172 = vmatprep.subr.mxu0 0.0
    %1173 = vmatpush1.msra.mxu0 0.0
    %1174 = vmatprep.mubr.f32.mxu0 0.0
    %1175 = vmatmul.mubr.f32.gmra.mrb[0].mxu0 %v797
    %v1176 = vpop.f32.mrb[0].mxu0
    %v1177 = vadd.f32 0.0, %v1176
    %v1178 = vpop.f32.mrb[0].mxu0
    %v1179 = vadd.f32 0.0, %v1178
    %1180 = vmatprep.mubr.f32.mxu0 0.0
    %1181 = vmatmul.mubr.f32.gmra.mrb[0].mxu0 %v800
    %v1182 = vpop.f32.mrb[0].mxu0
    %v1183 = vadd.f32 0.0, %v1182
    %v1184 = vpop.f32.mrb[0].mxu0
    %v1185 = vadd.f32 0.0, %v1184
    %1186 = vdwg.mxu0
    %1187 = vmatprep.subr.mxu0 %v780
    %1188 = vmatpush1.msra.mxu0 %v779
    %1189 = vmatprep.subr.mxu0 %v793
    %1190 = vmatpush1.msra.mxu0 %v792
    %1191 = vmatprep.subr.mxu0 0.0
    %1192 = vmatpush1.msra.mxu0 0.0
    %1193 = vmatprep.subr.mxu0 0.0
    %1194 = vmatpush1.msra.mxu0 0.0
    %1195 = vmatprep.subr.mxu0 0.0
    %1196 = vmatpush1.msra.mxu0 0.0
    %1197 = vmatprep.subr.mxu0 0.0
    %1198 = vmatpush1.msra.mxu0 0.0
    %1199 = vmatprep.subr.mxu0 0.0
    %1200 = vmatpush1.msra.mxu0 0.0
    %1201 = vmatprep.subr.mxu0 0.0
    %1202 = vmatpush1.msra.mxu0 0.0
    %1203 = vmatprep.subr.mxu0 0.0
    %1204 = vmatpush1.msra.mxu0 0.0
    %1205 = vmatprep.subr.mxu0 0.0
    %1206 = vmatpush1.msra.mxu0 0.0
    %1207 = vmatprep.subr.mxu0 0.0
    %1208 = vmatpush1.msra.mxu0 0.0
    %1209 = vmatprep.subr.mxu0 0.0
    %1210 = vmatpush1.msra.mxu0 0.0
    %1211 = vmatprep.subr.mxu0 0.0
    %1212 = vmatpush1.msra.mxu0 0.0
    %1213 = vmatprep.subr.mxu0 0.0
    %1214 = vmatpush1.msra.mxu0 0.0
    %1215 = vmatprep.subr.mxu0 0.0
    %1216 = vmatpush1.msra.mxu0 0.0
    %1217 = vmatprep.subr.mxu0 0.0
    %1218 = vmatpush1.msra.mxu0 0.0
    %1219 = vmatprep.subr.mxu0 0.0
    %1220 = vmatpush1.msra.mxu0 0.0
    %1221 = vmatprep.subr.mxu0 0.0
    %1222 = vmatpush1.msra.mxu0 0.0
    %1223 = vmatprep.subr.mxu0 0.0
    %1224 = vmatpush1.msra.mxu0 0.0
    %1225 = vmatprep.subr.mxu0 0.0
    %1226 = vmatpush1.msra.mxu0 0.0
    %1227 = vmatprep.subr.mxu0 0.0
    %1228 = vmatpush1.msra.mxu0 0.0
    %1229 = vmatprep.subr.mxu0 0.0
    %1230 = vmatpush1.msra.mxu0 0.0
    %1231 = vmatprep.subr.mxu0 0.0
    %1232 = vmatpush1.msra.mxu0 0.0
    %1233 = vmatprep.subr.mxu0 0.0
    %1234 = vmatpush1.msra.mxu0 0.0
    %1235 = vmatprep.subr.mxu0 0.0
    %1236 = vmatpush1.msra.mxu0 0.0
    %1237 = vmatprep.subr.mxu0 0.0
    %1238 = vmatpush1.msra.mxu0 0.0
    %1239 = vmatprep.subr.mxu0 0.0
    %1240 = vmatpush1.msra.mxu0 0.0
    %1241 = vmatprep.subr.mxu0 0.0
    %1242 = vmatpush1.msra.mxu0 0.0
    %1243 = vmatprep.subr.mxu0 0.0
    %1244 = vmatpush1.msra.mxu0 0.0
    %1245 = vmatprep.subr.mxu0 0.0
    %1246 = vmatpush1.msra.mxu0 0.0
    %1247 = vmatprep.subr.mxu0 0.0
    %1248 = vmatpush1.msra.mxu0 0.0
    %1249 = vmatprep.subr.mxu0 0.0
    %1250 = vmatpush1.msra.mxu0 0.0
    %1251 = vmatprep.mubr.f32.mxu0 0.0
    %1252 = vmatmul.mubr.f32.gmra.mrb[0].mxu0 %v797
    %v1253 = vpop.f32.mrb[0].mxu0
    %v1254 = vadd.f32 0.0, %v1253
    %v1255 = vpop.f32.mrb[0].mxu0
    %v1256 = vadd.f32 0.0, %v1255
    %1257 = vmatprep.mubr.f32.mxu0 0.0
    %1258 = vmatmul.mubr.f32.gmra.mrb[0].mxu0 %v800
    %v1259 = vpop.f32.mrb[0].mxu0
    %v1260 = vadd.f32 0.0, %v1259
    %v1261 = vpop.f32.mrb[0].mxu0
    %v1262 = vadd.f32 0.0, %v1261
    %1263 = vdwg.mxu0
    %1264 = vmatprep.subr.mxu0 0.0
    %1265 = vmatpush1.msra.mxu0 %v781
    %1266 = vmatprep.subr.mxu0 0.0
    %1267 = vmatpush1.msra.mxu0 %v794
    %1268 = vmatprep.subr.mxu0 0.0
    %1269 = vmatpush1.msra.mxu0 0.0
    %1270 = vmatprep.subr.mxu0 0.0
    %1271 = vmatpush1.msra.mxu0 0.0
    %1272 = vmatprep.subr.mxu0 0.0
    %1273 = vmatpush1.msra.mxu0 0.0
    %1274 = vmatprep.subr.mxu0 0.0
    %1275 = vmatpush1.msra.mxu0 0.0
    %1276 = vmatprep.subr.mxu0 0.0
    %1277 = vmatpush1.msra.mxu0 0.0
    %1278 = vmatprep.subr.mxu0 0.0
    %1279 = vmatpush1.msra.mxu0 0.0
    %1280 = vmatprep.subr.mxu0 0.0
    %1281 = vmatpush1.msra.mxu0 0.0
    %1282 = vmatprep.subr.mxu0 0.0
    %1283 = vmatpush1.msra.mxu0 0.0
    %1284 = vmatprep.subr.mxu0 0.0
    %1285 = vmatpush1.msra.mxu0 0.0
    %1286 = vmatprep.subr.mxu0 0.0
    %1287 = vmatpush1.msra.mxu0 0.0
    %1288 = vmatprep.subr.mxu0 0.0
    %1289 = vmatpush1.msra.mxu0 0.0
    %1290 = vmatprep.subr.mxu0 0.0
    %1291 = vmatpush1.msra.mxu0 0.0
    %1292 = vmatprep.subr.mxu0 0.0
    %1293 = vmatpush1.msra.mxu0 0.0
    %1294 = vmatprep.subr.mxu0 0.0
    %1295 = vmatpush1.msra.mxu0 0.0
    %1296 = vmatprep.subr.mxu0 0.0
    %1297 = vmatpush1.msra.mxu0 0.0
    %1298 = vmatprep.subr.mxu0 0.0
    %1299 = vmatpush1.msra.mxu0 0.0
    %1300 = vmatprep.subr.mxu0 0.0
    %1301 = vmatpush1.msra.mxu0 0.0
    %1302 = vmatprep.subr.mxu0 0.0
    %1303 = vmatpush1.msra.mxu0 0.0
    %1304 = vmatprep.subr.mxu0 0.0
    %1305 = vmatpush1.msra.mxu0 0.0
    %1306 = vmatprep.subr.mxu0 0.0
    %1307 = vmatpush1.msra.mxu0 0.0
    %1308 = vmatprep.subr.mxu0 0.0
    %1309 = vmatpush1.msra.mxu0 0.0
    %1310 = vmatprep.subr.mxu0 0.0
    %1311 = vmatpush1.msra.mxu0 0.0
    %1312 = vmatprep.subr.mxu0 0.0
    %1313 = vmatpush1.msra.mxu0 0.0
    %1314 = vmatprep.subr.mxu0 0.0
    %1315 = vmatpush1.msra.mxu0 0.0
    %1316 = vmatprep.subr.mxu0 0.0
    %1317 = vmatpush1.msra.mxu0 0.0
    %1318 = vmatprep.subr.mxu0 0.0
    %1319 = vmatpush1.msra.mxu0 0.0
    %1320 = vmatprep.subr.mxu0 0.0
    %1321 = vmatpush1.msra.mxu0 0.0
    %1322 = vmatprep.subr.mxu0 0.0
    %1323 = vmatpush1.msra.mxu0 0.0
    %1324 = vmatprep.subr.mxu0 0.0
    %1325 = vmatpush1.msra.mxu0 0.0
    %1326 = vmatprep.subr.mxu0 0.0
    %1327 = vmatpush1.msra.mxu0 0.0
    %1328 = vmatprep.mubr.f32.mxu0 0.0
    %1329 = vmatmul.mubr.f32.gmra.mrb[0].mxu0 %v797
    %v1330 = vpop.f32.mrb[0].mxu0
    %v1331 = vadd.f32 0.0, %v1330
    %v1332 = vpop.f32.mrb[0].mxu0
    %1333 = vmatprep.mubr.f32.mxu0 0.0
    %1334 = vmatmul.mubr.f32.gmra.mrb[0].mxu0 %v800
    %v1335 = vpop.f32.mrb[0].mxu0
    %v1336 = vadd.f32 0.0, %v1335
    %v1337 = vpop.f32.mrb[0].mxu0
    %1338 = vdwg.mxu0
    %v1341 = vlaneseq
    %v1342 = vshrl.u32 %v1341, 7
    %v1343 = vsub.s32 0, %v1342
    %v1344 = vrot.slane %v767, %v1343
    %v1345 = vlaneseq
    %v1346 = vshrl.u32 %v1345, 7
    %v1347 = vsub.s32 1, %v1346
    %v1348 = vrot.slane %v767, %v1347
    %v1349 = vlaneseq
    %v1350 = vshrl.u32 %v1349, 7
    %v1351 = vsub.s32 2, %v1350
    %v1352 = vrot.slane %v767, %v1351
    %v1353 = vlaneseq
    %v1354 = vshrl.u32 %v1353, 7
    %v1355 = vsub.s32 3, %v1354
    %v1356 = vrot.slane %v767, %v1355
    %v1357 = vlaneseq
    %v1358 = vshrl.u32 %v1357, 7
    %v1359 = vsub.s32 4, %v1358
    %v1360 = vrot.slane %v767, %v1359
    %v1361 = vlaneseq
    %v1362 = vshrl.u32 %v1361, 7
    %v1363 = vsub.s32 5, %v1362
    %v1364 = vrot.slane %v767, %v1363
    %v1365 = vlaneseq
    %v1366 = vshrl.u32 %v1365, 7
    %v1367 = vsub.s32 6, %v1366
    %v1368 = vrot.slane %v767, %v1367
    %v1369 = vlaneseq
    %v1370 = vshrl.u32 %v1369, 7
    %v1371 = vsub.s32 7, %v1370
    %v1372 = vrot.slane %v767, %v1371
    %v1373 = vlaneseq
    %v1374 = vshrl.u32 %v1373, 7
    %v1375 = vsub.s32 0, %v1374
    %v1376 = vrot.slane %v768, %v1375
    %v1377 = vlaneseq
    %v1378 = vshrl.u32 %v1377, 7
    %v1379 = vsub.s32 1, %v1378
    %v1380 = vrot.slane %v768, %v1379
    %v1381 = vlaneseq
    %v1382 = vshrl.u32 %v1381, 7
    %v1383 = vsub.s32 2, %v1382
    %v1384 = vrot.slane %v768, %v1383
    %v1385 = vlaneseq
    %v1386 = vshrl.u32 %v1385, 7
    %v1387 = vsub.s32 3, %v1386
    %v1388 = vrot.slane %v768, %v1387
    %v1389 = vlaneseq
    %v1390 = vshrl.u32 %v1389, 7
    %v1391 = vsub.s32 4, %v1390
    %v1392 = vrot.slane %v768, %v1391
    %v1406 = vadd.f32 %v1344, %v869
    %v1407 = vadd.f32 %v1348, %v871
    %v1408 = vadd.f32 %v1352, %v946
    %v1409 = vadd.f32 %v1356, %v948
    %v1410 = vadd.f32 %v1360, %v1023
    %v1411 = vadd.f32 %v1364, %v1025
    %v1412 = vadd.f32 %v1368, %v1100
    %v1413 = vadd.f32 %v1372, %v1102
    %v1414 = vadd.f32 %v1376, %v1177
    %v1415 = vadd.f32 %v1380, %v1179
    %v1416 = vadd.f32 %v1384, %v1254
    %v1417 = vadd.f32 %v1388, %v1256
    %v1418 = vadd.f32 %v1392, %v1331
    %v1419 = vadd.f32 %v1344, %v875
    %v1420 = vadd.f32 %v1348, %v877
    %v1421 = vadd.f32 %v1352, %v952
    %v1422 = vadd.f32 %v1356, %v954
    %v1423 = vadd.f32 %v1360, %v1029
    %v1424 = vadd.f32 %v1364, %v1031
    %v1425 = vadd.f32 %v1368, %v1106
    %v1426 = vadd.f32 %v1372, %v1108
    %v1427 = vadd.f32 %v1376, %v1183
    %v1428 = vadd.f32 %v1380, %v1185
    %v1429 = vadd.f32 %v1384, %v1260
    %v1430 = vadd.f32 %v1388, %v1262
    %v1431 = vadd.f32 %v1392, %v1336
    %v1432 = vld [vmem:[%s13 + $0xd0] sm:$0x3]
    %v1433 = vld [vmem:[%s13 + $0xd8] sm:$0x3]
    %v1434 = vld [vmem:[%s13 + $0xe0] sm:$0x3]
    %v1435 = vld [vmem:[%s13 + $0xe8] sm:$0x3]
    %v1436 = vld [vmem:[%s13 + $0xf0] sm:$0x3]
    %v1437 = vld [vmem:[%s13 + $0xf8] sm:$0x3]
    %v1438 = vld [vmem:[%s13 + $0x100] sm:$0x3]
    %v1439 = vld [vmem:[%s13 + $0x108] sm:$0x3]
    %v1440 = vld [vmem:[%s13 + $0x110] sm:$0x3]
    %v1441 = vld [vmem:[%s13 + $0x118] sm:$0x3]
    %v1442 = vld [vmem:[%s13 + $0x120] sm:$0x3]
    %v1443 = vld [vmem:[%s13 + $0x128] sm:$0x3]
    %v1444 = vld [vmem:[%s13 + $0x130] sm:$0x3]
    %1445 = vrot.lane.b32.xlu0 %v552, 102
    %v1446 = vpop.permute.xlu0 %1445
    %1447 = vrot.lane.b32.xlu0 %v553, 102
    %v1448 = vpop.permute.xlu0 %1447
    %vm1449 = vcmask 15360
    %v1450 = vsel %vm1449, %v1446, 0
    %v1452 = vsel %vm1449, %v1448, 0
    %v1455 = vsel %vm572, %v1432, 0
    %v1458 = vsel %vm572, %v1433, 0
    %v1461 = vsel %vm572, %v1434, 0
    %v1464 = vsel %vm572, %v1435, 0
    %v1467 = vsel %vm572, %v1436, 0
    %v1470 = vsel %vm572, %v1437, 0
    %v1473 = vsel %vm572, %v1438, 0
    %v1476 = vsel %vm572, %v1439, 0
    %v1479 = vsel %vm572, %v1440, 0
    %v1482 = vsel %vm572, %v1441, 0
    %v1485 = vsel %vm572, %v1442, 0
    %v1488 = vsel %vm572, %v1443, 0
    %v1491 = vsel %vm572, %v1444, 0
    %1493 = vmatprep.subr.mxu0 %v1458
    %1494 = vmatpush1.msra.mxu0 %v1455
    %1495 = vmatprep.subr.mxu0 0.0
    %1496 = vmatpush1.msra.mxu0 0.0
    %1497 = vmatprep.subr.mxu0 0.0
    %1498 = vmatpush1.msra.mxu0 0.0
    %1499 = vmatprep.subr.mxu0 0.0
    %1500 = vmatpush1.msra.mxu0 0.0
    %1501 = vmatprep.subr.mxu0 0.0
    %1502 = vmatpush1.msra.mxu0 0.0
    %1503 = vmatprep.subr.mxu0 0.0
    %1504 = vmatpush1.msra.mxu0 0.0
    %1505 = vmatprep.subr.mxu0 0.0
    %1506 = vmatpush1.msra.mxu0 0.0
    %1507 = vmatprep.subr.mxu0 0.0
    %1508 = vmatpush1.msra.mxu0 0.0
    %1509 = vmatprep.subr.mxu0 0.0
    %1510 = vmatpush1.msra.mxu0 0.0
    %1511 = vmatprep.subr.mxu0 0.0
    %1512 = vmatpush1.msra.mxu0 0.0
    %1513 = vmatprep.subr.mxu0 0.0
    %1514 = vmatpush1.msra.mxu0 0.0
    %1515 = vmatprep.subr.mxu0 0.0
    %1516 = vmatpush1.msra.mxu0 0.0
    %1517 = vmatprep.subr.mxu0 0.0
    %1518 = vmatpush1.msra.mxu0 0.0
    %1519 = vmatprep.subr.mxu0 0.0
    %1520 = vmatpush1.msra.mxu0 0.0
    %1521 = vmatprep.subr.mxu0 0.0
    %1522 = vmatpush1.msra.mxu0 0.0
    %1523 = vmatprep.subr.mxu0 0.0
    %1524 = vmatpush1.msra.mxu0 0.0
    %1525 = vmatprep.subr.mxu0 0.0
    %1526 = vmatpush1.msra.mxu0 0.0
    %1527 = vmatprep.subr.mxu0 0.0
    %1528 = vmatpush1.msra.mxu0 0.0
    %1529 = vmatprep.subr.mxu0 0.0
    %1530 = vmatpush1.msra.mxu0 0.0
    %1531 = vmatprep.subr.mxu0 0.0
    %1532 = vmatpush1.msra.mxu0 0.0
    %1533 = vmatprep.subr.mxu0 0.0
    %1534 = vmatpush1.msra.mxu0 0.0
    %1535 = vmatprep.subr.mxu0 0.0
    %1536 = vmatpush1.msra.mxu0 0.0
    %1537 = vmatprep.subr.mxu0 0.0
    %1538 = vmatpush1.msra.mxu0 0.0
    %1539 = vmatprep.subr.mxu0 0.0
    %1540 = vmatpush1.msra.mxu0 0.0
    %1541 = vmatprep.subr.mxu0 0.0
    %1542 = vmatpush1.msra.mxu0 0.0
    %1543 = vmatprep.subr.mxu0 0.0
    %1544 = vmatpush1.msra.mxu0 0.0
    %1545 = vmatprep.subr.mxu0 0.0
    %1546 = vmatpush1.msra.mxu0 0.0
    %1547 = vmatprep.subr.mxu0 0.0
    %1548 = vmatpush1.msra.mxu0 0.0
    %1549 = vmatprep.subr.mxu0 0.0
    %1550 = vmatpush1.msra.mxu0 0.0
    %1551 = vmatprep.subr.mxu0 0.0
    %1552 = vmatpush1.msra.mxu0 0.0
    %1553 = vmatprep.subr.mxu0 0.0
    %1554 = vmatpush1.msra.mxu0 0.0
    %1555 = vmatprep.subr.mxu0 0.0
    %1556 = vmatpush1.msra.mxu0 0.0
    %1557 = vmatprep.mubr.f32.mxu0 0.0
    %1558 = vmatmul.mubr.f32.gmra.mrb[0].mxu0 %v1450
    %v1559 = vpop.f32.mrb[0].mxu0
    %v1560 = vadd.f32 0.0, %v1559
    %v1561 = vpop.f32.mrb[0].mxu0
    %v1562 = vadd.f32 0.0, %v1561
    %1563 = vmatprep.mubr.f32.mxu0 0.0
    %1564 = vmatmul.mubr.f32.gmra.mrb[0].mxu0 %v1452
    %v1565 = vpop.f32.mrb[0].mxu0
    %v1566 = vadd.f32 0.0, %v1565
    %v1567 = vpop.f32.mrb[0].mxu0
    %v1568 = vadd.f32 0.0, %v1567
    %1569 = vdwg.mxu0
    %1570 = vmatprep.subr.mxu0 %v1464
    %1571 = vmatpush1.msra.mxu0 %v1461
    %1572 = vmatprep.subr.mxu0 0.0
    %1573 = vmatpush1.msra.mxu0 0.0
    %1574 = vmatprep.subr.mxu0 0.0
    %1575 = vmatpush1.msra.mxu0 0.0
    %1576 = vmatprep.subr.mxu0 0.0
    %1577 = vmatpush1.msra.mxu0 0.0
    %1578 = vmatprep.subr.mxu0 0.0
    %1579 = vmatpush1.msra.mxu0 0.0
    %1580 = vmatprep.subr.mxu0 0.0
    %1581 = vmatpush1.msra.mxu0 0.0
    %1582 = vmatprep.subr.mxu0 0.0
    %1583 = vmatpush1.msra.mxu0 0.0
    %1584 = vmatprep.subr.mxu0 0.0
    %1585 = vmatpush1.msra.mxu0 0.0
    %1586 = vmatprep.subr.mxu0 0.0
    %1587 = vmatpush1.msra.mxu0 0.0
    %1588 = vmatprep.subr.mxu0 0.0
    %1589 = vmatpush1.msra.mxu0 0.0
    %1590 = vmatprep.subr.mxu0 0.0
    %1591 = vmatpush1.msra.mxu0 0.0
    %1592 = vmatprep.subr.mxu0 0.0
    %1593 = vmatpush1.msra.mxu0 0.0
    %1594 = vmatprep.subr.mxu0 0.0
    %1595 = vmatpush1.msra.mxu0 0.0
    %1596 = vmatprep.subr.mxu0 0.0
    %1597 = vmatpush1.msra.mxu0 0.0
    %1598 = vmatprep.subr.mxu0 0.0
    %1599 = vmatpush1.msra.mxu0 0.0
    %1600 = vmatprep.subr.mxu0 0.0
    %1601 = vmatpush1.msra.mxu0 0.0
    %1602 = vmatprep.subr.mxu0 0.0
    %1603 = vmatpush1.msra.mxu0 0.0
    %1604 = vmatprep.subr.mxu0 0.0
    %1605 = vmatpush1.msra.mxu0 0.0
    %1606 = vmatprep.subr.mxu0 0.0
    %1607 = vmatpush1.msra.mxu0 0.0
    %1608 = vmatprep.subr.mxu0 0.0
    %1609 = vmatpush1.msra.mxu0 0.0
    %1610 = vmatprep.subr.mxu0 0.0
    %1611 = vmatpush1.msra.mxu0 0.0
    %1612 = vmatprep.subr.mxu0 0.0
    %1613 = vmatpush1.msra.mxu0 0.0
    %1614 = vmatprep.subr.mxu0 0.0
    %1615 = vmatpush1.msra.mxu0 0.0
    %1616 = vmatprep.subr.mxu0 0.0
    %1617 = vmatpush1.msra.mxu0 0.0
    %1618 = vmatprep.subr.mxu0 0.0
    %1619 = vmatpush1.msra.mxu0 0.0
    %1620 = vmatprep.subr.mxu0 0.0
    %1621 = vmatpush1.msra.mxu0 0.0
    %1622 = vmatprep.subr.mxu0 0.0
    %1623 = vmatpush1.msra.mxu0 0.0
    %1624 = vmatprep.subr.mxu0 0.0
    %1625 = vmatpush1.msra.mxu0 0.0
    %1626 = vmatprep.subr.mxu0 0.0
    %1627 = vmatpush1.msra.mxu0 0.0
    %1628 = vmatprep.subr.mxu0 0.0
    %1629 = vmatpush1.msra.mxu0 0.0
    %1630 = vmatprep.subr.mxu0 0.0
    %1631 = vmatpush1.msra.mxu0 0.0
    %1632 = vmatprep.subr.mxu0 0.0
    %1633 = vmatpush1.msra.mxu0 0.0
    %1634 = vmatprep.mubr.f32.mxu0 0.0
    %1635 = vmatmul.mubr.f32.gmra.mrb[0].mxu0 %v1450
    %v1636 = vpop.f32.mrb[0].mxu0
    %v1637 = vadd.f32 0.0, %v1636
    %v1638 = vpop.f32.mrb[0].mxu0
    %v1639 = vadd.f32 0.0, %v1638
    %1640 = vmatprep.mubr.f32.mxu0 0.0
    %1641 = vmatmul.mubr.f32.gmra.mrb[0].mxu0 %v1452
    %v1642 = vpop.f32.mrb[0].mxu0
    %v1643 = vadd.f32 0.0, %v1642
    %v1644 = vpop.f32.mrb[0].mxu0
    %v1645 = vadd.f32 0.0, %v1644
    %1646 = vdwg.mxu0
    %1647 = vmatprep.subr.mxu0 %v1470
    %1648 = vmatpush1.msra.mxu0 %v1467
    %1649 = vmatprep.subr.mxu0 0.0
    %1650 = vmatpush1.msra.mxu0 0.0
    %1651 = vmatprep.subr.mxu0 0.0
    %1652 = vmatpush1.msra.mxu0 0.0
    %1653 = vmatprep.subr.mxu0 0.0
    %1654 = vmatpush1.msra.mxu0 0.0
    %1655 = vmatprep.subr.mxu0 0.0
    %1656 = vmatpush1.msra.mxu0 0.0
    %1657 = vmatprep.subr.mxu0 0.0
    %1658 = vmatpush1.msra.mxu0 0.0
    %1659 = vmatprep.subr.mxu0 0.0
    %1660 = vmatpush1.msra.mxu0 0.0
    %1661 = vmatprep.subr.mxu0 0.0
    %1662 = vmatpush1.msra.mxu0 0.0
    %1663 = vmatprep.subr.mxu0 0.0
    %1664 = vmatpush1.msra.mxu0 0.0
    %1665 = vmatprep.subr.mxu0 0.0
    %1666 = vmatpush1.msra.mxu0 0.0
    %1667 = vmatprep.subr.mxu0 0.0
    %1668 = vmatpush1.msra.mxu0 0.0
    %1669 = vmatprep.subr.mxu0 0.0
    %1670 = vmatpush1.msra.mxu0 0.0
    %1671 = vmatprep.subr.mxu0 0.0
    %1672 = vmatpush1.msra.mxu0 0.0
    %1673 = vmatprep.subr.mxu0 0.0
    %1674 = vmatpush1.msra.mxu0 0.0
    %1675 = vmatprep.subr.mxu0 0.0
    %1676 = vmatpush1.msra.mxu0 0.0
    %1677 = vmatprep.subr.mxu0 0.0
    %1678 = vmatpush1.msra.mxu0 0.0
    %1679 = vmatprep.subr.mxu0 0.0
    %1680 = vmatpush1.msra.mxu0 0.0
    %1681 = vmatprep.subr.mxu0 0.0
    %1682 = vmatpush1.msra.mxu0 0.0
    %1683 = vmatprep.subr.mxu0 0.0
    %1684 = vmatpush1.msra.mxu0 0.0
    %1685 = vmatprep.subr.mxu0 0.0
    %1686 = vmatpush1.msra.mxu0 0.0
    %1687 = vmatprep.subr.mxu0 0.0
    %1688 = vmatpush1.msra.mxu0 0.0
    %1689 = vmatprep.subr.mxu0 0.0
    %1690 = vmatpush1.msra.mxu0 0.0
    %1691 = vmatprep.subr.mxu0 0.0
    %1692 = vmatpush1.msra.mxu0 0.0
    %1693 = vmatprep.subr.mxu0 0.0
    %1694 = vmatpush1.msra.mxu0 0.0
    %1695 = vmatprep.subr.mxu0 0.0
    %1696 = vmatpush1.msra.mxu0 0.0
    %1697 = vmatprep.subr.mxu0 0.0
    %1698 = vmatpush1.msra.mxu0 0.0
    %1699 = vmatprep.subr.mxu0 0.0
    %1700 = vmatpush1.msra.mxu0 0.0
    %1701 = vmatprep.subr.mxu0 0.0
    %1702 = vmatpush1.msra.mxu0 0.0
    %1703 = vmatprep.subr.mxu0 0.0
    %1704 = vmatpush1.msra.mxu0 0.0
    %1705 = vmatprep.subr.mxu0 0.0
    %1706 = vmatpush1.msra.mxu0 0.0
    %1707 = vmatprep.subr.mxu0 0.0
    %1708 = vmatpush1.msra.mxu0 0.0
    %1709 = vmatprep.subr.mxu0 0.0
    %1710 = vmatpush1.msra.mxu0 0.0
    %1711 = vmatprep.mubr.f32.mxu0 0.0
    %1712 = vmatmul.mubr.f32.gmra.mrb[0].mxu0 %v1450
    %v1713 = vpop.f32.mrb[0].mxu0
    %v1714 = vadd.f32 0.0, %v1713
    %v1715 = vpop.f32.mrb[0].mxu0
    %v1716 = vadd.f32 0.0, %v1715
    %1717 = vmatprep.mubr.f32.mxu0 0.0
    %1718 = vmatmul.mubr.f32.gmra.mrb[0].mxu0 %v1452
    %v1719 = vpop.f32.mrb[0].mxu0
    %v1720 = vadd.f32 0.0, %v1719
    %v1721 = vpop.f32.mrb[0].mxu0
    %v1722 = vadd.f32 0.0, %v1721
    %1723 = vdwg.mxu0
    %1724 = vmatprep.subr.mxu0 %v1476
    %1725 = vmatpush1.msra.mxu0 %v1473
    %1726 = vmatprep.subr.mxu0 0.0
    %1727 = vmatpush1.msra.mxu0 0.0
    %1728 = vmatprep.subr.mxu0 0.0
    %1729 = vmatpush1.msra.mxu0 0.0
    %1730 = vmatprep.subr.mxu0 0.0
    %1731 = vmatpush1.msra.mxu0 0.0
    %1732 = vmatprep.subr.mxu0 0.0
    %1733 = vmatpush1.msra.mxu0 0.0
    %1734 = vmatprep.subr.mxu0 0.0
    %1735 = vmatpush1.msra.mxu0 0.0
    %1736 = vmatprep.subr.mxu0 0.0
    %1737 = vmatpush1.msra.mxu0 0.0
    %1738 = vmatprep.subr.mxu0 0.0
    %1739 = vmatpush1.msra.mxu0 0.0
    %1740 = vmatprep.subr.mxu0 0.0
    %1741 = vmatpush1.msra.mxu0 0.0
    %1742 = vmatprep.subr.mxu0 0.0
    %1743 = vmatpush1.msra.mxu0 0.0
    %1744 = vmatprep.subr.mxu0 0.0
    %1745 = vmatpush1.msra.mxu0 0.0
    %1746 = vmatprep.subr.mxu0 0.0
    %1747 = vmatpush1.msra.mxu0 0.0
    %1748 = vmatprep.subr.mxu0 0.0
    %1749 = vmatpush1.msra.mxu0 0.0
    %1750 = vmatprep.subr.mxu0 0.0
    %1751 = vmatpush1.msra.mxu0 0.0
    %1752 = vmatprep.subr.mxu0 0.0
    %1753 = vmatpush1.msra.mxu0 0.0
    %1754 = vmatprep.subr.mxu0 0.0
    %1755 = vmatpush1.msra.mxu0 0.0
    %1756 = vmatprep.subr.mxu0 0.0
    %1757 = vmatpush1.msra.mxu0 0.0
    %1758 = vmatprep.subr.mxu0 0.0
    %1759 = vmatpush1.msra.mxu0 0.0
    %1760 = vmatprep.subr.mxu0 0.0
    %1761 = vmatpush1.msra.mxu0 0.0
    %1762 = vmatprep.subr.mxu0 0.0
    %1763 = vmatpush1.msra.mxu0 0.0
    %1764 = vmatprep.subr.mxu0 0.0
    %1765 = vmatpush1.msra.mxu0 0.0
    %1766 = vmatprep.subr.mxu0 0.0
    %1767 = vmatpush1.msra.mxu0 0.0
    %1768 = vmatprep.subr.mxu0 0.0
    %1769 = vmatpush1.msra.mxu0 0.0
    %1770 = vmatprep.subr.mxu0 0.0
    %1771 = vmatpush1.msra.mxu0 0.0
    %1772 = vmatprep.subr.mxu0 0.0
    %1773 = vmatpush1.msra.mxu0 0.0
    %1774 = vmatprep.subr.mxu0 0.0
    %1775 = vmatpush1.msra.mxu0 0.0
    %1776 = vmatprep.subr.mxu0 0.0
    %1777 = vmatpush1.msra.mxu0 0.0
    %1778 = vmatprep.subr.mxu0 0.0
    %1779 = vmatpush1.msra.mxu0 0.0
    %1780 = vmatprep.subr.mxu0 0.0
    %1781 = vmatpush1.msra.mxu0 0.0
    %1782 = vmatprep.subr.mxu0 0.0
    %1783 = vmatpush1.msra.mxu0 0.0
    %1784 = vmatprep.subr.mxu0 0.0
    %1785 = vmatpush1.msra.mxu0 0.0
    %1786 = vmatprep.subr.mxu0 0.0
    %1787 = vmatpush1.msra.mxu0 0.0
    %1788 = vmatprep.mubr.f32.mxu0 0.0
    %1789 = vmatmul.mubr.f32.gmra.mrb[0].mxu0 %v1450
    %v1790 = vpop.f32.mrb[0].mxu0
    %v1791 = vadd.f32 0.0, %v1790
    %v1792 = vpop.f32.mrb[0].mxu0
    %v1793 = vadd.f32 0.0, %v1792
    %1794 = vmatprep.mubr.f32.mxu0 0.0
    %1795 = vmatmul.mubr.f32.gmra.mrb[0].mxu0 %v1452
    %v1796 = vpop.f32.mrb[0].mxu0
    %v1797 = vadd.f32 0.0, %v1796
    %v1798 = vpop.f32.mrb[0].mxu0
    %v1799 = vadd.f32 0.0, %v1798
    %1800 = vdwg.mxu0
    %1801 = vmatprep.subr.mxu0 %v1482
    %1802 = vmatpush1.msra.mxu0 %v1479
    %1803 = vmatprep.subr.mxu0 0.0
    %1804 = vmatpush1.msra.mxu0 0.0
    %1805 = vmatprep.subr.mxu0 0.0
    %1806 = vmatpush1.msra.mxu0 0.0
    %1807 = vmatprep.subr.mxu0 0.0
    %1808 = vmatpush1.msra.mxu0 0.0
    %1809 = vmatprep.subr.mxu0 0.0
    %1810 = vmatpush1.msra.mxu0 0.0
    %1811 = vmatprep.subr.mxu0 0.0
    %1812 = vmatpush1.msra.mxu0 0.0
    %1813 = vmatprep.subr.mxu0 0.0
    %1814 = vmatpush1.msra.mxu0 0.0
    %1815 = vmatprep.subr.mxu0 0.0
    %1816 = vmatpush1.msra.mxu0 0.0
    %1817 = vmatprep.subr.mxu0 0.0
    %1818 = vmatpush1.msra.mxu0 0.0
    %1819 = vmatprep.subr.mxu0 0.0
    %1820 = vmatpush1.msra.mxu0 0.0
    %1821 = vmatprep.subr.mxu0 0.0
    %1822 = vmatpush1.msra.mxu0 0.0
    %1823 = vmatprep.subr.mxu0 0.0
    %1824 = vmatpush1.msra.mxu0 0.0
    %1825 = vmatprep.subr.mxu0 0.0
    %1826 = vmatpush1.msra.mxu0 0.0
    %1827 = vmatprep.subr.mxu0 0.0
    %1828 = vmatpush1.msra.mxu0 0.0
    %1829 = vmatprep.subr.mxu0 0.0
    %1830 = vmatpush1.msra.mxu0 0.0
    %1831 = vmatprep.subr.mxu0 0.0
    %1832 = vmatpush1.msra.mxu0 0.0
    %1833 = vmatprep.subr.mxu0 0.0
    %1834 = vmatpush1.msra.mxu0 0.0
    %1835 = vmatprep.subr.mxu0 0.0
    %1836 = vmatpush1.msra.mxu0 0.0
    %1837 = vmatprep.subr.mxu0 0.0
    %1838 = vmatpush1.msra.mxu0 0.0
    %1839 = vmatprep.subr.mxu0 0.0
    %1840 = vmatpush1.msra.mxu0 0.0
    %1841 = vmatprep.subr.mxu0 0.0
    %1842 = vmatpush1.msra.mxu0 0.0
    %1843 = vmatprep.subr.mxu0 0.0
    %1844 = vmatpush1.msra.mxu0 0.0
    %1845 = vmatprep.subr.mxu0 0.0
    %1846 = vmatpush1.msra.mxu0 0.0
    %1847 = vmatprep.subr.mxu0 0.0
    %1848 = vmatpush1.msra.mxu0 0.0
    %1849 = vmatprep.subr.mxu0 0.0
    %1850 = vmatpush1.msra.mxu0 0.0
    %1851 = vmatprep.subr.mxu0 0.0
    %1852 = vmatpush1.msra.mxu0 0.0
    %1853 = vmatprep.subr.mxu0 0.0
    %1854 = vmatpush1.msra.mxu0 0.0
    %1855 = vmatprep.subr.mxu0 0.0
    %1856 = vmatpush1.msra.mxu0 0.0
    %1857 = vmatprep.subr.mxu0 0.0
    %1858 = vmatpush1.msra.mxu0 0.0
    %1859 = vmatprep.subr.mxu0 0.0
    %1860 = vmatpush1.msra.mxu0 0.0
    %1861 = vmatprep.subr.mxu0 0.0
    %1862 = vmatpush1.msra.mxu0 0.0
    %1863 = vmatprep.subr.mxu0 0.0
    %1864 = vmatpush1.msra.mxu0 0.0
    %1865 = vmatprep.mubr.f32.mxu0 0.0
    %1866 = vmatmul.mubr.f32.gmra.mrb[0].mxu0 %v1450
    %v1867 = vpop.f32.mrb[0].mxu0
    %v1868 = vadd.f32 0.0, %v1867
    %v1869 = vpop.f32.mrb[0].mxu0
    %v1870 = vadd.f32 0.0, %v1869
    %1871 = vmatprep.mubr.f32.mxu0 0.0
    %1872 = vmatmul.mubr.f32.gmra.mrb[0].mxu0 %v1452
    %v1873 = vpop.f32.mrb[0].mxu0
    %v1874 = vadd.f32 0.0, %v1873
    %v1875 = vpop.f32.mrb[0].mxu0
    %v1876 = vadd.f32 0.0, %v1875
    %1877 = vdwg.mxu0
    %1878 = vmatprep.subr.mxu0 %v1488
    %1879 = vmatpush1.msra.mxu0 %v1485
    %1880 = vmatprep.subr.mxu0 0.0
    %1881 = vmatpush1.msra.mxu0 0.0
    %1882 = vmatprep.subr.mxu0 0.0
    %1883 = vmatpush1.msra.mxu0 0.0
    %1884 = vmatprep.subr.mxu0 0.0
    %1885 = vmatpush1.msra.mxu0 0.0
    %1886 = vmatprep.subr.mxu0 0.0
    %1887 = vmatpush1.msra.mxu0 0.0
    %1888 = vmatprep.subr.mxu0 0.0
    %1889 = vmatpush1.msra.mxu0 0.0
    %1890 = vmatprep.subr.mxu0 0.0
    %1891 = vmatpush1.msra.mxu0 0.0
    %1892 = vmatprep.subr.mxu0 0.0
    %1893 = vmatpush1.msra.mxu0 0.0
    %1894 = vmatprep.subr.mxu0 0.0
    %1895 = vmatpush1.msra.mxu0 0.0
    %1896 = vmatprep.subr.mxu0 0.0
    %1897 = vmatpush1.msra.mxu0 0.0
    %1898 = vmatprep.subr.mxu0 0.0
    %1899 = vmatpush1.msra.mxu0 0.0
    %1900 = vmatprep.subr.mxu0 0.0
    %1901 = vmatpush1.msra.mxu0 0.0
    %1902 = vmatprep.subr.mxu0 0.0
    %1903 = vmatpush1.msra.mxu0 0.0
    %1904 = vmatprep.subr.mxu0 0.0
    %1905 = vmatpush1.msra.mxu0 0.0
    %1906 = vmatprep.subr.mxu0 0.0
    %1907 = vmatpush1.msra.mxu0 0.0
    %1908 = vmatprep.subr.mxu0 0.0
    %1909 = vmatpush1.msra.mxu0 0.0
    %1910 = vmatprep.subr.mxu0 0.0
    %1911 = vmatpush1.msra.mxu0 0.0
    %1912 = vmatprep.subr.mxu0 0.0
    %1913 = vmatpush1.msra.mxu0 0.0
    %1914 = vmatprep.subr.mxu0 0.0
    %1915 = vmatpush1.msra.mxu0 0.0
    %1916 = vmatprep.subr.mxu0 0.0
    %1917 = vmatpush1.msra.mxu0 0.0
    %1918 = vmatprep.subr.mxu0 0.0
    %1919 = vmatpush1.msra.mxu0 0.0
    %1920 = vmatprep.subr.mxu0 0.0
    %1921 = vmatpush1.msra.mxu0 0.0
    %1922 = vmatprep.subr.mxu0 0.0
    %1923 = vmatpush1.msra.mxu0 0.0
    %1924 = vmatprep.subr.mxu0 0.0
    %1925 = vmatpush1.msra.mxu0 0.0
    %1926 = vmatprep.subr.mxu0 0.0
    %1927 = vmatpush1.msra.mxu0 0.0
    %1928 = vmatprep.subr.mxu0 0.0
    %1929 = vmatpush1.msra.mxu0 0.0
    %1930 = vmatprep.subr.mxu0 0.0
    %1931 = vmatpush1.msra.mxu0 0.0
    %1932 = vmatprep.subr.mxu0 0.0
    %1933 = vmatpush1.msra.mxu0 0.0
    %1934 = vmatprep.subr.mxu0 0.0
    %1935 = vmatpush1.msra.mxu0 0.0
    %1936 = vmatprep.subr.mxu0 0.0
    %1937 = vmatpush1.msra.mxu0 0.0
    %1938 = vmatprep.subr.mxu0 0.0
    %1939 = vmatpush1.msra.mxu0 0.0
    %1940 = vmatprep.subr.mxu0 0.0
    %1941 = vmatpush1.msra.mxu0 0.0
    %1942 = vmatprep.mubr.f32.mxu0 0.0
    %1943 = vmatmul.mubr.f32.gmra.mrb[0].mxu0 %v1450
    %v1944 = vpop.f32.mrb[0].mxu0
    %v1945 = vadd.f32 0.0, %v1944
    %v1946 = vpop.f32.mrb[0].mxu0
    %v1947 = vadd.f32 0.0, %v1946
    %1948 = vmatprep.mubr.f32.mxu0 0.0
    %1949 = vmatmul.mubr.f32.gmra.mrb[0].mxu0 %v1452
    %v1950 = vpop.f32.mrb[0].mxu0
    %v1951 = vadd.f32 0.0, %v1950
    %v1952 = vpop.f32.mrb[0].mxu0
    %v1953 = vadd.f32 0.0, %v1952
    %1954 = vdwg.mxu0
    %1955 = vmatprep.subr.mxu0 0.0
    %1956 = vmatpush1.msra.mxu0 %v1491
    %1957 = vmatprep.subr.mxu0 0.0
    %1958 = vmatpush1.msra.mxu0 0.0
    %1959 = vmatprep.subr.mxu0 0.0
    %1960 = vmatpush1.msra.mxu0 0.0
    %1961 = vmatprep.subr.mxu0 0.0
    %1962 = vmatpush1.msra.mxu0 0.0
    %1963 = vmatprep.subr.mxu0 0.0
    %1964 = vmatpush1.msra.mxu0 0.0
    %1965 = vmatprep.subr.mxu0 0.0
    %1966 = vmatpush1.msra.mxu0 0.0
    %1967 = vmatprep.subr.mxu0 0.0
    %1968 = vmatpush1.msra.mxu0 0.0
    %1969 = vmatprep.subr.mxu0 0.0
    %1970 = vmatpush1.msra.mxu0 0.0
    %1971 = vmatprep.subr.mxu0 0.0
    %1972 = vmatpush1.msra.mxu0 0.0
    %1973 = vmatprep.subr.mxu0 0.0
    %1974 = vmatpush1.msra.mxu0 0.0
    %1975 = vmatprep.subr.mxu0 0.0
    %1976 = vmatpush1.msra.mxu0 0.0
    %1977 = vmatprep.subr.mxu0 0.0
    %1978 = vmatpush1.msra.mxu0 0.0
    %1979 = vmatprep.subr.mxu0 0.0
    %1980 = vmatpush1.msra.mxu0 0.0
    %1981 = vmatprep.subr.mxu0 0.0
    %1982 = vmatpush1.msra.mxu0 0.0
    %1983 = vmatprep.subr.mxu0 0.0
    %1984 = vmatpush1.msra.mxu0 0.0
    %1985 = vmatprep.subr.mxu0 0.0
    %1986 = vmatpush1.msra.mxu0 0.0
    %1987 = vmatprep.subr.mxu0 0.0
    %1988 = vmatpush1.msra.mxu0 0.0
    %1989 = vmatprep.subr.mxu0 0.0
    %1990 = vmatpush1.msra.mxu0 0.0
    %1991 = vmatprep.subr.mxu0 0.0
    %1992 = vmatpush1.msra.mxu0 0.0
    %1993 = vmatprep.subr.mxu0 0.0
    %1994 = vmatpush1.msra.mxu0 0.0
    %1995 = vmatprep.subr.mxu0 0.0
    %1996 = vmatpush1.msra.mxu0 0.0
    %1997 = vmatprep.subr.mxu0 0.0
    %1998 = vmatpush1.msra.mxu0 0.0
    %1999 = vmatprep.subr.mxu0 0.0
    %2000 = vmatpush1.msra.mxu0 0.0
    %2001 = vmatprep.subr.mxu0 0.0
    %2002 = vmatpush1.msra.mxu0 0.0
    %2003 = vmatprep.subr.mxu0 0.0
    %2004 = vmatpush1.msra.mxu0 0.0
    %2005 = vmatprep.subr.mxu0 0.0
    %2006 = vmatpush1.msra.mxu0 0.0
    %2007 = vmatprep.subr.mxu0 0.0
    %2008 = vmatpush1.msra.mxu0 0.0
    %2009 = vmatprep.subr.mxu0 0.0
    %2010 = vmatpush1.msra.mxu0 0.0
    %2011 = vmatprep.subr.mxu0 0.0
    %2012 = vmatpush1.msra.mxu0 0.0
    %2013 = vmatprep.subr.mxu0 0.0
    %2014 = vmatpush1.msra.mxu0 0.0
    %2015 = vmatprep.subr.mxu0 0.0
    %2016 = vmatpush1.msra.mxu0 0.0
    %2017 = vmatprep.subr.mxu0 0.0
    %2018 = vmatpush1.msra.mxu0 0.0
    %2019 = vmatprep.mubr.f32.mxu0 0.0
    %2020 = vmatmul.mubr.f32.gmra.mrb[0].mxu0 %v1450
    %v2021 = vpop.f32.mrb[0].mxu0
    %v2022 = vadd.f32 0.0, %v2021
    %v2023 = vpop.f32.mrb[0].mxu0
    %2024 = vmatprep.mubr.f32.mxu0 0.0
    %2025 = vmatmul.mubr.f32.gmra.mrb[0].mxu0 %v1452
    %v2026 = vpop.f32.mrb[0].mxu0
    %v2027 = vadd.f32 0.0, %v2026
    %v2028 = vpop.f32.mrb[0].mxu0
    %2029 = vdwg.mxu0
    %v2030 = vadd.f32 %v1406, %v1560
    %v2031 = vadd.f32 %v1407, %v1562
    %v2032 = vadd.f32 %v1408, %v1637
    %v2033 = vadd.f32 %v1409, %v1639
    %v2034 = vadd.f32 %v1410, %v1714
    %v2035 = vadd.f32 %v1411, %v1716
    %v2036 = vadd.f32 %v1412, %v1791
    %v2037 = vadd.f32 %v1413, %v1793
    %v2038 = vadd.f32 %v1414, %v1868
    %v2039 = vadd.f32 %v1415, %v1870
    %v2040 = vadd.f32 %v1416, %v1945
    %v2041 = vadd.f32 %v1417, %v1947
    %v2042 = vadd.f32 %v1418, %v2022
    %v2043 = vadd.f32 %v1419, %v1566
    %v2044 = vadd.f32 %v1420, %v1568
    %v2045 = vadd.f32 %v1421, %v1643
    %v2046 = vadd.f32 %v1422, %v1645
    %v2047 = vadd.f32 %v1423, %v1720
    %v2048 = vadd.f32 %v1424, %v1722
    %v2049 = vadd.f32 %v1425, %v1797
    %v2050 = vadd.f32 %v1426, %v1799
    %v2051 = vadd.f32 %v1427, %v1874
    %v2052 = vadd.f32 %v1428, %v1876
    %v2053 = vadd.f32 %v1429, %v1951
    %v2054 = vadd.f32 %v1430, %v1953
    %v2055 = vadd.f32 %v1431, %v2027
    %v2056 = vld [vmem:[%s13 + $0x138] sm:$0x7]
    %v2057 = vld [vmem:[%s13 + $0x140] sm:$0x7]
    %v2058 = vld [vmem:[%s13 + $0x148] sm:$0x7]
    %v2059 = vld [vmem:[%s13 + $0x150] sm:$0x7]
    %v2060 = vld [vmem:[%s13 + $0x158] sm:$0x7]
    %v2061 = vld [vmem:[%s13 + $0x160] sm:$0x7]
    %v2062 = vld [vmem:[%s13 + $0x168] sm:$0x7]
    %v2063 = vld [vmem:[%s13 + $0x170] sm:$0x7]
    %v2064 = vld [vmem:[%s13 + $0x178] sm:$0x7]
    %v2065 = vld [vmem:[%s13 + $0x180] sm:$0x7]
    %v2066 = vld [vmem:[%s13 + $0x188] sm:$0x7]
    %v2067 = vld [vmem:[%s13 + $0x190] sm:$0x7]
    %v2068 = vld [vmem:[%s13 + $0x198] sm:$0x7]
    %2069 = vrot.lane.b32.xlu0 %v552, 100
    %v2070 = vpop.permute.xlu0 %2069
    %2071 = vrot.lane.b32.xlu0 %v553, 100
    %v2072 = vpop.permute.xlu0 %2071
    %vm2073 = vcmask 23552
    %v2074 = vsel %vm2073, %v2070, 0
    %v2076 = vsel %vm2073, %v2072, 0
    %vm2078 = vcmask 1042432
    %v2080 = vsel %vm2078, %v2056, 0
    %v2083 = vsel %vm2078, %v2057, 0
    %v2086 = vsel %vm2078, %v2058, 0
    %v2089 = vsel %vm2078, %v2059, 0
    %v2092 = vsel %vm2078, %v2060, 0
    %v2095 = vsel %vm2078, %v2061, 0
    %v2098 = vsel %vm2078, %v2062, 0
    %v2101 = vsel %vm2078, %v2063, 0
    %v2104 = vsel %vm2078, %v2064, 0
    %v2107 = vsel %vm2078, %v2065, 0
    %v2110 = vsel %vm2078, %v2066, 0
    %v2113 = vsel %vm2078, %v2067, 0
    %v2116 = vsel %vm2078, %v2068, 0
    %2118 = vmatprep.subr.mxu0 %v2083
    %2119 = vmatpush1.msra.mxu0 %v2080
    %2120 = vmatprep.subr.mxu0 0.0
    %2121 = vmatpush1.msra.mxu0 0.0
    %2122 = vmatprep.subr.mxu0 0.0
    %2123 = vmatpush1.msra.mxu0 0.0
    %2124 = vmatprep.subr.mxu0 0.0
    %2125 = vmatpush1.msra.mxu0 0.0
    %2126 = vmatprep.subr.mxu0 0.0
    %2127 = vmatpush1.msra.mxu0 0.0
    %2128 = vmatprep.subr.mxu0 0.0
    %2129 = vmatpush1.msra.mxu0 0.0
    %2130 = vmatprep.subr.mxu0 0.0
    %2131 = vmatpush1.msra.mxu0 0.0
    %2132 = vmatprep.subr.mxu0 0.0
    %2133 = vmatpush1.msra.mxu0 0.0
    %2134 = vmatprep.subr.mxu0 0.0
    %2135 = vmatpush1.msra.mxu0 0.0
    %2136 = vmatprep.subr.mxu0 0.0
    %2137 = vmatpush1.msra.mxu0 0.0
    %2138 = vmatprep.subr.mxu0 0.0
    %2139 = vmatpush1.msra.mxu0 0.0
    %2140 = vmatprep.subr.mxu0 0.0
    %2141 = vmatpush1.msra.mxu0 0.0
    %2142 = vmatprep.subr.mxu0 0.0
    %2143 = vmatpush1.msra.mxu0 0.0
    %2144 = vmatprep.subr.mxu0 0.0
    %2145 = vmatpush1.msra.mxu0 0.0
    %2146 = vmatprep.subr.mxu0 0.0
    %2147 = vmatpush1.msra.mxu0 0.0
    %2148 = vmatprep.subr.mxu0 0.0
    %2149 = vmatpush1.msra.mxu0 0.0
    %2150 = vmatprep.subr.mxu0 0.0
    %2151 = vmatpush1.msra.mxu0 0.0
    %2152 = vmatprep.subr.mxu0 0.0
    %2153 = vmatpush1.msra.mxu0 0.0
    %2154 = vmatprep.subr.mxu0 0.0
    %2155 = vmatpush1.msra.mxu0 0.0
    %2156 = vmatprep.subr.mxu0 0.0
    %2157 = vmatpush1.msra.mxu0 0.0
    %2158 = vmatprep.subr.mxu0 0.0
    %2159 = vmatpush1.msra.mxu0 0.0
    %2160 = vmatprep.subr.mxu0 0.0
    %2161 = vmatpush1.msra.mxu0 0.0
    %2162 = vmatprep.subr.mxu0 0.0
    %2163 = vmatpush1.msra.mxu0 0.0
    %2164 = vmatprep.subr.mxu0 0.0
    %2165 = vmatpush1.msra.mxu0 0.0
    %2166 = vmatprep.subr.mxu0 0.0
    %2167 = vmatpush1.msra.mxu0 0.0
    %2168 = vmatprep.subr.mxu0 0.0
    %2169 = vmatpush1.msra.mxu0 0.0
    %2170 = vmatprep.subr.mxu0 0.0
    %2171 = vmatpush1.msra.mxu0 0.0
    %2172 = vmatprep.subr.mxu0 0.0
    %2173 = vmatpush1.msra.mxu0 0.0
    %2174 = vmatprep.subr.mxu0 0.0
    %2175 = vmatpush1.msra.mxu0 0.0
    %2176 = vmatprep.subr.mxu0 0.0
    %2177 = vmatpush1.msra.mxu0 0.0
    %2178 = vmatprep.subr.mxu0 0.0
    %2179 = vmatpush1.msra.mxu0 0.0
    %2180 = vmatprep.subr.mxu0 0.0
    %2181 = vmatpush1.msra.mxu0 0.0
    %2182 = vmatprep.mubr.f32.mxu0 0.0
    %2183 = vmatmul.mubr.f32.gmra.mrb[0].mxu0 %v2074
    %v2184 = vpop.f32.mrb[0].mxu0
    %v2185 = vadd.f32 0.0, %v2184
    %v2186 = vpop.f32.mrb[0].mxu0
    %v2187 = vadd.f32 0.0, %v2186
    %2188 = vmatprep.mubr.f32.mxu0 0.0
    %2189 = vmatmul.mubr.f32.gmra.mrb[0].mxu0 %v2076
    %v2190 = vpop.f32.mrb[0].mxu0
    %v2191 = vadd.f32 0.0, %v2190
    %v2192 = vpop.f32.mrb[0].mxu0
    %v2193 = vadd.f32 0.0, %v2192
    %2194 = vdwg.mxu0
    %2195 = vmatprep.subr.mxu0 %v2089
    %2196 = vmatpush1.msra.mxu0 %v2086
    %2197 = vmatprep.subr.mxu0 0.0
    %2198 = vmatpush1.msra.mxu0 0.0
    %2199 = vmatprep.subr.mxu0 0.0
    %2200 = vmatpush1.msra.mxu0 0.0
    %2201 = vmatprep.subr.mxu0 0.0
    %2202 = vmatpush1.msra.mxu0 0.0
    %2203 = vmatprep.subr.mxu0 0.0
    %2204 = vmatpush1.msra.mxu0 0.0
    %2205 = vmatprep.subr.mxu0 0.0
    %2206 = vmatpush1.msra.mxu0 0.0
    %2207 = vmatprep.subr.mxu0 0.0
    %2208 = vmatpush1.msra.mxu0 0.0
    %2209 = vmatprep.subr.mxu0 0.0
    %2210 = vmatpush1.msra.mxu0 0.0
    %2211 = vmatprep.subr.mxu0 0.0
    %2212 = vmatpush1.msra.mxu0 0.0
    %2213 = vmatprep.subr.mxu0 0.0
    %2214 = vmatpush1.msra.mxu0 0.0
    %2215 = vmatprep.subr.mxu0 0.0
    %2216 = vmatpush1.msra.mxu0 0.0
    %2217 = vmatprep.subr.mxu0 0.0
    %2218 = vmatpush1.msra.mxu0 0.0
    %2219 = vmatprep.subr.mxu0 0.0
    %2220 = vmatpush1.msra.mxu0 0.0
    %2221 = vmatprep.subr.mxu0 0.0
    %2222 = vmatpush1.msra.mxu0 0.0
    %2223 = vmatprep.subr.mxu0 0.0
    %2224 = vmatpush1.msra.mxu0 0.0
    %2225 = vmatprep.subr.mxu0 0.0
    %2226 = vmatpush1.msra.mxu0 0.0
    %2227 = vmatprep.subr.mxu0 0.0
    %2228 = vmatpush1.msra.mxu0 0.0
    %2229 = vmatprep.subr.mxu0 0.0
    %2230 = vmatpush1.msra.mxu0 0.0
    %2231 = vmatprep.subr.mxu0 0.0
    %2232 = vmatpush1.msra.mxu0 0.0
    %2233 = vmatprep.subr.mxu0 0.0
    %2234 = vmatpush1.msra.mxu0 0.0
    %2235 = vmatprep.subr.mxu0 0.0
    %2236 = vmatpush1.msra.mxu0 0.0
    %2237 = vmatprep.subr.mxu0 0.0
    %2238 = vmatpush1.msra.mxu0 0.0
    %2239 = vmatprep.subr.mxu0 0.0
    %2240 = vmatpush1.msra.mxu0 0.0
    %2241 = vmatprep.subr.mxu0 0.0
    %2242 = vmatpush1.msra.mxu0 0.0
    %2243 = vmatprep.subr.mxu0 0.0
    %2244 = vmatpush1.msra.mxu0 0.0
    %2245 = vmatprep.subr.mxu0 0.0
    %2246 = vmatpush1.msra.mxu0 0.0
    %2247 = vmatprep.subr.mxu0 0.0
    %2248 = vmatpush1.msra.mxu0 0.0
    %2249 = vmatprep.subr.mxu0 0.0
    %2250 = vmatpush1.msra.mxu0 0.0
    %2251 = vmatprep.subr.mxu0 0.0
    %2252 = vmatpush1.msra.mxu0 0.0
    %2253 = vmatprep.subr.mxu0 0.0
    %2254 = vmatpush1.msra.mxu0 0.0
    %2255 = vmatprep.subr.mxu0 0.0
    %2256 = vmatpush1.msra.mxu0 0.0
    %2257 = vmatprep.subr.mxu0 0.0
    %2258 = vmatpush1.msra.mxu0 0.0
    %2259 = vmatprep.mubr.f32.mxu0 0.0
    %2260 = vmatmul.mubr.f32.gmra.mrb[0].mxu0 %v2074
    %v2261 = vpop.f32.mrb[0].mxu0
    %v2262 = vadd.f32 0.0, %v2261
    %v2263 = vpop.f32.mrb[0].mxu0
    %v2264 = vadd.f32 0.0, %v2263
    %2265 = vmatprep.mubr.f32.mxu0 0.0
    %2266 = vmatmul.mubr.f32.gmra.mrb[0].mxu0 %v2076
    %v2267 = vpop.f32.mrb[0].mxu0
    %v2268 = vadd.f32 0.0, %v2267
    %v2269 = vpop.f32.mrb[0].mxu0
    %v2270 = vadd.f32 0.0, %v2269
    %2271 = vdwg.mxu0
    %2272 = vmatprep.subr.mxu0 %v2095
    %2273 = vmatpush1.msra.mxu0 %v2092
    %2274 = vmatprep.subr.mxu0 0.0
    %2275 = vmatpush1.msra.mxu0 0.0
    %2276 = vmatprep.subr.mxu0 0.0
    %2277 = vmatpush1.msra.mxu0 0.0
    %2278 = vmatprep.subr.mxu0 0.0
    %2279 = vmatpush1.msra.mxu0 0.0
    %2280 = vmatprep.subr.mxu0 0.0
    %2281 = vmatpush1.msra.mxu0 0.0
    %2282 = vmatprep.subr.mxu0 0.0
    %2283 = vmatpush1.msra.mxu0 0.0
    %2284 = vmatprep.subr.mxu0 0.0
    %2285 = vmatpush1.msra.mxu0 0.0
    %2286 = vmatprep.subr.mxu0 0.0
    %2287 = vmatpush1.msra.mxu0 0.0
    %2288 = vmatprep.subr.mxu0 0.0
    %2289 = vmatpush1.msra.mxu0 0.0
    %2290 = vmatprep.subr.mxu0 0.0
    %2291 = vmatpush1.msra.mxu0 0.0
    %2292 = vmatprep.subr.mxu0 0.0
    %2293 = vmatpush1.msra.mxu0 0.0
    %2294 = vmatprep.subr.mxu0 0.0
    %2295 = vmatpush1.msra.mxu0 0.0
    %2296 = vmatprep.subr.mxu0 0.0
    %2297 = vmatpush1.msra.mxu0 0.0
    %2298 = vmatprep.subr.mxu0 0.0
    %2299 = vmatpush1.msra.mxu0 0.0
    %2300 = vmatprep.subr.mxu0 0.0
    %2301 = vmatpush1.msra.mxu0 0.0
    %2302 = vmatprep.subr.mxu0 0.0
    %2303 = vmatpush1.msra.mxu0 0.0
    %2304 = vmatprep.subr.mxu0 0.0
    %2305 = vmatpush1.msra.mxu0 0.0
    %2306 = vmatprep.subr.mxu0 0.0
    %2307 = vmatpush1.msra.mxu0 0.0
    %2308 = vmatprep.subr.mxu0 0.0
    %2309 = vmatpush1.msra.mxu0 0.0
    %2310 = vmatprep.subr.mxu0 0.0
    %2311 = vmatpush1.msra.mxu0 0.0
    %2312 = vmatprep.subr.mxu0 0.0
    %2313 = vmatpush1.msra.mxu0 0.0
    %2314 = vmatprep.subr.mxu0 0.0
    %2315 = vmatpush1.msra.mxu0 0.0
    %2316 = vmatprep.subr.mxu0 0.0
    %2317 = vmatpush1.msra.mxu0 0.0
    %2318 = vmatprep.subr.mxu0 0.0
    %2319 = vmatpush1.msra.mxu0 0.0
    %2320 = vmatprep.subr.mxu0 0.0
    %2321 = vmatpush1.msra.mxu0 0.0
    %2322 = vmatprep.subr.mxu0 0.0
    %2323 = vmatpush1.msra.mxu0 0.0
    %2324 = vmatprep.subr.mxu0 0.0
    %2325 = vmatpush1.msra.mxu0 0.0
    %2326 = vmatprep.subr.mxu0 0.0
    %2327 = vmatpush1.msra.mxu0 0.0
    %2328 = vmatprep.subr.mxu0 0.0
    %2329 = vmatpush1.msra.mxu0 0.0
    %2330 = vmatprep.subr.mxu0 0.0
    %2331 = vmatpush1.msra.mxu0 0.0
    %2332 = vmatprep.subr.mxu0 0.0
    %2333 = vmatpush1.msra.mxu0 0.0
    %2334 = vmatprep.subr.mxu0 0.0
    %2335 = vmatpush1.msra.mxu0 0.0
    %2336 = vmatprep.mubr.f32.mxu0 0.0
    %2337 = vmatmul.mubr.f32.gmra.mrb[0].mxu0 %v2074
    %v2338 = vpop.f32.mrb[0].mxu0
    %v2339 = vadd.f32 0.0, %v2338
    %v2340 = vpop.f32.mrb[0].mxu0
    %v2341 = vadd.f32 0.0, %v2340
    %2342 = vmatprep.mubr.f32.mxu0 0.0
    %2343 = vmatmul.mubr.f32.gmra.mrb[0].mxu0 %v2076
    %v2344 = vpop.f32.mrb[0].mxu0
    %v2345 = vadd.f32 0.0, %v2344
    %v2346 = vpop.f32.mrb[0].mxu0
    %v2347 = vadd.f32 0.0, %v2346
    %2348 = vdwg.mxu0
    %2349 = vmatprep.subr.mxu0 %v2101
    %2350 = vmatpush1.msra.mxu0 %v2098
    %2351 = vmatprep.subr.mxu0 0.0
    %2352 = vmatpush1.msra.mxu0 0.0
    %2353 = vmatprep.subr.mxu0 0.0
    %2354 = vmatpush1.msra.mxu0 0.0
    %2355 = vmatprep.subr.mxu0 0.0
    %2356 = vmatpush1.msra.mxu0 0.0
    %2357 = vmatprep.subr.mxu0 0.0
    %2358 = vmatpush1.msra.mxu0 0.0
    %2359 = vmatprep.subr.mxu0 0.0
    %2360 = vmatpush1.msra.mxu0 0.0
    %2361 = vmatprep.subr.mxu0 0.0
    %2362 = vmatpush1.msra.mxu0 0.0
    %2363 = vmatprep.subr.mxu0 0.0
    %2364 = vmatpush1.msra.mxu0 0.0
    %2365 = vmatprep.subr.mxu0 0.0
    %2366 = vmatpush1.msra.mxu0 0.0
    %2367 = vmatprep.subr.mxu0 0.0
    %2368 = vmatpush1.msra.mxu0 0.0
    %2369 = vmatprep.subr.mxu0 0.0
    %2370 = vmatpush1.msra.mxu0 0.0
    %2371 = vmatprep.subr.mxu0 0.0
    %2372 = vmatpush1.msra.mxu0 0.0
    %2373 = vmatprep.subr.mxu0 0.0
    %2374 = vmatpush1.msra.mxu0 0.0
    %2375 = vmatprep.subr.mxu0 0.0
    %2376 = vmatpush1.msra.mxu0 0.0
    %2377 = vmatprep.subr.mxu0 0.0
    %2378 = vmatpush1.msra.mxu0 0.0
    %2379 = vmatprep.subr.mxu0 0.0
    %2380 = vmatpush1.msra.mxu0 0.0
    %2381 = vmatprep.subr.mxu0 0.0
    %2382 = vmatpush1.msra.mxu0 0.0
    %2383 = vmatprep.subr.mxu0 0.0
    %2384 = vmatpush1.msra.mxu0 0.0
    %2385 = vmatprep.subr.mxu0 0.0
    %2386 = vmatpush1.msra.mxu0 0.0
    %2387 = vmatprep.subr.mxu0 0.0
    %2388 = vmatpush1.msra.mxu0 0.0
    %2389 = vmatprep.subr.mxu0 0.0
    %2390 = vmatpush1.msra.mxu0 0.0
    %2391 = vmatprep.subr.mxu0 0.0
    %2392 = vmatpush1.msra.mxu0 0.0
    %2393 = vmatprep.subr.mxu0 0.0
    %2394 = vmatpush1.msra.mxu0 0.0
    %2395 = vmatprep.subr.mxu0 0.0
    %2396 = vmatpush1.msra.mxu0 0.0
    %2397 = vmatprep.subr.mxu0 0.0
    %2398 = vmatpush1.msra.mxu0 0.0
    %2399 = vmatprep.subr.mxu0 0.0
    %2400 = vmatpush1.msra.mxu0 0.0
    %2401 = vmatprep.subr.mxu0 0.0
    %2402 = vmatpush1.msra.mxu0 0.0
    %2403 = vmatprep.subr.mxu0 0.0
    %2404 = vmatpush1.msra.mxu0 0.0
    %2405 = vmatprep.subr.mxu0 0.0
    %2406 = vmatpush1.msra.mxu0 0.0
    %2407 = vmatprep.subr.mxu0 0.0
    %2408 = vmatpush1.msra.mxu0 0.0
    %2409 = vmatprep.subr.mxu0 0.0
    %2410 = vmatpush1.msra.mxu0 0.0
    %2411 = vmatprep.subr.mxu0 0.0
    %2412 = vmatpush1.msra.mxu0 0.0
    %2413 = vmatprep.mubr.f32.mxu0 0.0
    %2414 = vmatmul.mubr.f32.gmra.mrb[0].mxu0 %v2074
    %v2415 = vpop.f32.mrb[0].mxu0
    %v2416 = vadd.f32 0.0, %v2415
    %v2417 = vpop.f32.mrb[0].mxu0
    %v2418 = vadd.f32 0.0, %v2417
    %2419 = vmatprep.mubr.f32.mxu0 0.0
    %2420 = vmatmul.mubr.f32.gmra.mrb[0].mxu0 %v2076
    %v2421 = vpop.f32.mrb[0].mxu0
    %v2422 = vadd.f32 0.0, %v2421
    %v2423 = vpop.f32.mrb[0].mxu0
    %v2424 = vadd.f32 0.0, %v2423
    %2425 = vdwg.mxu0
    %2426 = vmatprep.subr.mxu0 %v2107
    %2427 = vmatpush1.msra.mxu0 %v2104
    %2428 = vmatprep.subr.mxu0 0.0
    %2429 = vmatpush1.msra.mxu0 0.0
    %2430 = vmatprep.subr.mxu0 0.0
    %2431 = vmatpush1.msra.mxu0 0.0
    %2432 = vmatprep.subr.mxu0 0.0
    %2433 = vmatpush1.msra.mxu0 0.0
    %2434 = vmatprep.subr.mxu0 0.0
    %2435 = vmatpush1.msra.mxu0 0.0
    %2436 = vmatprep.subr.mxu0 0.0
    %2437 = vmatpush1.msra.mxu0 0.0
    %2438 = vmatprep.subr.mxu0 0.0
    %2439 = vmatpush1.msra.mxu0 0.0
    %2440 = vmatprep.subr.mxu0 0.0
    %2441 = vmatpush1.msra.mxu0 0.0
    %2442 = vmatprep.subr.mxu0 0.0
    %2443 = vmatpush1.msra.mxu0 0.0
    %2444 = vmatprep.subr.mxu0 0.0
    %2445 = vmatpush1.msra.mxu0 0.0
    %2446 = vmatprep.subr.mxu0 0.0
    %2447 = vmatpush1.msra.mxu0 0.0
    %2448 = vmatprep.subr.mxu0 0.0
    %2449 = vmatpush1.msra.mxu0 0.0
    %2450 = vmatprep.subr.mxu0 0.0
    %2451 = vmatpush1.msra.mxu0 0.0
    %2452 = vmatprep.subr.mxu0 0.0
    %2453 = vmatpush1.msra.mxu0 0.0
    %2454 = vmatprep.subr.mxu0 0.0
    %2455 = vmatpush1.msra.mxu0 0.0
    %2456 = vmatprep.subr.mxu0 0.0
    %2457 = vmatpush1.msra.mxu0 0.0
    %2458 = vmatprep.subr.mxu0 0.0
    %2459 = vmatpush1.msra.mxu0 0.0
    %2460 = vmatprep.subr.mxu0 0.0
    %2461 = vmatpush1.msra.mxu0 0.0
    %2462 = vmatprep.subr.mxu0 0.0
    %2463 = vmatpush1.msra.mxu0 0.0
    %2464 = vmatprep.subr.mxu0 0.0
    %2465 = vmatpush1.msra.mxu0 0.0
    %2466 = vmatprep.subr.mxu0 0.0
    %2467 = vmatpush1.msra.mxu0 0.0
    %2468 = vmatprep.subr.mxu0 0.0
    %2469 = vmatpush1.msra.mxu0 0.0
    %2470 = vmatprep.subr.mxu0 0.0
    %2471 = vmatpush1.msra.mxu0 0.0
    %2472 = vmatprep.subr.mxu0 0.0
    %2473 = vmatpush1.msra.mxu0 0.0
    %2474 = vmatprep.subr.mxu0 0.0
    %2475 = vmatpush1.msra.mxu0 0.0
    %2476 = vmatprep.subr.mxu0 0.0
    %2477 = vmatpush1.msra.mxu0 0.0
    %2478 = vmatprep.subr.mxu0 0.0
    %2479 = vmatpush1.msra.mxu0 0.0
    %2480 = vmatprep.subr.mxu0 0.0
    %2481 = vmatpush1.msra.mxu0 0.0
    %2482 = vmatprep.subr.mxu0 0.0
    %2483 = vmatpush1.msra.mxu0 0.0
    %2484 = vmatprep.subr.mxu0 0.0
    %2485 = vmatpush1.msra.mxu0 0.0
    %2486 = vmatprep.subr.mxu0 0.0
    %2487 = vmatpush1.msra.mxu0 0.0
    %2488 = vmatprep.subr.mxu0 0.0
    %2489 = vmatpush1.msra.mxu0 0.0
    %2490 = vmatprep.mubr.f32.mxu0 0.0
    %2491 = vmatmul.mubr.f32.gmra.mrb[0].mxu0 %v2074
    %v2492 = vpop.f32.mrb[0].mxu0
    %v2493 = vadd.f32 0.0, %v2492
    %v2494 = vpop.f32.mrb[0].mxu0
    %v2495 = vadd.f32 0.0, %v2494
    %2496 = vmatprep.mubr.f32.mxu0 0.0
    %2497 = vmatmul.mubr.f32.gmra.mrb[0].mxu0 %v2076
    %v2498 = vpop.f32.mrb[0].mxu0
    %v2499 = vadd.f32 0.0, %v2498
    %v2500 = vpop.f32.mrb[0].mxu0
    %v2501 = vadd.f32 0.0, %v2500
    %2502 = vdwg.mxu0
    %2503 = vmatprep.subr.mxu0 %v2113
    %2504 = vmatpush1.msra.mxu0 %v2110
    %2505 = vmatprep.subr.mxu0 0.0
    %2506 = vmatpush1.msra.mxu0 0.0
    %2507 = vmatprep.subr.mxu0 0.0
    %2508 = vmatpush1.msra.mxu0 0.0
    %2509 = vmatprep.subr.mxu0 0.0
    %2510 = vmatpush1.msra.mxu0 0.0
    %2511 = vmatprep.subr.mxu0 0.0
    %2512 = vmatpush1.msra.mxu0 0.0
    %2513 = vmatprep.subr.mxu0 0.0
    %2514 = vmatpush1.msra.mxu0 0.0
    %2515 = vmatprep.subr.mxu0 0.0
    %2516 = vmatpush1.msra.mxu0 0.0
    %2517 = vmatprep.subr.mxu0 0.0
    %2518 = vmatpush1.msra.mxu0 0.0
    %2519 = vmatprep.subr.mxu0 0.0
    %2520 = vmatpush1.msra.mxu0 0.0
    %2521 = vmatprep.subr.mxu0 0.0
    %2522 = vmatpush1.msra.mxu0 0.0
    %2523 = vmatprep.subr.mxu0 0.0
    %2524 = vmatpush1.msra.mxu0 0.0
    %2525 = vmatprep.subr.mxu0 0.0
    %2526 = vmatpush1.msra.mxu0 0.0
    %2527 = vmatprep.subr.mxu0 0.0
    %2528 = vmatpush1.msra.mxu0 0.0
    %2529 = vmatprep.subr.mxu0 0.0
    %2530 = vmatpush1.msra.mxu0 0.0
    %2531 = vmatprep.subr.mxu0 0.0
    %2532 = vmatpush1.msra.mxu0 0.0
    %2533 = vmatprep.subr.mxu0 0.0
    %2534 = vmatpush1.msra.mxu0 0.0
    %2535 = vmatprep.subr.mxu0 0.0
    %2536 = vmatpush1.msra.mxu0 0.0
    %2537 = vmatprep.subr.mxu0 0.0
    %2538 = vmatpush1.msra.mxu0 0.0
    %2539 = vmatprep.subr.mxu0 0.0
    %2540 = vmatpush1.msra.mxu0 0.0
    %2541 = vmatprep.subr.mxu0 0.0
    %2542 = vmatpush1.msra.mxu0 0.0
    %2543 = vmatprep.subr.mxu0 0.0
    %2544 = vmatpush1.msra.mxu0 0.0
    %2545 = vmatprep.subr.mxu0 0.0
    %2546 = vmatpush1.msra.mxu0 0.0
    %2547 = vmatprep.subr.mxu0 0.0
    %2548 = vmatpush1.msra.mxu0 0.0
    %2549 = vmatprep.subr.mxu0 0.0
    %2550 = vmatpush1.msra.mxu0 0.0
    %2551 = vmatprep.subr.mxu0 0.0
    %2552 = vmatpush1.msra.mxu0 0.0
    %2553 = vmatprep.subr.mxu0 0.0
    %2554 = vmatpush1.msra.mxu0 0.0
    %2555 = vmatprep.subr.mxu0 0.0
    %2556 = vmatpush1.msra.mxu0 0.0
    %2557 = vmatprep.subr.mxu0 0.0
    %2558 = vmatpush1.msra.mxu0 0.0
    %2559 = vmatprep.subr.mxu0 0.0
    %2560 = vmatpush1.msra.mxu0 0.0
    %2561 = vmatprep.subr.mxu0 0.0
    %2562 = vmatpush1.msra.mxu0 0.0
    %2563 = vmatprep.subr.mxu0 0.0
    %2564 = vmatpush1.msra.mxu0 0.0
    %2565 = vmatprep.subr.mxu0 0.0
    %2566 = vmatpush1.msra.mxu0 0.0
    %2567 = vmatprep.mubr.f32.mxu0 0.0
    %2568 = vmatmul.mubr.f32.gmra.mrb[0].mxu0 %v2074
    %v2569 = vpop.f32.mrb[0].mxu0
    %v2570 = vadd.f32 0.0, %v2569
    %v2571 = vpop.f32.mrb[0].mxu0
    %v2572 = vadd.f32 0.0, %v2571
    %2573 = vmatprep.mubr.f32.mxu0 0.0
    %2574 = vmatmul.mubr.f32.gmra.mrb[0].mxu0 %v2076
    %v2575 = vpop.f32.mrb[0].mxu0
    %v2576 = vadd.f32 0.0, %v2575
    %v2577 = vpop.f32.mrb[0].mxu0
    %v2578 = vadd.f32 0.0, %v2577
    %2579 = vdwg.mxu0
    %2580 = vmatprep.subr.mxu0 0.0
    %2581 = vmatpush1.msra.mxu0 %v2116
    %2582 = vmatprep.subr.mxu0 0.0
    %2583 = vmatpush1.msra.mxu0 0.0
    %2584 = vmatprep.subr.mxu0 0.0
    %2585 = vmatpush1.msra.mxu0 0.0
    %2586 = vmatprep.subr.mxu0 0.0
    %2587 = vmatpush1.msra.mxu0 0.0
    %2588 = vmatprep.subr.mxu0 0.0
    %2589 = vmatpush1.msra.mxu0 0.0
    %2590 = vmatprep.subr.mxu0 0.0
    %2591 = vmatpush1.msra.mxu0 0.0
    %2592 = vmatprep.subr.mxu0 0.0
    %2593 = vmatpush1.msra.mxu0 0.0
    %2594 = vmatprep.subr.mxu0 0.0
    %2595 = vmatpush1.msra.mxu0 0.0
    %2596 = vmatprep.subr.mxu0 0.0
    %2597 = vmatpush1.msra.mxu0 0.0
    %2598 = vmatprep.subr.mxu0 0.0
    %2599 = vmatpush1.msra.mxu0 0.0
    %2600 = vmatprep.subr.mxu0 0.0
    %2601 = vmatpush1.msra.mxu0 0.0
    %2602 = vmatprep.subr.mxu0 0.0
    %2603 = vmatpush1.msra.mxu0 0.0
    %2604 = vmatprep.subr.mxu0 0.0
    %2605 = vmatpush1.msra.mxu0 0.0
    %2606 = vmatprep.subr.mxu0 0.0
    %2607 = vmatpush1.msra.mxu0 0.0
    %2608 = vmatprep.subr.mxu0 0.0
    %2609 = vmatpush1.msra.mxu0 0.0
    %2610 = vmatprep.subr.mxu0 0.0
    %2611 = vmatpush1.msra.mxu0 0.0
    %2612 = vmatprep.subr.mxu0 0.0
    %2613 = vmatpush1.msra.mxu0 0.0
    %2614 = vmatprep.subr.mxu0 0.0
    %2615 = vmatpush1.msra.mxu0 0.0
    %2616 = vmatprep.subr.mxu0 0.0
    %2617 = vmatpush1.msra.mxu0 0.0
    %2618 = vmatprep.subr.mxu0 0.0
    %2619 = vmatpush1.msra.mxu0 0.0
    %2620 = vmatprep.subr.mxu0 0.0
    %2621 = vmatpush1.msra.mxu0 0.0
    %2622 = vmatprep.subr.mxu0 0.0
    %2623 = vmatpush1.msra.mxu0 0.0
    %2624 = vmatprep.subr.mxu0 0.0
    %2625 = vmatpush1.msra.mxu0 0.0
    %2626 = vmatprep.subr.mxu0 0.0
    %2627 = vmatpush1.msra.mxu0 0.0
    %2628 = vmatprep.subr.mxu0 0.0
    %2629 = vmatpush1.msra.mxu0 0.0
    %2630 = vmatprep.subr.mxu0 0.0
    %2631 = vmatpush1.msra.mxu0 0.0
    %2632 = vmatprep.subr.mxu0 0.0
    %2633 = vmatpush1.msra.mxu0 0.0
    %2634 = vmatprep.subr.mxu0 0.0
    %2635 = vmatpush1.msra.mxu0 0.0
    %2636 = vmatprep.subr.mxu0 0.0
    %2637 = vmatpush1.msra.mxu0 0.0
    %2638 = vmatprep.subr.mxu0 0.0
    %2639 = vmatpush1.msra.mxu0 0.0
    %2640 = vmatprep.subr.mxu0 0.0
    %2641 = vmatpush1.msra.mxu0 0.0
    %2642 = vmatprep.subr.mxu0 0.0
    %2643 = vmatpush1.msra.mxu0 0.0
    %2644 = vmatprep.mubr.f32.mxu0 0.0
    %2645 = vmatmul.mubr.f32.gmra.mrb[0].mxu0 %v2074
    %v2646 = vpop.f32.mrb[0].mxu0
    %v2647 = vadd.f32 0.0, %v2646
    %v2648 = vpop.f32.mrb[0].mxu0
    %2649 = vmatprep.mubr.f32.mxu0 0.0
    %2650 = vmatmul.mubr.f32.gmra.mrb[0].mxu0 %v2076
    %v2651 = vpop.f32.mrb[0].mxu0
    %v2652 = vadd.f32 0.0, %v2651
    %v2653 = vpop.f32.mrb[0].mxu0
    %2654 = vdwg.mxu0
    %v2655 = vadd.f32 %v2030, %v2185
    %v2656 = vadd.f32 %v2031, %v2187
    %v2657 = vadd.f32 %v2032, %v2262
    %v2658 = vadd.f32 %v2033, %v2264
    %v2659 = vadd.f32 %v2034, %v2339
    %v2660 = vadd.f32 %v2035, %v2341
    %v2661 = vadd.f32 %v2036, %v2416
    %v2662 = vadd.f32 %v2037, %v2418
    %v2663 = vadd.f32 %v2038, %v2493
    %v2664 = vadd.f32 %v2039, %v2495
    %v2665 = vadd.f32 %v2040, %v2570
    %v2666 = vadd.f32 %v2041, %v2572
    %v2667 = vadd.f32 %v2042, %v2647
    %v2668 = vadd.f32 %v2043, %v2191
    %v2669 = vadd.f32 %v2044, %v2193
    %v2670 = vadd.f32 %v2045, %v2268
    %v2671 = vadd.f32 %v2046, %v2270
    %v2672 = vadd.f32 %v2047, %v2345
    %v2673 = vadd.f32 %v2048, %v2347
    %v2674 = vadd.f32 %v2049, %v2422
    %v2675 = vadd.f32 %v2050, %v2424
    %v2676 = vadd.f32 %v2051, %v2499
    %v2677 = vadd.f32 %v2052, %v2501
    %v2678 = vadd.f32 %v2053, %v2576
    %v2679 = vadd.f32 %v2054, %v2578
    %v2680 = vadd.f32 %v2055, %v2652
    %v2681 = vld [vmem:[%s13 + $0x1a0] sm:$0xff]
    %v2682 = vld [vmem:[%s13 + $0x1a8] sm:$0xff]
    %v2683 = vld [vmem:[%s13 + $0x1b0] sm:$0xff]
    %v2684 = vld [vmem:[%s13 + $0x1b8] sm:$0xff]
    %v2685 = vld [vmem:[%s13 + $0x1c0] sm:$0xff]
    %v2686 = vld [vmem:[%s13 + $0x1c8] sm:$0xff]
    %v2687 = vld [vmem:[%s13 + $0x1d0] sm:$0xff]
    %v2688 = vld [vmem:[%s13 + $0x1d8] sm:$0xff]
    %v2689 = vld [vmem:[%s13 + $0x1e0] sm:$0xff]
    %v2690 = vld [vmem:[%s13 + $0x1e8] sm:$0xff]
    %v2691 = vld [vmem:[%s13 + $0x1f0] sm:$0xff]
    %v2692 = vld [vmem:[%s13 + $0x1f8] sm:$0xff]
    %v2693 = vld [vmem:[%s13 + $0x200] sm:$0xff]
    %vm2694 = vcmask 64512
    %v2696 = vsel %vm2694, %v753, 0
    %v2699 = vsel %vm2694, %v754, 0
    %2701 = vmatprep.subr.mxu0 %v2682
    %2702 = vmatpush1.msra.mxu0 %v2681
    %2703 = vmatprep.subr.mxu0 0.0
    %2704 = vmatpush1.msra.mxu0 0.0
    %2705 = vmatprep.subr.mxu0 0.0
    %2706 = vmatpush1.msra.mxu0 0.0
    %2707 = vmatprep.subr.mxu0 0.0
    %2708 = vmatpush1.msra.mxu0 0.0
    %2709 = vmatprep.subr.mxu0 0.0
    %2710 = vmatpush1.msra.mxu0 0.0
    %2711 = vmatprep.subr.mxu0 0.0
    %2712 = vmatpush1.msra.mxu0 0.0
    %2713 = vmatprep.subr.mxu0 0.0
    %2714 = vmatpush1.msra.mxu0 0.0
    %2715 = vmatprep.subr.mxu0 0.0
    %2716 = vmatpush1.msra.mxu0 0.0
    %2717 = vmatprep.subr.mxu0 0.0
    %2718 = vmatpush1.msra.mxu0 0.0
    %2719 = vmatprep.subr.mxu0 0.0
    %2720 = vmatpush1.msra.mxu0 0.0
    %2721 = vmatprep.subr.mxu0 0.0
    %2722 = vmatpush1.msra.mxu0 0.0
    %2723 = vmatprep.subr.mxu0 0.0
    %2724 = vmatpush1.msra.mxu0 0.0
    %2725 = vmatprep.subr.mxu0 0.0
    %2726 = vmatpush1.msra.mxu0 0.0
    %2727 = vmatprep.subr.mxu0 0.0
    %2728 = vmatpush1.msra.mxu0 0.0
    %2729 = vmatprep.subr.mxu0 0.0
    %2730 = vmatpush1.msra.mxu0 0.0
    %2731 = vmatprep.subr.mxu0 0.0
    %2732 = vmatpush1.msra.mxu0 0.0
    %2733 = vmatprep.subr.mxu0 0.0
    %2734 = vmatpush1.msra.mxu0 0.0
    %2735 = vmatprep.subr.mxu0 0.0
    %2736 = vmatpush1.msra.mxu0 0.0
    %2737 = vmatprep.subr.mxu0 0.0
    %2738 = vmatpush1.msra.mxu0 0.0
    %2739 = vmatprep.subr.mxu0 0.0
    %2740 = vmatpush1.msra.mxu0 0.0
    %2741 = vmatprep.subr.mxu0 0.0
    %2742 = vmatpush1.msra.mxu0 0.0
    %2743 = vmatprep.subr.mxu0 0.0
    %2744 = vmatpush1.msra.mxu0 0.0
    %2745 = vmatprep.subr.mxu0 0.0
    %2746 = vmatpush1.msra.mxu0 0.0
    %2747 = vmatprep.subr.mxu0 0.0
    %2748 = vmatpush1.msra.mxu0 0.0
    %2749 = vmatprep.subr.mxu0 0.0
    %2750 = vmatpush1.msra.mxu0 0.0
    %2751 = vmatprep.subr.mxu0 0.0
    %2752 = vmatpush1.msra.mxu0 0.0
    %2753 = vmatprep.subr.mxu0 0.0
    %2754 = vmatpush1.msra.mxu0 0.0
    %2755 = vmatprep.subr.mxu0 0.0
    %2756 = vmatpush1.msra.mxu0 0.0
    %2757 = vmatprep.subr.mxu0 0.0
    %2758 = vmatpush1.msra.mxu0 0.0
    %2759 = vmatprep.subr.mxu0 0.0
    %2760 = vmatpush1.msra.mxu0 0.0
    %2761 = vmatprep.subr.mxu0 0.0
    %2762 = vmatpush1.msra.mxu0 0.0
    %2763 = vmatprep.subr.mxu0 0.0
    %2764 = vmatpush1.msra.mxu0 0.0
    %2765 = vmatprep.mubr.f32.mxu0 0.0
    %2766 = vmatmul.mubr.f32.gmra.mrb[0].mxu0 %v2696
    %v2767 = vpop.f32.mrb[0].mxu0
    %v2768 = vadd.f32 0.0, %v2767
    %v2769 = vpop.f32.mrb[0].mxu0
    %v2770 = vadd.f32 0.0, %v2769
    %2771 = vmatprep.mubr.f32.mxu0 0.0
    %2772 = vmatmul.mubr.f32.gmra.mrb[0].mxu0 %v2699
    %v2773 = vpop.f32.mrb[0].mxu0
    %v2774 = vadd.f32 0.0, %v2773
    %v2775 = vpop.f32.mrb[0].mxu0
    %v2776 = vadd.f32 0.0, %v2775
    %2777 = vdwg.mxu0
    %2778 = vmatprep.subr.mxu0 %v2684
    %2779 = vmatpush1.msra.mxu0 %v2683
    %2780 = vmatprep.subr.mxu0 0.0
    %2781 = vmatpush1.msra.mxu0 0.0
    %2782 = vmatprep.subr.mxu0 0.0
    %2783 = vmatpush1.msra.mxu0 0.0
    %2784 = vmatprep.subr.mxu0 0.0
    %2785 = vmatpush1.msra.mxu0 0.0
    %2786 = vmatprep.subr.mxu0 0.0
    %2787 = vmatpush1.msra.mxu0 0.0
    %2788 = vmatprep.subr.mxu0 0.0
    %2789 = vmatpush1.msra.mxu0 0.0
    %2790 = vmatprep.subr.mxu0 0.0
    %2791 = vmatpush1.msra.mxu0 0.0
    %2792 = vmatprep.subr.mxu0 0.0
    %2793 = vmatpush1.msra.mxu0 0.0
    %2794 = vmatprep.subr.mxu0 0.0
    %2795 = vmatpush1.msra.mxu0 0.0
    %2796 = vmatprep.subr.mxu0 0.0
    %2797 = vmatpush1.msra.mxu0 0.0
    %2798 = vmatprep.subr.mxu0 0.0
    %2799 = vmatpush1.msra.mxu0 0.0
    %2800 = vmatprep.subr.mxu0 0.0
    %2801 = vmatpush1.msra.mxu0 0.0
    %2802 = vmatprep.subr.mxu0 0.0
    %2803 = vmatpush1.msra.mxu0 0.0
    %2804 = vmatprep.subr.mxu0 0.0
    %2805 = vmatpush1.msra.mxu0 0.0
    %2806 = vmatprep.subr.mxu0 0.0
    %2807 = vmatpush1.msra.mxu0 0.0
    %2808 = vmatprep.subr.mxu0 0.0
    %2809 = vmatpush1.msra.mxu0 0.0
    %2810 = vmatprep.subr.mxu0 0.0
    %2811 = vmatpush1.msra.mxu0 0.0
    %2812 = vmatprep.subr.mxu0 0.0
    %2813 = vmatpush1.msra.mxu0 0.0
    %2814 = vmatprep.subr.mxu0 0.0
    %2815 = vmatpush1.msra.mxu0 0.0
    %2816 = vmatprep.subr.mxu0 0.0
    %2817 = vmatpush1.msra.mxu0 0.0
    %2818 = vmatprep.subr.mxu0 0.0
    %2819 = vmatpush1.msra.mxu0 0.0
    %2820 = vmatprep.subr.mxu0 0.0
    %2821 = vmatpush1.msra.mxu0 0.0
    %2822 = vmatprep.subr.mxu0 0.0
    %2823 = vmatpush1.msra.mxu0 0.0
    %2824 = vmatprep.subr.mxu0 0.0
    %2825 = vmatpush1.msra.mxu0 0.0
    %2826 = vmatprep.subr.mxu0 0.0
    %2827 = vmatpush1.msra.mxu0 0.0
    %2828 = vmatprep.subr.mxu0 0.0
    %2829 = vmatpush1.msra.mxu0 0.0
    %2830 = vmatprep.subr.mxu0 0.0
    %2831 = vmatpush1.msra.mxu0 0.0
    %2832 = vmatprep.subr.mxu0 0.0
    %2833 = vmatpush1.msra.mxu0 0.0
    %2834 = vmatprep.subr.mxu0 0.0
    %2835 = vmatpush1.msra.mxu0 0.0
    %2836 = vmatprep.subr.mxu0 0.0
    %2837 = vmatpush1.msra.mxu0 0.0
    %2838 = vmatprep.subr.mxu0 0.0
    %2839 = vmatpush1.msra.mxu0 0.0
    %2840 = vmatprep.subr.mxu0 0.0
    %2841 = vmatpush1.msra.mxu0 0.0
    %2842 = vmatprep.mubr.f32.mxu0 0.0
    %2843 = vmatmul.mubr.f32.gmra.mrb[0].mxu0 %v2696
    %v2844 = vpop.f32.mrb[0].mxu0
    %v2845 = vadd.f32 0.0, %v2844
    %v2846 = vpop.f32.mrb[0].mxu0
    %v2847 = vadd.f32 0.0, %v2846
    %2848 = vmatprep.mubr.f32.mxu0 0.0
    %2849 = vmatmul.mubr.f32.gmra.mrb[0].mxu0 %v2699
    %v2850 = vpop.f32.mrb[0].mxu0
    %v2851 = vadd.f32 0.0, %v2850
    %v2852 = vpop.f32.mrb[0].mxu0
    %v2853 = vadd.f32 0.0, %v2852
    %2854 = vdwg.mxu0
    %2855 = vmatprep.subr.mxu0 %v2686
    %2856 = vmatpush1.msra.mxu0 %v2685
    %2857 = vmatprep.subr.mxu0 0.0
    %2858 = vmatpush1.msra.mxu0 0.0
    %2859 = vmatprep.subr.mxu0 0.0
    %2860 = vmatpush1.msra.mxu0 0.0
    %2861 = vmatprep.subr.mxu0 0.0
    %2862 = vmatpush1.msra.mxu0 0.0
    %2863 = vmatprep.subr.mxu0 0.0
    %2864 = vmatpush1.msra.mxu0 0.0
    %2865 = vmatprep.subr.mxu0 0.0
    %2866 = vmatpush1.msra.mxu0 0.0
    %2867 = vmatprep.subr.mxu0 0.0
    %2868 = vmatpush1.msra.mxu0 0.0
    %2869 = vmatprep.subr.mxu0 0.0
    %2870 = vmatpush1.msra.mxu0 0.0
    %2871 = vmatprep.subr.mxu0 0.0
    %2872 = vmatpush1.msra.mxu0 0.0
    %2873 = vmatprep.subr.mxu0 0.0
    %2874 = vmatpush1.msra.mxu0 0.0
    %2875 = vmatprep.subr.mxu0 0.0
    %2876 = vmatpush1.msra.mxu0 0.0
    %2877 = vmatprep.subr.mxu0 0.0
    %2878 = vmatpush1.msra.mxu0 0.0
    %2879 = vmatprep.subr.mxu0 0.0
    %2880 = vmatpush1.msra.mxu0 0.0
    %2881 = vmatprep.subr.mxu0 0.0
    %2882 = vmatpush1.msra.mxu0 0.0
    %2883 = vmatprep.subr.mxu0 0.0
    %2884 = vmatpush1.msra.mxu0 0.0
    %2885 = vmatprep.subr.mxu0 0.0
    %2886 = vmatpush1.msra.mxu0 0.0
    %2887 = vmatprep.subr.mxu0 0.0
    %2888 = vmatpush1.msra.mxu0 0.0
    %2889 = vmatprep.subr.mxu0 0.0
    %2890 = vmatpush1.msra.mxu0 0.0
    %2891 = vmatprep.subr.mxu0 0.0
    %2892 = vmatpush1.msra.mxu0 0.0
    %2893 = vmatprep.subr.mxu0 0.0
    %2894 = vmatpush1.msra.mxu0 0.0
    %2895 = vmatprep.subr.mxu0 0.0
    %2896 = vmatpush1.msra.mxu0 0.0
    %2897 = vmatprep.subr.mxu0 0.0
    %2898 = vmatpush1.msra.mxu0 0.0
    %2899 = vmatprep.subr.mxu0 0.0
    %2900 = vmatpush1.msra.mxu0 0.0
    %2901 = vmatprep.subr.mxu0 0.0
    %2902 = vmatpush1.msra.mxu0 0.0
    %2903 = vmatprep.subr.mxu0 0.0
    %2904 = vmatpush1.msra.mxu0 0.0
    %2905 = vmatprep.subr.mxu0 0.0
    %2906 = vmatpush1.msra.mxu0 0.0
    %2907 = vmatprep.subr.mxu0 0.0
    %2908 = vmatpush1.msra.mxu0 0.0
    %2909 = vmatprep.subr.mxu0 0.0
    %2910 = vmatpush1.msra.mxu0 0.0
    %2911 = vmatprep.subr.mxu0 0.0
    %2912 = vmatpush1.msra.mxu0 0.0
    %2913 = vmatprep.subr.mxu0 0.0
    %2914 = vmatpush1.msra.mxu0 0.0
    %2915 = vmatprep.subr.mxu0 0.0
    %2916 = vmatpush1.msra.mxu0 0.0
    %2917 = vmatprep.subr.mxu0 0.0
    %2918 = vmatpush1.msra.mxu0 0.0
    %2919 = vmatprep.mubr.f32.mxu0 0.0
    %2920 = vmatmul.mubr.f32.gmra.mrb[0].mxu0 %v2696
    %v2921 = vpop.f32.mrb[0].mxu0
    %v2922 = vadd.f32 0.0, %v2921
    %v2923 = vpop.f32.mrb[0].mxu0
    %v2924 = vadd.f32 0.0, %v2923
    %2925 = vmatprep.mubr.f32.mxu0 0.0
    %2926 = vmatmul.mubr.f32.gmra.mrb[0].mxu0 %v2699
    %v2927 = vpop.f32.mrb[0].mxu0
    %v2928 = vadd.f32 0.0, %v2927
    %v2929 = vpop.f32.mrb[0].mxu0
    %v2930 = vadd.f32 0.0, %v2929
    %2931 = vdwg.mxu0
    %2932 = vmatprep.subr.mxu0 %v2688
    %2933 = vmatpush1.msra.mxu0 %v2687
    %2934 = vmatprep.subr.mxu0 0.0
    %2935 = vmatpush1.msra.mxu0 0.0
    %2936 = vmatprep.subr.mxu0 0.0
    %2937 = vmatpush1.msra.mxu0 0.0
    %2938 = vmatprep.subr.mxu0 0.0
    %2939 = vmatpush1.msra.mxu0 0.0
    %2940 = vmatprep.subr.mxu0 0.0
    %2941 = vmatpush1.msra.mxu0 0.0
    %2942 = vmatprep.subr.mxu0 0.0
    %2943 = vmatpush1.msra.mxu0 0.0
    %2944 = vmatprep.subr.mxu0 0.0
    %2945 = vmatpush1.msra.mxu0 0.0
    %2946 = vmatprep.subr.mxu0 0.0
    %2947 = vmatpush1.msra.mxu0 0.0
    %2948 = vmatprep.subr.mxu0 0.0
    %2949 = vmatpush1.msra.mxu0 0.0
    %2950 = vmatprep.subr.mxu0 0.0
    %2951 = vmatpush1.msra.mxu0 0.0
    %2952 = vmatprep.subr.mxu0 0.0
    %2953 = vmatpush1.msra.mxu0 0.0
    %2954 = vmatprep.subr.mxu0 0.0
    %2955 = vmatpush1.msra.mxu0 0.0
    %2956 = vmatprep.subr.mxu0 0.0
    %2957 = vmatpush1.msra.mxu0 0.0
    %2958 = vmatprep.subr.mxu0 0.0
    %2959 = vmatpush1.msra.mxu0 0.0
    %2960 = vmatprep.subr.mxu0 0.0
    %2961 = vmatpush1.msra.mxu0 0.0
    %2962 = vmatprep.subr.mxu0 0.0
    %2963 = vmatpush1.msra.mxu0 0.0
    %2964 = vmatprep.subr.mxu0 0.0
    %2965 = vmatpush1.msra.mxu0 0.0
    %2966 = vmatprep.subr.mxu0 0.0
    %2967 = vmatpush1.msra.mxu0 0.0
    %2968 = vmatprep.subr.mxu0 0.0
    %2969 = vmatpush1.msra.mxu0 0.0
    %2970 = vmatprep.subr.mxu0 0.0
    %2971 = vmatpush1.msra.mxu0 0.0
    %2972 = vmatprep.subr.mxu0 0.0
    %2973 = vmatpush1.msra.mxu0 0.0
    %2974 = vmatprep.subr.mxu0 0.0
    %2975 = vmatpush1.msra.mxu0 0.0
    %2976 = vmatprep.subr.mxu0 0.0
    %2977 = vmatpush1.msra.mxu0 0.0
    %2978 = vmatprep.subr.mxu0 0.0
    %2979 = vmatpush1.msra.mxu0 0.0
    %2980 = vmatprep.subr.mxu0 0.0
    %2981 = vmatpush1.msra.mxu0 0.0
    %2982 = vmatprep.subr.mxu0 0.0
    %2983 = vmatpush1.msra.mxu0 0.0
    %2984 = vmatprep.subr.mxu0 0.0
    %2985 = vmatpush1.msra.mxu0 0.0
    %2986 = vmatprep.subr.mxu0 0.0
    %2987 = vmatpush1.msra.mxu0 0.0
    %2988 = vmatprep.subr.mxu0 0.0
    %2989 = vmatpush1.msra.mxu0 0.0
    %2990 = vmatprep.subr.mxu0 0.0
    %2991 = vmatpush1.msra.mxu0 0.0
    %2992 = vmatprep.subr.mxu0 0.0
    %2993 = vmatpush1.msra.mxu0 0.0
    %2994 = vmatprep.subr.mxu0 0.0
    %2995 = vmatpush1.msra.mxu0 0.0
    %2996 = vmatprep.mubr.f32.mxu0 0.0
    %2997 = vmatmul.mubr.f32.gmra.mrb[0].mxu0 %v2696
    %v2998 = vpop.f32.mrb[0].mxu0
    %v2999 = vadd.f32 0.0, %v2998
    %v3000 = vpop.f32.mrb[0].mxu0
    %v3001 = vadd.f32 0.0, %v3000
    %3002 = vmatprep.mubr.f32.mxu0 0.0
    %3003 = vmatmul.mubr.f32.gmra.mrb[0].mxu0 %v2699
    %v3004 = vpop.f32.mrb[0].mxu0
    %v3005 = vadd.f32 0.0, %v3004
    %v3006 = vpop.f32.mrb[0].mxu0
    %v3007 = vadd.f32 0.0, %v3006
    %3008 = vdwg.mxu0
    %3009 = vmatprep.subr.mxu0 %v2690
    %3010 = vmatpush1.msra.mxu0 %v2689
    %3011 = vmatprep.subr.mxu0 0.0
    %3012 = vmatpush1.msra.mxu0 0.0
    %3013 = vmatprep.subr.mxu0 0.0
    %3014 = vmatpush1.msra.mxu0 0.0
    %3015 = vmatprep.subr.mxu0 0.0
    %3016 = vmatpush1.msra.mxu0 0.0
    %3017 = vmatprep.subr.mxu0 0.0
    %3018 = vmatpush1.msra.mxu0 0.0
    %3019 = vmatprep.subr.mxu0 0.0
    %3020 = vmatpush1.msra.mxu0 0.0
    %3021 = vmatprep.subr.mxu0 0.0
    %3022 = vmatpush1.msra.mxu0 0.0
    %3023 = vmatprep.subr.mxu0 0.0
    %3024 = vmatpush1.msra.mxu0 0.0
    %3025 = vmatprep.subr.mxu0 0.0
    %3026 = vmatpush1.msra.mxu0 0.0
    %3027 = vmatprep.subr.mxu0 0.0
    %3028 = vmatpush1.msra.mxu0 0.0
    %3029 = vmatprep.subr.mxu0 0.0
    %3030 = vmatpush1.msra.mxu0 0.0
    %3031 = vmatprep.subr.mxu0 0.0
    %3032 = vmatpush1.msra.mxu0 0.0
    %3033 = vmatprep.subr.mxu0 0.0
    %3034 = vmatpush1.msra.mxu0 0.0
    %3035 = vmatprep.subr.mxu0 0.0
    %3036 = vmatpush1.msra.mxu0 0.0
    %3037 = vmatprep.subr.mxu0 0.0
    %3038 = vmatpush1.msra.mxu0 0.0
    %3039 = vmatprep.subr.mxu0 0.0
    %3040 = vmatpush1.msra.mxu0 0.0
    %3041 = vmatprep.subr.mxu0 0.0
    %3042 = vmatpush1.msra.mxu0 0.0
    %3043 = vmatprep.subr.mxu0 0.0
    %3044 = vmatpush1.msra.mxu0 0.0
    %3045 = vmatprep.subr.mxu0 0.0
    %3046 = vmatpush1.msra.mxu0 0.0
    %3047 = vmatprep.subr.mxu0 0.0
    %3048 = vmatpush1.msra.mxu0 0.0
    %3049 = vmatprep.subr.mxu0 0.0
    %3050 = vmatpush1.msra.mxu0 0.0
    %3051 = vmatprep.subr.mxu0 0.0
    %3052 = vmatpush1.msra.mxu0 0.0
    %3053 = vmatprep.subr.mxu0 0.0
    %3054 = vmatpush1.msra.mxu0 0.0
    %3055 = vmatprep.subr.mxu0 0.0
    %3056 = vmatpush1.msra.mxu0 0.0
    %3057 = vmatprep.subr.mxu0 0.0
    %3058 = vmatpush1.msra.mxu0 0.0
    %3059 = vmatprep.subr.mxu0 0.0
    %3060 = vmatpush1.msra.mxu0 0.0
    %3061 = vmatprep.subr.mxu0 0.0
    %3062 = vmatpush1.msra.mxu0 0.0
    %3063 = vmatprep.subr.mxu0 0.0
    %3064 = vmatpush1.msra.mxu0 0.0
    %3065 = vmatprep.subr.mxu0 0.0
    %3066 = vmatpush1.msra.mxu0 0.0
    %3067 = vmatprep.subr.mxu0 0.0
    %3068 = vmatpush1.msra.mxu0 0.0
    %3069 = vmatprep.subr.mxu0 0.0
    %3070 = vmatpush1.msra.mxu0 0.0
    %3071 = vmatprep.subr.mxu0 0.0
    %3072 = vmatpush1.msra.mxu0 0.0
    %3073 = vmatprep.mubr.f32.mxu0 0.0
    %3074 = vmatmul.mubr.f32.gmra.mrb[0].mxu0 %v2696
    %v3075 = vpop.f32.mrb[0].mxu0
    %v3076 = vadd.f32 0.0, %v3075
    %v3077 = vpop.f32.mrb[0].mxu0
    %v3078 = vadd.f32 0.0, %v3077
    %3079 = vmatprep.mubr.f32.mxu0 0.0
    %3080 = vmatmul.mubr.f32.gmra.mrb[0].mxu0 %v2699
    %v3081 = vpop.f32.mrb[0].mxu0
    %v3082 = vadd.f32 0.0, %v3081
    %v3083 = vpop.f32.mrb[0].mxu0
    %v3084 = vadd.f32 0.0, %v3083
    %3085 = vdwg.mxu0
    %3086 = vmatprep.subr.mxu0 %v2692
    %3087 = vmatpush1.msra.mxu0 %v2691
    %3088 = vmatprep.subr.mxu0 0.0
    %3089 = vmatpush1.msra.mxu0 0.0
    %3090 = vmatprep.subr.mxu0 0.0
    %3091 = vmatpush1.msra.mxu0 0.0
    %3092 = vmatprep.subr.mxu0 0.0
    %3093 = vmatpush1.msra.mxu0 0.0
    %3094 = vmatprep.subr.mxu0 0.0
    %3095 = vmatpush1.msra.mxu0 0.0
    %3096 = vmatprep.subr.mxu0 0.0
    %3097 = vmatpush1.msra.mxu0 0.0
    %3098 = vmatprep.subr.mxu0 0.0
    %3099 = vmatpush1.msra.mxu0 0.0
    %3100 = vmatprep.subr.mxu0 0.0
    %3101 = vmatpush1.msra.mxu0 0.0
    %3102 = vmatprep.subr.mxu0 0.0
    %3103 = vmatpush1.msra.mxu0 0.0
    %3104 = vmatprep.subr.mxu0 0.0
    %3105 = vmatpush1.msra.mxu0 0.0
    %3106 = vmatprep.subr.mxu0 0.0
    %3107 = vmatpush1.msra.mxu0 0.0
    %3108 = vmatprep.subr.mxu0 0.0
    %3109 = vmatpush1.msra.mxu0 0.0
    %3110 = vmatprep.subr.mxu0 0.0
    %3111 = vmatpush1.msra.mxu0 0.0
    %3112 = vmatprep.subr.mxu0 0.0
    %3113 = vmatpush1.msra.mxu0 0.0
    %3114 = vmatprep.subr.mxu0 0.0
    %3115 = vmatpush1.msra.mxu0 0.0
    %3116 = vmatprep.subr.mxu0 0.0
    %3117 = vmatpush1.msra.mxu0 0.0
    %3118 = vmatprep.subr.mxu0 0.0
    %3119 = vmatpush1.msra.mxu0 0.0
    %3120 = vmatprep.subr.mxu0 0.0
    %3121 = vmatpush1.msra.mxu0 0.0
    %3122 = vmatprep.subr.mxu0 0.0
    %3123 = vmatpush1.msra.mxu0 0.0
    %3124 = vmatprep.subr.mxu0 0.0
    %3125 = vmatpush1.msra.mxu0 0.0
    %3126 = vmatprep.subr.mxu0 0.0
    %3127 = vmatpush1.msra.mxu0 0.0
    %3128 = vmatprep.subr.mxu0 0.0
    %3129 = vmatpush1.msra.mxu0 0.0
    %3130 = vmatprep.subr.mxu0 0.0
    %3131 = vmatpush1.msra.mxu0 0.0
    %3132 = vmatprep.subr.mxu0 0.0
    %3133 = vmatpush1.msra.mxu0 0.0
    %3134 = vmatprep.subr.mxu0 0.0
    %3135 = vmatpush1.msra.mxu0 0.0
    %3136 = vmatprep.subr.mxu0 0.0
    %3137 = vmatpush1.msra.mxu0 0.0
    %3138 = vmatprep.subr.mxu0 0.0
    %3139 = vmatpush1.msra.mxu0 0.0
    %3140 = vmatprep.subr.mxu0 0.0
    %3141 = vmatpush1.msra.mxu0 0.0
    %3142 = vmatprep.subr.mxu0 0.0
    %3143 = vmatpush1.msra.mxu0 0.0
    %3144 = vmatprep.subr.mxu0 0.0
    %3145 = vmatpush1.msra.mxu0 0.0
    %3146 = vmatprep.subr.mxu0 0.0
    %3147 = vmatpush1.msra.mxu0 0.0
    %3148 = vmatprep.subr.mxu0 0.0
    %3149 = vmatpush1.msra.mxu0 0.0
    %3150 = vmatprep.mubr.f32.mxu0 0.0
    %3151 = vmatmul.mubr.f32.gmra.mrb[0].mxu0 %v2696
    %v3152 = vpop.f32.mrb[0].mxu0
    %v3153 = vadd.f32 0.0, %v3152
    %v3154 = vpop.f32.mrb[0].mxu0
    %v3155 = vadd.f32 0.0, %v3154
    %3156 = vmatprep.mubr.f32.mxu0 0.0
    %3157 = vmatmul.mubr.f32.gmra.mrb[0].mxu0 %v2699
    %v3158 = vpop.f32.mrb[0].mxu0
    %v3159 = vadd.f32 0.0, %v3158
    %v3160 = vpop.f32.mrb[0].mxu0
    %v3161 = vadd.f32 0.0, %v3160
    %3162 = vdwg.mxu0
    %3163 = vmatprep.subr.mxu0 0.0
    %3164 = vmatpush1.msra.mxu0 %v2693
    %3165 = vmatprep.subr.mxu0 0.0
    %3166 = vmatpush1.msra.mxu0 0.0
    %3167 = vmatprep.subr.mxu0 0.0
    %3168 = vmatpush1.msra.mxu0 0.0
    %3169 = vmatprep.subr.mxu0 0.0
    %3170 = vmatpush1.msra.mxu0 0.0
    %3171 = vmatprep.subr.mxu0 0.0
    %3172 = vmatpush1.msra.mxu0 0.0
    %3173 = vmatprep.subr.mxu0 0.0
    %3174 = vmatpush1.msra.mxu0 0.0
    %3175 = vmatprep.subr.mxu0 0.0
    %3176 = vmatpush1.msra.mxu0 0.0
    %3177 = vmatprep.subr.mxu0 0.0
    %3178 = vmatpush1.msra.mxu0 0.0
    %3179 = vmatprep.subr.mxu0 0.0
    %3180 = vmatpush1.msra.mxu0 0.0
    %3181 = vmatprep.subr.mxu0 0.0
    %3182 = vmatpush1.msra.mxu0 0.0
    %3183 = vmatprep.subr.mxu0 0.0
    %3184 = vmatpush1.msra.mxu0 0.0
    %3185 = vmatprep.subr.mxu0 0.0
    %3186 = vmatpush1.msra.mxu0 0.0
    %3187 = vmatprep.subr.mxu0 0.0
    %3188 = vmatpush1.msra.mxu0 0.0
    %3189 = vmatprep.subr.mxu0 0.0
    %3190 = vmatpush1.msra.mxu0 0.0
    %3191 = vmatprep.subr.mxu0 0.0
    %3192 = vmatpush1.msra.mxu0 0.0
    %3193 = vmatprep.subr.mxu0 0.0
    %3194 = vmatpush1.msra.mxu0 0.0
    %3195 = vmatprep.subr.mxu0 0.0
    %3196 = vmatpush1.msra.mxu0 0.0
    %3197 = vmatprep.subr.mxu0 0.0
    %3198 = vmatpush1.msra.mxu0 0.0
    %3199 = vmatprep.subr.mxu0 0.0
    %3200 = vmatpush1.msra.mxu0 0.0
    %3201 = vmatprep.subr.mxu0 0.0
    %3202 = vmatpush1.msra.mxu0 0.0
    %3203 = vmatprep.subr.mxu0 0.0
    %3204 = vmatpush1.msra.mxu0 0.0
    %3205 = vmatprep.subr.mxu0 0.0
    %3206 = vmatpush1.msra.mxu0 0.0
    %3207 = vmatprep.subr.mxu0 0.0
    %3208 = vmatpush1.msra.mxu0 0.0
    %3209 = vmatprep.subr.mxu0 0.0
    %3210 = vmatpush1.msra.mxu0 0.0
    %3211 = vmatprep.subr.mxu0 0.0
    %3212 = vmatpush1.msra.mxu0 0.0
    %3213 = vmatprep.subr.mxu0 0.0
    %3214 = vmatpush1.msra.mxu0 0.0
    %3215 = vmatprep.subr.mxu0 0.0
    %3216 = vmatpush1.msra.mxu0 0.0
    %3217 = vmatprep.subr.mxu0 0.0
    %3218 = vmatpush1.msra.mxu0 0.0
    %3219 = vmatprep.subr.mxu0 0.0
    %3220 = vmatpush1.msra.mxu0 0.0
    %3221 = vmatprep.subr.mxu0 0.0
    %3222 = vmatpush1.msra.mxu0 0.0
    %3223 = vmatprep.subr.mxu0 0.0
    %3224 = vmatpush1.msra.mxu0 0.0
    %3225 = vmatprep.subr.mxu0 0.0
    %3226 = vmatpush1.msra.mxu0 0.0
    %3227 = vmatprep.mubr.f32.mxu0 0.0
    %3228 = vmatmul.mubr.f32.gmra.mrb[0].mxu0 %v2696
    %v3229 = vpop.f32.mrb[0].mxu0
    %v3230 = vadd.f32 0.0, %v3229
    %v3231 = vpop.f32.mrb[0].mxu0
    %3232 = vmatprep.mubr.f32.mxu0 0.0
    %3233 = vmatmul.mubr.f32.gmra.mrb[0].mxu0 %v2699
    %v3234 = vpop.f32.mrb[0].mxu0
    %v3235 = vadd.f32 0.0, %v3234
    %v3236 = vpop.f32.mrb[0].mxu0
    %3237 = vdwg.mxu0
    %v3238 = vadd.f32 %v2655, %v2768
    %v3239 = vadd.f32 %v2656, %v2770
    %v3240 = vadd.f32 %v2657, %v2845
    %v3241 = vadd.f32 %v2658, %v2847
    %v3242 = vadd.f32 %v2659, %v2922
    %v3243 = vadd.f32 %v2660, %v2924
    %v3244 = vadd.f32 %v2661, %v2999
    %v3245 = vadd.f32 %v2662, %v3001
    %v3246 = vadd.f32 %v2663, %v3076
    %v3247 = vadd.f32 %v2664, %v3078
    %v3248 = vadd.f32 %v2665, %v3153
    %v3249 = vadd.f32 %v2666, %v3155
    %v3250 = vadd.f32 %v2667, %v3230
    %v3251 = vadd.f32 %v2668, %v2774
    %v3252 = vadd.f32 %v2669, %v2776
    %v3253 = vadd.f32 %v2670, %v2851
    %v3254 = vadd.f32 %v2671, %v2853
    %v3255 = vadd.f32 %v2672, %v2928
    %v3256 = vadd.f32 %v2673, %v2930
    %v3257 = vadd.f32 %v2674, %v3005
    %v3258 = vadd.f32 %v2675, %v3007
    %v3259 = vadd.f32 %v2676, %v3082
    %v3260 = vadd.f32 %v2677, %v3084
    %v3261 = vadd.f32 %v2678, %v3159
    %v3262 = vadd.f32 %v2679, %v3161
    %v3263 = vadd.f32 %v2680, %v3235
    %v3264 = vld [vmem:[%s13 + $0x208] sm:$0xff]
    %v3265 = vld [vmem:[%s13 + $0x210] sm:$0xff]
    %v3266 = vld [vmem:[%s13 + $0x218] sm:$0xff]
    %v3267 = vld [vmem:[%s13 + $0x220] sm:$0xff]
    %v3268 = vld [vmem:[%s13 + $0x228] sm:$0xff]
    %v3269 = vld [vmem:[%s13 + $0x230] sm:$0xff]
    %v3270 = vld [vmem:[%s13 + $0x238] sm:$0xff]
    %v3271 = vld [vmem:[%s13 + $0x240] sm:$0xff]
    %v3272 = vld [vmem:[%s13 + $0x248] sm:$0xff]
    %v3273 = vld [vmem:[%s13 + $0x250] sm:$0xff]
    %v3274 = vld [vmem:[%s13 + $0x258] sm:$0xff]
    %v3275 = vld [vmem:[%s13 + $0x260] sm:$0xff]
    %v3276 = vld [vmem:[%s13 + $0x268] sm:$0xff]
    %3279 = vrot.lane.b32.xlu0 %v761, 112
    %v3280 = vpop.permute.xlu0 %3279
    %3281 = vrot.lane.b32.xlu0 %v762, 112
    %v3282 = vpop.permute.xlu0 %3281
    %v3283 = vsel %vm2694, %v3280, 0
    %v3285 = vsel %vm2694, %v3282, 0
    %3287 = vmatprep.subr.mxu0 %v3265
    %3288 = vmatpush1.msra.mxu0 %v3264
    %3289 = vmatprep.subr.mxu0 0.0
    %3290 = vmatpush1.msra.mxu0 0.0
    %3291 = vmatprep.subr.mxu0 0.0
    %3292 = vmatpush1.msra.mxu0 0.0
    %3293 = vmatprep.subr.mxu0 0.0
    %3294 = vmatpush1.msra.mxu0 0.0
    %3295 = vmatprep.subr.mxu0 0.0
    %3296 = vmatpush1.msra.mxu0 0.0
    %3297 = vmatprep.subr.mxu0 0.0
    %3298 = vmatpush1.msra.mxu0 0.0
    %3299 = vmatprep.subr.mxu0 0.0
    %3300 = vmatpush1.msra.mxu0 0.0
    %3301 = vmatprep.subr.mxu0 0.0
    %3302 = vmatpush1.msra.mxu0 0.0
    %3303 = vmatprep.subr.mxu0 0.0
    %3304 = vmatpush1.msra.mxu0 0.0
    %3305 = vmatprep.subr.mxu0 0.0
    %3306 = vmatpush1.msra.mxu0 0.0
    %3307 = vmatprep.subr.mxu0 0.0
    %3308 = vmatpush1.msra.mxu0 0.0
    %3309 = vmatprep.subr.mxu0 0.0
    %3310 = vmatpush1.msra.mxu0 0.0
    %3311 = vmatprep.subr.mxu0 0.0
    %3312 = vmatpush1.msra.mxu0 0.0
    %3313 = vmatprep.subr.mxu0 0.0
    %3314 = vmatpush1.msra.mxu0 0.0
    %3315 = vmatprep.subr.mxu0 0.0
    %3316 = vmatpush1.msra.mxu0 0.0
    %3317 = vmatprep.subr.mxu0 0.0
    %3318 = vmatpush1.msra.mxu0 0.0
    %3319 = vmatprep.subr.mxu0 0.0
    %3320 = vmatpush1.msra.mxu0 0.0
    %3321 = vmatprep.subr.mxu0 0.0
    %3322 = vmatpush1.msra.mxu0 0.0
    %3323 = vmatprep.subr.mxu0 0.0
    %3324 = vmatpush1.msra.mxu0 0.0
    %3325 = vmatprep.subr.mxu0 0.0
    %3326 = vmatpush1.msra.mxu0 0.0
    %3327 = vmatprep.subr.mxu0 0.0
    %3328 = vmatpush1.msra.mxu0 0.0
    %3329 = vmatprep.subr.mxu0 0.0
    %3330 = vmatpush1.msra.mxu0 0.0
    %3331 = vmatprep.subr.mxu0 0.0
    %3332 = vmatpush1.msra.mxu0 0.0
    %3333 = vmatprep.subr.mxu0 0.0
    %3334 = vmatpush1.msra.mxu0 0.0
    %3335 = vmatprep.subr.mxu0 0.0
    %3336 = vmatpush1.msra.mxu0 0.0
    %3337 = vmatprep.subr.mxu0 0.0
    %3338 = vmatpush1.msra.mxu0 0.0
    %3339 = vmatprep.subr.mxu0 0.0
    %3340 = vmatpush1.msra.mxu0 0.0
    %3341 = vmatprep.subr.mxu0 0.0
    %3342 = vmatpush1.msra.mxu0 0.0
    %3343 = vmatprep.subr.mxu0 0.0
    %3344 = vmatpush1.msra.mxu0 0.0
    %3345 = vmatprep.subr.mxu0 0.0
    %3346 = vmatpush1.msra.mxu0 0.0
    %3347 = vmatprep.subr.mxu0 0.0
    %3348 = vmatpush1.msra.mxu0 0.0
    %3349 = vmatprep.subr.mxu0 0.0
    %3350 = vmatpush1.msra.mxu0 0.0
    %3351 = vmatprep.mubr.f32.mxu0 0.0
    %3352 = vmatmul.mubr.f32.gmra.mrb[0].mxu0 %v3283
    %v3353 = vpop.f32.mrb[0].mxu0
    %v3354 = vadd.f32 0.0, %v3353
    %v3355 = vpop.f32.mrb[0].mxu0
    %v3356 = vadd.f32 0.0, %v3355
    %3357 = vmatprep.mubr.f32.mxu0 0.0
    %3358 = vmatmul.mubr.f32.gmra.mrb[0].mxu0 %v3285
    %v3359 = vpop.f32.mrb[0].mxu0
    %v3360 = vadd.f32 0.0, %v3359
    %v3361 = vpop.f32.mrb[0].mxu0
    %v3362 = vadd.f32 0.0, %v3361
    %3363 = vdwg.mxu0
    %3364 = vmatprep.subr.mxu0 %v3267
    %3365 = vmatpush1.msra.mxu0 %v3266
    %3366 = vmatprep.subr.mxu0 0.0
    %3367 = vmatpush1.msra.mxu0 0.0
    %3368 = vmatprep.subr.mxu0 0.0
    %3369 = vmatpush1.msra.mxu0 0.0
    %3370 = vmatprep.subr.mxu0 0.0
    %3371 = vmatpush1.msra.mxu0 0.0
    %3372 = vmatprep.subr.mxu0 0.0
    %3373 = vmatpush1.msra.mxu0 0.0
    %3374 = vmatprep.subr.mxu0 0.0
    %3375 = vmatpush1.msra.mxu0 0.0
    %3376 = vmatprep.subr.mxu0 0.0
    %3377 = vmatpush1.msra.mxu0 0.0
    %3378 = vmatprep.subr.mxu0 0.0
    %3379 = vmatpush1.msra.mxu0 0.0
    %3380 = vmatprep.subr.mxu0 0.0
    %3381 = vmatpush1.msra.mxu0 0.0
    %3382 = vmatprep.subr.mxu0 0.0
    %3383 = vmatpush1.msra.mxu0 0.0
    %3384 = vmatprep.subr.mxu0 0.0
    %3385 = vmatpush1.msra.mxu0 0.0
    %3386 = vmatprep.subr.mxu0 0.0
    %3387 = vmatpush1.msra.mxu0 0.0
    %3388 = vmatprep.subr.mxu0 0.0
    %3389 = vmatpush1.msra.mxu0 0.0
    %3390 = vmatprep.subr.mxu0 0.0
    %3391 = vmatpush1.msra.mxu0 0.0
    %3392 = vmatprep.subr.mxu0 0.0
    %3393 = vmatpush1.msra.mxu0 0.0
    %3394 = vmatprep.subr.mxu0 0.0
    %3395 = vmatpush1.msra.mxu0 0.0
    %3396 = vmatprep.subr.mxu0 0.0
    %3397 = vmatpush1.msra.mxu0 0.0
    %3398 = vmatprep.subr.mxu0 0.0
    %3399 = vmatpush1.msra.mxu0 0.0
    %3400 = vmatprep.subr.mxu0 0.0
    %3401 = vmatpush1.msra.mxu0 0.0
    %3402 = vmatprep.subr.mxu0 0.0
    %3403 = vmatpush1.msra.mxu0 0.0
    %3404 = vmatprep.subr.mxu0 0.0
    %3405 = vmatpush1.msra.mxu0 0.0
    %3406 = vmatprep.subr.mxu0 0.0
    %3407 = vmatpush1.msra.mxu0 0.0
    %3408 = vmatprep.subr.mxu0 0.0
    %3409 = vmatpush1.msra.mxu0 0.0
    %3410 = vmatprep.subr.mxu0 0.0
    %3411 = vmatpush1.msra.mxu0 0.0
    %3412 = vmatprep.subr.mxu0 0.0
    %3413 = vmatpush1.msra.mxu0 0.0
    %3414 = vmatprep.subr.mxu0 0.0
    %3415 = vmatpush1.msra.mxu0 0.0
    %3416 = vmatprep.subr.mxu0 0.0
    %3417 = vmatpush1.msra.mxu0 0.0
    %3418 = vmatprep.subr.mxu0 0.0
    %3419 = vmatpush1.msra.mxu0 0.0
    %3420 = vmatprep.subr.mxu0 0.0
    %3421 = vmatpush1.msra.mxu0 0.0
    %3422 = vmatprep.subr.mxu0 0.0
    %3423 = vmatpush1.msra.mxu0 0.0
    %3424 = vmatprep.subr.mxu0 0.0
    %3425 = vmatpush1.msra.mxu0 0.0
    %3426 = vmatprep.subr.mxu0 0.0
    %3427 = vmatpush1.msra.mxu0 0.0
    %3428 = vmatprep.mubr.f32.mxu0 0.0
    %3429 = vmatmul.mubr.f32.gmra.mrb[0].mxu0 %v3283
    %v3430 = vpop.f32.mrb[0].mxu0
    %v3431 = vadd.f32 0.0, %v3430
    %v3432 = vpop.f32.mrb[0].mxu0
    %v3433 = vadd.f32 0.0, %v3432
    %3434 = vmatprep.mubr.f32.mxu0 0.0
    %3435 = vmatmul.mubr.f32.gmra.mrb[0].mxu0 %v3285
    %v3436 = vpop.f32.mrb[0].mxu0
    %v3437 = vadd.f32 0.0, %v3436
    %v3438 = vpop.f32.mrb[0].mxu0
    %v3439 = vadd.f32 0.0, %v3438
    %3440 = vdwg.mxu0
    %3441 = vmatprep.subr.mxu0 %v3269
    %3442 = vmatpush1.msra.mxu0 %v3268
    %3443 = vmatprep.subr.mxu0 0.0
    %3444 = vmatpush1.msra.mxu0 0.0
    %3445 = vmatprep.subr.mxu0 0.0
    %3446 = vmatpush1.msra.mxu0 0.0
    %3447 = vmatprep.subr.mxu0 0.0
    %3448 = vmatpush1.msra.mxu0 0.0
    %3449 = vmatprep.subr.mxu0 0.0
    %3450 = vmatpush1.msra.mxu0 0.0
    %3451 = vmatprep.subr.mxu0 0.0
    %3452 = vmatpush1.msra.mxu0 0.0
    %3453 = vmatprep.subr.mxu0 0.0
    %3454 = vmatpush1.msra.mxu0 0.0
    %3455 = vmatprep.subr.mxu0 0.0
    %3456 = vmatpush1.msra.mxu0 0.0
    %3457 = vmatprep.subr.mxu0 0.0
    %3458 = vmatpush1.msra.mxu0 0.0
    %3459 = vmatprep.subr.mxu0 0.0
    %3460 = vmatpush1.msra.mxu0 0.0
    %3461 = vmatprep.subr.mxu0 0.0
    %3462 = vmatpush1.msra.mxu0 0.0
    %3463 = vmatprep.subr.mxu0 0.0
    %3464 = vmatpush1.msra.mxu0 0.0
    %3465 = vmatprep.subr.mxu0 0.0
    %3466 = vmatpush1.msra.mxu0 0.0
    %3467 = vmatprep.subr.mxu0 0.0
    %3468 = vmatpush1.msra.mxu0 0.0
    %3469 = vmatprep.subr.mxu0 0.0
    %3470 = vmatpush1.msra.mxu0 0.0
    %3471 = vmatprep.subr.mxu0 0.0
    %3472 = vmatpush1.msra.mxu0 0.0
    %3473 = vmatprep.subr.mxu0 0.0
    %3474 = vmatpush1.msra.mxu0 0.0
    %3475 = vmatprep.subr.mxu0 0.0
    %3476 = vmatpush1.msra.mxu0 0.0
    %3477 = vmatprep.subr.mxu0 0.0
    %3478 = vmatpush1.msra.mxu0 0.0
    %3479 = vmatprep.subr.mxu0 0.0
    %3480 = vmatpush1.msra.mxu0 0.0
    %3481 = vmatprep.subr.mxu0 0.0
    %3482 = vmatpush1.msra.mxu0 0.0
    %3483 = vmatprep.subr.mxu0 0.0
    %3484 = vmatpush1.msra.mxu0 0.0
    %3485 = vmatprep.subr.mxu0 0.0
    %3486 = vmatpush1.msra.mxu0 0.0
    %3487 = vmatprep.subr.mxu0 0.0
    %3488 = vmatpush1.msra.mxu0 0.0
    %3489 = vmatprep.subr.mxu0 0.0
    %3490 = vmatpush1.msra.mxu0 0.0
    %3491 = vmatprep.subr.mxu0 0.0
    %3492 = vmatpush1.msra.mxu0 0.0
    %3493 = vmatprep.subr.mxu0 0.0
    %3494 = vmatpush1.msra.mxu0 0.0
    %3495 = vmatprep.subr.mxu0 0.0
    %3496 = vmatpush1.msra.mxu0 0.0
    %3497 = vmatprep.subr.mxu0 0.0
    %3498 = vmatpush1.msra.mxu0 0.0
    %3499 = vmatprep.subr.mxu0 0.0
    %3500 = vmatpush1.msra.mxu0 0.0
    %3501 = vmatprep.subr.mxu0 0.0
    %3502 = vmatpush1.msra.mxu0 0.0
    %3503 = vmatprep.subr.mxu0 0.0
    %3504 = vmatpush1.msra.mxu0 0.0
    %3505 = vmatprep.mubr.f32.mxu0 0.0
    %3506 = vmatmul.mubr.f32.gmra.mrb[0].mxu0 %v3283
    %v3507 = vpop.f32.mrb[0].mxu0
    %v3508 = vadd.f32 0.0, %v3507
    %v3509 = vpop.f32.mrb[0].mxu0
    %v3510 = vadd.f32 0.0, %v3509
    %3511 = vmatprep.mubr.f32.mxu0 0.0
    %3512 = vmatmul.mubr.f32.gmra.mrb[0].mxu0 %v3285
    %v3513 = vpop.f32.mrb[0].mxu0
    %v3514 = vadd.f32 0.0, %v3513
    %v3515 = vpop.f32.mrb[0].mxu0
    %v3516 = vadd.f32 0.0, %v3515
    %3517 = vdwg.mxu0
    %3518 = vmatprep.subr.mxu0 %v3271
    %3519 = vmatpush1.msra.mxu0 %v3270
    %3520 = vmatprep.subr.mxu0 0.0
    %3521 = vmatpush1.msra.mxu0 0.0
    %3522 = vmatprep.subr.mxu0 0.0
    %3523 = vmatpush1.msra.mxu0 0.0
    %3524 = vmatprep.subr.mxu0 0.0
    %3525 = vmatpush1.msra.mxu0 0.0
    %3526 = vmatprep.subr.mxu0 0.0
    %3527 = vmatpush1.msra.mxu0 0.0
    %3528 = vmatprep.subr.mxu0 0.0
    %3529 = vmatpush1.msra.mxu0 0.0
    %3530 = vmatprep.subr.mxu0 0.0
    %3531 = vmatpush1.msra.mxu0 0.0
    %3532 = vmatprep.subr.mxu0 0.0
    %3533 = vmatpush1.msra.mxu0 0.0
    %3534 = vmatprep.subr.mxu0 0.0
    %3535 = vmatpush1.msra.mxu0 0.0
    %3536 = vmatprep.subr.mxu0 0.0
    %3537 = vmatpush1.msra.mxu0 0.0
    %3538 = vmatprep.subr.mxu0 0.0
    %3539 = vmatpush1.msra.mxu0 0.0
    %3540 = vmatprep.subr.mxu0 0.0
    %3541 = vmatpush1.msra.mxu0 0.0
    %3542 = vmatprep.subr.mxu0 0.0
    %3543 = vmatpush1.msra.mxu0 0.0
    %3544 = vmatprep.subr.mxu0 0.0
    %3545 = vmatpush1.msra.mxu0 0.0
    %3546 = vmatprep.subr.mxu0 0.0
    %3547 = vmatpush1.msra.mxu0 0.0
    %3548 = vmatprep.subr.mxu0 0.0
    %3549 = vmatpush1.msra.mxu0 0.0
    %3550 = vmatprep.subr.mxu0 0.0
    %3551 = vmatpush1.msra.mxu0 0.0
    %3552 = vmatprep.subr.mxu0 0.0
    %3553 = vmatpush1.msra.mxu0 0.0
    %3554 = vmatprep.subr.mxu0 0.0
    %3555 = vmatpush1.msra.mxu0 0.0
    %3556 = vmatprep.subr.mxu0 0.0
    %3557 = vmatpush1.msra.mxu0 0.0
    %3558 = vmatprep.subr.mxu0 0.0
    %3559 = vmatpush1.msra.mxu0 0.0
    %3560 = vmatprep.subr.mxu0 0.0
    %3561 = vmatpush1.msra.mxu0 0.0
    %3562 = vmatprep.subr.mxu0 0.0
    %3563 = vmatpush1.msra.mxu0 0.0
    %3564 = vmatprep.subr.mxu0 0.0
    %3565 = vmatpush1.msra.mxu0 0.0
    %3566 = vmatprep.subr.mxu0 0.0
    %3567 = vmatpush1.msra.mxu0 0.0
    %3568 = vmatprep.subr.mxu0 0.0
    %3569 = vmatpush1.msra.mxu0 0.0
    %3570 = vmatprep.subr.mxu0 0.0
    %3571 = vmatpush1.msra.mxu0 0.0
    %3572 = vmatprep.subr.mxu0 0.0
    %3573 = vmatpush1.msra.mxu0 0.0
    %3574 = vmatprep.subr.mxu0 0.0
    %3575 = vmatpush1.msra.mxu0 0.0
    %3576 = vmatprep.subr.mxu0 0.0
    %3577 = vmatpush1.msra.mxu0 0.0
    %3578 = vmatprep.subr.mxu0 0.0
    %3579 = vmatpush1.msra.mxu0 0.0
    %3580 = vmatprep.subr.mxu0 0.0
    %3581 = vmatpush1.msra.mxu0 0.0
    %3582 = vmatprep.mubr.f32.mxu0 0.0
    %3583 = vmatmul.mubr.f32.gmra.mrb[0].mxu0 %v3283
    %v3584 = vpop.f32.mrb[0].mxu0
    %v3585 = vadd.f32 0.0, %v3584
    %v3586 = vpop.f32.mrb[0].mxu0
    %v3587 = vadd.f32 0.0, %v3586
    %3588 = vmatprep.mubr.f32.mxu0 0.0
    %3589 = vmatmul.mubr.f32.gmra.mrb[0].mxu0 %v3285
    %v3590 = vpop.f32.mrb[0].mxu0
    %v3591 = vadd.f32 0.0, %v3590
    %v3592 = vpop.f32.mrb[0].mxu0
    %v3593 = vadd.f32 0.0, %v3592
    %3594 = vdwg.mxu0
    %3595 = vmatprep.subr.mxu0 %v3273
    %3596 = vmatpush1.msra.mxu0 %v3272
    %3597 = vmatprep.subr.mxu0 0.0
    %3598 = vmatpush1.msra.mxu0 0.0
    %3599 = vmatprep.subr.mxu0 0.0
    %3600 = vmatpush1.msra.mxu0 0.0
    %3601 = vmatprep.subr.mxu0 0.0
    %3602 = vmatpush1.msra.mxu0 0.0
    %3603 = vmatprep.subr.mxu0 0.0
    %3604 = vmatpush1.msra.mxu0 0.0
    %3605 = vmatprep.subr.mxu0 0.0
    %3606 = vmatpush1.msra.mxu0 0.0
    %3607 = vmatprep.subr.mxu0 0.0
    %3608 = vmatpush1.msra.mxu0 0.0
    %3609 = vmatprep.subr.mxu0 0.0
    %3610 = vmatpush1.msra.mxu0 0.0
    %3611 = vmatprep.subr.mxu0 0.0
    %3612 = vmatpush1.msra.mxu0 0.0
    %3613 = vmatprep.subr.mxu0 0.0
    %3614 = vmatpush1.msra.mxu0 0.0
    %3615 = vmatprep.subr.mxu0 0.0
    %3616 = vmatpush1.msra.mxu0 0.0
    %3617 = vmatprep.subr.mxu0 0.0
    %3618 = vmatpush1.msra.mxu0 0.0
    %3619 = vmatprep.subr.mxu0 0.0
    %3620 = vmatpush1.msra.mxu0 0.0
    %3621 = vmatprep.subr.mxu0 0.0
    %3622 = vmatpush1.msra.mxu0 0.0
    %3623 = vmatprep.subr.mxu0 0.0
    %3624 = vmatpush1.msra.mxu0 0.0
    %3625 = vmatprep.subr.mxu0 0.0
    %3626 = vmatpush1.msra.mxu0 0.0
    %3627 = vmatprep.subr.mxu0 0.0
    %3628 = vmatpush1.msra.mxu0 0.0
    %3629 = vmatprep.subr.mxu0 0.0
    %3630 = vmatpush1.msra.mxu0 0.0
    %3631 = vmatprep.subr.mxu0 0.0
    %3632 = vmatpush1.msra.mxu0 0.0
    %3633 = vmatprep.subr.mxu0 0.0
    %3634 = vmatpush1.msra.mxu0 0.0
    %3635 = vmatprep.subr.mxu0 0.0
    %3636 = vmatpush1.msra.mxu0 0.0
    %3637 = vmatprep.subr.mxu0 0.0
    %3638 = vmatpush1.msra.mxu0 0.0
    %3639 = vmatprep.subr.mxu0 0.0
    %3640 = vmatpush1.msra.mxu0 0.0
    %3641 = vmatprep.subr.mxu0 0.0
    %3642 = vmatpush1.msra.mxu0 0.0
    %3643 = vmatprep.subr.mxu0 0.0
    %3644 = vmatpush1.msra.mxu0 0.0
    %3645 = vmatprep.subr.mxu0 0.0
    %3646 = vmatpush1.msra.mxu0 0.0
    %3647 = vmatprep.subr.mxu0 0.0
    %3648 = vmatpush1.msra.mxu0 0.0
    %3649 = vmatprep.subr.mxu0 0.0
    %3650 = vmatpush1.msra.mxu0 0.0
    %3651 = vmatprep.subr.mxu0 0.0
    %3652 = vmatpush1.msra.mxu0 0.0
    %3653 = vmatprep.subr.mxu0 0.0
    %3654 = vmatpush1.msra.mxu0 0.0
    %3655 = vmatprep.subr.mxu0 0.0
    %3656 = vmatpush1.msra.mxu0 0.0
    %3657 = vmatprep.subr.mxu0 0.0
    %3658 = vmatpush1.msra.mxu0 0.0
    %3659 = vmatprep.mubr.f32.mxu0 0.0
    %3660 = vmatmul.mubr.f32.gmra.mrb[0].mxu0 %v3283
    %v3661 = vpop.f32.mrb[0].mxu0
    %v3662 = vadd.f32 0.0, %v3661
    %v3663 = vpop.f32.mrb[0].mxu0
    %v3664 = vadd.f32 0.0, %v3663
    %3665 = vmatprep.mubr.f32.mxu0 0.0
    %3666 = vmatmul.mubr.f32.gmra.mrb[0].mxu0 %v3285
    %v3667 = vpop.f32.mrb[0].mxu0
    %v3668 = vadd.f32 0.0, %v3667
    %v3669 = vpop.f32.mrb[0].mxu0
    %v3670 = vadd.f32 0.0, %v3669
    %3671 = vdwg.mxu0
    %3672 = vmatprep.subr.mxu0 %v3275
    %3673 = vmatpush1.msra.mxu0 %v3274
    %3674 = vmatprep.subr.mxu0 0.0
    %3675 = vmatpush1.msra.mxu0 0.0
    %3676 = vmatprep.subr.mxu0 0.0
    %3677 = vmatpush1.msra.mxu0 0.0
    %3678 = vmatprep.subr.mxu0 0.0
    %3679 = vmatpush1.msra.mxu0 0.0
    %3680 = vmatprep.subr.mxu0 0.0
    %3681 = vmatpush1.msra.mxu0 0.0
    %3682 = vmatprep.subr.mxu0 0.0
    %3683 = vmatpush1.msra.mxu0 0.0
    %3684 = vmatprep.subr.mxu0 0.0
    %3685 = vmatpush1.msra.mxu0 0.0
    %3686 = vmatprep.subr.mxu0 0.0
    %3687 = vmatpush1.msra.mxu0 0.0
    %3688 = vmatprep.subr.mxu0 0.0
    %3689 = vmatpush1.msra.mxu0 0.0
    %3690 = vmatprep.subr.mxu0 0.0
    %3691 = vmatpush1.msra.mxu0 0.0
    %3692 = vmatprep.subr.mxu0 0.0
    %3693 = vmatpush1.msra.mxu0 0.0
    %3694 = vmatprep.subr.mxu0 0.0
    %3695 = vmatpush1.msra.mxu0 0.0
    %3696 = vmatprep.subr.mxu0 0.0
    %3697 = vmatpush1.msra.mxu0 0.0
    %3698 = vmatprep.subr.mxu0 0.0
    %3699 = vmatpush1.msra.mxu0 0.0
    %3700 = vmatprep.subr.mxu0 0.0
    %3701 = vmatpush1.msra.mxu0 0.0
    %3702 = vmatprep.subr.mxu0 0.0
    %3703 = vmatpush1.msra.mxu0 0.0
    %3704 = vmatprep.subr.mxu0 0.0
    %3705 = vmatpush1.msra.mxu0 0.0
    %3706 = vmatprep.subr.mxu0 0.0
    %3707 = vmatpush1.msra.mxu0 0.0
    %3708 = vmatprep.subr.mxu0 0.0
    %3709 = vmatpush1.msra.mxu0 0.0
    %3710 = vmatprep.subr.mxu0 0.0
    %3711 = vmatpush1.msra.mxu0 0.0
    %3712 = vmatprep.subr.mxu0 0.0
    %3713 = vmatpush1.msra.mxu0 0.0
    %3714 = vmatprep.subr.mxu0 0.0
    %3715 = vmatpush1.msra.mxu0 0.0
    %3716 = vmatprep.subr.mxu0 0.0
    %3717 = vmatpush1.msra.mxu0 0.0
    %3718 = vmatprep.subr.mxu0 0.0
    %3719 = vmatpush1.msra.mxu0 0.0
    %3720 = vmatprep.subr.mxu0 0.0
    %3721 = vmatpush1.msra.mxu0 0.0
    %3722 = vmatprep.subr.mxu0 0.0
    %3723 = vmatpush1.msra.mxu0 0.0
    %3724 = vmatprep.subr.mxu0 0.0
    %3725 = vmatpush1.msra.mxu0 0.0
    %3726 = vmatprep.subr.mxu0 0.0
    %3727 = vmatpush1.msra.mxu0 0.0
    %3728 = vmatprep.subr.mxu0 0.0
    %3729 = vmatpush1.msra.mxu0 0.0
    %3730 = vmatprep.subr.mxu0 0.0
    %3731 = vmatpush1.msra.mxu0 0.0
    %3732 = vmatprep.subr.mxu0 0.0
    %3733 = vmatpush1.msra.mxu0 0.0
    %3734 = vmatprep.subr.mxu0 0.0
    %3735 = vmatpush1.msra.mxu0 0.0
    %3736 = vmatprep.mubr.f32.mxu0 0.0
    %3737 = vmatmul.mubr.f32.gmra.mrb[0].mxu0 %v3283
    %v3738 = vpop.f32.mrb[0].mxu0
    %v3739 = vadd.f32 0.0, %v3738
    %v3740 = vpop.f32.mrb[0].mxu0
    %v3741 = vadd.f32 0.0, %v3740
    %3742 = vmatprep.mubr.f32.mxu0 0.0
    %3743 = vmatmul.mubr.f32.gmra.mrb[0].mxu0 %v3285
    %v3744 = vpop.f32.mrb[0].mxu0
    %v3745 = vadd.f32 0.0, %v3744
    %v3746 = vpop.f32.mrb[0].mxu0
    %v3747 = vadd.f32 0.0, %v3746
    %3748 = vdwg.mxu0
    %3749 = vmatprep.subr.mxu0 0.0
    %3750 = vmatpush1.msra.mxu0 %v3276
    %3751 = vmatprep.subr.mxu0 0.0
    %3752 = vmatpush1.msra.mxu0 0.0
    %3753 = vmatprep.subr.mxu0 0.0
    %3754 = vmatpush1.msra.mxu0 0.0
    %3755 = vmatprep.subr.mxu0 0.0
    %3756 = vmatpush1.msra.mxu0 0.0
    %3757 = vmatprep.subr.mxu0 0.0
    %3758 = vmatpush1.msra.mxu0 0.0
    %3759 = vmatprep.subr.mxu0 0.0
    %3760 = vmatpush1.msra.mxu0 0.0
    %3761 = vmatprep.subr.mxu0 0.0
    %3762 = vmatpush1.msra.mxu0 0.0
    %3763 = vmatprep.subr.mxu0 0.0
    %3764 = vmatpush1.msra.mxu0 0.0
    %3765 = vmatprep.subr.mxu0 0.0
    %3766 = vmatpush1.msra.mxu0 0.0
    %3767 = vmatprep.subr.mxu0 0.0
    %3768 = vmatpush1.msra.mxu0 0.0
    %3769 = vmatprep.subr.mxu0 0.0
    %3770 = vmatpush1.msra.mxu0 0.0
    %3771 = vmatprep.subr.mxu0 0.0
    %3772 = vmatpush1.msra.mxu0 0.0
    %3773 = vmatprep.subr.mxu0 0.0
    %3774 = vmatpush1.msra.mxu0 0.0
    %3775 = vmatprep.subr.mxu0 0.0
    %3776 = vmatpush1.msra.mxu0 0.0
    %3777 = vmatprep.subr.mxu0 0.0
    %3778 = vmatpush1.msra.mxu0 0.0
    %3779 = vmatprep.subr.mxu0 0.0
    %3780 = vmatpush1.msra.mxu0 0.0
    %3781 = vmatprep.subr.mxu0 0.0
    %3782 = vmatpush1.msra.mxu0 0.0
    %3783 = vmatprep.subr.mxu0 0.0
    %3784 = vmatpush1.msra.mxu0 0.0
    %3785 = vmatprep.subr.mxu0 0.0
    %3786 = vmatpush1.msra.mxu0 0.0
    %3787 = vmatprep.subr.mxu0 0.0
    %3788 = vmatpush1.msra.mxu0 0.0
    %3789 = vmatprep.subr.mxu0 0.0
    %3790 = vmatpush1.msra.mxu0 0.0
    %3791 = vmatprep.subr.mxu0 0.0
    %3792 = vmatpush1.msra.mxu0 0.0
    %3793 = vmatprep.subr.mxu0 0.0
    %3794 = vmatpush1.msra.mxu0 0.0
    %3795 = vmatprep.subr.mxu0 0.0
    %3796 = vmatpush1.msra.mxu0 0.0
    %3797 = vmatprep.subr.mxu0 0.0
    %3798 = vmatpush1.msra.mxu0 0.0
    %3799 = vmatprep.subr.mxu0 0.0
    %3800 = vmatpush1.msra.mxu0 0.0
    %3801 = vmatprep.subr.mxu0 0.0
    %3802 = vmatpush1.msra.mxu0 0.0
    %3803 = vmatprep.subr.mxu0 0.0
    %3804 = vmatpush1.msra.mxu0 0.0
    %3805 = vmatprep.subr.mxu0 0.0
    %3806 = vmatpush1.msra.mxu0 0.0
    %3807 = vmatprep.subr.mxu0 0.0
    %3808 = vmatpush1.msra.mxu0 0.0
    %3809 = vmatprep.subr.mxu0 0.0
    %3810 = vmatpush1.msra.mxu0 0.0
    %3811 = vmatprep.subr.mxu0 0.0
    %3812 = vmatpush1.msra.mxu0 0.0
    %3813 = vmatprep.mubr.f32.mxu0 0.0
    %3814 = vmatmul.mubr.f32.gmra.mrb[0].mxu0 %v3283
    %v3815 = vpop.f32.mrb[0].mxu0
    %v3816 = vadd.f32 0.0, %v3815
    %v3817 = vpop.f32.mrb[0].mxu0
    %3818 = vmatprep.mubr.f32.mxu0 0.0
    %3819 = vmatmul.mubr.f32.gmra.mrb[0].mxu0 %v3285
    %v3820 = vpop.f32.mrb[0].mxu0
    %v3821 = vadd.f32 0.0, %v3820
    %v3822 = vpop.f32.mrb[0].mxu0
    %3823 = vdwg.mxu0
    %v3824 = vadd.f32 %v3238, %v3354
    %v3825 = vadd.f32 %v3239, %v3356
    %v3826 = vadd.f32 %v3240, %v3431
    %v3827 = vadd.f32 %v3241, %v3433
    %v3828 = vadd.f32 %v3242, %v3508
    %v3829 = vadd.f32 %v3243, %v3510
    %v3830 = vadd.f32 %v3244, %v3585
    %v3831 = vadd.f32 %v3245, %v3587
    %v3832 = vadd.f32 %v3246, %v3662
    %v3833 = vadd.f32 %v3247, %v3664
    %v3834 = vadd.f32 %v3248, %v3739
    %v3835 = vadd.f32 %v3249, %v3741
    %v3836 = vadd.f32 %v3250, %v3816
    %v3837 = vadd.f32 %v3251, %v3360
    %v3838 = vadd.f32 %v3252, %v3362
    %v3839 = vadd.f32 %v3253, %v3437
    %v3840 = vadd.f32 %v3254, %v3439
    %v3841 = vadd.f32 %v3255, %v3514
    %v3842 = vadd.f32 %v3256, %v3516
    %v3843 = vadd.f32 %v3257, %v3591
    %v3844 = vadd.f32 %v3258, %v3593
    %v3845 = vadd.f32 %v3259, %v3668
    %v3846 = vadd.f32 %v3260, %v3670
    %v3847 = vadd.f32 %v3261, %v3745
    %v3848 = vadd.f32 %v3262, %v3747
    %v3849 = vadd.f32 %v3263, %v3821
    %v3850 = vld [vmem:[%s13 + $0x270] sm:$0xff]
    %v3851 = vld [vmem:[%s13 + $0x278] sm:$0xff]
    %v3852 = vld [vmem:[%s13 + $0x280] sm:$0xff]
    %v3853 = vld [vmem:[%s13 + $0x288] sm:$0xff]
    %v3854 = vld [vmem:[%s13 + $0x290] sm:$0xff]
    %v3855 = vld [vmem:[%s13 + $0x298] sm:$0xff]
    %v3856 = vld [vmem:[%s13 + $0x2a0] sm:$0xff]
    %v3857 = vld [vmem:[%s13 + $0x2a8] sm:$0xff]
    %v3858 = vld [vmem:[%s13 + $0x2b0] sm:$0xff]
    %v3859 = vld [vmem:[%s13 + $0x2b8] sm:$0xff]
    %v3860 = vld [vmem:[%s13 + $0x2c0] sm:$0xff]
    %v3861 = vld [vmem:[%s13 + $0x2c8] sm:$0xff]
    %v3862 = vld [vmem:[%s13 + $0x2d0] sm:$0xff]
    %3863 = vrot.lane.b32.xlu0 %v743, 88
    %v3864 = vpop.permute.xlu0 %3863
    %3865 = vrot.lane.b32.xlu0 %v744, 88
    %v3866 = vpop.permute.xlu0 %3865
    %v3867 = vsel %vm2694, %v3864, 0
    %v3869 = vsel %vm2694, %v3866, 0
    %3871 = vmatprep.subr.mxu0 %v3851
    %3872 = vmatpush1.msra.mxu0 %v3850
    %3873 = vmatprep.subr.mxu0 0.0
    %3874 = vmatpush1.msra.mxu0 0.0
    %3875 = vmatprep.subr.mxu0 0.0
    %3876 = vmatpush1.msra.mxu0 0.0
    %3877 = vmatprep.subr.mxu0 0.0
    %3878 = vmatpush1.msra.mxu0 0.0
    %3879 = vmatprep.subr.mxu0 0.0
    %3880 = vmatpush1.msra.mxu0 0.0
    %3881 = vmatprep.subr.mxu0 0.0
    %3882 = vmatpush1.msra.mxu0 0.0
    %3883 = vmatprep.subr.mxu0 0.0
    %3884 = vmatpush1.msra.mxu0 0.0
    %3885 = vmatprep.subr.mxu0 0.0
    %3886 = vmatpush1.msra.mxu0 0.0
    %3887 = vmatprep.subr.mxu0 0.0
    %3888 = vmatpush1.msra.mxu0 0.0
    %3889 = vmatprep.subr.mxu0 0.0
    %3890 = vmatpush1.msra.mxu0 0.0
    %3891 = vmatprep.subr.mxu0 0.0
    %3892 = vmatpush1.msra.mxu0 0.0
    %3893 = vmatprep.subr.mxu0 0.0
    %3894 = vmatpush1.msra.mxu0 0.0
    %3895 = vmatprep.subr.mxu0 0.0
    %3896 = vmatpush1.msra.mxu0 0.0
    %3897 = vmatprep.subr.mxu0 0.0
    %3898 = vmatpush1.msra.mxu0 0.0
    %3899 = vmatprep.subr.mxu0 0.0
    %3900 = vmatpush1.msra.mxu0 0.0
    %3901 = vmatprep.subr.mxu0 0.0
    %3902 = vmatpush1.msra.mxu0 0.0
    %3903 = vmatprep.subr.mxu0 0.0
    %3904 = vmatpush1.msra.mxu0 0.0
    %3905 = vmatprep.subr.mxu0 0.0
    %3906 = vmatpush1.msra.mxu0 0.0
    %3907 = vmatprep.subr.mxu0 0.0
    %3908 = vmatpush1.msra.mxu0 0.0
    %3909 = vmatprep.subr.mxu0 0.0
    %3910 = vmatpush1.msra.mxu0 0.0
    %3911 = vmatprep.subr.mxu0 0.0
    %3912 = vmatpush1.msra.mxu0 0.0
    %3913 = vmatprep.subr.mxu0 0.0
    %3914 = vmatpush1.msra.mxu0 0.0
    %3915 = vmatprep.subr.mxu0 0.0
    %3916 = vmatpush1.msra.mxu0 0.0
    %3917 = vmatprep.subr.mxu0 0.0
    %3918 = vmatpush1.msra.mxu0 0.0
    %3919 = vmatprep.subr.mxu0 0.0
    %3920 = vmatpush1.msra.mxu0 0.0
    %3921 = vmatprep.subr.mxu0 0.0
    %3922 = vmatpush1.msra.mxu0 0.0
    %3923 = vmatprep.subr.mxu0 0.0
    %3924 = vmatpush1.msra.mxu0 0.0
    %3925 = vmatprep.subr.mxu0 0.0
    %3926 = vmatpush1.msra.mxu0 0.0
    %3927 = vmatprep.subr.mxu0 0.0
    %3928 = vmatpush1.msra.mxu0 0.0
    %3929 = vmatprep.subr.mxu0 0.0
    %3930 = vmatpush1.msra.mxu0 0.0
    %3931 = vmatprep.subr.mxu0 0.0
    %3932 = vmatpush1.msra.mxu0 0.0
    %3933 = vmatprep.subr.mxu0 0.0
    %3934 = vmatpush1.msra.mxu0 0.0
    %3935 = vmatprep.mubr.f32.mxu0 0.0
    %3936 = vmatmul.mubr.f32.gmra.mrb[0].mxu0 %v3867
    %v3937 = vpop.f32.mrb[0].mxu0
    %v3938 = vadd.f32 0.0, %v3937
    %v3939 = vpop.f32.mrb[0].mxu0
    %v3940 = vadd.f32 0.0, %v3939
    %3941 = vmatprep.mubr.f32.mxu0 0.0
    %3942 = vmatmul.mubr.f32.gmra.mrb[0].mxu0 %v3869
    %v3943 = vpop.f32.mrb[0].mxu0
    %v3944 = vadd.f32 0.0, %v3943
    %v3945 = vpop.f32.mrb[0].mxu0
    %v3946 = vadd.f32 0.0, %v3945
    %3947 = vdwg.mxu0
    %3948 = vmatprep.subr.mxu0 %v3853
    %3949 = vmatpush1.msra.mxu0 %v3852
    %3950 = vmatprep.subr.mxu0 0.0
    %3951 = vmatpush1.msra.mxu0 0.0
    %3952 = vmatprep.subr.mxu0 0.0
    %3953 = vmatpush1.msra.mxu0 0.0
    %3954 = vmatprep.subr.mxu0 0.0
    %3955 = vmatpush1.msra.mxu0 0.0
    %3956 = vmatprep.subr.mxu0 0.0
    %3957 = vmatpush1.msra.mxu0 0.0
    %3958 = vmatprep.subr.mxu0 0.0
    %3959 = vmatpush1.msra.mxu0 0.0
    %3960 = vmatprep.subr.mxu0 0.0
    %3961 = vmatpush1.msra.mxu0 0.0
    %3962 = vmatprep.subr.mxu0 0.0
    %3963 = vmatpush1.msra.mxu0 0.0
    %3964 = vmatprep.subr.mxu0 0.0
    %3965 = vmatpush1.msra.mxu0 0.0
    %3966 = vmatprep.subr.mxu0 0.0
    %3967 = vmatpush1.msra.mxu0 0.0
    %3968 = vmatprep.subr.mxu0 0.0
    %3969 = vmatpush1.msra.mxu0 0.0
    %3970 = vmatprep.subr.mxu0 0.0
    %3971 = vmatpush1.msra.mxu0 0.0
    %3972 = vmatprep.subr.mxu0 0.0
    %3973 = vmatpush1.msra.mxu0 0.0
    %3974 = vmatprep.subr.mxu0 0.0
    %3975 = vmatpush1.msra.mxu0 0.0
    %3976 = vmatprep.subr.mxu0 0.0
    %3977 = vmatpush1.msra.mxu0 0.0
    %3978 = vmatprep.subr.mxu0 0.0
    %3979 = vmatpush1.msra.mxu0 0.0
    %3980 = vmatprep.subr.mxu0 0.0
    %3981 = vmatpush1.msra.mxu0 0.0
    %3982 = vmatprep.subr.mxu0 0.0
    %3983 = vmatpush1.msra.mxu0 0.0
    %3984 = vmatprep.subr.mxu0 0.0
    %3985 = vmatpush1.msra.mxu0 0.0
    %3986 = vmatprep.subr.mxu0 0.0
    %3987 = vmatpush1.msra.mxu0 0.0
    %3988 = vmatprep.subr.mxu0 0.0
    %3989 = vmatpush1.msra.mxu0 0.0
    %3990 = vmatprep.subr.mxu0 0.0
    %3991 = vmatpush1.msra.mxu0 0.0
    %3992 = vmatprep.subr.mxu0 0.0
    %3993 = vmatpush1.msra.mxu0 0.0
    %3994 = vmatprep.subr.mxu0 0.0
    %3995 = vmatpush1.msra.mxu0 0.0
    %3996 = vmatprep.subr.mxu0 0.0
    %3997 = vmatpush1.msra.mxu0 0.0
    %3998 = vmatprep.subr.mxu0 0.0
    %3999 = vmatpush1.msra.mxu0 0.0
    %4000 = vmatprep.subr.mxu0 0.0
    %4001 = vmatpush1.msra.mxu0 0.0
    %4002 = vmatprep.subr.mxu0 0.0
    %4003 = vmatpush1.msra.mxu0 0.0
    %4004 = vmatprep.subr.mxu0 0.0
    %4005 = vmatpush1.msra.mxu0 0.0
    %4006 = vmatprep.subr.mxu0 0.0
    %4007 = vmatpush1.msra.mxu0 0.0
    %4008 = vmatprep.subr.mxu0 0.0
    %4009 = vmatpush1.msra.mxu0 0.0
    %4010 = vmatprep.subr.mxu0 0.0
    %4011 = vmatpush1.msra.mxu0 0.0
    %4012 = vmatprep.mubr.f32.mxu0 0.0
    %4013 = vmatmul.mubr.f32.gmra.mrb[0].mxu0 %v3867
    %v4014 = vpop.f32.mrb[0].mxu0
    %v4015 = vadd.f32 0.0, %v4014
    %v4016 = vpop.f32.mrb[0].mxu0
    %v4017 = vadd.f32 0.0, %v4016
    %4018 = vmatprep.mubr.f32.mxu0 0.0
    %4019 = vmatmul.mubr.f32.gmra.mrb[0].mxu0 %v3869
    %v4020 = vpop.f32.mrb[0].mxu0
    %v4021 = vadd.f32 0.0, %v4020
    %v4022 = vpop.f32.mrb[0].mxu0
    %v4023 = vadd.f32 0.0, %v4022
    %4024 = vdwg.mxu0
    %4025 = vmatprep.subr.mxu0 %v3855
    %4026 = vmatpush1.msra.mxu0 %v3854
    %4027 = vmatprep.subr.mxu0 0.0
    %4028 = vmatpush1.msra.mxu0 0.0
    %4029 = vmatprep.subr.mxu0 0.0
    %4030 = vmatpush1.msra.mxu0 0.0
    %4031 = vmatprep.subr.mxu0 0.0
    %4032 = vmatpush1.msra.mxu0 0.0
    %4033 = vmatprep.subr.mxu0 0.0
    %4034 = vmatpush1.msra.mxu0 0.0
    %4035 = vmatprep.subr.mxu0 0.0
    %4036 = vmatpush1.msra.mxu0 0.0
    %4037 = vmatprep.subr.mxu0 0.0
    %4038 = vmatpush1.msra.mxu0 0.0
    %4039 = vmatprep.subr.mxu0 0.0
    %4040 = vmatpush1.msra.mxu0 0.0
    %4041 = vmatprep.subr.mxu0 0.0
    %4042 = vmatpush1.msra.mxu0 0.0
    %4043 = vmatprep.subr.mxu0 0.0
    %4044 = vmatpush1.msra.mxu0 0.0
    %4045 = vmatprep.subr.mxu0 0.0
    %4046 = vmatpush1.msra.mxu0 0.0
    %4047 = vmatprep.subr.mxu0 0.0
    %4048 = vmatpush1.msra.mxu0 0.0
    %4049 = vmatprep.subr.mxu0 0.0
    %4050 = vmatpush1.msra.mxu0 0.0
    %4051 = vmatprep.subr.mxu0 0.0
    %4052 = vmatpush1.msra.mxu0 0.0
    %4053 = vmatprep.subr.mxu0 0.0
    %4054 = vmatpush1.msra.mxu0 0.0
    %4055 = vmatprep.subr.mxu0 0.0
    %4056 = vmatpush1.msra.mxu0 0.0
    %4057 = vmatprep.subr.mxu0 0.0
    %4058 = vmatpush1.msra.mxu0 0.0
    %4059 = vmatprep.subr.mxu0 0.0
    %4060 = vmatpush1.msra.mxu0 0.0
    %4061 = vmatprep.subr.mxu0 0.0
    %4062 = vmatpush1.msra.mxu0 0.0
    %4063 = vmatprep.subr.mxu0 0.0
    %4064 = vmatpush1.msra.mxu0 0.0
    %4065 = vmatprep.subr.mxu0 0.0
    %4066 = vmatpush1.msra.mxu0 0.0
    %4067 = vmatprep.subr.mxu0 0.0
    %4068 = vmatpush1.msra.mxu0 0.0
    %4069 = vmatprep.subr.mxu0 0.0
    %4070 = vmatpush1.msra.mxu0 0.0
    %4071 = vmatprep.subr.mxu0 0.0
    %4072 = vmatpush1.msra.mxu0 0.0
    %4073 = vmatprep.subr.mxu0 0.0
    %4074 = vmatpush1.msra.mxu0 0.0
    %4075 = vmatprep.subr.mxu0 0.0
    %4076 = vmatpush1.msra.mxu0 0.0
    %4077 = vmatprep.subr.mxu0 0.0
    %4078 = vmatpush1.msra.mxu0 0.0
    %4079 = vmatprep.subr.mxu0 0.0
    %4080 = vmatpush1.msra.mxu0 0.0
    %4081 = vmatprep.subr.mxu0 0.0
    %4082 = vmatpush1.msra.mxu0 0.0
    %4083 = vmatprep.subr.mxu0 0.0
    %4084 = vmatpush1.msra.mxu0 0.0
    %4085 = vmatprep.subr.mxu0 0.0
    %4086 = vmatpush1.msra.mxu0 0.0
    %4087 = vmatprep.subr.mxu0 0.0
    %4088 = vmatpush1.msra.mxu0 0.0
    %4089 = vmatprep.mubr.f32.mxu0 0.0
    %4090 = vmatmul.mubr.f32.gmra.mrb[0].mxu0 %v3867
    %v4091 = vpop.f32.mrb[0].mxu0
    %v4092 = vadd.f32 0.0, %v4091
    %v4093 = vpop.f32.mrb[0].mxu0
    %v4094 = vadd.f32 0.0, %v4093
    %4095 = vmatprep.mubr.f32.mxu0 0.0
    %4096 = vmatmul.mubr.f32.gmra.mrb[0].mxu0 %v3869
    %v4097 = vpop.f32.mrb[0].mxu0
    %v4098 = vadd.f32 0.0, %v4097
    %v4099 = vpop.f32.mrb[0].mxu0
    %v4100 = vadd.f32 0.0, %v4099
    %4101 = vdwg.mxu0
    %4102 = vmatprep.subr.mxu0 %v3857
    %4103 = vmatpush1.msra.mxu0 %v3856
    %4104 = vmatprep.subr.mxu0 0.0
    %4105 = vmatpush1.msra.mxu0 0.0
    %4106 = vmatprep.subr.mxu0 0.0
    %4107 = vmatpush1.msra.mxu0 0.0
    %4108 = vmatprep.subr.mxu0 0.0
    %4109 = vmatpush1.msra.mxu0 0.0
    %4110 = vmatprep.subr.mxu0 0.0
    %4111 = vmatpush1.msra.mxu0 0.0
    %4112 = vmatprep.subr.mxu0 0.0
    %4113 = vmatpush1.msra.mxu0 0.0
    %4114 = vmatprep.subr.mxu0 0.0
    %4115 = vmatpush1.msra.mxu0 0.0
    %4116 = vmatprep.subr.mxu0 0.0
    %4117 = vmatpush1.msra.mxu0 0.0
    %4118 = vmatprep.subr.mxu0 0.0
    %4119 = vmatpush1.msra.mxu0 0.0
    %4120 = vmatprep.subr.mxu0 0.0
    %4121 = vmatpush1.msra.mxu0 0.0
    %4122 = vmatprep.subr.mxu0 0.0
    %4123 = vmatpush1.msra.mxu0 0.0
    %4124 = vmatprep.subr.mxu0 0.0
    %4125 = vmatpush1.msra.mxu0 0.0
    %4126 = vmatprep.subr.mxu0 0.0
    %4127 = vmatpush1.msra.mxu0 0.0
    %4128 = vmatprep.subr.mxu0 0.0
    %4129 = vmatpush1.msra.mxu0 0.0
    %4130 = vmatprep.subr.mxu0 0.0
    %4131 = vmatpush1.msra.mxu0 0.0
    %4132 = vmatprep.subr.mxu0 0.0
    %4133 = vmatpush1.msra.mxu0 0.0
    %4134 = vmatprep.subr.mxu0 0.0
    %4135 = vmatpush1.msra.mxu0 0.0
    %4136 = vmatprep.subr.mxu0 0.0
    %4137 = vmatpush1.msra.mxu0 0.0
    %4138 = vmatprep.subr.mxu0 0.0
    %4139 = vmatpush1.msra.mxu0 0.0
    %4140 = vmatprep.subr.mxu0 0.0
    %4141 = vmatpush1.msra.mxu0 0.0
    %4142 = vmatprep.subr.mxu0 0.0
    %4143 = vmatpush1.msra.mxu0 0.0
    %4144 = vmatprep.subr.mxu0 0.0
    %4145 = vmatpush1.msra.mxu0 0.0
    %4146 = vmatprep.subr.mxu0 0.0
    %4147 = vmatpush1.msra.mxu0 0.0
    %4148 = vmatprep.subr.mxu0 0.0
    %4149 = vmatpush1.msra.mxu0 0.0
    %4150 = vmatprep.subr.mxu0 0.0
    %4151 = vmatpush1.msra.mxu0 0.0
    %4152 = vmatprep.subr.mxu0 0.0
    %4153 = vmatpush1.msra.mxu0 0.0
    %4154 = vmatprep.subr.mxu0 0.0
    %4155 = vmatpush1.msra.mxu0 0.0
    %4156 = vmatprep.subr.mxu0 0.0
    %4157 = vmatpush1.msra.mxu0 0.0
    %4158 = vmatprep.subr.mxu0 0.0
    %4159 = vmatpush1.msra.mxu0 0.0
    %4160 = vmatprep.subr.mxu0 0.0
    %4161 = vmatpush1.msra.mxu0 0.0
    %4162 = vmatprep.subr.mxu0 0.0
    %4163 = vmatpush1.msra.mxu0 0.0
    %4164 = vmatprep.subr.mxu0 0.0
    %4165 = vmatpush1.msra.mxu0 0.0
    %4166 = vmatprep.mubr.f32.mxu0 0.0
    %4167 = vmatmul.mubr.f32.gmra.mrb[0].mxu0 %v3867
    %v4168 = vpop.f32.mrb[0].mxu0
    %v4169 = vadd.f32 0.0, %v4168
    %v4170 = vpop.f32.mrb[0].mxu0
    %v4171 = vadd.f32 0.0, %v4170
    %4172 = vmatprep.mubr.f32.mxu0 0.0
    %4173 = vmatmul.mubr.f32.gmra.mrb[0].mxu0 %v3869
    %v4174 = vpop.f32.mrb[0].mxu0
    %v4175 = vadd.f32 0.0, %v4174
    %v4176 = vpop.f32.mrb[0].mxu0
    %v4177 = vadd.f32 0.0, %v4176
    %4178 = vdwg.mxu0
    %4179 = vmatprep.subr.mxu0 %v3859
    %4180 = vmatpush1.msra.mxu0 %v3858
    %4181 = vmatprep.subr.mxu0 0.0
    %4182 = vmatpush1.msra.mxu0 0.0
    %4183 = vmatprep.subr.mxu0 0.0
    %4184 = vmatpush1.msra.mxu0 0.0
    %4185 = vmatprep.subr.mxu0 0.0
    %4186 = vmatpush1.msra.mxu0 0.0
    %4187 = vmatprep.subr.mxu0 0.0
    %4188 = vmatpush1.msra.mxu0 0.0
    %4189 = vmatprep.subr.mxu0 0.0
    %4190 = vmatpush1.msra.mxu0 0.0
    %4191 = vmatprep.subr.mxu0 0.0
    %4192 = vmatpush1.msra.mxu0 0.0
    %4193 = vmatprep.subr.mxu0 0.0
    %4194 = vmatpush1.msra.mxu0 0.0
    %4195 = vmatprep.subr.mxu0 0.0
    %4196 = vmatpush1.msra.mxu0 0.0
    %4197 = vmatprep.subr.mxu0 0.0
    %4198 = vmatpush1.msra.mxu0 0.0
    %4199 = vmatprep.subr.mxu0 0.0
    %4200 = vmatpush1.msra.mxu0 0.0
    %4201 = vmatprep.subr.mxu0 0.0
    %4202 = vmatpush1.msra.mxu0 0.0
    %4203 = vmatprep.subr.mxu0 0.0
    %4204 = vmatpush1.msra.mxu0 0.0
    %4205 = vmatprep.subr.mxu0 0.0
    %4206 = vmatpush1.msra.mxu0 0.0
    %4207 = vmatprep.subr.mxu0 0.0
    %4208 = vmatpush1.msra.mxu0 0.0
    %4209 = vmatprep.subr.mxu0 0.0
    %4210 = vmatpush1.msra.mxu0 0.0
    %4211 = vmatprep.subr.mxu0 0.0
    %4212 = vmatpush1.msra.mxu0 0.0
    %4213 = vmatprep.subr.mxu0 0.0
    %4214 = vmatpush1.msra.mxu0 0.0
    %4215 = vmatprep.subr.mxu0 0.0
    %4216 = vmatpush1.msra.mxu0 0.0
    %4217 = vmatprep.subr.mxu0 0.0
    %4218 = vmatpush1.msra.mxu0 0.0
    %4219 = vmatprep.subr.mxu0 0.0
    %4220 = vmatpush1.msra.mxu0 0.0
    %4221 = vmatprep.subr.mxu0 0.0
    %4222 = vmatpush1.msra.mxu0 0.0
    %4223 = vmatprep.subr.mxu0 0.0
    %4224 = vmatpush1.msra.mxu0 0.0
    %4225 = vmatprep.subr.mxu0 0.0
    %4226 = vmatpush1.msra.mxu0 0.0
    %4227 = vmatprep.subr.mxu0 0.0
    %4228 = vmatpush1.msra.mxu0 0.0
    %4229 = vmatprep.subr.mxu0 0.0
    %4230 = vmatpush1.msra.mxu0 0.0
    %4231 = vmatprep.subr.mxu0 0.0
    %4232 = vmatpush1.msra.mxu0 0.0
    %4233 = vmatprep.subr.mxu0 0.0
    %4234 = vmatpush1.msra.mxu0 0.0
    %4235 = vmatprep.subr.mxu0 0.0
    %4236 = vmatpush1.msra.mxu0 0.0
    %4237 = vmatprep.subr.mxu0 0.0
    %4238 = vmatpush1.msra.mxu0 0.0
    %4239 = vmatprep.subr.mxu0 0.0
    %4240 = vmatpush1.msra.mxu0 0.0
    %4241 = vmatprep.subr.mxu0 0.0
    %4242 = vmatpush1.msra.mxu0 0.0
    %4243 = vmatprep.mubr.f32.mxu0 0.0
    %4244 = vmatmul.mubr.f32.gmra.mrb[0].mxu0 %v3867
    %v4245 = vpop.f32.mrb[0].mxu0
    %v4246 = vadd.f32 0.0, %v4245
    %v4247 = vpop.f32.mrb[0].mxu0
    %v4248 = vadd.f32 0.0, %v4247
    %4249 = vmatprep.mubr.f32.mxu0 0.0
    %4250 = vmatmul.mubr.f32.gmra.mrb[0].mxu0 %v3869
    %v4251 = vpop.f32.mrb[0].mxu0
    %v4252 = vadd.f32 0.0, %v4251
    %v4253 = vpop.f32.mrb[0].mxu0
    %v4254 = vadd.f32 0.0, %v4253
    %4255 = vdwg.mxu0
    %4256 = vmatprep.subr.mxu0 %v3861
    %4257 = vmatpush1.msra.mxu0 %v3860
    %4258 = vmatprep.subr.mxu0 0.0
    %4259 = vmatpush1.msra.mxu0 0.0
    %4260 = vmatprep.subr.mxu0 0.0
    %4261 = vmatpush1.msra.mxu0 0.0
    %4262 = vmatprep.subr.mxu0 0.0
    %4263 = vmatpush1.msra.mxu0 0.0
    %4264 = vmatprep.subr.mxu0 0.0
    %4265 = vmatpush1.msra.mxu0 0.0
    %4266 = vmatprep.subr.mxu0 0.0
    %4267 = vmatpush1.msra.mxu0 0.0
    %4268 = vmatprep.subr.mxu0 0.0
    %4269 = vmatpush1.msra.mxu0 0.0
    %4270 = vmatprep.subr.mxu0 0.0
    %4271 = vmatpush1.msra.mxu0 0.0
    %4272 = vmatprep.subr.mxu0 0.0
    %4273 = vmatpush1.msra.mxu0 0.0
    %4274 = vmatprep.subr.mxu0 0.0
    %4275 = vmatpush1.msra.mxu0 0.0
    %4276 = vmatprep.subr.mxu0 0.0
    %4277 = vmatpush1.msra.mxu0 0.0
    %4278 = vmatprep.subr.mxu0 0.0
    %4279 = vmatpush1.msra.mxu0 0.0
    %4280 = vmatprep.subr.mxu0 0.0
    %4281 = vmatpush1.msra.mxu0 0.0
    %4282 = vmatprep.subr.mxu0 0.0
    %4283 = vmatpush1.msra.mxu0 0.0
    %4284 = vmatprep.subr.mxu0 0.0
    %4285 = vmatpush1.msra.mxu0 0.0
    %4286 = vmatprep.subr.mxu0 0.0
    %4287 = vmatpush1.msra.mxu0 0.0
    %4288 = vmatprep.subr.mxu0 0.0
    %4289 = vmatpush1.msra.mxu0 0.0
    %4290 = vmatprep.subr.mxu0 0.0
    %4291 = vmatpush1.msra.mxu0 0.0
    %4292 = vmatprep.subr.mxu0 0.0
    %4293 = vmatpush1.msra.mxu0 0.0
    %4294 = vmatprep.subr.mxu0 0.0
    %4295 = vmatpush1.msra.mxu0 0.0
    %4296 = vmatprep.subr.mxu0 0.0
    %4297 = vmatpush1.msra.mxu0 0.0
    %4298 = vmatprep.subr.mxu0 0.0
    %4299 = vmatpush1.msra.mxu0 0.0
    %4300 = vmatprep.subr.mxu0 0.0
    %4301 = vmatpush1.msra.mxu0 0.0
    %4302 = vmatprep.subr.mxu0 0.0
    %4303 = vmatpush1.msra.mxu0 0.0
    %4304 = vmatprep.subr.mxu0 0.0
    %4305 = vmatpush1.msra.mxu0 0.0
    %4306 = vmatprep.subr.mxu0 0.0
    %4307 = vmatpush1.msra.mxu0 0.0
    %4308 = vmatprep.subr.mxu0 0.0
    %4309 = vmatpush1.msra.mxu0 0.0
    %4310 = vmatprep.subr.mxu0 0.0
    %4311 = vmatpush1.msra.mxu0 0.0
    %4312 = vmatprep.subr.mxu0 0.0
    %4313 = vmatpush1.msra.mxu0 0.0
    %4314 = vmatprep.subr.mxu0 0.0
    %4315 = vmatpush1.msra.mxu0 0.0
    %4316 = vmatprep.subr.mxu0 0.0
    %4317 = vmatpush1.msra.mxu0 0.0
    %4318 = vmatprep.subr.mxu0 0.0
    %4319 = vmatpush1.msra.mxu0 0.0
    %4320 = vmatprep.mubr.f32.mxu0 0.0
    %4321 = vmatmul.mubr.f32.gmra.mrb[0].mxu0 %v3867
    %v4322 = vpop.f32.mrb[0].mxu0
    %v4323 = vadd.f32 0.0, %v4322
    %v4324 = vpop.f32.mrb[0].mxu0
    %v4325 = vadd.f32 0.0, %v4324
    %4326 = vmatprep.mubr.f32.mxu0 0.0
    %4327 = vmatmul.mubr.f32.gmra.mrb[0].mxu0 %v3869
    %v4328 = vpop.f32.mrb[0].mxu0
    %v4329 = vadd.f32 0.0, %v4328
    %v4330 = vpop.f32.mrb[0].mxu0
    %v4331 = vadd.f32 0.0, %v4330
    %4332 = vdwg.mxu0
    %4333 = vmatprep.subr.mxu0 0.0
    %4334 = vmatpush1.msra.mxu0 %v3862
    %4335 = vmatprep.subr.mxu0 0.0
    %4336 = vmatpush1.msra.mxu0 0.0
    %4337 = vmatprep.subr.mxu0 0.0
    %4338 = vmatpush1.msra.mxu0 0.0
    %4339 = vmatprep.subr.mxu0 0.0
    %4340 = vmatpush1.msra.mxu0 0.0
    %4341 = vmatprep.subr.mxu0 0.0
    %4342 = vmatpush1.msra.mxu0 0.0
    %4343 = vmatprep.subr.mxu0 0.0
    %4344 = vmatpush1.msra.mxu0 0.0
    %4345 = vmatprep.subr.mxu0 0.0
    %4346 = vmatpush1.msra.mxu0 0.0
    %4347 = vmatprep.subr.mxu0 0.0
    %4348 = vmatpush1.msra.mxu0 0.0
    %4349 = vmatprep.subr.mxu0 0.0
    %4350 = vmatpush1.msra.mxu0 0.0
    %4351 = vmatprep.subr.mxu0 0.0
    %4352 = vmatpush1.msra.mxu0 0.0
    %4353 = vmatprep.subr.mxu0 0.0
    %4354 = vmatpush1.msra.mxu0 0.0
    %4355 = vmatprep.subr.mxu0 0.0
    %4356 = vmatpush1.msra.mxu0 0.0
    %4357 = vmatprep.subr.mxu0 0.0
    %4358 = vmatpush1.msra.mxu0 0.0
    %4359 = vmatprep.subr.mxu0 0.0
    %4360 = vmatpush1.msra.mxu0 0.0
    %4361 = vmatprep.subr.mxu0 0.0
    %4362 = vmatpush1.msra.mxu0 0.0
    %4363 = vmatprep.subr.mxu0 0.0
    %4364 = vmatpush1.msra.mxu0 0.0
    %4365 = vmatprep.subr.mxu0 0.0
    %4366 = vmatpush1.msra.mxu0 0.0
    %4367 = vmatprep.subr.mxu0 0.0
    %4368 = vmatpush1.msra.mxu0 0.0
    %4369 = vmatprep.subr.mxu0 0.0
    %4370 = vmatpush1.msra.mxu0 0.0
    %4371 = vmatprep.subr.mxu0 0.0
    %4372 = vmatpush1.msra.mxu0 0.0
    %4373 = vmatprep.subr.mxu0 0.0
    %4374 = vmatpush1.msra.mxu0 0.0
    %4375 = vmatprep.subr.mxu0 0.0
    %4376 = vmatpush1.msra.mxu0 0.0
    %4377 = vmatprep.subr.mxu0 0.0
    %4378 = vmatpush1.msra.mxu0 0.0
    %4379 = vmatprep.subr.mxu0 0.0
    %4380 = vmatpush1.msra.mxu0 0.0
    %4381 = vmatprep.subr.mxu0 0.0
    %4382 = vmatpush1.msra.mxu0 0.0
    %4383 = vmatprep.subr.mxu0 0.0
    %4384 = vmatpush1.msra.mxu0 0.0
    %4385 = vmatprep.subr.mxu0 0.0
    %4386 = vmatpush1.msra.mxu0 0.0
    %4387 = vmatprep.subr.mxu0 0.0
    %4388 = vmatpush1.msra.mxu0 0.0
    %4389 = vmatprep.subr.mxu0 0.0
    %4390 = vmatpush1.msra.mxu0 0.0
    %4391 = vmatprep.subr.mxu0 0.0
    %4392 = vmatpush1.msra.mxu0 0.0
    %4393 = vmatprep.subr.mxu0 0.0
    %4394 = vmatpush1.msra.mxu0 0.0
    %4395 = vmatprep.subr.mxu0 0.0
    %4396 = vmatpush1.msra.mxu0 0.0
    %4397 = vmatprep.mubr.f32.mxu0 0.0
    %4398 = vmatmul.mubr.f32.gmra.mrb[0].mxu0 %v3867
    %v4399 = vpop.f32.mrb[0].mxu0
    %v4400 = vadd.f32 0.0, %v4399
    %v4401 = vpop.f32.mrb[0].mxu0
    %4402 = vmatprep.mubr.f32.mxu0 0.0
    %4403 = vmatmul.mubr.f32.gmra.mrb[0].mxu0 %v3869
    %v4404 = vpop.f32.mrb[0].mxu0
    %v4405 = vadd.f32 0.0, %v4404
    %v4406 = vpop.f32.mrb[0].mxu0
    %4407 = vdwg.mxu0
    %v4408 = vadd.f32 %v3824, %v3938
    %v4409 = vadd.f32 %v3825, %v3940
    %v4410 = vadd.f32 %v3826, %v4015
    %v4411 = vadd.f32 %v3827, %v4017
    %v4412 = vadd.f32 %v3828, %v4092
    %v4413 = vadd.f32 %v3829, %v4094
    %v4414 = vadd.f32 %v3830, %v4169
    %v4415 = vadd.f32 %v3831, %v4171
    %v4416 = vadd.f32 %v3832, %v4246
    %v4417 = vadd.f32 %v3833, %v4248
    %v4418 = vadd.f32 %v3834, %v4323
    %v4419 = vadd.f32 %v3835, %v4325
    %v4420 = vadd.f32 %v3836, %v4400
    %v4421 = vadd.f32 %v3837, %v3944
    %v4422 = vadd.f32 %v3838, %v3946
    %v4423 = vadd.f32 %v3839, %v4021
    %v4424 = vadd.f32 %v3840, %v4023
    %v4425 = vadd.f32 %v3841, %v4098
    %v4426 = vadd.f32 %v3842, %v4100
    %v4427 = vadd.f32 %v3843, %v4175
    %v4428 = vadd.f32 %v3844, %v4177
    %v4429 = vadd.f32 %v3845, %v4252
    %v4430 = vadd.f32 %v3846, %v4254
    %v4431 = vadd.f32 %v3847, %v4329
    %v4432 = vadd.f32 %v3848, %v4331
    %v4433 = vadd.f32 %v3849, %v4405
    %4434 = vmatprep.subr.mxu0 0.0
    %4435 = vmatpush1.xpose.msra.mxu0 %v4410
    %4436 = vmatprep.subr.mxu0 0.0
    %4437 = vmatpush1.xpose.msra.mxu0 %v4423
    %4438 = vmatprep.subr.mxu0 0.0
    %4439 = vmatpush1.xpose.msra.mxu0 0.0
    %4440 = vmatprep.subr.mxu0 0.0
    %4441 = vmatpush1.xpose.msra.mxu0 0.0
    %4442 = vmatprep.subr.mxu0 0.0
    %4443 = vmatpush1.xpose.msra.mxu0 0.0
    %4444 = vmatprep.subr.mxu0 0.0
    %4445 = vmatpush1.xpose.msra.mxu0 0.0
    %4446 = vmatprep.subr.mxu0 0.0
    %4447 = vmatpush1.xpose.msra.mxu0 0.0
    %4448 = vmatprep.subr.mxu0 0.0
    %4449 = vmatpush1.xpose.msra.mxu0 0.0
    %4450 = vmatprep.subr.mxu0 0.0
    %4451 = vmatpush1.xpose.msra.mxu0 0.0
    %4452 = vmatprep.subr.mxu0 0.0
    %4453 = vmatpush1.xpose.msra.mxu0 0.0
    %4454 = vmatprep.subr.mxu0 0.0
    %4455 = vmatpush1.xpose.msra.mxu0 0.0
    %4456 = vmatprep.subr.mxu0 0.0
    %4457 = vmatpush1.xpose.msra.mxu0 0.0
    %4458 = vmatprep.subr.mxu0 0.0
    %4459 = vmatpush1.xpose.msra.mxu0 0.0
    %4460 = vmatprep.subr.mxu0 0.0
    %4461 = vmatpush1.xpose.msra.mxu0 0.0
    %4462 = vmatprep.subr.mxu0 0.0
    %4463 = vmatpush1.xpose.msra.mxu0 0.0
    %4464 = vmatprep.subr.mxu0 0.0
    %4465 = vmatpush1.xpose.msra.mxu0 0.0
    %4466 = vmatprep.subr.mxu0 0.0
    %4467 = vmatpush1.xpose.msra.mxu0 0.0
    %4468 = vmatprep.subr.mxu0 0.0
    %4469 = vmatpush1.xpose.msra.mxu0 0.0
    %4470 = vmatprep.subr.mxu0 0.0
    %4471 = vmatpush1.xpose.msra.mxu0 0.0
    %4472 = vmatprep.subr.mxu0 0.0
    %4473 = vmatpush1.xpose.msra.mxu0 0.0
    %4474 = vmatprep.subr.mxu0 0.0
    %4475 = vmatpush1.xpose.msra.mxu0 0.0
    %4476 = vmatprep.subr.mxu0 0.0
    %4477 = vmatpush1.xpose.msra.mxu0 0.0
    %4478 = vmatprep.subr.mxu0 0.0
    %4479 = vmatpush1.xpose.msra.mxu0 0.0
    %4480 = vmatprep.subr.mxu0 0.0
    %4481 = vmatpush1.xpose.msra.mxu0 0.0
    %4482 = vmatprep.subr.mxu0 0.0
    %4483 = vmatpush1.xpose.msra.mxu0 0.0
    %4484 = vmatprep.subr.mxu0 0.0
    %4485 = vmatpush1.xpose.msra.mxu0 0.0
    %4486 = vmatprep.subr.mxu0 0.0
    %4487 = vmatpush1.xpose.msra.mxu0 0.0
    %4488 = vmatprep.subr.mxu0 0.0
    %4489 = vmatpush1.xpose.msra.mxu0 0.0
    %4490 = vmatprep.subr.mxu0 0.0
    %4491 = vmatpush1.xpose.msra.mxu0 0.0
    %4492 = vmatprep.subr.mxu0 0.0
    %4493 = vmatpush1.xpose.msra.mxu0 0.0
    %4494 = vmatprep.subr.mxu0 0.0
    %4495 = vmatpush1.xpose.msra.mxu0 0.0
    %4496 = vmatprep.subr.mxu0 0.0
    %4497 = vmatpush1.xpose.msra.mxu0 0.0
    %4498 = vmatprep.mubr.f32.mxu0 0.0
    %4499 = vmatmul.mubr.f32.gmra.mrb[0].mxu0 %v4408
    %v4500 = vpop.f32.mrb[0].mxu0
    %v4501 = vadd.f32 0.0, %v4500
    %v4502 = vpop.f32.mrb[0].mxu0
    %4503 = vmatprep.mubr.f32.mxu0 0.0
    %4504 = vmatmul.mubr.f32.gmra.mrb[0].mxu0 %v4421
    %v4505 = vpop.f32.mrb[0].mxu0
    %v4506 = vadd.f32 0.0, %v4505
    %v4507 = vpop.f32.mrb[0].mxu0
    %4508 = vdwg.mxu0
    %v4509 = vmul.f32 %v4501, 0.17677669
    %v4510 = vmul.f32 %v4506, 0.17677669
    %vm4511 = vcmp.gt.f32.partialorder %v763, 0.0
    %vm4512 = vcmp.gt.f32.partialorder %v764, 0.0
    %v4513 = vsel %vm4511, %v4509, -1e+30
    %v4514 = vsel %vm4512, %v4510, -1e+30
    %vm4515 = vcmask 72704
    %v4516 = vsel %vm4515, %v4513, -inf
    %4517 = vmax.xlane.f32.xlu0 %v4516
    %v4518 = vpop.xlane.xlu0 %4517
    %vm4519 = vcmask 65536
    %v4520 = vsel %vm4519, %v4514, -inf
    %4521 = vmax.xlane.f32.xlu0 %v4520
    %v4522 = vpop.xlane.xlu0 %4521
    %v4523 = vsub.f32 %v4513, %v4518
    %v4524 = vsub.f32 %v4514, %v4522
    %v4525 = vmul.f32 %v4523, 1.442695
    %v4526 = vpow.pop %v4525
    %v4527 = vmul.f32 %v4524, 1.442695
    %v4528 = vpow.pop %v4527
    %v4529 = vmul.f32 %v4526, %v763
    %v4530 = vmul.f32 %v4528, %v764
    %v4531 = vsel %vm4515, %v4529, 0.0
    %4532 = vadd.xlane.f32.xlu0 %v4531
    %v4533 = vpop.xlane.xlu0 %4532
    %v4534 = vsel %vm4519, %v4530, 0.0
    %4535 = vadd.xlane.f32.xlu0 %v4534
    %v4536 = vpop.xlane.xlu0 %4535
    %v4537 = vmax.f32 %v4533, 1e-20
    %v4538 = vmax.f32 %v4536, 1e-20
    %v4539 = vrcp.pop %v4537
    %v4540 = vrcp.pop %v4538
    %v4542 = vsel %vm4515, %v4529, 0
    %v4545 = vsel %vm4515, %v4530, 0
    %vm4547 = vcmask 1040384
    %v4549 = vsel %vm4547, %v4425, 0
    %4551 = vmatprep.subr.mxu0 0.0
    %4552 = vmatpush1.msra.mxu0 %v4412
    %4553 = vmatprep.subr.mxu0 0.0
    %4554 = vmatpush1.msra.mxu0 %v4549
    %4555 = vmatprep.subr.mxu0 0.0
    %4556 = vmatpush1.msra.mxu0 0.0
    %4557 = vmatprep.subr.mxu0 0.0
    %4558 = vmatpush1.msra.mxu0 0.0
    %4559 = vmatprep.subr.mxu0 0.0
    %4560 = vmatpush1.msra.mxu0 0.0
    %4561 = vmatprep.subr.mxu0 0.0
    %4562 = vmatpush1.msra.mxu0 0.0
    %4563 = vmatprep.subr.mxu0 0.0
    %4564 = vmatpush1.msra.mxu0 0.0
    %4565 = vmatprep.subr.mxu0 0.0
    %4566 = vmatpush1.msra.mxu0 0.0
    %4567 = vmatprep.subr.mxu0 0.0
    %4568 = vmatpush1.msra.mxu0 0.0
    %4569 = vmatprep.subr.mxu0 0.0
    %4570 = vmatpush1.msra.mxu0 0.0
    %4571 = vmatprep.subr.mxu0 0.0
    %4572 = vmatpush1.msra.mxu0 0.0
    %4573 = vmatprep.subr.mxu0 0.0
    %4574 = vmatpush1.msra.mxu0 0.0
    %4575 = vmatprep.subr.mxu0 0.0
    %4576 = vmatpush1.msra.mxu0 0.0
    %4577 = vmatprep.subr.mxu0 0.0
    %4578 = vmatpush1.msra.mxu0 0.0
    %4579 = vmatprep.subr.mxu0 0.0
    %4580 = vmatpush1.msra.mxu0 0.0
    %4581 = vmatprep.subr.mxu0 0.0
    %4582 = vmatpush1.msra.mxu0 0.0
    %4583 = vmatprep.subr.mxu0 0.0
    %4584 = vmatpush1.msra.mxu0 0.0
    %4585 = vmatprep.subr.mxu0 0.0
    %4586 = vmatpush1.msra.mxu0 0.0
    %4587 = vmatprep.subr.mxu0 0.0
    %4588 = vmatpush1.msra.mxu0 0.0
    %4589 = vmatprep.subr.mxu0 0.0
    %4590 = vmatpush1.msra.mxu0 0.0
    %4591 = vmatprep.subr.mxu0 0.0
    %4592 = vmatpush1.msra.mxu0 0.0
    %4593 = vmatprep.subr.mxu0 0.0
    %4594 = vmatpush1.msra.mxu0 0.0
    %4595 = vmatprep.subr.mxu0 0.0
    %4596 = vmatpush1.msra.mxu0 0.0
    %4597 = vmatprep.subr.mxu0 0.0
    %4598 = vmatpush1.msra.mxu0 0.0
    %4599 = vmatprep.subr.mxu0 0.0
    %4600 = vmatpush1.msra.mxu0 0.0
    %4601 = vmatprep.subr.mxu0 0.0
    %4602 = vmatpush1.msra.mxu0 0.0
    %4603 = vmatprep.subr.mxu0 0.0
    %4604 = vmatpush1.msra.mxu0 0.0
    %4605 = vmatprep.subr.mxu0 0.0
    %4606 = vmatpush1.msra.mxu0 0.0
    %4607 = vmatprep.subr.mxu0 0.0
    %4608 = vmatpush1.msra.mxu0 0.0
    %4609 = vmatprep.subr.mxu0 0.0
    %4610 = vmatpush1.msra.mxu0 0.0
    %4611 = vmatprep.subr.mxu0 0.0
    %4612 = vmatpush1.msra.mxu0 0.0
    %4613 = vmatprep.subr.mxu0 0.0
    %4614 = vmatpush1.msra.mxu0 0.0
    %4615 = vmatprep.mubr.f32.mxu0 0.0
    %4616 = vmatmul.mubr.f32.gmra.mrb[0].mxu0 %v4542
    %v4617 = vpop.f32.mrb[0].mxu0
    %v4618 = vadd.f32 0.0, %v4617
    %v4619 = vpop.f32.mrb[0].mxu0
    %4620 = vmatprep.mubr.f32.mxu0 0.0
    %4621 = vmatmul.mubr.f32.gmra.mrb[0].mxu0 %v4545
    %v4622 = vpop.f32.mrb[0].mxu0
    %v4623 = vadd.f32 0.0, %v4622
    %v4624 = vpop.f32.mrb[0].mxu0
    %4625 = vdwg.mxu0
    %v4626 = vmul.f32 %v4618, %v4539
    %v4627 = vmul.f32 %v4623, %v4540
    %v4628 = vadd.f32 %v4626, 0.0
    %v4629 = vadd.f32 %v4627, 0.0
    %4630 = vmatprep.subr.mxu0 0.0
    %4631 = vmatpush1.xpose.msra.mxu0 %v4411
    %4632 = vmatprep.subr.mxu0 0.0
    %4633 = vmatpush1.xpose.msra.mxu0 %v4424
    %4634 = vmatprep.subr.mxu0 0.0
    %4635 = vmatpush1.xpose.msra.mxu0 0.0
    %4636 = vmatprep.subr.mxu0 0.0
    %4637 = vmatpush1.xpose.msra.mxu0 0.0
    %4638 = vmatprep.subr.mxu0 0.0
    %4639 = vmatpush1.xpose.msra.mxu0 0.0
    %4640 = vmatprep.subr.mxu0 0.0
    %4641 = vmatpush1.xpose.msra.mxu0 0.0
    %4642 = vmatprep.subr.mxu0 0.0
    %4643 = vmatpush1.xpose.msra.mxu0 0.0
    %4644 = vmatprep.subr.mxu0 0.0
    %4645 = vmatpush1.xpose.msra.mxu0 0.0
    %4646 = vmatprep.subr.mxu0 0.0
    %4647 = vmatpush1.xpose.msra.mxu0 0.0
    %4648 = vmatprep.subr.mxu0 0.0
    %4649 = vmatpush1.xpose.msra.mxu0 0.0
    %4650 = vmatprep.subr.mxu0 0.0
    %4651 = vmatpush1.xpose.msra.mxu0 0.0
    %4652 = vmatprep.subr.mxu0 0.0
    %4653 = vmatpush1.xpose.msra.mxu0 0.0
    %4654 = vmatprep.subr.mxu0 0.0
    %4655 = vmatpush1.xpose.msra.mxu0 0.0
    %4656 = vmatprep.subr.mxu0 0.0
    %4657 = vmatpush1.xpose.msra.mxu0 0.0
    %4658 = vmatprep.subr.mxu0 0.0
    %4659 = vmatpush1.xpose.msra.mxu0 0.0
    %4660 = vmatprep.subr.mxu0 0.0
    %4661 = vmatpush1.xpose.msra.mxu0 0.0
    %4662 = vmatprep.subr.mxu0 0.0
    %4663 = vmatpush1.xpose.msra.mxu0 0.0
    %4664 = vmatprep.subr.mxu0 0.0
    %4665 = vmatpush1.xpose.msra.mxu0 0.0
    %4666 = vmatprep.subr.mxu0 0.0
    %4667 = vmatpush1.xpose.msra.mxu0 0.0
    %4668 = vmatprep.subr.mxu0 0.0
    %4669 = vmatpush1.xpose.msra.mxu0 0.0
    %4670 = vmatprep.subr.mxu0 0.0
    %4671 = vmatpush1.xpose.msra.mxu0 0.0
    %4672 = vmatprep.subr.mxu0 0.0
    %4673 = vmatpush1.xpose.msra.mxu0 0.0
    %4674 = vmatprep.subr.mxu0 0.0
    %4675 = vmatpush1.xpose.msra.mxu0 0.0
    %4676 = vmatprep.subr.mxu0 0.0
    %4677 = vmatpush1.xpose.msra.mxu0 0.0
    %4678 = vmatprep.subr.mxu0 0.0
    %4679 = vmatpush1.xpose.msra.mxu0 0.0
    %4680 = vmatprep.subr.mxu0 0.0
    %4681 = vmatpush1.xpose.msra.mxu0 0.0
    %4682 = vmatprep.subr.mxu0 0.0
    %4683 = vmatpush1.xpose.msra.mxu0 0.0
    %4684 = vmatprep.subr.mxu0 0.0
    %4685 = vmatpush1.xpose.msra.mxu0 0.0
    %4686 = vmatprep.subr.mxu0 0.0
    %4687 = vmatpush1.xpose.msra.mxu0 0.0
    %4688 = vmatprep.subr.mxu0 0.0
    %4689 = vmatpush1.xpose.msra.mxu0 0.0
    %4690 = vmatprep.subr.mxu0 0.0
    %4691 = vmatpush1.xpose.msra.mxu0 0.0
    %4692 = vmatprep.subr.mxu0 0.0
    %4693 = vmatpush1.xpose.msra.mxu0 0.0
    %4694 = vmatprep.mubr.f32.mxu0 0.0
    %4695 = vmatmul.mubr.f32.gmra.mrb[0].mxu0 %v4409
    %v4696 = vpop.f32.mrb[0].mxu0
    %v4697 = vadd.f32 0.0, %v4696
    %v4698 = vpop.f32.mrb[0].mxu0
    %4699 = vmatprep.mubr.f32.mxu0 0.0
    %4700 = vmatmul.mubr.f32.gmra.mrb[0].mxu0 %v4422
    %v4701 = vpop.f32.mrb[0].mxu0
    %v4702 = vadd.f32 0.0, %v4701
    %v4703 = vpop.f32.mrb[0].mxu0
    %4704 = vdwg.mxu0
    %v4705 = vmul.f32 %v4697, 0.17677669
    %v4706 = vmul.f32 %v4702, 0.17677669
    %v4707 = vsel %vm4511, %v4705, -1e+30
    %v4708 = vsel %vm4512, %v4706, -1e+30
    %v4709 = vsel %vm4515, %v4707, -inf
    %4710 = vmax.xlane.f32.xlu0 %v4709
    %v4711 = vpop.xlane.xlu0 %4710
    %v4712 = vsel %vm4519, %v4708, -inf
    %4713 = vmax.xlane.f32.xlu0 %v4712
    %v4714 = vpop.xlane.xlu0 %4713
    %v4715 = vsub.f32 %v4707, %v4711
    %v4716 = vsub.f32 %v4708, %v4714
    %v4717 = vmul.f32 %v4715, 1.442695
    %v4718 = vpow.pop %v4717
    %v4719 = vmul.f32 %v4716, 1.442695
    %v4720 = vpow.pop %v4719
    %v4721 = vmul.f32 %v4718, %v763
    %v4722 = vmul.f32 %v4720, %v764
    %v4723 = vsel %vm4515, %v4721, 0.0
    %4724 = vadd.xlane.f32.xlu0 %v4723
    %v4725 = vpop.xlane.xlu0 %4724
    %v4726 = vsel %vm4519, %v4722, 0.0
    %4727 = vadd.xlane.f32.xlu0 %v4726
    %v4728 = vpop.xlane.xlu0 %4727
    %v4729 = vmax.f32 %v4725, 1e-20
    %v4730 = vmax.f32 %v4728, 1e-20
    %v4731 = vrcp.pop %v4729
    %v4732 = vrcp.pop %v4730
    %v4734 = vsel %vm4515, %v4721, 0
    %v4737 = vsel %vm4515, %v4722, 0
    %v4740 = vsel %vm4547, %v4426, 0
    %4742 = vmatprep.subr.mxu0 0.0
    %4743 = vmatpush1.msra.mxu0 %v4413
    %4744 = vmatprep.subr.mxu0 0.0
    %4745 = vmatpush1.msra.mxu0 %v4740
    %4746 = vmatprep.subr.mxu0 0.0
    %4747 = vmatpush1.msra.mxu0 0.0
    %4748 = vmatprep.subr.mxu0 0.0
    %4749 = vmatpush1.msra.mxu0 0.0
    %4750 = vmatprep.subr.mxu0 0.0
    %4751 = vmatpush1.msra.mxu0 0.0
    %4752 = vmatprep.subr.mxu0 0.0
    %4753 = vmatpush1.msra.mxu0 0.0
    %4754 = vmatprep.subr.mxu0 0.0
    %4755 = vmatpush1.msra.mxu0 0.0
    %4756 = vmatprep.subr.mxu0 0.0
    %4757 = vmatpush1.msra.mxu0 0.0
    %4758 = vmatprep.subr.mxu0 0.0
    %4759 = vmatpush1.msra.mxu0 0.0
    %4760 = vmatprep.subr.mxu0 0.0
    %4761 = vmatpush1.msra.mxu0 0.0
    %4762 = vmatprep.subr.mxu0 0.0
    %4763 = vmatpush1.msra.mxu0 0.0
    %4764 = vmatprep.subr.mxu0 0.0
    %4765 = vmatpush1.msra.mxu0 0.0
    %4766 = vmatprep.subr.mxu0 0.0
    %4767 = vmatpush1.msra.mxu0 0.0
    %4768 = vmatprep.subr.mxu0 0.0
    %4769 = vmatpush1.msra.mxu0 0.0
    %4770 = vmatprep.subr.mxu0 0.0
    %4771 = vmatpush1.msra.mxu0 0.0
    %4772 = vmatprep.subr.mxu0 0.0
    %4773 = vmatpush1.msra.mxu0 0.0
    %4774 = vmatprep.subr.mxu0 0.0
    %4775 = vmatpush1.msra.mxu0 0.0
    %4776 = vmatprep.subr.mxu0 0.0
    %4777 = vmatpush1.msra.mxu0 0.0
    %4778 = vmatprep.subr.mxu0 0.0
    %4779 = vmatpush1.msra.mxu0 0.0
    %4780 = vmatprep.subr.mxu0 0.0
    %4781 = vmatpush1.msra.mxu0 0.0
    %4782 = vmatprep.subr.mxu0 0.0
    %4783 = vmatpush1.msra.mxu0 0.0
    %4784 = vmatprep.subr.mxu0 0.0
    %4785 = vmatpush1.msra.mxu0 0.0
    %4786 = vmatprep.subr.mxu0 0.0
    %4787 = vmatpush1.msra.mxu0 0.0
    %4788 = vmatprep.subr.mxu0 0.0
    %4789 = vmatpush1.msra.mxu0 0.0
    %4790 = vmatprep.subr.mxu0 0.0
    %4791 = vmatpush1.msra.mxu0 0.0
    %4792 = vmatprep.subr.mxu0 0.0
    %4793 = vmatpush1.msra.mxu0 0.0
    %4794 = vmatprep.subr.mxu0 0.0
    %4795 = vmatpush1.msra.mxu0 0.0
    %4796 = vmatprep.subr.mxu0 0.0
    %4797 = vmatpush1.msra.mxu0 0.0
    %4798 = vmatprep.subr.mxu0 0.0
    %4799 = vmatpush1.msra.mxu0 0.0
    %4800 = vmatprep.subr.mxu0 0.0
    %4801 = vmatpush1.msra.mxu0 0.0
    %4802 = vmatprep.subr.mxu0 0.0
    %4803 = vmatpush1.msra.mxu0 0.0
    %4804 = vmatprep.subr.mxu0 0.0
    %4805 = vmatpush1.msra.mxu0 0.0
    %4806 = vmatprep.mubr.f32.mxu0 0.0
    %4807 = vmatmul.mubr.f32.gmra.mrb[0].mxu0 %v4734
    %v4808 = vpop.f32.mrb[0].mxu0
    %v4809 = vadd.f32 0.0, %v4808
    %v4810 = vpop.f32.mrb[0].mxu0
    %4811 = vmatprep.mubr.f32.mxu0 0.0
    %4812 = vmatmul.mubr.f32.gmra.mrb[0].mxu0 %v4737
    %v4813 = vpop.f32.mrb[0].mxu0
    %v4814 = vadd.f32 0.0, %v4813
    %v4815 = vpop.f32.mrb[0].mxu0
    %4816 = vdwg.mxu0
    %v4817 = vmul.f32 %v4809, %v4731
    %v4818 = vmul.f32 %v4814, %v4732
    %v4819 = vadd.f32 %v4628, %v4817
    %v4820 = vadd.f32 %v4629, %v4818
    %v4821 = vmul.f32 %v4819, 0.5
    %v4822 = vmul.f32 %v4820, 0.5
    %4823 = vmatprep.subr.mxu0 0.0
    %4824 = vmatpush1.xpose.msra.mxu0 %v4416
    %4825 = vmatprep.subr.mxu0 0.0
    %4826 = vmatpush1.xpose.msra.mxu0 %v4429
    %4827 = vmatprep.subr.mxu0 0.0
    %4828 = vmatpush1.xpose.msra.mxu0 0.0
    %4829 = vmatprep.subr.mxu0 0.0
    %4830 = vmatpush1.xpose.msra.mxu0 0.0
    %4831 = vmatprep.subr.mxu0 0.0
    %4832 = vmatpush1.xpose.msra.mxu0 0.0
    %4833 = vmatprep.subr.mxu0 0.0
    %4834 = vmatpush1.xpose.msra.mxu0 0.0
    %4835 = vmatprep.subr.mxu0 0.0
    %4836 = vmatpush1.xpose.msra.mxu0 0.0
    %4837 = vmatprep.subr.mxu0 0.0
    %4838 = vmatpush1.xpose.msra.mxu0 0.0
    %4839 = vmatprep.subr.mxu0 0.0
    %4840 = vmatpush1.xpose.msra.mxu0 0.0
    %4841 = vmatprep.subr.mxu0 0.0
    %4842 = vmatpush1.xpose.msra.mxu0 0.0
    %4843 = vmatprep.subr.mxu0 0.0
    %4844 = vmatpush1.xpose.msra.mxu0 0.0
    %4845 = vmatprep.subr.mxu0 0.0
    %4846 = vmatpush1.xpose.msra.mxu0 0.0
    %4847 = vmatprep.subr.mxu0 0.0
    %4848 = vmatpush1.xpose.msra.mxu0 0.0
    %4849 = vmatprep.subr.mxu0 0.0
    %4850 = vmatpush1.xpose.msra.mxu0 0.0
    %4851 = vmatprep.subr.mxu0 0.0
    %4852 = vmatpush1.xpose.msra.mxu0 0.0
    %4853 = vmatprep.subr.mxu0 0.0
    %4854 = vmatpush1.xpose.msra.mxu0 0.0
    %4855 = vmatprep.subr.mxu0 0.0
    %4856 = vmatpush1.xpose.msra.mxu0 0.0
    %4857 = vmatprep.subr.mxu0 0.0
    %4858 = vmatpush1.xpose.msra.mxu0 0.0
    %4859 = vmatprep.subr.mxu0 0.0
    %4860 = vmatpush1.xpose.msra.mxu0 0.0
    %4861 = vmatprep.subr.mxu0 0.0
    %4862 = vmatpush1.xpose.msra.mxu0 0.0
    %4863 = vmatprep.subr.mxu0 0.0
    %4864 = vmatpush1.xpose.msra.mxu0 0.0
    %4865 = vmatprep.subr.mxu0 0.0
    %4866 = vmatpush1.xpose.msra.mxu0 0.0
    %4867 = vmatprep.subr.mxu0 0.0
    %4868 = vmatpush1.xpose.msra.mxu0 0.0
    %4869 = vmatprep.subr.mxu0 0.0
    %4870 = vmatpush1.xpose.msra.mxu0 0.0
    %4871 = vmatprep.subr.mxu0 0.0
    %4872 = vmatpush1.xpose.msra.mxu0 0.0
    %4873 = vmatprep.subr.mxu0 0.0
    %4874 = vmatpush1.xpose.msra.mxu0 0.0
    %4875 = vmatprep.subr.mxu0 0.0
    %4876 = vmatpush1.xpose.msra.mxu0 0.0
    %4877 = vmatprep.subr.mxu0 0.0
    %4878 = vmatpush1.xpose.msra.mxu0 0.0
    %4879 = vmatprep.subr.mxu0 0.0
    %4880 = vmatpush1.xpose.msra.mxu0 0.0
    %4881 = vmatprep.subr.mxu0 0.0
    %4882 = vmatpush1.xpose.msra.mxu0 0.0
    %4883 = vmatprep.subr.mxu0 0.0
    %4884 = vmatpush1.xpose.msra.mxu0 0.0
    %4885 = vmatprep.subr.mxu0 0.0
    %4886 = vmatpush1.xpose.msra.mxu0 0.0
    %4887 = vmatprep.mubr.f32.mxu0 0.0
    %4888 = vmatmul.mubr.f32.gmra.mrb[0].mxu0 %v4414
    %v4889 = vpop.f32.mrb[0].mxu0
    %v4890 = vadd.f32 0.0, %v4889
    %v4891 = vpop.f32.mrb[0].mxu0
    %4892 = vmatprep.mubr.f32.mxu0 0.0
    %4893 = vmatmul.mubr.f32.gmra.mrb[0].mxu0 %v4427
    %v4894 = vpop.f32.mrb[0].mxu0
    %v4895 = vadd.f32 0.0, %v4894
    %v4896 = vpop.f32.mrb[0].mxu0
    %4897 = vdwg.mxu0
    %v4898 = vmul.f32 %v4890, 0.17677669
    %v4899 = vmul.f32 %v4895, 0.17677669
    %vm4900 = vcmp.gt.f32.partialorder %v765, 0.0
    %vm4901 = vcmp.gt.f32.partialorder %v766, 0.0
    %v4902 = vsel %vm4900, %v4898, -1e+30
    %v4903 = vsel %vm4901, %v4899, -1e+30
    %v4904 = vsel %vm4515, %v4902, -inf
    %4905 = vmax.xlane.f32.xlu0 %v4904
    %v4906 = vpop.xlane.xlu0 %4905
    %v4907 = vsel %vm4519, %v4903, -inf
    %4908 = vmax.xlane.f32.xlu0 %v4907
    %v4909 = vpop.xlane.xlu0 %4908
    %v4910 = vsub.f32 %v4902, %v4906
    %v4911 = vsub.f32 %v4903, %v4909
    %v4912 = vmul.f32 %v4910, 1.442695
    %v4913 = vpow.pop %v4912
    %v4914 = vmul.f32 %v4911, 1.442695
    %v4915 = vpow.pop %v4914
    %v4916 = vmul.f32 %v4913, %v765
    %v4917 = vmul.f32 %v4915, %v766
    %v4918 = vsel %vm4515, %v4916, 0.0
    %4919 = vadd.xlane.f32.xlu0 %v4918
    %v4920 = vpop.xlane.xlu0 %4919
    %v4921 = vsel %vm4519, %v4917, 0.0
    %4922 = vadd.xlane.f32.xlu0 %v4921
    %v4923 = vpop.xlane.xlu0 %4922
    %v4924 = vmax.f32 %v4920, 1e-20
    %v4925 = vmax.f32 %v4923, 1e-20
    %v4926 = vrcp.pop %v4924
    %v4927 = vrcp.pop %v4925
    %v4929 = vsel %vm4515, %v4916, 0
    %v4932 = vsel %vm4515, %v4917, 0
    %v4935 = vsel %vm4547, %v4431, 0
    %4937 = vmatprep.subr.mxu0 0.0
    %4938 = vmatpush1.msra.mxu0 %v4418
    %4939 = vmatprep.subr.mxu0 0.0
    %4940 = vmatpush1.msra.mxu0 %v4935
    %4941 = vmatprep.subr.mxu0 0.0
    %4942 = vmatpush1.msra.mxu0 0.0
    %4943 = vmatprep.subr.mxu0 0.0
    %4944 = vmatpush1.msra.mxu0 0.0
    %4945 = vmatprep.subr.mxu0 0.0
    %4946 = vmatpush1.msra.mxu0 0.0
    %4947 = vmatprep.subr.mxu0 0.0
    %4948 = vmatpush1.msra.mxu0 0.0
    %4949 = vmatprep.subr.mxu0 0.0
    %4950 = vmatpush1.msra.mxu0 0.0
    %4951 = vmatprep.subr.mxu0 0.0
    %4952 = vmatpush1.msra.mxu0 0.0
    %4953 = vmatprep.subr.mxu0 0.0
    %4954 = vmatpush1.msra.mxu0 0.0
    %4955 = vmatprep.subr.mxu0 0.0
    %4956 = vmatpush1.msra.mxu0 0.0
    %4957 = vmatprep.subr.mxu0 0.0
    %4958 = vmatpush1.msra.mxu0 0.0
    %4959 = vmatprep.subr.mxu0 0.0
    %4960 = vmatpush1.msra.mxu0 0.0
    %4961 = vmatprep.subr.mxu0 0.0
    %4962 = vmatpush1.msra.mxu0 0.0
    %4963 = vmatprep.subr.mxu0 0.0
    %4964 = vmatpush1.msra.mxu0 0.0
    %4965 = vmatprep.subr.mxu0 0.0
    %4966 = vmatpush1.msra.mxu0 0.0
    %4967 = vmatprep.subr.mxu0 0.0
    %4968 = vmatpush1.msra.mxu0 0.0
    %4969 = vmatprep.subr.mxu0 0.0
    %4970 = vmatpush1.msra.mxu0 0.0
    %4971 = vmatprep.subr.mxu0 0.0
    %4972 = vmatpush1.msra.mxu0 0.0
    %4973 = vmatprep.subr.mxu0 0.0
    %4974 = vmatpush1.msra.mxu0 0.0
    %4975 = vmatprep.subr.mxu0 0.0
    %4976 = vmatpush1.msra.mxu0 0.0
    %4977 = vmatprep.subr.mxu0 0.0
    %4978 = vmatpush1.msra.mxu0 0.0
    %4979 = vmatprep.subr.mxu0 0.0
    %4980 = vmatpush1.msra.mxu0 0.0
    %4981 = vmatprep.subr.mxu0 0.0
    %4982 = vmatpush1.msra.mxu0 0.0
    %4983 = vmatprep.subr.mxu0 0.0
    %4984 = vmatpush1.msra.mxu0 0.0
    %4985 = vmatprep.subr.mxu0 0.0
    %4986 = vmatpush1.msra.mxu0 0.0
    %4987 = vmatprep.subr.mxu0 0.0
    %4988 = vmatpush1.msra.mxu0 0.0
    %4989 = vmatprep.subr.mxu0 0.0
    %4990 = vmatpush1.msra.mxu0 0.0
    %4991 = vmatprep.subr.mxu0 0.0
    %4992 = vmatpush1.msra.mxu0 0.0
    %4993 = vmatprep.subr.mxu0 0.0
    %4994 = vmatpush1.msra.mxu0 0.0
    %4995 = vmatprep.subr.mxu0 0.0
    %4996 = vmatpush1.msra.mxu0 0.0
    %4997 = vmatprep.subr.mxu0 0.0
    %4998 = vmatpush1.msra.mxu0 0.0
    %4999 = vmatprep.subr.mxu0 0.0
    %5000 = vmatpush1.msra.mxu0 0.0
    %5001 = vmatprep.mubr.f32.mxu0 0.0
    %5002 = vmatmul.mubr.f32.gmra.mrb[0].mxu0 %v4929
    %v5003 = vpop.f32.mrb[0].mxu0
    %v5004 = vadd.f32 0.0, %v5003
    %v5005 = vpop.f32.mrb[0].mxu0
    %5006 = vmatprep.mubr.f32.mxu0 0.0
    %5007 = vmatmul.mubr.f32.gmra.mrb[0].mxu0 %v4932
    %v5008 = vpop.f32.mrb[0].mxu0
    %v5009 = vadd.f32 0.0, %v5008
    %v5010 = vpop.f32.mrb[0].mxu0
    %5011 = vdwg.mxu0
    %v5012 = vmul.f32 %v5004, %v4926
    %v5013 = vmul.f32 %v5009, %v4927
    %v5014 = vadd.f32 %v5012, 0.0
    %v5015 = vadd.f32 %v5013, 0.0
    %5016 = vmatprep.subr.mxu0 0.0
    %5017 = vmatpush1.xpose.msra.mxu0 %v4417
    %5018 = vmatprep.subr.mxu0 0.0
    %5019 = vmatpush1.xpose.msra.mxu0 %v4430
    %5020 = vmatprep.subr.mxu0 0.0
    %5021 = vmatpush1.xpose.msra.mxu0 0.0
    %5022 = vmatprep.subr.mxu0 0.0
    %5023 = vmatpush1.xpose.msra.mxu0 0.0
    %5024 = vmatprep.subr.mxu0 0.0
    %5025 = vmatpush1.xpose.msra.mxu0 0.0
    %5026 = vmatprep.subr.mxu0 0.0
    %5027 = vmatpush1.xpose.msra.mxu0 0.0
    %5028 = vmatprep.subr.mxu0 0.0
    %5029 = vmatpush1.xpose.msra.mxu0 0.0
    %5030 = vmatprep.subr.mxu0 0.0
    %5031 = vmatpush1.xpose.msra.mxu0 0.0
    %5032 = vmatprep.subr.mxu0 0.0
    %5033 = vmatpush1.xpose.msra.mxu0 0.0
    %5034 = vmatprep.subr.mxu0 0.0
    %5035 = vmatpush1.xpose.msra.mxu0 0.0
    %5036 = vmatprep.subr.mxu0 0.0
    %5037 = vmatpush1.xpose.msra.mxu0 0.0
    %5038 = vmatprep.subr.mxu0 0.0
    %5039 = vmatpush1.xpose.msra.mxu0 0.0
    %5040 = vmatprep.subr.mxu0 0.0
    %5041 = vmatpush1.xpose.msra.mxu0 0.0
    %5042 = vmatprep.subr.mxu0 0.0
    %5043 = vmatpush1.xpose.msra.mxu0 0.0
    %5044 = vmatprep.subr.mxu0 0.0
    %5045 = vmatpush1.xpose.msra.mxu0 0.0
    %5046 = vmatprep.subr.mxu0 0.0
    %5047 = vmatpush1.xpose.msra.mxu0 0.0
    %5048 = vmatprep.subr.mxu0 0.0
    %5049 = vmatpush1.xpose.msra.mxu0 0.0
    %5050 = vmatprep.subr.mxu0 0.0
    %5051 = vmatpush1.xpose.msra.mxu0 0.0
    %5052 = vmatprep.subr.mxu0 0.0
    %5053 = vmatpush1.xpose.msra.mxu0 0.0
    %5054 = vmatprep.subr.mxu0 0.0
    %5055 = vmatpush1.xpose.msra.mxu0 0.0
    %5056 = vmatprep.subr.mxu0 0.0
    %5057 = vmatpush1.xpose.msra.mxu0 0.0
    %5058 = vmatprep.subr.mxu0 0.0
    %5059 = vmatpush1.xpose.msra.mxu0 0.0
    %5060 = vmatprep.subr.mxu0 0.0
    %5061 = vmatpush1.xpose.msra.mxu0 0.0
    %5062 = vmatprep.subr.mxu0 0.0
    %5063 = vmatpush1.xpose.msra.mxu0 0.0
    %5064 = vmatprep.subr.mxu0 0.0
    %5065 = vmatpush1.xpose.msra.mxu0 0.0
    %5066 = vmatprep.subr.mxu0 0.0
    %5067 = vmatpush1.xpose.msra.mxu0 0.0
    %5068 = vmatprep.subr.mxu0 0.0
    %5069 = vmatpush1.xpose.msra.mxu0 0.0
    %5070 = vmatprep.subr.mxu0 0.0
    %5071 = vmatpush1.xpose.msra.mxu0 0.0
    %5072 = vmatprep.subr.mxu0 0.0
    %5073 = vmatpush1.xpose.msra.mxu0 0.0
    %5074 = vmatprep.subr.mxu0 0.0
    %5075 = vmatpush1.xpose.msra.mxu0 0.0
    %5076 = vmatprep.subr.mxu0 0.0
    %5077 = vmatpush1.xpose.msra.mxu0 0.0
    %5078 = vmatprep.subr.mxu0 0.0
    %5079 = vmatpush1.xpose.msra.mxu0 0.0
    %5080 = vmatprep.mubr.f32.mxu0 0.0
    %5081 = vmatmul.mubr.f32.gmra.mrb[0].mxu0 %v4415
    %v5082 = vpop.f32.mrb[0].mxu0
    %v5083 = vadd.f32 0.0, %v5082
    %v5084 = vpop.f32.mrb[0].mxu0
    %5085 = vmatprep.mubr.f32.mxu0 0.0
    %5086 = vmatmul.mubr.f32.gmra.mrb[0].mxu0 %v4428
    %v5087 = vpop.f32.mrb[0].mxu0
    %v5088 = vadd.f32 0.0, %v5087
    %v5089 = vpop.f32.mrb[0].mxu0
    %5090 = vdwg.mxu0
    %v5091 = vmul.f32 %v5083, 0.17677669
    %v5092 = vmul.f32 %v5088, 0.17677669
    %v5093 = vsel %vm4900, %v5091, -1e+30
    %v5094 = vsel %vm4901, %v5092, -1e+30
    %v5095 = vsel %vm4515, %v5093, -inf
    %5096 = vmax.xlane.f32.xlu0 %v5095
    %v5097 = vpop.xlane.xlu0 %5096
    %v5098 = vsel %vm4519, %v5094, -inf
    %5099 = vmax.xlane.f32.xlu0 %v5098
    %v5100 = vpop.xlane.xlu0 %5099
    %v5101 = vsub.f32 %v5093, %v5097
    %v5102 = vsub.f32 %v5094, %v5100
    %v5103 = vmul.f32 %v5101, 1.442695
    %v5104 = vpow.pop %v5103
    %v5105 = vmul.f32 %v5102, 1.442695
    %v5106 = vpow.pop %v5105
    %v5107 = vmul.f32 %v5104, %v765
    %v5108 = vmul.f32 %v5106, %v766
    %v5109 = vsel %vm4515, %v5107, 0.0
    %5110 = vadd.xlane.f32.xlu0 %v5109
    %v5111 = vpop.xlane.xlu0 %5110
    %v5112 = vsel %vm4519, %v5108, 0.0
    %5113 = vadd.xlane.f32.xlu0 %v5112
    %v5114 = vpop.xlane.xlu0 %5113
    %v5115 = vmax.f32 %v5111, 1e-20
    %v5116 = vmax.f32 %v5114, 1e-20
    %v5117 = vrcp.pop %v5115
    %v5118 = vrcp.pop %v5116
    %v5120 = vsel %vm4515, %v5107, 0
    %v5123 = vsel %vm4515, %v5108, 0
    %v5126 = vsel %vm4547, %v4432, 0
    %5128 = vmatprep.subr.mxu0 0.0
    %5129 = vmatpush1.msra.mxu0 %v4419
    %5130 = vmatprep.subr.mxu0 0.0
    %5131 = vmatpush1.msra.mxu0 %v5126
    %5132 = vmatprep.subr.mxu0 0.0
    %5133 = vmatpush1.msra.mxu0 0.0
    %5134 = vmatprep.subr.mxu0 0.0
    %5135 = vmatpush1.msra.mxu0 0.0
    %5136 = vmatprep.subr.mxu0 0.0
    %5137 = vmatpush1.msra.mxu0 0.0
    %5138 = vmatprep.subr.mxu0 0.0
    %5139 = vmatpush1.msra.mxu0 0.0
    %5140 = vmatprep.subr.mxu0 0.0
    %5141 = vmatpush1.msra.mxu0 0.0
    %5142 = vmatprep.subr.mxu0 0.0
    %5143 = vmatpush1.msra.mxu0 0.0
    %5144 = vmatprep.subr.mxu0 0.0
    %5145 = vmatpush1.msra.mxu0 0.0
    %5146 = vmatprep.subr.mxu0 0.0
    %5147 = vmatpush1.msra.mxu0 0.0
    %5148 = vmatprep.subr.mxu0 0.0
    %5149 = vmatpush1.msra.mxu0 0.0
    %5150 = vmatprep.subr.mxu0 0.0
    %5151 = vmatpush1.msra.mxu0 0.0
    %5152 = vmatprep.subr.mxu0 0.0
    %5153 = vmatpush1.msra.mxu0 0.0
    %5154 = vmatprep.subr.mxu0 0.0
    %5155 = vmatpush1.msra.mxu0 0.0
    %5156 = vmatprep.subr.mxu0 0.0
    %5157 = vmatpush1.msra.mxu0 0.0
    %5158 = vmatprep.subr.mxu0 0.0
    %5159 = vmatpush1.msra.mxu0 0.0
    %5160 = vmatprep.subr.mxu0 0.0
    %5161 = vmatpush1.msra.mxu0 0.0
    %5162 = vmatprep.subr.mxu0 0.0
    %5163 = vmatpush1.msra.mxu0 0.0
    %5164 = vmatprep.subr.mxu0 0.0
    %5165 = vmatpush1.msra.mxu0 0.0
    %5166 = vmatprep.subr.mxu0 0.0
    %5167 = vmatpush1.msra.mxu0 0.0
    %5168 = vmatprep.subr.mxu0 0.0
    %5169 = vmatpush1.msra.mxu0 0.0
    %5170 = vmatprep.subr.mxu0 0.0
    %5171 = vmatpush1.msra.mxu0 0.0
    %5172 = vmatprep.subr.mxu0 0.0
    %5173 = vmatpush1.msra.mxu0 0.0
    %5174 = vmatprep.subr.mxu0 0.0
    %5175 = vmatpush1.msra.mxu0 0.0
    %5176 = vmatprep.subr.mxu0 0.0
    %5177 = vmatpush1.msra.mxu0 0.0
    %5178 = vmatprep.subr.mxu0 0.0
    %5179 = vmatpush1.msra.mxu0 0.0
    %5180 = vmatprep.subr.mxu0 0.0
    %5181 = vmatpush1.msra.mxu0 0.0
    %5182 = vmatprep.subr.mxu0 0.0
    %5183 = vmatpush1.msra.mxu0 0.0
    %5184 = vmatprep.subr.mxu0 0.0
    %5185 = vmatpush1.msra.mxu0 0.0
    %5186 = vmatprep.subr.mxu0 0.0
    %5187 = vmatpush1.msra.mxu0 0.0
    %5188 = vmatprep.subr.mxu0 0.0
    %5189 = vmatpush1.msra.mxu0 0.0
    %5190 = vmatprep.subr.mxu0 0.0
    %5191 = vmatpush1.msra.mxu0 0.0
    %5192 = vmatprep.mubr.f32.mxu0 0.0
    %5193 = vmatmul.mubr.f32.gmra.mrb[0].mxu0 %v5120
    %v5194 = vpop.f32.mrb[0].mxu0
    %v5195 = vadd.f32 0.0, %v5194
    %v5196 = vpop.f32.mrb[0].mxu0
    %5197 = vmatprep.mubr.f32.mxu0 0.0
    %5198 = vmatmul.mubr.f32.gmra.mrb[0].mxu0 %v5123
    %v5199 = vpop.f32.mrb[0].mxu0
    %v5200 = vadd.f32 0.0, %v5199
    %v5201 = vpop.f32.mrb[0].mxu0
    %5202 = vdwg.mxu0
    %v5203 = vmul.f32 %v5195, %v5117
    %v5204 = vmul.f32 %v5200, %v5118
    %v5205 = vadd.f32 %v5014, %v5203
    %v5206 = vadd.f32 %v5015, %v5204
    %v5207 = vmul.f32 %v5205, 0.5
    %v5208 = vmul.f32 %v5206, 0.5
    %v5209 = vmul.f32 %v5207, 0.5
    %v5210 = vmul.f32 %v5208, 0.5
    %v5211 = vmul.f32 %v4821, 0.5
    %v5212 = vmul.f32 %v4822, 0.5
    %v5213 = vadd.f32 %v5209, %v5211
    %v5214 = vadd.f32 %v5210, %v5212
    %v5215 = vadd.f32 %v5213, %v4420
    %v5216 = vadd.f32 %v5214, %v4433
    %v5217 = vsel %vm4547, %v5216, 0.0
    %v5218 = vadd.f32 %v5215, %v5217
    %v5219 = vrot.slane %v5218, 4
    %v5220 = vadd.f32 %v5218, %v5219
    %v5221 = vrot.slane %v5220, 2
    %v5222 = vadd.f32 %v5220, %v5221
    %v5223 = vrot.slane %v5222, 1
    %v5224 = vadd.f32 %v5222, %v5223
    %v5225 = vrcp.pop 9.0
    %v5226 = vmul.f32 %v5224, %v5225
    %v5227 = vsub.f32 %v5215, %v5226
    %v5228 = vsub.f32 %v5216, %v5226
    %v5229 = vmul.f32 %v5227, %v5227
    %v5230 = vmul.f32 %v5228, %v5228
    %v5231 = vsel %vm4547, %v5230, 0.0
    %v5232 = vadd.f32 %v5229, %v5231
    %v5233 = vrot.slane %v5232, 4
    %v5234 = vadd.f32 %v5232, %v5233
    %v5235 = vrot.slane %v5234, 2
    %v5236 = vadd.f32 %v5234, %v5235
    %v5237 = vrot.slane %v5236, 1
    %v5238 = vadd.f32 %v5236, %v5237
    %v5239 = vmul.f32 %v5238, %v5225
    %v5240 = vadd.f32 %v5239, 1e-05
    %v5241 = vrsqrt.pop %v5240
    %v5242 = vmul.f32 %v5227, %v5241
    %v5243 = vmul.f32 %v5228, %v5241
    %v5244 = vld [vmem:[#allocation21] sm:$0x1]
    %v5246 = vlaneseq
    %v5247 = vshrl.u32 %v5246, 7
    %v5248 = vsub.s32 0, %v5247
    %v5249 = vrot.slane %v5244, %v5248
    %v5251 = vmul.f32 %v5242, %v5249
    %v5252 = vmul.f32 %v5243, %v5249
    %v5253 = vld [vmem:[#allocation22] sm:$0x1]
    %v5255 = vlaneseq
    %v5256 = vshrl.u32 %v5255, 7
    %v5257 = vsub.s32 0, %v5256
    %v5258 = vrot.slane %v5253, %v5257
    %v5260 = vadd.f32 %v5251, %v5258
    %v5261 = vadd.f32 %v5252, %v5258
    %v5262 = vmax.f32 %v5260, 0.0
    %v5263 = vmax.f32 %v5261, 0.0
    %v5264 = vld [vmem:[#allocation24] sm:$0xff]
    %v5265 = vld [vmem:[#allocation24 + $0x8] sm:$0xff]
    %v5266 = vld [vmem:[#allocation24 + $0x10] sm:$0xff]
    %v5267 = vld [vmem:[#allocation24 + $0x18] sm:$0xff]
    %v5268 = vld [vmem:[#allocation24 + $0x20] sm:$0xff]
    %v5269 = vld [vmem:[#allocation24 + $0x28] sm:$0xff]
    %v5270 = vld [vmem:[#allocation24 + $0x30] sm:$0xff]
    %v5271 = vld [vmem:[#allocation24 + $0x38] sm:$0xff]
    %v5272 = vld [vmem:[#allocation24 + $0x40] sm:$0xff]
    %v5273 = vld [vmem:[#allocation24 + $0x48] sm:$0xff]
    %v5274 = vld [vmem:[#allocation24 + $0x50] sm:$0xff]
    %v5275 = vld [vmem:[#allocation24 + $0x58] sm:$0xff]
    %v5276 = vld [vmem:[#allocation24 + $0x60] sm:$0xff]
    %v5277 = vld [vmem:[#allocation24 + $0x68] sm:$0xff]
    %v5278 = vld [vmem:[#allocation24 + $0x70] sm:$0xff]
    %v5279 = vld [vmem:[#allocation24 + $0x78] sm:$0xff]
    %v5280 = vld [vmem:[#allocation24 + $0x80] sm:$0xff]
    %v5281 = vld [vmem:[#allocation24 + $0x88] sm:$0xff]
    %v5282 = vld [vmem:[#allocation24 + $0x90] sm:$0xff]
    %v5283 = vld [vmem:[#allocation24 + $0x98] sm:$0xff]
    %v5284 = vld [vmem:[#allocation24 + $0xa0] sm:$0xff]
    %v5285 = vld [vmem:[#allocation24 + $0xa8] sm:$0xff]
    %v5286 = vld [vmem:[#allocation24 + $0xb0] sm:$0xff]
    %v5287 = vld [vmem:[#allocation24 + $0xb8] sm:$0xff]
    %v5288 = vld [vmem:[#allocation24 + $0xc0] sm:$0xff]
    %v5289 = vld [vmem:[#allocation24 + $0xc8] sm:$0xff]
    %v5290 = vld [vmem:[#allocation24 + $0xd0] sm:$0xff]
    %v5291 = vld [vmem:[#allocation24 + $0xd8] sm:$0xff]
    %v5292 = vld [vmem:[#allocation24 + $0xe0] sm:$0xff]
    %v5293 = vld [vmem:[#allocation24 + $0xe8] sm:$0xff]
    %v5294 = vld [vmem:[#allocation24 + $0xf0] sm:$0xff]
    %v5295 = vld [vmem:[#allocation24 + $0xf8] sm:$0xff]
    %v5296 = vld [vmem:[#allocation24 + $0x100] sm:$0xff]
    %v5297 = vld [vmem:[#allocation24 + $0x108] sm:$0xff]
    %v5298 = vld [vmem:[#allocation24 + $0x110] sm:$0xff]
    %v5299 = vld [vmem:[#allocation24 + $0x118] sm:$0xff]
    %v5300 = vld [vmem:[#allocation24 + $0x120] sm:$0xff]
    %v5301 = vld [vmem:[#allocation24 + $0x128] sm:$0xff]
    %v5302 = vld [vmem:[#allocation24 + $0x130] sm:$0xff]
    %v5303 = vld [vmem:[#allocation24 + $0x138] sm:$0xff]
    %v5304 = vld [vmem:[#allocation24 + $0x140] sm:$0xff]
    %v5305 = vld [vmem:[#allocation24 + $0x148] sm:$0xff]
    %v5306 = vld [vmem:[#allocation24 + $0x150] sm:$0xff]
    %v5307 = vld [vmem:[#allocation24 + $0x158] sm:$0xff]
    %v5308 = vld [vmem:[#allocation24 + $0x160] sm:$0xff]
    %v5309 = vld [vmem:[#allocation24 + $0x168] sm:$0xff]
    %v5310 = vld [vmem:[#allocation24 + $0x170] sm:$0xff]
    %v5311 = vld [vmem:[#allocation24 + $0x178] sm:$0xff]
    %v5312 = vld [vmem:[#allocation24 + $0x180] sm:$0xff]
    %v5313 = vld [vmem:[#allocation24 + $0x188] sm:$0xff]
    %v5314 = vld [vmem:[#allocation24 + $0x190] sm:$0xff]
    %v5315 = vld [vmem:[#allocation24 + $0x198] sm:$0xff]
    %v5316 = vld [vmem:[#allocation24 + $0x1a0] sm:$0xff]
    %v5317 = vld [vmem:[#allocation24 + $0x1a8] sm:$0xff]
    %v5318 = vld [vmem:[#allocation24 + $0x1b0] sm:$0xff]
    %v5319 = vld [vmem:[#allocation24 + $0x1b8] sm:$0xff]
    %v5320 = vld [vmem:[#allocation24 + $0x1c0] sm:$0xff]
    %v5321 = vld [vmem:[#allocation24 + $0x1c8] sm:$0xff]
    %v5322 = vld [vmem:[#allocation24 + $0x1d0] sm:$0xff]
    %v5323 = vld [vmem:[#allocation24 + $0x1d8] sm:$0xff]
    %v5324 = vld [vmem:[#allocation24 + $0x1e0] sm:$0xff]
    %v5325 = vld [vmem:[#allocation24 + $0x1e8] sm:$0xff]
    %v5326 = vld [vmem:[#allocation24 + $0x1f0] sm:$0xff]
    %v5327 = vld [vmem:[#allocation24 + $0x1f8] sm:$0xff]
    %v5328 = vld [vmem:[#allocation24 + $0x200] sm:$0xff]
    %v5329 = vld [vmem:[#allocation24 + $0x208] sm:$0xff]
    %v5330 = vld [vmem:[#allocation24 + $0x210] sm:$0xff]
    %v5331 = vld [vmem:[#allocation24 + $0x218] sm:$0xff]
    %v5332 = vld [vmem:[#allocation24 + $0x220] sm:$0xff]
    %v5333 = vld [vmem:[#allocation24 + $0x228] sm:$0xff]
    %v5334 = vld [vmem:[#allocation24 + $0x230] sm:$0xff]
    %v5335 = vld [vmem:[#allocation24 + $0x238] sm:$0xff]
    %v5336 = vld [vmem:[#allocation24 + $0x240] sm:$0xff]
    %v5337 = vld [vmem:[#allocation24 + $0x248] sm:$0xff]
    %v5338 = vld [vmem:[#allocation24 + $0x250] sm:$0xff]
    %v5339 = vld [vmem:[#allocation24 + $0x258] sm:$0xff]
    %v5340 = vld [vmem:[#allocation24 + $0x260] sm:$0xff]
    %v5341 = vld [vmem:[#allocation24 + $0x268] sm:$0xff]
    %v5342 = vld [vmem:[#allocation24 + $0x270] sm:$0xff]
    %v5343 = vld [vmem:[#allocation24 + $0x278] sm:$0xff]
    %v5344 = vld [vmem:[#allocation24 + $0x280] sm:$0xff]
    %v5345 = vld [vmem:[#allocation24 + $0x288] sm:$0xff]
    %v5346 = vld [vmem:[#allocation24 + $0x290] sm:$0xff]
    %v5347 = vld [vmem:[#allocation24 + $0x298] sm:$0xff]
    %v5348 = vld [vmem:[#allocation24 + $0x2a0] sm:$0xff]
    %v5349 = vld [vmem:[#allocation24 + $0x2a8] sm:$0xff]
    %v5350 = vld [vmem:[#allocation24 + $0x2b0] sm:$0xff]
    %v5351 = vld [vmem:[#allocation24 + $0x2b8] sm:$0xff]
    %v5352 = vld [vmem:[#allocation24 + $0x2c0] sm:$0xff]
    %v5353 = vld [vmem:[#allocation24 + $0x2c8] sm:$0xff]
    %v5354 = vld [vmem:[#allocation24 + $0x2d0] sm:$0xff]
    %v5355 = vld [vmem:[#allocation24 + $0x2d8] sm:$0xff]
    %v5356 = vld [vmem:[#allocation24 + $0x2e0] sm:$0xff]
    %v5357 = vld [vmem:[#allocation24 + $0x2e8] sm:$0xff]
    %v5358 = vld [vmem:[#allocation24 + $0x2f0] sm:$0xff]
    %v5359 = vld [vmem:[#allocation24 + $0x2f8] sm:$0xff]
    %v5360 = vld [vmem:[#allocation24 + $0x300] sm:$0xff]
    %v5361 = vld [vmem:[#allocation24 + $0x308] sm:$0xff]
    %v5362 = vld [vmem:[#allocation24 + $0x310] sm:$0xff]
    %v5363 = vld [vmem:[#allocation24 + $0x318] sm:$0xff]
    %v5364 = vld [vmem:[#allocation24 + $0x320] sm:$0xff]
    %v5365 = vld [vmem:[#allocation24 + $0x328] sm:$0xff]
    %v5366 = vld [vmem:[#allocation24 + $0x330] sm:$0xff]
    %v5367 = vld [vmem:[#allocation24 + $0x338] sm:$0xff]
    %v5368 = vld [vmem:[#allocation24 + $0x340] sm:$0xff]
    %v5369 = vld [vmem:[#allocation24 + $0x348] sm:$0xff]
    %v5370 = vld [vmem:[#allocation24 + $0x350] sm:$0xff]
    %v5371 = vld [vmem:[#allocation24 + $0x358] sm:$0xff]
    %v5372 = vld [vmem:[#allocation24 + $0x360] sm:$0xff]
    %v5373 = vld [vmem:[#allocation24 + $0x368] sm:$0xff]
    %v5374 = vld [vmem:[#allocation24 + $0x370] sm:$0xff]
    %v5375 = vld [vmem:[#allocation24 + $0x378] sm:$0xff]
    %v5376 = vld [vmem:[#allocation24 + $0x380] sm:$0xff]
    %v5377 = vld [vmem:[#allocation24 + $0x388] sm:$0xff]
    %v5378 = vld [vmem:[#allocation24 + $0x390] sm:$0xff]
    %v5379 = vld [vmem:[#allocation24 + $0x398] sm:$0xff]
    %v5380 = vld [vmem:[#allocation24 + $0x3a0] sm:$0xff]
    %v5381 = vld [vmem:[#allocation24 + $0x3a8] sm:$0xff]
    %v5382 = vld [vmem:[#allocation24 + $0x3b0] sm:$0xff]
    %v5383 = vld [vmem:[#allocation24 + $0x3b8] sm:$0xff]
    %v5384 = vld [vmem:[#allocation24 + $0x3c0] sm:$0xff]
    %v5385 = vld [vmem:[#allocation24 + $0x3c8] sm:$0xff]
    %v5386 = vld [vmem:[#allocation24 + $0x3d0] sm:$0xff]
    %v5387 = vld [vmem:[#allocation24 + $0x3d8] sm:$0xff]
    %v5388 = vld [vmem:[#allocation24 + $0x3e0] sm:$0xff]
    %v5389 = vld [vmem:[#allocation24 + $0x3e8] sm:$0xff]
    %v5390 = vld [vmem:[#allocation24 + $0x3f0] sm:$0xff]
    %v5391 = vld [vmem:[#allocation24 + $0x3f8] sm:$0xff]
    %v5392 = vld [vmem:[#allocation24 + $0x400] sm:$0xff]
    %v5393 = vld [vmem:[#allocation24 + $0x408] sm:$0xff]
    %v5394 = vld [vmem:[#allocation24 + $0x410] sm:$0xff]
    %v5395 = vld [vmem:[#allocation24 + $0x418] sm:$0xff]
    %v5396 = vld [vmem:[#allocation24 + $0x420] sm:$0xff]
    %v5397 = vld [vmem:[#allocation24 + $0x428] sm:$0xff]
    %v5398 = vld [vmem:[#allocation24 + $0x430] sm:$0xff]
    %v5399 = vld [vmem:[#allocation24 + $0x438] sm:$0xff]
    %v5400 = vld [vmem:[#allocation24 + $0x440] sm:$0xff]
    %v5401 = vld [vmem:[#allocation24 + $0x448] sm:$0xff]
    %v5402 = vld [vmem:[#allocation24 + $0x450] sm:$0xff]
    %v5403 = vld [vmem:[#allocation24 + $0x458] sm:$0xff]
    %v5404 = vld [vmem:[#allocation24 + $0x460] sm:$0xff]
    %v5405 = vld [vmem:[#allocation24 + $0x468] sm:$0xff]
    %v5406 = vld [vmem:[#allocation24 + $0x470] sm:$0xff]
    %v5407 = vld [vmem:[#allocation24 + $0x478] sm:$0xff]
    %v5408 = vld [vmem:[#allocation24 + $0x480] sm:$0xff]
    %v5409 = vld [vmem:[#allocation24 + $0x488] sm:$0xff]
    %v5410 = vld [vmem:[#allocation24 + $0x490] sm:$0xff]
    %v5411 = vld [vmem:[#allocation24 + $0x498] sm:$0xff]
    %v5412 = vld [vmem:[#allocation24 + $0x4a0] sm:$0xff]
    %v5413 = vld [vmem:[#allocation24 + $0x4a8] sm:$0xff]
    %v5414 = vld [vmem:[#allocation24 + $0x4b0] sm:$0xff]
    %v5415 = vld [vmem:[#allocation24 + $0x4b8] sm:$0xff]
    %v5416 = vld [vmem:[#allocation24 + $0x4c0] sm:$0xff]
    %v5417 = vld [vmem:[#allocation24 + $0x4c8] sm:$0xff]
    %v5418 = vld [vmem:[#allocation24 + $0x4d0] sm:$0xff]
    %v5419 = vld [vmem:[#allocation24 + $0x4d8] sm:$0xff]
    %v5420 = vld [vmem:[#allocation24 + $0x4e0] sm:$0xff]
    %v5421 = vld [vmem:[#allocation24 + $0x4e8] sm:$0xff]
    %v5422 = vld [vmem:[#allocation24 + $0x4f0] sm:$0xff]
    %v5423 = vld [vmem:[#allocation24 + $0x4f8] sm:$0xff]
    %v5424 = vld [vmem:[#allocation24 + $0x500] sm:$0xff]
    %v5425 = vld [vmem:[#allocation24 + $0x508] sm:$0xff]
    %v5426 = vld [vmem:[#allocation24 + $0x510] sm:$0xff]
    %v5427 = vld [vmem:[#allocation24 + $0x518] sm:$0xff]
    %v5428 = vld [vmem:[#allocation24 + $0x520] sm:$0xff]
    %v5429 = vld [vmem:[#allocation24 + $0x528] sm:$0xff]
    %v5430 = vld [vmem:[#allocation24 + $0x530] sm:$0xff]
    %v5431 = vld [vmem:[#allocation24 + $0x538] sm:$0xff]
    %v5432 = vld [vmem:[#allocation24 + $0x540] sm:$0xff]
    %v5433 = vld [vmem:[#allocation24 + $0x548] sm:$0xff]
    %v5434 = vld [vmem:[#allocation24 + $0x550] sm:$0xff]
    %v5435 = vld [vmem:[#allocation24 + $0x558] sm:$0xff]
    %v5436 = vld [vmem:[#allocation24 + $0x560] sm:$0xff]
    %v5437 = vld [vmem:[#allocation24 + $0x568] sm:$0xff]
    %v5438 = vld [vmem:[#allocation24 + $0x570] sm:$0xff]
    %v5439 = vld [vmem:[#allocation24 + $0x578] sm:$0xff]
    %v5440 = vld [vmem:[#allocation24 + $0x580] sm:$0xff]
    %v5441 = vld [vmem:[#allocation24 + $0x588] sm:$0xff]
    %v5442 = vld [vmem:[#allocation24 + $0x590] sm:$0xff]
    %v5443 = vld [vmem:[#allocation24 + $0x598] sm:$0xff]
    %v5444 = vld [vmem:[#allocation24 + $0x5a0] sm:$0xff]
    %v5445 = vld [vmem:[#allocation24 + $0x5a8] sm:$0xff]
    %v5446 = vld [vmem:[#allocation24 + $0x5b0] sm:$0xff]
    %v5447 = vld [vmem:[#allocation24 + $0x5b8] sm:$0xff]
    %v5448 = vld [vmem:[#allocation24 + $0x5c0] sm:$0xff]
    %v5449 = vld [vmem:[#allocation24 + $0x5c8] sm:$0xff]
    %v5450 = vld [vmem:[#allocation24 + $0x5d0] sm:$0xff]
    %v5451 = vld [vmem:[#allocation24 + $0x5d8] sm:$0xff]
    %v5452 = vld [vmem:[#allocation24 + $0x5e0] sm:$0xff]
    %v5453 = vld [vmem:[#allocation24 + $0x5e8] sm:$0xff]
    %v5454 = vld [vmem:[#allocation24 + $0x5f0] sm:$0xff]
    %v5455 = vld [vmem:[#allocation24 + $0x5f8] sm:$0xff]
    %v5456 = vld [vmem:[#allocation24 + $0x600] sm:$0xff]
    %v5457 = vld [vmem:[#allocation24 + $0x608] sm:$0xff]
    %v5458 = vld [vmem:[#allocation24 + $0x610] sm:$0xff]
    %v5459 = vld [vmem:[#allocation24 + $0x618] sm:$0xff]
    %v5460 = vld [vmem:[#allocation24 + $0x620] sm:$0xff]
    %v5461 = vld [vmem:[#allocation24 + $0x628] sm:$0xff]
    %v5462 = vld [vmem:[#allocation24 + $0x630] sm:$0xff]
    %v5463 = vld [vmem:[#allocation24 + $0x638] sm:$0xff]
    %v5464 = vld [vmem:[#allocation24 + $0x640] sm:$0xff]
    %v5465 = vld [vmem:[#allocation24 + $0x648] sm:$0xff]
    %v5466 = vld [vmem:[#allocation24 + $0x650] sm:$0xff]
    %v5467 = vld [vmem:[#allocation24 + $0x658] sm:$0xff]
    %v5468 = vld [vmem:[#allocation24 + $0x660] sm:$0xff]
    %v5469 = vld [vmem:[#allocation24 + $0x668] sm:$0xff]
    %v5470 = vld [vmem:[#allocation24 + $0x670] sm:$0xff]
    %v5471 = vld [vmem:[#allocation24 + $0x678] sm:$0xff]
    %v5472 = vld [vmem:[#allocation25] sm:$0xff]
    %v5473 = vld [vmem:[#allocation25 + $0x8] sm:$0x1f]
    %v5476 = vlaneseq
    %v5477 = vshrl.u32 %v5476, 7
    %v5478 = vsub.s32 0, %v5477
    %v5479 = vrot.slane %v5472, %v5478
    %v5480 = vlaneseq
    %v5481 = vshrl.u32 %v5480, 7
    %v5482 = vsub.s32 1, %v5481
    %v5483 = vrot.slane %v5472, %v5482
    %v5484 = vlaneseq
    %v5485 = vshrl.u32 %v5484, 7
    %v5486 = vsub.s32 2, %v5485
    %v5487 = vrot.slane %v5472, %v5486
    %v5488 = vlaneseq
    %v5489 = vshrl.u32 %v5488, 7
    %v5490 = vsub.s32 3, %v5489
    %v5491 = vrot.slane %v5472, %v5490
    %v5492 = vlaneseq
    %v5493 = vshrl.u32 %v5492, 7
    %v5494 = vsub.s32 4, %v5493
    %v5495 = vrot.slane %v5472, %v5494
    %v5496 = vlaneseq
    %v5497 = vshrl.u32 %v5496, 7
    %v5498 = vsub.s32 5, %v5497
    %v5499 = vrot.slane %v5472, %v5498
    %v5500 = vlaneseq
    %v5501 = vshrl.u32 %v5500, 7
    %v5502 = vsub.s32 6, %v5501
    %v5503 = vrot.slane %v5472, %v5502
    %v5504 = vlaneseq
    %v5505 = vshrl.u32 %v5504, 7
    %v5506 = vsub.s32 7, %v5505
    %v5507 = vrot.slane %v5472, %v5506
    %v5508 = vlaneseq
    %v5509 = vshrl.u32 %v5508, 7
    %v5510 = vsub.s32 0, %v5509
    %v5511 = vrot.slane %v5473, %v5510
    %v5512 = vlaneseq
    %v5513 = vshrl.u32 %v5512, 7
    %v5514 = vsub.s32 1, %v5513
    %v5515 = vrot.slane %v5473, %v5514
    %v5516 = vlaneseq
    %v5517 = vshrl.u32 %v5516, 7
    %v5518 = vsub.s32 2, %v5517
    %v5519 = vrot.slane %v5473, %v5518
    %v5520 = vlaneseq
    %v5521 = vshrl.u32 %v5520, 7
    %v5522 = vsub.s32 3, %v5521
    %v5523 = vrot.slane %v5473, %v5522
    %v5524 = vlaneseq
    %v5525 = vshrl.u32 %v5524, 7
    %v5526 = vsub.s32 4, %v5525
    %v5527 = vrot.slane %v5473, %v5526
    %5541 = vmatprep.subr.mxu0 %v5265
    %5542 = vmatpush1.msra.mxu0 %v5264
    %5543 = vmatprep.subr.mxu0 %v5278
    %5544 = vmatpush1.msra.mxu0 %v5277
    %5545 = vmatprep.subr.mxu0 %v5291
    %5546 = vmatpush1.msra.mxu0 %v5290
    %5547 = vmatprep.subr.mxu0 %v5304
    %5548 = vmatpush1.msra.mxu0 %v5303
    %5549 = vmatprep.subr.mxu0 %v5317
    %5550 = vmatpush1.msra.mxu0 %v5316
    %5551 = vmatprep.subr.mxu0 %v5330
    %5552 = vmatpush1.msra.mxu0 %v5329
    %5553 = vmatprep.subr.mxu0 %v5343
    %5554 = vmatpush1.msra.mxu0 %v5342
    %5555 = vmatprep.subr.mxu0 %v5356
    %5556 = vmatpush1.msra.mxu0 %v5355
    %5557 = vmatprep.subr.mxu0 %v5369
    %5558 = vmatpush1.msra.mxu0 %v5368
    %5559 = vmatprep.subr.mxu0 %v5382
    %5560 = vmatpush1.msra.mxu0 %v5381
    %5561 = vmatprep.subr.mxu0 %v5395
    %5562 = vmatpush1.msra.mxu0 %v5394
    %5563 = vmatprep.subr.mxu0 %v5408
    %5564 = vmatpush1.msra.mxu0 %v5407
    %5565 = vmatprep.subr.mxu0 %v5421
    %5566 = vmatpush1.msra.mxu0 %v5420
    %5567 = vmatprep.subr.mxu0 %v5434
    %5568 = vmatpush1.msra.mxu0 %v5433
    %5569 = vmatprep.subr.mxu0 %v5447
    %5570 = vmatpush1.msra.mxu0 %v5446
    %5571 = vmatprep.subr.mxu0 %v5460
    %5572 = vmatpush1.msra.mxu0 %v5459
    %5573 = vmatprep.subr.mxu0 0.0
    %5574 = vmatpush1.msra.mxu0 0.0
    %5575 = vmatprep.subr.mxu0 0.0
    %5576 = vmatpush1.msra.mxu0 0.0
    %5577 = vmatprep.subr.mxu0 0.0
    %5578 = vmatpush1.msra.mxu0 0.0
    %5579 = vmatprep.subr.mxu0 0.0
    %5580 = vmatpush1.msra.mxu0 0.0
    %5581 = vmatprep.subr.mxu0 0.0
    %5582 = vmatpush1.msra.mxu0 0.0
    %5583 = vmatprep.subr.mxu0 0.0
    %5584 = vmatpush1.msra.mxu0 0.0
    %5585 = vmatprep.subr.mxu0 0.0
    %5586 = vmatpush1.msra.mxu0 0.0
    %5587 = vmatprep.subr.mxu0 0.0
    %5588 = vmatpush1.msra.mxu0 0.0
    %5589 = vmatprep.subr.mxu0 0.0
    %5590 = vmatpush1.msra.mxu0 0.0
    %5591 = vmatprep.subr.mxu0 0.0
    %5592 = vmatpush1.msra.mxu0 0.0
    %5593 = vmatprep.subr.mxu0 0.0
    %5594 = vmatpush1.msra.mxu0 0.0
    %5595 = vmatprep.subr.mxu0 0.0
    %5596 = vmatpush1.msra.mxu0 0.0
    %5597 = vmatprep.subr.mxu0 0.0
    %5598 = vmatpush1.msra.mxu0 0.0
    %5599 = vmatprep.subr.mxu0 0.0
    %5600 = vmatpush1.msra.mxu0 0.0
    %5601 = vmatprep.subr.mxu0 0.0
    %5602 = vmatpush1.msra.mxu0 0.0
    %5603 = vmatprep.subr.mxu0 0.0
    %5604 = vmatpush1.msra.mxu0 0.0
    %5605 = vmatprep.mubr.f32.mxu0 0.0
    %5606 = vmatmul.mubr.f32.gmra.mrb[0].mxu0 %v5262
    %v5607 = vpop.f32.mrb[0].mxu0
    %v5608 = vadd.f32 %v5479, %v5607
    %v5609 = vpop.f32.mrb[0].mxu0
    %v5610 = vadd.f32 %v5483, %v5609
    %5611 = vmatprep.mubr.f32.mxu0 0.0
    %5612 = vmatmul.mubr.f32.gmra.mrb[0].mxu0 %v5263
    %v5613 = vpop.f32.mrb[0].mxu0
    %v5614 = vadd.f32 %v5479, %v5613
    %v5615 = vpop.f32.mrb[0].mxu0
    %v5616 = vadd.f32 %v5483, %v5615
    %5617 = vdwg.mxu0
    %5618 = vmatprep.subr.mxu0 %v5267
    %5619 = vmatpush1.msra.mxu0 %v5266
    %5620 = vmatprep.subr.mxu0 %v5280
    %5621 = vmatpush1.msra.mxu0 %v5279
    %5622 = vmatprep.subr.mxu0 %v5293
    %5623 = vmatpush1.msra.mxu0 %v5292
    %5624 = vmatprep.subr.mxu0 %v5306
    %5625 = vmatpush1.msra.mxu0 %v5305
    %5626 = vmatprep.subr.mxu0 %v5319
    %5627 = vmatpush1.msra.mxu0 %v5318
    %5628 = vmatprep.subr.mxu0 %v5332
    %5629 = vmatpush1.msra.mxu0 %v5331
    %5630 = vmatprep.subr.mxu0 %v5345
    %5631 = vmatpush1.msra.mxu0 %v5344
    %5632 = vmatprep.subr.mxu0 %v5358
    %5633 = vmatpush1.msra.mxu0 %v5357
    %5634 = vmatprep.subr.mxu0 %v5371
    %5635 = vmatpush1.msra.mxu0 %v5370
    %5636 = vmatprep.subr.mxu0 %v5384
    %5637 = vmatpush1.msra.mxu0 %v5383
    %5638 = vmatprep.subr.mxu0 %v5397
    %5639 = vmatpush1.msra.mxu0 %v5396
    %5640 = vmatprep.subr.mxu0 %v5410
    %5641 = vmatpush1.msra.mxu0 %v5409
    %5642 = vmatprep.subr.mxu0 %v5423
    %5643 = vmatpush1.msra.mxu0 %v5422
    %5644 = vmatprep.subr.mxu0 %v5436
    %5645 = vmatpush1.msra.mxu0 %v5435
    %5646 = vmatprep.subr.mxu0 %v5449
    %5647 = vmatpush1.msra.mxu0 %v5448
    %5648 = vmatprep.subr.mxu0 %v5462
    %5649 = vmatpush1.msra.mxu0 %v5461
    %5650 = vmatprep.subr.mxu0 0.0
    %5651 = vmatpush1.msra.mxu0 0.0
    %5652 = vmatprep.subr.mxu0 0.0
    %5653 = vmatpush1.msra.mxu0 0.0
    %5654 = vmatprep.subr.mxu0 0.0
    %5655 = vmatpush1.msra.mxu0 0.0
    %5656 = vmatprep.subr.mxu0 0.0
    %5657 = vmatpush1.msra.mxu0 0.0
    %5658 = vmatprep.subr.mxu0 0.0
    %5659 = vmatpush1.msra.mxu0 0.0
    %5660 = vmatprep.subr.mxu0 0.0
    %5661 = vmatpush1.msra.mxu0 0.0
    %5662 = vmatprep.subr.mxu0 0.0
    %5663 = vmatpush1.msra.mxu0 0.0
    %5664 = vmatprep.subr.mxu0 0.0
    %5665 = vmatpush1.msra.mxu0 0.0
    %5666 = vmatprep.subr.mxu0 0.0
    %5667 = vmatpush1.msra.mxu0 0.0
    %5668 = vmatprep.subr.mxu0 0.0
    %5669 = vmatpush1.msra.mxu0 0.0
    %5670 = vmatprep.subr.mxu0 0.0
    %5671 = vmatpush1.msra.mxu0 0.0
    %5672 = vmatprep.subr.mxu0 0.0
    %5673 = vmatpush1.msra.mxu0 0.0
    %5674 = vmatprep.subr.mxu0 0.0
    %5675 = vmatpush1.msra.mxu0 0.0
    %5676 = vmatprep.subr.mxu0 0.0
    %5677 = vmatpush1.msra.mxu0 0.0
    %5678 = vmatprep.subr.mxu0 0.0
    %5679 = vmatpush1.msra.mxu0 0.0
    %5680 = vmatprep.subr.mxu0 0.0
    %5681 = vmatpush1.msra.mxu0 0.0
    %5682 = vmatprep.mubr.f32.mxu0 0.0
    %5683 = vmatmul.mubr.f32.gmra.mrb[0].mxu0 %v5262
    %v5684 = vpop.f32.mrb[0].mxu0
    %v5685 = vadd.f32 %v5487, %v5684
    %v5686 = vpop.f32.mrb[0].mxu0
    %v5687 = vadd.f32 %v5491, %v5686
    %5688 = vmatprep.mubr.f32.mxu0 0.0
    %5689 = vmatmul.mubr.f32.gmra.mrb[0].mxu0 %v5263
    %v5690 = vpop.f32.mrb[0].mxu0
    %v5691 = vadd.f32 %v5487, %v5690
    %v5692 = vpop.f32.mrb[0].mxu0
    %v5693 = vadd.f32 %v5491, %v5692
    %5694 = vdwg.mxu0
    %5695 = vmatprep.subr.mxu0 %v5269
    %5696 = vmatpush1.msra.mxu0 %v5268
    %5697 = vmatprep.subr.mxu0 %v5282
    %5698 = vmatpush1.msra.mxu0 %v5281
    %5699 = vmatprep.subr.mxu0 %v5295
    %5700 = vmatpush1.msra.mxu0 %v5294
    %5701 = vmatprep.subr.mxu0 %v5308
    %5702 = vmatpush1.msra.mxu0 %v5307
    %5703 = vmatprep.subr.mxu0 %v5321
    %5704 = vmatpush1.msra.mxu0 %v5320
    %5705 = vmatprep.subr.mxu0 %v5334
    %5706 = vmatpush1.msra.mxu0 %v5333
    %5707 = vmatprep.subr.mxu0 %v5347
    %5708 = vmatpush1.msra.mxu0 %v5346
    %5709 = vmatprep.subr.mxu0 %v5360
    %5710 = vmatpush1.msra.mxu0 %v5359
    %5711 = vmatprep.subr.mxu0 %v5373
    %5712 = vmatpush1.msra.mxu0 %v5372
    %5713 = vmatprep.subr.mxu0 %v5386
    %5714 = vmatpush1.msra.mxu0 %v5385
    %5715 = vmatprep.subr.mxu0 %v5399
    %5716 = vmatpush1.msra.mxu0 %v5398
    %5717 = vmatprep.subr.mxu0 %v5412
    %5718 = vmatpush1.msra.mxu0 %v5411
    %5719 = vmatprep.subr.mxu0 %v5425
    %5720 = vmatpush1.msra.mxu0 %v5424
    %5721 = vmatprep.subr.mxu0 %v5438
    %5722 = vmatpush1.msra.mxu0 %v5437
    %5723 = vmatprep.subr.mxu0 %v5451
    %5724 = vmatpush1.msra.mxu0 %v5450
    %5725 = vmatprep.subr.mxu0 %v5464
    %5726 = vmatpush1.msra.mxu0 %v5463
    %5727 = vmatprep.subr.mxu0 0.0
    %5728 = vmatpush1.msra.mxu0 0.0
    %5729 = vmatprep.subr.mxu0 0.0
    %5730 = vmatpush1.msra.mxu0 0.0
    %5731 = vmatprep.subr.mxu0 0.0
    %5732 = vmatpush1.msra.mxu0 0.0
    %5733 = vmatprep.subr.mxu0 0.0
    %5734 = vmatpush1.msra.mxu0 0.0
    %5735 = vmatprep.subr.mxu0 0.0
    %5736 = vmatpush1.msra.mxu0 0.0
    %5737 = vmatprep.subr.mxu0 0.0
    %5738 = vmatpush1.msra.mxu0 0.0
    %5739 = vmatprep.subr.mxu0 0.0
    %5740 = vmatpush1.msra.mxu0 0.0
    %5741 = vmatprep.subr.mxu0 0.0
    %5742 = vmatpush1.msra.mxu0 0.0
    %5743 = vmatprep.subr.mxu0 0.0
    %5744 = vmatpush1.msra.mxu0 0.0
    %5745 = vmatprep.subr.mxu0 0.0
    %5746 = vmatpush1.msra.mxu0 0.0
    %5747 = vmatprep.subr.mxu0 0.0
    %5748 = vmatpush1.msra.mxu0 0.0
    %5749 = vmatprep.subr.mxu0 0.0
    %5750 = vmatpush1.msra.mxu0 0.0
    %5751 = vmatprep.subr.mxu0 0.0
    %5752 = vmatpush1.msra.mxu0 0.0
    %5753 = vmatprep.subr.mxu0 0.0
    %5754 = vmatpush1.msra.mxu0 0.0
    %5755 = vmatprep.subr.mxu0 0.0
    %5756 = vmatpush1.msra.mxu0 0.0
    %5757 = vmatprep.subr.mxu0 0.0
    %5758 = vmatpush1.msra.mxu0 0.0
    %5759 = vmatprep.mubr.f32.mxu0 0.0
    %5760 = vmatmul.mubr.f32.gmra.mrb[0].mxu0 %v5262
    %v5761 = vpop.f32.mrb[0].mxu0
    %v5762 = vadd.f32 %v5495, %v5761
    %v5763 = vpop.f32.mrb[0].mxu0
    %v5764 = vadd.f32 %v5499, %v5763
    %5765 = vmatprep.mubr.f32.mxu0 0.0
    %5766 = vmatmul.mubr.f32.gmra.mrb[0].mxu0 %v5263
    %v5767 = vpop.f32.mrb[0].mxu0
    %v5768 = vadd.f32 %v5495, %v5767
    %v5769 = vpop.f32.mrb[0].mxu0
    %v5770 = vadd.f32 %v5499, %v5769
    %5771 = vdwg.mxu0
    %5772 = vmatprep.subr.mxu0 %v5271
    %5773 = vmatpush1.msra.mxu0 %v5270
    %5774 = vmatprep.subr.mxu0 %v5284
    %5775 = vmatpush1.msra.mxu0 %v5283
    %5776 = vmatprep.subr.mxu0 %v5297
    %5777 = vmatpush1.msra.mxu0 %v5296
    %5778 = vmatprep.subr.mxu0 %v5310
    %5779 = vmatpush1.msra.mxu0 %v5309
    %5780 = vmatprep.subr.mxu0 %v5323
    %5781 = vmatpush1.msra.mxu0 %v5322
    %5782 = vmatprep.subr.mxu0 %v5336
    %5783 = vmatpush1.msra.mxu0 %v5335
    %5784 = vmatprep.subr.mxu0 %v5349
    %5785 = vmatpush1.msra.mxu0 %v5348
    %5786 = vmatprep.subr.mxu0 %v5362
    %5787 = vmatpush1.msra.mxu0 %v5361
    %5788 = vmatprep.subr.mxu0 %v5375
    %5789 = vmatpush1.msra.mxu0 %v5374
    %5790 = vmatprep.subr.mxu0 %v5388
    %5791 = vmatpush1.msra.mxu0 %v5387
    %5792 = vmatprep.subr.mxu0 %v5401
    %5793 = vmatpush1.msra.mxu0 %v5400
    %5794 = vmatprep.subr.mxu0 %v5414
    %5795 = vmatpush1.msra.mxu0 %v5413
    %5796 = vmatprep.subr.mxu0 %v5427
    %5797 = vmatpush1.msra.mxu0 %v5426
    %5798 = vmatprep.subr.mxu0 %v5440
    %5799 = vmatpush1.msra.mxu0 %v5439
    %5800 = vmatprep.subr.mxu0 %v5453
    %5801 = vmatpush1.msra.mxu0 %v5452
    %5802 = vmatprep.subr.mxu0 %v5466
    %5803 = vmatpush1.msra.mxu0 %v5465
    %5804 = vmatprep.subr.mxu0 0.0
    %5805 = vmatpush1.msra.mxu0 0.0
    %5806 = vmatprep.subr.mxu0 0.0
    %5807 = vmatpush1.msra.mxu0 0.0
    %5808 = vmatprep.subr.mxu0 0.0
    %5809 = vmatpush1.msra.mxu0 0.0
    %5810 = vmatprep.subr.mxu0 0.0
    %5811 = vmatpush1.msra.mxu0 0.0
    %5812 = vmatprep.subr.mxu0 0.0
    %5813 = vmatpush1.msra.mxu0 0.0
    %5814 = vmatprep.subr.mxu0 0.0
    %5815 = vmatpush1.msra.mxu0 0.0
    %5816 = vmatprep.subr.mxu0 0.0
    %5817 = vmatpush1.msra.mxu0 0.0
    %5818 = vmatprep.subr.mxu0 0.0
    %5819 = vmatpush1.msra.mxu0 0.0
    %5820 = vmatprep.subr.mxu0 0.0
    %5821 = vmatpush1.msra.mxu0 0.0
    %5822 = vmatprep.subr.mxu0 0.0
    %5823 = vmatpush1.msra.mxu0 0.0
    %5824 = vmatprep.subr.mxu0 0.0
    %5825 = vmatpush1.msra.mxu0 0.0
    %5826 = vmatprep.subr.mxu0 0.0
    %5827 = vmatpush1.msra.mxu0 0.0
    %5828 = vmatprep.subr.mxu0 0.0
    %5829 = vmatpush1.msra.mxu0 0.0
    %5830 = vmatprep.subr.mxu0 0.0
    %5831 = vmatpush1.msra.mxu0 0.0
    %5832 = vmatprep.subr.mxu0 0.0
    %5833 = vmatpush1.msra.mxu0 0.0
    %5834 = vmatprep.subr.mxu0 0.0
    %5835 = vmatpush1.msra.mxu0 0.0
    %5836 = vmatprep.mubr.f32.mxu0 0.0
    %5837 = vmatmul.mubr.f32.gmra.mrb[0].mxu0 %v5262
    %v5838 = vpop.f32.mrb[0].mxu0
    %v5839 = vadd.f32 %v5503, %v5838
    %v5840 = vpop.f32.mrb[0].mxu0
    %v5841 = vadd.f32 %v5507, %v5840
    %5842 = vmatprep.mubr.f32.mxu0 0.0
    %5843 = vmatmul.mubr.f32.gmra.mrb[0].mxu0 %v5263
    %v5844 = vpop.f32.mrb[0].mxu0
    %v5845 = vadd.f32 %v5503, %v5844
    %v5846 = vpop.f32.mrb[0].mxu0
    %v5847 = vadd.f32 %v5507, %v5846
    %5848 = vdwg.mxu0
    %5849 = vmatprep.subr.mxu0 %v5273
    %5850 = vmatpush1.msra.mxu0 %v5272
    %5851 = vmatprep.subr.mxu0 %v5286
    %5852 = vmatpush1.msra.mxu0 %v5285
    %5853 = vmatprep.subr.mxu0 %v5299
    %5854 = vmatpush1.msra.mxu0 %v5298
    %5855 = vmatprep.subr.mxu0 %v5312
    %5856 = vmatpush1.msra.mxu0 %v5311
    %5857 = vmatprep.subr.mxu0 %v5325
    %5858 = vmatpush1.msra.mxu0 %v5324
    %5859 = vmatprep.subr.mxu0 %v5338
    %5860 = vmatpush1.msra.mxu0 %v5337
    %5861 = vmatprep.subr.mxu0 %v5351
    %5862 = vmatpush1.msra.mxu0 %v5350
    %5863 = vmatprep.subr.mxu0 %v5364
    %5864 = vmatpush1.msra.mxu0 %v5363
    %5865 = vmatprep.subr.mxu0 %v5377
    %5866 = vmatpush1.msra.mxu0 %v5376
    %5867 = vmatprep.subr.mxu0 %v5390
    %5868 = vmatpush1.msra.mxu0 %v5389
    %5869 = vmatprep.subr.mxu0 %v5403
    %5870 = vmatpush1.msra.mxu0 %v5402
    %5871 = vmatprep.subr.mxu0 %v5416
    %5872 = vmatpush1.msra.mxu0 %v5415
    %5873 = vmatprep.subr.mxu0 %v5429
    %5874 = vmatpush1.msra.mxu0 %v5428
    %5875 = vmatprep.subr.mxu0 %v5442
    %5876 = vmatpush1.msra.mxu0 %v5441
    %5877 = vmatprep.subr.mxu0 %v5455
    %5878 = vmatpush1.msra.mxu0 %v5454
    %5879 = vmatprep.subr.mxu0 %v5468
    %5880 = vmatpush1.msra.mxu0 %v5467
    %5881 = vmatprep.subr.mxu0 0.0
    %5882 = vmatpush1.msra.mxu0 0.0
    %5883 = vmatprep.subr.mxu0 0.0
    %5884 = vmatpush1.msra.mxu0 0.0
    %5885 = vmatprep.subr.mxu0 0.0
    %5886 = vmatpush1.msra.mxu0 0.0
    %5887 = vmatprep.subr.mxu0 0.0
    %5888 = vmatpush1.msra.mxu0 0.0
    %5889 = vmatprep.subr.mxu0 0.0
    %5890 = vmatpush1.msra.mxu0 0.0
    %5891 = vmatprep.subr.mxu0 0.0
    %5892 = vmatpush1.msra.mxu0 0.0
    %5893 = vmatprep.subr.mxu0 0.0
    %5894 = vmatpush1.msra.mxu0 0.0
    %5895 = vmatprep.subr.mxu0 0.0
    %5896 = vmatpush1.msra.mxu0 0.0
    %5897 = vmatprep.subr.mxu0 0.0
    %5898 = vmatpush1.msra.mxu0 0.0
    %5899 = vmatprep.subr.mxu0 0.0
    %5900 = vmatpush1.msra.mxu0 0.0
    %5901 = vmatprep.subr.mxu0 0.0
    %5902 = vmatpush1.msra.mxu0 0.0
    %5903 = vmatprep.subr.mxu0 0.0
    %5904 = vmatpush1.msra.mxu0 0.0
    %5905 = vmatprep.subr.mxu0 0.0
    %5906 = vmatpush1.msra.mxu0 0.0
    %5907 = vmatprep.subr.mxu0 0.0
    %5908 = vmatpush1.msra.mxu0 0.0
    %5909 = vmatprep.subr.mxu0 0.0
    %5910 = vmatpush1.msra.mxu0 0.0
    %5911 = vmatprep.subr.mxu0 0.0
    %5912 = vmatpush1.msra.mxu0 0.0
    %5913 = vmatprep.mubr.f32.mxu0 0.0
    %5914 = vmatmul.mubr.f32.gmra.mrb[0].mxu0 %v5262
    %v5915 = vpop.f32.mrb[0].mxu0
    %v5916 = vadd.f32 %v5511, %v5915
    %v5917 = vpop.f32.mrb[0].mxu0
    %v5918 = vadd.f32 %v5515, %v5917
    %5919 = vmatprep.mubr.f32.mxu0 0.0
    %5920 = vmatmul.mubr.f32.gmra.mrb[0].mxu0 %v5263
    %v5921 = vpop.f32.mrb[0].mxu0
    %v5922 = vadd.f32 %v5511, %v5921
    %v5923 = vpop.f32.mrb[0].mxu0
    %v5924 = vadd.f32 %v5515, %v5923
    %5925 = vdwg.mxu0
    %5926 = vmatprep.subr.mxu0 %v5275
    %5927 = vmatpush1.msra.mxu0 %v5274
    %5928 = vmatprep.subr.mxu0 %v5288
    %5929 = vmatpush1.msra.mxu0 %v5287
    %5930 = vmatprep.subr.mxu0 %v5301
    %5931 = vmatpush1.msra.mxu0 %v5300
    %5932 = vmatprep.subr.mxu0 %v5314
    %5933 = vmatpush1.msra.mxu0 %v5313
    %5934 = vmatprep.subr.mxu0 %v5327
    %5935 = vmatpush1.msra.mxu0 %v5326
    %5936 = vmatprep.subr.mxu0 %v5340
    %5937 = vmatpush1.msra.mxu0 %v5339
    %5938 = vmatprep.subr.mxu0 %v5353
    %5939 = vmatpush1.msra.mxu0 %v5352
    %5940 = vmatprep.subr.mxu0 %v5366
    %5941 = vmatpush1.msra.mxu0 %v5365
    %5942 = vmatprep.subr.mxu0 %v5379
    %5943 = vmatpush1.msra.mxu0 %v5378
    %5944 = vmatprep.subr.mxu0 %v5392
    %5945 = vmatpush1.msra.mxu0 %v5391
    %5946 = vmatprep.subr.mxu0 %v5405
    %5947 = vmatpush1.msra.mxu0 %v5404
    %5948 = vmatprep.subr.mxu0 %v5418
    %5949 = vmatpush1.msra.mxu0 %v5417
    %5950 = vmatprep.subr.mxu0 %v5431
    %5951 = vmatpush1.msra.mxu0 %v5430
    %5952 = vmatprep.subr.mxu0 %v5444
    %5953 = vmatpush1.msra.mxu0 %v5443
    %5954 = vmatprep.subr.mxu0 %v5457
    %5955 = vmatpush1.msra.mxu0 %v5456
    %5956 = vmatprep.subr.mxu0 %v5470
    %5957 = vmatpush1.msra.mxu0 %v5469
    %5958 = vmatprep.subr.mxu0 0.0
    %5959 = vmatpush1.msra.mxu0 0.0
    %5960 = vmatprep.subr.mxu0 0.0
    %5961 = vmatpush1.msra.mxu0 0.0
    %5962 = vmatprep.subr.mxu0 0.0
    %5963 = vmatpush1.msra.mxu0 0.0
    %5964 = vmatprep.subr.mxu0 0.0
    %5965 = vmatpush1.msra.mxu0 0.0
    %5966 = vmatprep.subr.mxu0 0.0
    %5967 = vmatpush1.msra.mxu0 0.0
    %5968 = vmatprep.subr.mxu0 0.0
    %5969 = vmatpush1.msra.mxu0 0.0
    %5970 = vmatprep.subr.mxu0 0.0
    %5971 = vmatpush1.msra.mxu0 0.0
    %5972 = vmatprep.subr.mxu0 0.0
    %5973 = vmatpush1.msra.mxu0 0.0
    %5974 = vmatprep.subr.mxu0 0.0
    %5975 = vmatpush1.msra.mxu0 0.0
    %5976 = vmatprep.subr.mxu0 0.0
    %5977 = vmatpush1.msra.mxu0 0.0
    %5978 = vmatprep.subr.mxu0 0.0
    %5979 = vmatpush1.msra.mxu0 0.0
    %5980 = vmatprep.subr.mxu0 0.0
    %5981 = vmatpush1.msra.mxu0 0.0
    %5982 = vmatprep.subr.mxu0 0.0
    %5983 = vmatpush1.msra.mxu0 0.0
    %5984 = vmatprep.subr.mxu0 0.0
    %5985 = vmatpush1.msra.mxu0 0.0
    %5986 = vmatprep.subr.mxu0 0.0
    %5987 = vmatpush1.msra.mxu0 0.0
    %5988 = vmatprep.subr.mxu0 0.0
    %5989 = vmatpush1.msra.mxu0 0.0
    %5990 = vmatprep.mubr.f32.mxu0 0.0
    %5991 = vmatmul.mubr.f32.gmra.mrb[0].mxu0 %v5262
    %v5992 = vpop.f32.mrb[0].mxu0
    %v5993 = vadd.f32 %v5519, %v5992
    %v5994 = vpop.f32.mrb[0].mxu0
    %v5995 = vadd.f32 %v5523, %v5994
    %5996 = vmatprep.mubr.f32.mxu0 0.0
    %5997 = vmatmul.mubr.f32.gmra.mrb[0].mxu0 %v5263
    %v5998 = vpop.f32.mrb[0].mxu0
    %v5999 = vadd.f32 %v5519, %v5998
    %v6000 = vpop.f32.mrb[0].mxu0
    %v6001 = vadd.f32 %v5523, %v6000
    %6002 = vdwg.mxu0
    %6003 = vmatprep.subr.mxu0 0.0
    %6004 = vmatpush1.msra.mxu0 %v5276
    %6005 = vmatprep.subr.mxu0 0.0
    %6006 = vmatpush1.msra.mxu0 %v5289
    %6007 = vmatprep.subr.mxu0 0.0
    %6008 = vmatpush1.msra.mxu0 %v5302
    %6009 = vmatprep.subr.mxu0 0.0
    %6010 = vmatpush1.msra.mxu0 %v5315
    %6011 = vmatprep.subr.mxu0 0.0
    %6012 = vmatpush1.msra.mxu0 %v5328
    %6013 = vmatprep.subr.mxu0 0.0
    %6014 = vmatpush1.msra.mxu0 %v5341
    %6015 = vmatprep.subr.mxu0 0.0
    %6016 = vmatpush1.msra.mxu0 %v5354
    %6017 = vmatprep.subr.mxu0 0.0
    %6018 = vmatpush1.msra.mxu0 %v5367
    %6019 = vmatprep.subr.mxu0 0.0
    %6020 = vmatpush1.msra.mxu0 %v5380
    %6021 = vmatprep.subr.mxu0 0.0
    %6022 = vmatpush1.msra.mxu0 %v5393
    %6023 = vmatprep.subr.mxu0 0.0
    %6024 = vmatpush1.msra.mxu0 %v5406
    %6025 = vmatprep.subr.mxu0 0.0
    %6026 = vmatpush1.msra.mxu0 %v5419
    %6027 = vmatprep.subr.mxu0 0.0
    %6028 = vmatpush1.msra.mxu0 %v5432
    %6029 = vmatprep.subr.mxu0 0.0
    %6030 = vmatpush1.msra.mxu0 %v5445
    %6031 = vmatprep.subr.mxu0 0.0
    %6032 = vmatpush1.msra.mxu0 %v5458
    %6033 = vmatprep.subr.mxu0 0.0
    %6034 = vmatpush1.msra.mxu0 %v5471
    %6035 = vmatprep.subr.mxu0 0.0
    %6036 = vmatpush1.msra.mxu0 0.0
    %6037 = vmatprep.subr.mxu0 0.0
    %6038 = vmatpush1.msra.mxu0 0.0
    %6039 = vmatprep.subr.mxu0 0.0
    %6040 = vmatpush1.msra.mxu0 0.0
    %6041 = vmatprep.subr.mxu0 0.0
    %6042 = vmatpush1.msra.mxu0 0.0
    %6043 = vmatprep.subr.mxu0 0.0
    %6044 = vmatpush1.msra.mxu0 0.0
    %6045 = vmatprep.subr.mxu0 0.0
    %6046 = vmatpush1.msra.mxu0 0.0
    %6047 = vmatprep.subr.mxu0 0.0
    %6048 = vmatpush1.msra.mxu0 0.0
    %6049 = vmatprep.subr.mxu0 0.0
    %6050 = vmatpush1.msra.mxu0 0.0
    %6051 = vmatprep.subr.mxu0 0.0
    %6052 = vmatpush1.msra.mxu0 0.0
    %6053 = vmatprep.subr.mxu0 0.0
    %6054 = vmatpush1.msra.mxu0 0.0
    %6055 = vmatprep.subr.mxu0 0.0
    %6056 = vmatpush1.msra.mxu0 0.0
    %6057 = vmatprep.subr.mxu0 0.0
    %6058 = vmatpush1.msra.mxu0 0.0
    %6059 = vmatprep.subr.mxu0 0.0
    %6060 = vmatpush1.msra.mxu0 0.0
    %6061 = vmatprep.subr.mxu0 0.0
    %6062 = vmatpush1.msra.mxu0 0.0
    %6063 = vmatprep.subr.mxu0 0.0
    %6064 = vmatpush1.msra.mxu0 0.0
    %6065 = vmatprep.subr.mxu0 0.0
    %6066 = vmatpush1.msra.mxu0 0.0
    %6067 = vmatprep.mubr.f32.mxu0 0.0
    %6068 = vmatmul.mubr.f32.gmra.mrb[0].mxu0 %v5262
    %v6069 = vpop.f32.mrb[0].mxu0
    %v6070 = vadd.f32 %v5527, %v6069
    %v6071 = vpop.f32.mrb[0].mxu0
    %6072 = vmatprep.mubr.f32.mxu0 0.0
    %6073 = vmatmul.mubr.f32.gmra.mrb[0].mxu0 %v5263
    %v6074 = vpop.f32.mrb[0].mxu0
    %v6075 = vadd.f32 %v5527, %v6074
    %v6076 = vpop.f32.mrb[0].mxu0
    %6077 = vdwg.mxu0
    %6078 = vmatprep.subr.mxu0 0.0
    %6079 = vmatpush1.xpose.msra.mxu0 %v5685
    %6080 = vmatprep.subr.mxu0 0.0
    %6081 = vmatpush1.xpose.msra.mxu0 %v5691
    %6082 = vmatprep.subr.mxu0 0.0
    %6083 = vmatpush1.xpose.msra.mxu0 0.0
    %6084 = vmatprep.subr.mxu0 0.0
    %6085 = vmatpush1.xpose.msra.mxu0 0.0
    %6086 = vmatprep.subr.mxu0 0.0
    %6087 = vmatpush1.xpose.msra.mxu0 0.0
    %6088 = vmatprep.subr.mxu0 0.0
    %6089 = vmatpush1.xpose.msra.mxu0 0.0
    %6090 = vmatprep.subr.mxu0 0.0
    %6091 = vmatpush1.xpose.msra.mxu0 0.0
    %6092 = vmatprep.subr.mxu0 0.0
    %6093 = vmatpush1.xpose.msra.mxu0 0.0
    %6094 = vmatprep.subr.mxu0 0.0
    %6095 = vmatpush1.xpose.msra.mxu0 0.0
    %6096 = vmatprep.subr.mxu0 0.0
    %6097 = vmatpush1.xpose.msra.mxu0 0.0
    %6098 = vmatprep.subr.mxu0 0.0
    %6099 = vmatpush1.xpose.msra.mxu0 0.0
    %6100 = vmatprep.subr.mxu0 0.0
    %6101 = vmatpush1.xpose.msra.mxu0 0.0
    %6102 = vmatprep.subr.mxu0 0.0
    %6103 = vmatpush1.xpose.msra.mxu0 0.0
    %6104 = vmatprep.subr.mxu0 0.0
    %6105 = vmatpush1.xpose.msra.mxu0 0.0
    %6106 = vmatprep.subr.mxu0 0.0
    %6107 = vmatpush1.xpose.msra.mxu0 0.0
    %6108 = vmatprep.subr.mxu0 0.0
    %6109 = vmatpush1.xpose.msra.mxu0 0.0
    %6110 = vmatprep.subr.mxu0 0.0
    %6111 = vmatpush1.xpose.msra.mxu0 0.0
    %6112 = vmatprep.subr.mxu0 0.0
    %6113 = vmatpush1.xpose.msra.mxu0 0.0
    %6114 = vmatprep.subr.mxu0 0.0
    %6115 = vmatpush1.xpose.msra.mxu0 0.0
    %6116 = vmatprep.subr.mxu0 0.0
    %6117 = vmatpush1.xpose.msra.mxu0 0.0
    %6118 = vmatprep.subr.mxu0 0.0
    %6119 = vmatpush1.xpose.msra.mxu0 0.0
    %6120 = vmatprep.subr.mxu0 0.0
    %6121 = vmatpush1.xpose.msra.mxu0 0.0
    %6122 = vmatprep.subr.mxu0 0.0
    %6123 = vmatpush1.xpose.msra.mxu0 0.0
    %6124 = vmatprep.subr.mxu0 0.0
    %6125 = vmatpush1.xpose.msra.mxu0 0.0
    %6126 = vmatprep.subr.mxu0 0.0
    %6127 = vmatpush1.xpose.msra.mxu0 0.0
    %6128 = vmatprep.subr.mxu0 0.0
    %6129 = vmatpush1.xpose.msra.mxu0 0.0
    %6130 = vmatprep.subr.mxu0 0.0
    %6131 = vmatpush1.xpose.msra.mxu0 0.0
    %6132 = vmatprep.subr.mxu0 0.0
    %6133 = vmatpush1.xpose.msra.mxu0 0.0
    %6134 = vmatprep.subr.mxu0 0.0
    %6135 = vmatpush1.xpose.msra.mxu0 0.0
    %6136 = vmatprep.subr.mxu0 0.0
    %6137 = vmatpush1.xpose.msra.mxu0 0.0
    %6138 = vmatprep.subr.mxu0 0.0
    %6139 = vmatpush1.xpose.msra.mxu0 0.0
    %6140 = vmatprep.subr.mxu0 0.0
    %6141 = vmatpush1.xpose.msra.mxu0 0.0
    %6142 = vmatprep.mubr.f32.mxu0 0.0
    %6143 = vmatmul.mubr.f32.gmra.mrb[0].mxu0 %v5608
    %v6144 = vpop.f32.mrb[0].mxu0
    %v6145 = vadd.f32 0.0, %v6144
    %v6146 = vpop.f32.mrb[0].mxu0
    %6147 = vmatprep.mubr.f32.mxu0 0.0
    %6148 = vmatmul.mubr.f32.gmra.mrb[0].mxu0 %v5614
    %v6149 = vpop.f32.mrb[0].mxu0
    %v6150 = vadd.f32 0.0, %v6149
    %v6151 = vpop.f32.mrb[0].mxu0
    %6152 = vdwg.mxu0
    %v6153 = vmul.f32 %v6145, 0.17677669
    %v6154 = vmul.f32 %v6150, 0.17677669
    %v6155 = vsel %vm4511, %v6153, -1e+30
    %v6156 = vsel %vm4512, %v6154, -1e+30
    %v6157 = vsel %vm4515, %v6155, -inf
    %6158 = vmax.xlane.f32.xlu0 %v6157
    %v6159 = vpop.xlane.xlu0 %6158
    %v6160 = vsel %vm4519, %v6156, -inf
    %6161 = vmax.xlane.f32.xlu0 %v6160
    %v6162 = vpop.xlane.xlu0 %6161
    %v6163 = vsub.f32 %v6155, %v6159
    %v6164 = vsub.f32 %v6156, %v6162
    %v6165 = vmul.f32 %v6163, 1.442695
    %v6166 = vpow.pop %v6165
    %v6167 = vmul.f32 %v6164, 1.442695
    %v6168 = vpow.pop %v6167
    %v6169 = vmul.f32 %v6166, %v763
    %v6170 = vmul.f32 %v6168, %v764
    %v6171 = vsel %vm4515, %v6169, 0.0
    %6172 = vadd.xlane.f32.xlu0 %v6171
    %v6173 = vpop.xlane.xlu0 %6172
    %v6174 = vsel %vm4519, %v6170, 0.0
    %6175 = vadd.xlane.f32.xlu0 %v6174
    %v6176 = vpop.xlane.xlu0 %6175
    %v6177 = vmax.f32 %v6173, 1e-20
    %v6178 = vmax.f32 %v6176, 1e-20
    %v6179 = vrcp.pop %v6177
    %v6180 = vrcp.pop %v6178
    %v6182 = vsel %vm4515, %v6169, 0
    %v6185 = vsel %vm4515, %v6170, 0
    %v6188 = vsel %vm4547, %v5768, 0
    %6190 = vmatprep.subr.mxu0 0.0
    %6191 = vmatpush1.msra.mxu0 %v5762
    %6192 = vmatprep.subr.mxu0 0.0
    %6193 = vmatpush1.msra.mxu0 %v6188
    %6194 = vmatprep.subr.mxu0 0.0
    %6195 = vmatpush1.msra.mxu0 0.0
    %6196 = vmatprep.subr.mxu0 0.0
    %6197 = vmatpush1.msra.mxu0 0.0
    %6198 = vmatprep.subr.mxu0 0.0
    %6199 = vmatpush1.msra.mxu0 0.0
    %6200 = vmatprep.subr.mxu0 0.0
    %6201 = vmatpush1.msra.mxu0 0.0
    %6202 = vmatprep.subr.mxu0 0.0
    %6203 = vmatpush1.msra.mxu0 0.0
    %6204 = vmatprep.subr.mxu0 0.0
    %6205 = vmatpush1.msra.mxu0 0.0
    %6206 = vmatprep.subr.mxu0 0.0
    %6207 = vmatpush1.msra.mxu0 0.0
    %6208 = vmatprep.subr.mxu0 0.0
    %6209 = vmatpush1.msra.mxu0 0.0
    %6210 = vmatprep.subr.mxu0 0.0
    %6211 = vmatpush1.msra.mxu0 0.0
    %6212 = vmatprep.subr.mxu0 0.0
    %6213 = vmatpush1.msra.mxu0 0.0
    %6214 = vmatprep.subr.mxu0 0.0
    %6215 = vmatpush1.msra.mxu0 0.0
    %6216 = vmatprep.subr.mxu0 0.0
    %6217 = vmatpush1.msra.mxu0 0.0
    %6218 = vmatprep.subr.mxu0 0.0
    %6219 = vmatpush1.msra.mxu0 0.0
    %6220 = vmatprep.subr.mxu0 0.0
    %6221 = vmatpush1.msra.mxu0 0.0
    %6222 = vmatprep.subr.mxu0 0.0
    %6223 = vmatpush1.msra.mxu0 0.0
    %6224 = vmatprep.subr.mxu0 0.0
    %6225 = vmatpush1.msra.mxu0 0.0
    %6226 = vmatprep.subr.mxu0 0.0
    %6227 = vmatpush1.msra.mxu0 0.0
    %6228 = vmatprep.subr.mxu0 0.0
    %6229 = vmatpush1.msra.mxu0 0.0
    %6230 = vmatprep.subr.mxu0 0.0
    %6231 = vmatpush1.msra.mxu0 0.0
    %6232 = vmatprep.subr.mxu0 0.0
    %6233 = vmatpush1.msra.mxu0 0.0
    %6234 = vmatprep.subr.mxu0 0.0
    %6235 = vmatpush1.msra.mxu0 0.0
    %6236 = vmatprep.subr.mxu0 0.0
    %6237 = vmatpush1.msra.mxu0 0.0
    %6238 = vmatprep.subr.mxu0 0.0
    %6239 = vmatpush1.msra.mxu0 0.0
    %6240 = vmatprep.subr.mxu0 0.0
    %6241 = vmatpush1.msra.mxu0 0.0
    %6242 = vmatprep.subr.mxu0 0.0
    %6243 = vmatpush1.msra.mxu0 0.0
    %6244 = vmatprep.subr.mxu0 0.0
    %6245 = vmatpush1.msra.mxu0 0.0
    %6246 = vmatprep.subr.mxu0 0.0
    %6247 = vmatpush1.msra.mxu0 0.0
    %6248 = vmatprep.subr.mxu0 0.0
    %6249 = vmatpush1.msra.mxu0 0.0
    %6250 = vmatprep.subr.mxu0 0.0
    %6251 = vmatpush1.msra.mxu0 0.0
    %6252 = vmatprep.subr.mxu0 0.0
    %6253 = vmatpush1.msra.mxu0 0.0
    %6254 = vmatprep.mubr.f32.mxu0 0.0
    %6255 = vmatmul.mubr.f32.gmra.mrb[0].mxu0 %v6182
    %v6256 = vpop.f32.mrb[0].mxu0
    %v6257 = vadd.f32 0.0, %v6256
    %v6258 = vpop.f32.mrb[0].mxu0
    %6259 = vmatprep.mubr.f32.mxu0 0.0
    %6260 = vmatmul.mubr.f32.gmra.mrb[0].mxu0 %v6185
    %v6261 = vpop.f32.mrb[0].mxu0
    %v6262 = vadd.f32 0.0, %v6261
    %v6263 = vpop.f32.mrb[0].mxu0
    %6264 = vdwg.mxu0
    %v6265 = vmul.f32 %v6257, %v6179
    %v6266 = vmul.f32 %v6262, %v6180
    %v6267 = vadd.f32 %v6265, 0.0
    %v6268 = vadd.f32 %v6266, 0.0
    %6269 = vmatprep.subr.mxu0 0.0
    %6270 = vmatpush1.xpose.msra.mxu0 %v5687
    %6271 = vmatprep.subr.mxu0 0.0
    %6272 = vmatpush1.xpose.msra.mxu0 %v5693
    %6273 = vmatprep.subr.mxu0 0.0
    %6274 = vmatpush1.xpose.msra.mxu0 0.0
    %6275 = vmatprep.subr.mxu0 0.0
    %6276 = vmatpush1.xpose.msra.mxu0 0.0
    %6277 = vmatprep.subr.mxu0 0.0
    %6278 = vmatpush1.xpose.msra.mxu0 0.0
    %6279 = vmatprep.subr.mxu0 0.0
    %6280 = vmatpush1.xpose.msra.mxu0 0.0
    %6281 = vmatprep.subr.mxu0 0.0
    %6282 = vmatpush1.xpose.msra.mxu0 0.0
    %6283 = vmatprep.subr.mxu0 0.0
    %6284 = vmatpush1.xpose.msra.mxu0 0.0
    %6285 = vmatprep.subr.mxu0 0.0
    %6286 = vmatpush1.xpose.msra.mxu0 0.0
    %6287 = vmatprep.subr.mxu0 0.0
    %6288 = vmatpush1.xpose.msra.mxu0 0.0
    %6289 = vmatprep.subr.mxu0 0.0
    %6290 = vmatpush1.xpose.msra.mxu0 0.0
    %6291 = vmatprep.subr.mxu0 0.0
    %6292 = vmatpush1.xpose.msra.mxu0 0.0
    %6293 = vmatprep.subr.mxu0 0.0
    %6294 = vmatpush1.xpose.msra.mxu0 0.0
    %6295 = vmatprep.subr.mxu0 0.0
    %6296 = vmatpush1.xpose.msra.mxu0 0.0
    %6297 = vmatprep.subr.mxu0 0.0
    %6298 = vmatpush1.xpose.msra.mxu0 0.0
    %6299 = vmatprep.subr.mxu0 0.0
    %6300 = vmatpush1.xpose.msra.mxu0 0.0
    %6301 = vmatprep.subr.mxu0 0.0
    %6302 = vmatpush1.xpose.msra.mxu0 0.0
    %6303 = vmatprep.subr.mxu0 0.0
    %6304 = vmatpush1.xpose.msra.mxu0 0.0
    %6305 = vmatprep.subr.mxu0 0.0
    %6306 = vmatpush1.xpose.msra.mxu0 0.0
    %6307 = vmatprep.subr.mxu0 0.0
    %6308 = vmatpush1.xpose.msra.mxu0 0.0
    %6309 = vmatprep.subr.mxu0 0.0
    %6310 = vmatpush1.xpose.msra.mxu0 0.0
    %6311 = vmatprep.subr.mxu0 0.0
    %6312 = vmatpush1.xpose.msra.mxu0 0.0
    %6313 = vmatprep.subr.mxu0 0.0
    %6314 = vmatpush1.xpose.msra.mxu0 0.0
    %6315 = vmatprep.subr.mxu0 0.0
    %6316 = vmatpush1.xpose.msra.mxu0 0.0
    %6317 = vmatprep.subr.mxu0 0.0
    %6318 = vmatpush1.xpose.msra.mxu0 0.0
    %6319 = vmatprep.subr.mxu0 0.0
    %6320 = vmatpush1.xpose.msra.mxu0 0.0
    %6321 = vmatprep.subr.mxu0 0.0
    %6322 = vmatpush1.xpose.msra.mxu0 0.0
    %6323 = vmatprep.subr.mxu0 0.0
    %6324 = vmatpush1.xpose.msra.mxu0 0.0
    %6325 = vmatprep.subr.mxu0 0.0
    %6326 = vmatpush1.xpose.msra.mxu0 0.0
    %6327 = vmatprep.subr.mxu0 0.0
    %6328 = vmatpush1.xpose.msra.mxu0 0.0
    %6329 = vmatprep.subr.mxu0 0.0
    %6330 = vmatpush1.xpose.msra.mxu0 0.0
    %6331 = vmatprep.subr.mxu0 0.0
    %6332 = vmatpush1.xpose.msra.mxu0 0.0
    %6333 = vmatprep.mubr.f32.mxu0 0.0
    %6334 = vmatmul.mubr.f32.gmra.mrb[0].mxu0 %v5610
    %v6335 = vpop.f32.mrb[0].mxu0
    %v6336 = vadd.f32 0.0, %v6335
    %v6337 = vpop.f32.mrb[0].mxu0
    %6338 = vmatprep.mubr.f32.mxu0 0.0
    %6339 = vmatmul.mubr.f32.gmra.mrb[0].mxu0 %v5616
    %v6340 = vpop.f32.mrb[0].mxu0
    %v6341 = vadd.f32 0.0, %v6340
    %v6342 = vpop.f32.mrb[0].mxu0
    %6343 = vdwg.mxu0
    %v6344 = vmul.f32 %v6336, 0.17677669
    %v6345 = vmul.f32 %v6341, 0.17677669
    %v6346 = vsel %vm4511, %v6344, -1e+30
    %v6347 = vsel %vm4512, %v6345, -1e+30
    %v6348 = vsel %vm4515, %v6346, -inf
    %6349 = vmax.xlane.f32.xlu0 %v6348
    %v6350 = vpop.xlane.xlu0 %6349
    %v6351 = vsel %vm4519, %v6347, -inf
    %6352 = vmax.xlane.f32.xlu0 %v6351
    %v6353 = vpop.xlane.xlu0 %6352
    %v6354 = vsub.f32 %v6346, %v6350
    %v6355 = vsub.f32 %v6347, %v6353
    %v6356 = vmul.f32 %v6354, 1.442695
    %v6357 = vpow.pop %v6356
    %v6358 = vmul.f32 %v6355, 1.442695
    %v6359 = vpow.pop %v6358
    %v6360 = vmul.f32 %v6357, %v763
    %v6361 = vmul.f32 %v6359, %v764
    %v6362 = vsel %vm4515, %v6360, 0.0
    %6363 = vadd.xlane.f32.xlu0 %v6362
    %v6364 = vpop.xlane.xlu0 %6363
    %v6365 = vsel %vm4519, %v6361, 0.0
    %6366 = vadd.xlane.f32.xlu0 %v6365
    %v6367 = vpop.xlane.xlu0 %6366
    %v6368 = vmax.f32 %v6364, 1e-20
    %v6369 = vmax.f32 %v6367, 1e-20
    %v6370 = vrcp.pop %v6368
    %v6371 = vrcp.pop %v6369
    %v6373 = vsel %vm4515, %v6360, 0
    %v6376 = vsel %vm4515, %v6361, 0
    %v6379 = vsel %vm4547, %v5770, 0
    %6381 = vmatprep.subr.mxu0 0.0
    %6382 = vmatpush1.msra.mxu0 %v5764
    %6383 = vmatprep.subr.mxu0 0.0
    %6384 = vmatpush1.msra.mxu0 %v6379
    %6385 = vmatprep.subr.mxu0 0.0
    %6386 = vmatpush1.msra.mxu0 0.0
    %6387 = vmatprep.subr.mxu0 0.0
    %6388 = vmatpush1.msra.mxu0 0.0
    %6389 = vmatprep.subr.mxu0 0.0
    %6390 = vmatpush1.msra.mxu0 0.0
    %6391 = vmatprep.subr.mxu0 0.0
    %6392 = vmatpush1.msra.mxu0 0.0
    %6393 = vmatprep.subr.mxu0 0.0
    %6394 = vmatpush1.msra.mxu0 0.0
    %6395 = vmatprep.subr.mxu0 0.0
    %6396 = vmatpush1.msra.mxu0 0.0
    %6397 = vmatprep.subr.mxu0 0.0
    %6398 = vmatpush1.msra.mxu0 0.0
    %6399 = vmatprep.subr.mxu0 0.0
    %6400 = vmatpush1.msra.mxu0 0.0
    %6401 = vmatprep.subr.mxu0 0.0
    %6402 = vmatpush1.msra.mxu0 0.0
    %6403 = vmatprep.subr.mxu0 0.0
    %6404 = vmatpush1.msra.mxu0 0.0
    %6405 = vmatprep.subr.mxu0 0.0
    %6406 = vmatpush1.msra.mxu0 0.0
    %6407 = vmatprep.subr.mxu0 0.0
    %6408 = vmatpush1.msra.mxu0 0.0
    %6409 = vmatprep.subr.mxu0 0.0
    %6410 = vmatpush1.msra.mxu0 0.0
    %6411 = vmatprep.subr.mxu0 0.0
    %6412 = vmatpush1.msra.mxu0 0.0
    %6413 = vmatprep.subr.mxu0 0.0
    %6414 = vmatpush1.msra.mxu0 0.0
    %6415 = vmatprep.subr.mxu0 0.0
    %6416 = vmatpush1.msra.mxu0 0.0
    %6417 = vmatprep.subr.mxu0 0.0
    %6418 = vmatpush1.msra.mxu0 0.0
    %6419 = vmatprep.subr.mxu0 0.0
    %6420 = vmatpush1.msra.mxu0 0.0
    %6421 = vmatprep.subr.mxu0 0.0
    %6422 = vmatpush1.msra.mxu0 0.0
    %6423 = vmatprep.subr.mxu0 0.0
    %6424 = vmatpush1.msra.mxu0 0.0
    %6425 = vmatprep.subr.mxu0 0.0
    %6426 = vmatpush1.msra.mxu0 0.0
    %6427 = vmatprep.subr.mxu0 0.0
    %6428 = vmatpush1.msra.mxu0 0.0
    %6429 = vmatprep.subr.mxu0 0.0
    %6430 = vmatpush1.msra.mxu0 0.0
    %6431 = vmatprep.subr.mxu0 0.0
    %6432 = vmatpush1.msra.mxu0 0.0
    %6433 = vmatprep.subr.mxu0 0.0
    %6434 = vmatpush1.msra.mxu0 0.0
    %6435 = vmatprep.subr.mxu0 0.0
    %6436 = vmatpush1.msra.mxu0 0.0
    %6437 = vmatprep.subr.mxu0 0.0
    %6438 = vmatpush1.msra.mxu0 0.0
    %6439 = vmatprep.subr.mxu0 0.0
    %6440 = vmatpush1.msra.mxu0 0.0
    %6441 = vmatprep.subr.mxu0 0.0
    %6442 = vmatpush1.msra.mxu0 0.0
    %6443 = vmatprep.subr.mxu0 0.0
    %6444 = vmatpush1.msra.mxu0 0.0
    %6445 = vmatprep.mubr.f32.mxu0 0.0
    %6446 = vmatmul.mubr.f32.gmra.mrb[0].mxu0 %v6373
    %v6447 = vpop.f32.mrb[0].mxu0
    %v6448 = vadd.f32 0.0, %v6447
    %v6449 = vpop.f32.mrb[0].mxu0
    %6450 = vmatprep.mubr.f32.mxu0 0.0
    %6451 = vmatmul.mubr.f32.gmra.mrb[0].mxu0 %v6376
    %v6452 = vpop.f32.mrb[0].mxu0
    %v6453 = vadd.f32 0.0, %v6452
    %v6454 = vpop.f32.mrb[0].mxu0
    %6455 = vdwg.mxu0
    %v6456 = vmul.f32 %v6448, %v6370
    %v6457 = vmul.f32 %v6453, %v6371
    %v6458 = vadd.f32 %v6267, %v6456
    %v6459 = vadd.f32 %v6268, %v6457
    %v6460 = vmul.f32 %v6458, 0.5
    %v6461 = vmul.f32 %v6459, 0.5
    %6462 = vmatprep.subr.mxu0 0.0
    %6463 = vmatpush1.xpose.msra.mxu0 %v5916
    %6464 = vmatprep.subr.mxu0 0.0
    %6465 = vmatpush1.xpose.msra.mxu0 %v5922
    %6466 = vmatprep.subr.mxu0 0.0
    %6467 = vmatpush1.xpose.msra.mxu0 0.0
    %6468 = vmatprep.subr.mxu0 0.0
    %6469 = vmatpush1.xpose.msra.mxu0 0.0
    %6470 = vmatprep.subr.mxu0 0.0
    %6471 = vmatpush1.xpose.msra.mxu0 0.0
    %6472 = vmatprep.subr.mxu0 0.0
    %6473 = vmatpush1.xpose.msra.mxu0 0.0
    %6474 = vmatprep.subr.mxu0 0.0
    %6475 = vmatpush1.xpose.msra.mxu0 0.0
    %6476 = vmatprep.subr.mxu0 0.0
    %6477 = vmatpush1.xpose.msra.mxu0 0.0
    %6478 = vmatprep.subr.mxu0 0.0
    %6479 = vmatpush1.xpose.msra.mxu0 0.0
    %6480 = vmatprep.subr.mxu0 0.0
    %6481 = vmatpush1.xpose.msra.mxu0 0.0
    %6482 = vmatprep.subr.mxu0 0.0
    %6483 = vmatpush1.xpose.msra.mxu0 0.0
    %6484 = vmatprep.subr.mxu0 0.0
    %6485 = vmatpush1.xpose.msra.mxu0 0.0
    %6486 = vmatprep.subr.mxu0 0.0
    %6487 = vmatpush1.xpose.msra.mxu0 0.0
    %6488 = vmatprep.subr.mxu0 0.0
    %6489 = vmatpush1.xpose.msra.mxu0 0.0
    %6490 = vmatprep.subr.mxu0 0.0
    %6491 = vmatpush1.xpose.msra.mxu0 0.0
    %6492 = vmatprep.subr.mxu0 0.0
    %6493 = vmatpush1.xpose.msra.mxu0 0.0
    %6494 = vmatprep.subr.mxu0 0.0
    %6495 = vmatpush1.xpose.msra.mxu0 0.0
    %6496 = vmatprep.subr.mxu0 0.0
    %6497 = vmatpush1.xpose.msra.mxu0 0.0
    %6498 = vmatprep.subr.mxu0 0.0
    %6499 = vmatpush1.xpose.msra.mxu0 0.0
    %6500 = vmatprep.subr.mxu0 0.0
    %6501 = vmatpush1.xpose.msra.mxu0 0.0
    %6502 = vmatprep.subr.mxu0 0.0
    %6503 = vmatpush1.xpose.msra.mxu0 0.0
    %6504 = vmatprep.subr.mxu0 0.0
    %6505 = vmatpush1.xpose.msra.mxu0 0.0
    %6506 = vmatprep.subr.mxu0 0.0
    %6507 = vmatpush1.xpose.msra.mxu0 0.0
    %6508 = vmatprep.subr.mxu0 0.0
    %6509 = vmatpush1.xpose.msra.mxu0 0.0
    %6510 = vmatprep.subr.mxu0 0.0
    %6511 = vmatpush1.xpose.msra.mxu0 0.0
    %6512 = vmatprep.subr.mxu0 0.0
    %6513 = vmatpush1.xpose.msra.mxu0 0.0
    %6514 = vmatprep.subr.mxu0 0.0
    %6515 = vmatpush1.xpose.msra.mxu0 0.0
    %6516 = vmatprep.subr.mxu0 0.0
    %6517 = vmatpush1.xpose.msra.mxu0 0.0
    %6518 = vmatprep.subr.mxu0 0.0
    %6519 = vmatpush1.xpose.msra.mxu0 0.0
    %6520 = vmatprep.subr.mxu0 0.0
    %6521 = vmatpush1.xpose.msra.mxu0 0.0
    %6522 = vmatprep.subr.mxu0 0.0
    %6523 = vmatpush1.xpose.msra.mxu0 0.0
    %6524 = vmatprep.subr.mxu0 0.0
    %6525 = vmatpush1.xpose.msra.mxu0 0.0
    %6526 = vmatprep.mubr.f32.mxu0 0.0
    %6527 = vmatmul.mubr.f32.gmra.mrb[0].mxu0 %v5839
    %v6528 = vpop.f32.mrb[0].mxu0
    %v6529 = vadd.f32 0.0, %v6528
    %v6530 = vpop.f32.mrb[0].mxu0
    %6531 = vmatprep.mubr.f32.mxu0 0.0
    %6532 = vmatmul.mubr.f32.gmra.mrb[0].mxu0 %v5845
    %v6533 = vpop.f32.mrb[0].mxu0
    %v6534 = vadd.f32 0.0, %v6533
    %v6535 = vpop.f32.mrb[0].mxu0
    %6536 = vdwg.mxu0
    %v6537 = vmul.f32 %v6529, 0.17677669
    %v6538 = vmul.f32 %v6534, 0.17677669
    %v6539 = vsel %vm4900, %v6537, -1e+30
    %v6540 = vsel %vm4901, %v6538, -1e+30
    %v6541 = vsel %vm4515, %v6539, -inf
    %6542 = vmax.xlane.f32.xlu0 %v6541
    %v6543 = vpop.xlane.xlu0 %6542
    %v6544 = vsel %vm4519, %v6540, -inf
    %6545 = vmax.xlane.f32.xlu0 %v6544
    %v6546 = vpop.xlane.xlu0 %6545
    %v6547 = vsub.f32 %v6539, %v6543
    %v6548 = vsub.f32 %v6540, %v6546
    %v6549 = vmul.f32 %v6547, 1.442695
    %v6550 = vpow.pop %v6549
    %v6551 = vmul.f32 %v6548, 1.442695
    %v6552 = vpow.pop %v6551
    %v6553 = vmul.f32 %v6550, %v765
    %v6554 = vmul.f32 %v6552, %v766
    %v6555 = vsel %vm4515, %v6553, 0.0
    %6556 = vadd.xlane.f32.xlu0 %v6555
    %v6557 = vpop.xlane.xlu0 %6556
    %v6558 = vsel %vm4519, %v6554, 0.0
    %6559 = vadd.xlane.f32.xlu0 %v6558
    %v6560 = vpop.xlane.xlu0 %6559
    %v6561 = vmax.f32 %v6557, 1e-20
    %v6562 = vmax.f32 %v6560, 1e-20
    %v6563 = vrcp.pop %v6561
    %v6564 = vrcp.pop %v6562
    %v6566 = vsel %vm4515, %v6553, 0
    %v6569 = vsel %vm4515, %v6554, 0
    %v6572 = vsel %vm4547, %v5999, 0
    %6574 = vmatprep.subr.mxu0 0.0
    %6575 = vmatpush1.msra.mxu0 %v5993
    %6576 = vmatprep.subr.mxu0 0.0
    %6577 = vmatpush1.msra.mxu0 %v6572
    %6578 = vmatprep.subr.mxu0 0.0
    %6579 = vmatpush1.msra.mxu0 0.0
    %6580 = vmatprep.subr.mxu0 0.0
    %6581 = vmatpush1.msra.mxu0 0.0
    %6582 = vmatprep.subr.mxu0 0.0
    %6583 = vmatpush1.msra.mxu0 0.0
    %6584 = vmatprep.subr.mxu0 0.0
    %6585 = vmatpush1.msra.mxu0 0.0
    %6586 = vmatprep.subr.mxu0 0.0
    %6587 = vmatpush1.msra.mxu0 0.0
    %6588 = vmatprep.subr.mxu0 0.0
    %6589 = vmatpush1.msra.mxu0 0.0
    %6590 = vmatprep.subr.mxu0 0.0
    %6591 = vmatpush1.msra.mxu0 0.0
    %6592 = vmatprep.subr.mxu0 0.0
    %6593 = vmatpush1.msra.mxu0 0.0
    %6594 = vmatprep.subr.mxu0 0.0
    %6595 = vmatpush1.msra.mxu0 0.0
    %6596 = vmatprep.subr.mxu0 0.0
    %6597 = vmatpush1.msra.mxu0 0.0
    %6598 = vmatprep.subr.mxu0 0.0
    %6599 = vmatpush1.msra.mxu0 0.0
    %6600 = vmatprep.subr.mxu0 0.0
    %6601 = vmatpush1.msra.mxu0 0.0
    %6602 = vmatprep.subr.mxu0 0.0
    %6603 = vmatpush1.msra.mxu0 0.0
    %6604 = vmatprep.subr.mxu0 0.0
    %6605 = vmatpush1.msra.mxu0 0.0
    %6606 = vmatprep.subr.mxu0 0.0
    %6607 = vmatpush1.msra.mxu0 0.0
    %6608 = vmatprep.subr.mxu0 0.0
    %6609 = vmatpush1.msra.mxu0 0.0
    %6610 = vmatprep.subr.mxu0 0.0
    %6611 = vmatpush1.msra.mxu0 0.0
    %6612 = vmatprep.subr.mxu0 0.0
    %6613 = vmatpush1.msra.mxu0 0.0
    %6614 = vmatprep.subr.mxu0 0.0
    %6615 = vmatpush1.msra.mxu0 0.0
    %6616 = vmatprep.subr.mxu0 0.0
    %6617 = vmatpush1.msra.mxu0 0.0
    %6618 = vmatprep.subr.mxu0 0.0
    %6619 = vmatpush1.msra.mxu0 0.0
    %6620 = vmatprep.subr.mxu0 0.0
    %6621 = vmatpush1.msra.mxu0 0.0
    %6622 = vmatprep.subr.mxu0 0.0
    %6623 = vmatpush1.msra.mxu0 0.0
    %6624 = vmatprep.subr.mxu0 0.0
    %6625 = vmatpush1.msra.mxu0 0.0
    %6626 = vmatprep.subr.mxu0 0.0
    %6627 = vmatpush1.msra.mxu0 0.0
    %6628 = vmatprep.subr.mxu0 0.0
    %6629 = vmatpush1.msra.mxu0 0.0
    %6630 = vmatprep.subr.mxu0 0.0
    %6631 = vmatpush1.msra.mxu0 0.0
    %6632 = vmatprep.subr.mxu0 0.0
    %6633 = vmatpush1.msra.mxu0 0.0
    %6634 = vmatprep.subr.mxu0 0.0
    %6635 = vmatpush1.msra.mxu0 0.0
    %6636 = vmatprep.subr.mxu0 0.0
    %6637 = vmatpush1.msra.mxu0 0.0
    %6638 = vmatprep.mubr.f32.mxu0 0.0
    %6639 = vmatmul.mubr.f32.gmra.mrb[0].mxu0 %v6566
    %v6640 = vpop.f32.mrb[0].mxu0
    %v6641 = vadd.f32 0.0, %v6640
    %v6642 = vpop.f32.mrb[0].mxu0
    %6643 = vmatprep.mubr.f32.mxu0 0.0
    %6644 = vmatmul.mubr.f32.gmra.mrb[0].mxu0 %v6569
    %v6645 = vpop.f32.mrb[0].mxu0
    %v6646 = vadd.f32 0.0, %v6645
    %v6647 = vpop.f32.mrb[0].mxu0
    %6648 = vdwg.mxu0
    %v6649 = vmul.f32 %v6641, %v6563
    %v6650 = vmul.f32 %v6646, %v6564
    %v6651 = vadd.f32 %v6649, 0.0
    %v6652 = vadd.f32 %v6650, 0.0
    %6653 = vmatprep.subr.mxu0 0.0
    %6654 = vmatpush1.xpose.msra.mxu0 %v5918
    %6655 = vmatprep.subr.mxu0 0.0
    %6656 = vmatpush1.xpose.msra.mxu0 %v5924
    %6657 = vmatprep.subr.mxu0 0.0
    %6658 = vmatpush1.xpose.msra.mxu0 0.0
    %6659 = vmatprep.subr.mxu0 0.0
    %6660 = vmatpush1.xpose.msra.mxu0 0.0
    %6661 = vmatprep.subr.mxu0 0.0
    %6662 = vmatpush1.xpose.msra.mxu0 0.0
    %6663 = vmatprep.subr.mxu0 0.0
    %6664 = vmatpush1.xpose.msra.mxu0 0.0
    %6665 = vmatprep.subr.mxu0 0.0
    %6666 = vmatpush1.xpose.msra.mxu0 0.0
    %6667 = vmatprep.subr.mxu0 0.0
    %6668 = vmatpush1.xpose.msra.mxu0 0.0
    %6669 = vmatprep.subr.mxu0 0.0
    %6670 = vmatpush1.xpose.msra.mxu0 0.0
    %6671 = vmatprep.subr.mxu0 0.0
    %6672 = vmatpush1.xpose.msra.mxu0 0.0
    %6673 = vmatprep.subr.mxu0 0.0
    %6674 = vmatpush1.xpose.msra.mxu0 0.0
    %6675 = vmatprep.subr.mxu0 0.0
    %6676 = vmatpush1.xpose.msra.mxu0 0.0
    %6677 = vmatprep.subr.mxu0 0.0
    %6678 = vmatpush1.xpose.msra.mxu0 0.0
    %6679 = vmatprep.subr.mxu0 0.0
    %6680 = vmatpush1.xpose.msra.mxu0 0.0
    %6681 = vmatprep.subr.mxu0 0.0
    %6682 = vmatpush1.xpose.msra.mxu0 0.0
    %6683 = vmatprep.subr.mxu0 0.0
    %6684 = vmatpush1.xpose.msra.mxu0 0.0
    %6685 = vmatprep.subr.mxu0 0.0
    %6686 = vmatpush1.xpose.msra.mxu0 0.0
    %6687 = vmatprep.subr.mxu0 0.0
    %6688 = vmatpush1.xpose.msra.mxu0 0.0
    %6689 = vmatprep.subr.mxu0 0.0
    %6690 = vmatpush1.xpose.msra.mxu0 0.0
    %6691 = vmatprep.subr.mxu0 0.0
    %6692 = vmatpush1.xpose.msra.mxu0 0.0
    %6693 = vmatprep.subr.mxu0 0.0
    %6694 = vmatpush1.xpose.msra.mxu0 0.0
    %6695 = vmatprep.subr.mxu0 0.0
    %6696 = vmatpush1.xpose.msra.mxu0 0.0
    %6697 = vmatprep.subr.mxu0 0.0
    %6698 = vmatpush1.xpose.msra.mxu0 0.0
    %6699 = vmatprep.subr.mxu0 0.0
    %6700 = vmatpush1.xpose.msra.mxu0 0.0
    %6701 = vmatprep.subr.mxu0 0.0
    %6702 = vmatpush1.xpose.msra.mxu0 0.0
    %6703 = vmatprep.subr.mxu0 0.0
    %6704 = vmatpush1.xpose.msra.mxu0 0.0
    %6705 = vmatprep.subr.mxu0 0.0
    %6706 = vmatpush1.xpose.msra.mxu0 0.0
    %6707 = vmatprep.subr.mxu0 0.0
    %6708 = vmatpush1.xpose.msra.mxu0 0.0
    %6709 = vmatprep.subr.mxu0 0.0
    %6710 = vmatpush1.xpose.msra.mxu0 0.0
    %6711 = vmatprep.subr.mxu0 0.0
    %6712 = vmatpush1.xpose.msra.mxu0 0.0
    %6713 = vmatprep.subr.mxu0 0.0
    %6714 = vmatpush1.xpose.msra.mxu0 0.0
    %6715 = vmatprep.subr.mxu0 0.0
    %6716 = vmatpush1.xpose.msra.mxu0 0.0
    %6717 = vmatprep.mubr.f32.mxu0 0.0
    %6718 = vmatmul.mubr.f32.gmra.mrb[0].mxu0 %v5841
    %v6719 = vpop.f32.mrb[0].mxu0
    %v6720 = vadd.f32 0.0, %v6719
    %v6721 = vpop.f32.mrb[0].mxu0
    %6722 = vmatprep.mubr.f32.mxu0 0.0
    %6723 = vmatmul.mubr.f32.gmra.mrb[0].mxu0 %v5847
    %v6724 = vpop.f32.mrb[0].mxu0
    %v6725 = vadd.f32 0.0, %v6724
    %v6726 = vpop.f32.mrb[0].mxu0
    %6727 = vdwg.mxu0
    %v6728 = vmul.f32 %v6720, 0.17677669
    %v6729 = vmul.f32 %v6725, 0.17677669
    %v6730 = vsel %vm4900, %v6728, -1e+30
    %v6731 = vsel %vm4901, %v6729, -1e+30
    %v6732 = vsel %vm4515, %v6730, -inf
    %6733 = vmax.xlane.f32.xlu0 %v6732
    %v6734 = vpop.xlane.xlu0 %6733
    %v6735 = vsel %vm4519, %v6731, -inf
    %6736 = vmax.xlane.f32.xlu0 %v6735
    %v6737 = vpop.xlane.xlu0 %6736
    %v6738 = vsub.f32 %v6730, %v6734
    %v6739 = vsub.f32 %v6731, %v6737
    %v6740 = vmul.f32 %v6738, 1.442695
    %v6741 = vpow.pop %v6740
    %v6742 = vmul.f32 %v6739, 1.442695
    %v6743 = vpow.pop %v6742
    %v6744 = vmul.f32 %v6741, %v765
    %v6745 = vmul.f32 %v6743, %v766
    %v6746 = vsel %vm4515, %v6744, 0.0
    %6747 = vadd.xlane.f32.xlu0 %v6746
    %v6748 = vpop.xlane.xlu0 %6747
    %v6749 = vsel %vm4519, %v6745, 0.0
    %6750 = vadd.xlane.f32.xlu0 %v6749
    %v6751 = vpop.xlane.xlu0 %6750
    %v6752 = vmax.f32 %v6748, 1e-20
    %v6753 = vmax.f32 %v6751, 1e-20
    %v6754 = vrcp.pop %v6752
    %v6755 = vrcp.pop %v6753
    %v6757 = vsel %vm4515, %v6744, 0
    %v6760 = vsel %vm4515, %v6745, 0
    %v6763 = vsel %vm4547, %v6001, 0
    %6765 = vmatprep.subr.mxu0 0.0
    %6766 = vmatpush1.msra.mxu0 %v5995
    %6767 = vmatprep.subr.mxu0 0.0
    %6768 = vmatpush1.msra.mxu0 %v6763
    %6769 = vmatprep.subr.mxu0 0.0
    %6770 = vmatpush1.msra.mxu0 0.0
    %6771 = vmatprep.subr.mxu0 0.0
    %6772 = vmatpush1.msra.mxu0 0.0
    %6773 = vmatprep.subr.mxu0 0.0
    %6774 = vmatpush1.msra.mxu0 0.0
    %6775 = vmatprep.subr.mxu0 0.0
    %6776 = vmatpush1.msra.mxu0 0.0
    %6777 = vmatprep.subr.mxu0 0.0
    %6778 = vmatpush1.msra.mxu0 0.0
    %6779 = vmatprep.subr.mxu0 0.0
    %6780 = vmatpush1.msra.mxu0 0.0
    %6781 = vmatprep.subr.mxu0 0.0
    %6782 = vmatpush1.msra.mxu0 0.0
    %6783 = vmatprep.subr.mxu0 0.0
    %6784 = vmatpush1.msra.mxu0 0.0
    %6785 = vmatprep.subr.mxu0 0.0
    %6786 = vmatpush1.msra.mxu0 0.0
    %6787 = vmatprep.subr.mxu0 0.0
    %6788 = vmatpush1.msra.mxu0 0.0
    %6789 = vmatprep.subr.mxu0 0.0
    %6790 = vmatpush1.msra.mxu0 0.0
    %6791 = vmatprep.subr.mxu0 0.0
    %6792 = vmatpush1.msra.mxu0 0.0
    %6793 = vmatprep.subr.mxu0 0.0
    %6794 = vmatpush1.msra.mxu0 0.0
    %6795 = vmatprep.subr.mxu0 0.0
    %6796 = vmatpush1.msra.mxu0 0.0
    %6797 = vmatprep.subr.mxu0 0.0
    %6798 = vmatpush1.msra.mxu0 0.0
    %6799 = vmatprep.subr.mxu0 0.0
    %6800 = vmatpush1.msra.mxu0 0.0
    %6801 = vmatprep.subr.mxu0 0.0
    %6802 = vmatpush1.msra.mxu0 0.0
    %6803 = vmatprep.subr.mxu0 0.0
    %6804 = vmatpush1.msra.mxu0 0.0
    %6805 = vmatprep.subr.mxu0 0.0
    %6806 = vmatpush1.msra.mxu0 0.0
    %6807 = vmatprep.subr.mxu0 0.0
    %6808 = vmatpush1.msra.mxu0 0.0
    %6809 = vmatprep.subr.mxu0 0.0
    %6810 = vmatpush1.msra.mxu0 0.0
    %6811 = vmatprep.subr.mxu0 0.0
    %6812 = vmatpush1.msra.mxu0 0.0
    %6813 = vmatprep.subr.mxu0 0.0
    %6814 = vmatpush1.msra.mxu0 0.0
    %6815 = vmatprep.subr.mxu0 0.0
    %6816 = vmatpush1.msra.mxu0 0.0
    %6817 = vmatprep.subr.mxu0 0.0
    %6818 = vmatpush1.msra.mxu0 0.0
    %6819 = vmatprep.subr.mxu0 0.0
    %6820 = vmatpush1.msra.mxu0 0.0
    %6821 = vmatprep.subr.mxu0 0.0
    %6822 = vmatpush1.msra.mxu0 0.0
    %6823 = vmatprep.subr.mxu0 0.0
    %6824 = vmatpush1.msra.mxu0 0.0
    %6825 = vmatprep.subr.mxu0 0.0
    %6826 = vmatpush1.msra.mxu0 0.0
    %6827 = vmatprep.subr.mxu0 0.0
    %6828 = vmatpush1.msra.mxu0 0.0
    %6829 = vmatprep.mubr.f32.mxu0 0.0
    %6830 = vmatmul.mubr.f32.gmra.mrb[0].mxu0 %v6757
    %v6831 = vpop.f32.mrb[0].mxu0
    %v6832 = vadd.f32 0.0, %v6831
    %v6833 = vpop.f32.mrb[0].mxu0
    %6834 = vmatprep.mubr.f32.mxu0 0.0
    %6835 = vmatmul.mubr.f32.gmra.mrb[0].mxu0 %v6760
    %v6836 = vpop.f32.mrb[0].mxu0
    %v6837 = vadd.f32 0.0, %v6836
    %v6838 = vpop.f32.mrb[0].mxu0
    %6839 = vdwg.mxu0
    %v6840 = vmul.f32 %v6832, %v6754
    %v6841 = vmul.f32 %v6837, %v6755
    %v6842 = vadd.f32 %v6651, %v6840
    %v6843 = vadd.f32 %v6652, %v6841
    %v6844 = vmul.f32 %v6842, 0.5
    %v6845 = vmul.f32 %v6843, 0.5
    %v6846 = vmul.f32 %v6844, 0.5
    %v6847 = vmul.f32 %v6845, 0.5
    %v6848 = vmul.f32 %v6460, 0.5
    %v6849 = vmul.f32 %v6461, 0.5
    %v6850 = vadd.f32 %v6846, %v6848
    %v6851 = vadd.f32 %v6847, %v6849
    %v6852 = vadd.f32 %v6850, %v6070
    %v6853 = vadd.f32 %v6851, %v6075
    %v6854 = vsel %vm4547, %v6853, 0.0
    %v6855 = vadd.f32 %v6852, %v6854
    %v6856 = vrot.slane %v6855, 4
    %v6857 = vadd.f32 %v6855, %v6856
    %v6858 = vrot.slane %v6857, 2
    %v6859 = vadd.f32 %v6857, %v6858
    %v6860 = vrot.slane %v6859, 1
    %v6861 = vadd.f32 %v6859, %v6860
    %v6862 = vmul.f32 %v6861, %v5225
    %v6863 = vsub.f32 %v6852, %v6862
    %v6864 = vsub.f32 %v6853, %v6862
    %v6865 = vmul.f32 %v6863, %v6863
    %v6866 = vmul.f32 %v6864, %v6864
    %v6867 = vsel %vm4547, %v6866, 0.0
    %v6868 = vadd.f32 %v6865, %v6867
    %v6869 = vrot.slane %v6868, 4
    %v6870 = vadd.f32 %v6868, %v6869
    %v6871 = vrot.slane %v6870, 2
    %v6872 = vadd.f32 %v6870, %v6871
    %v6873 = vrot.slane %v6872, 1
    %v6874 = vadd.f32 %v6872, %v6873
    %v6875 = vmul.f32 %v6874, %v5225
    %v6876 = vadd.f32 %v6875, 1e-05
    %v6877 = vrsqrt.pop %v6876
    %v6878 = vmul.f32 %v6863, %v6877
    %v6879 = vmul.f32 %v6864, %v6877
    %v6880 = vld [vmem:[#allocation27] sm:$0x1]
    %v6882 = vlaneseq
    %v6883 = vshrl.u32 %v6882, 7
    %v6884 = vsub.s32 0, %v6883
    %v6885 = vrot.slane %v6880, %v6884
    %v6887 = vmul.f32 %v6878, %v6885
    %v6888 = vmul.f32 %v6879, %v6885
    %v6889 = vld [vmem:[#allocation28] sm:$0x1]
    %v6891 = vlaneseq
    %v6892 = vshrl.u32 %v6891, 7
    %v6893 = vsub.s32 0, %v6892
    %v6894 = vrot.slane %v6889, %v6893
    %v6896 = vadd.f32 %v6887, %v6894
    %v6897 = vadd.f32 %v6888, %v6894
    %v6898 = vmax.f32 %v6896, 0.0
    %v6899 = vmax.f32 %v6897, 0.0
    %v6900 = vld [vmem:[%s37] sm:$0xff]
    %v6901 = vld [vmem:[%s37 + $0x8] sm:$0xff]
    %v6902 = vld [vmem:[%s37 + $0x10] sm:$0xff]
    %v6904 = vsel %vm4515, %v6900, 0
    %v6907 = vsel %vm4515, %v6901, 0
    %v6910 = vsel %vm4515, %v6902, 0
    %v6913 = vsel %vm4547, %v6899, 0
    %6915 = vmatprep.subr.mxu0 0.0
    %6916 = vmatpush1.msra.mxu0 %v6898
    %6917 = vmatprep.subr.mxu0 0.0
    %6918 = vmatpush1.msra.mxu0 %v6913
    %6919 = vmatprep.subr.mxu0 0.0
    %6920 = vmatpush1.msra.mxu0 0.0
    %6921 = vmatprep.subr.mxu0 0.0
    %6922 = vmatpush1.msra.mxu0 0.0
    %6923 = vmatprep.subr.mxu0 0.0
    %6924 = vmatpush1.msra.mxu0 0.0
    %6925 = vmatprep.subr.mxu0 0.0
    %6926 = vmatpush1.msra.mxu0 0.0
    %6927 = vmatprep.subr.mxu0 0.0
    %6928 = vmatpush1.msra.mxu0 0.0
    %6929 = vmatprep.subr.mxu0 0.0
    %6930 = vmatpush1.msra.mxu0 0.0
    %6931 = vmatprep.subr.mxu0 0.0
    %6932 = vmatpush1.msra.mxu0 0.0
    %6933 = vmatprep.subr.mxu0 0.0
    %6934 = vmatpush1.msra.mxu0 0.0
    %6935 = vmatprep.subr.mxu0 0.0
    %6936 = vmatpush1.msra.mxu0 0.0
    %6937 = vmatprep.subr.mxu0 0.0
    %6938 = vmatpush1.msra.mxu0 0.0
    %6939 = vmatprep.subr.mxu0 0.0
    %6940 = vmatpush1.msra.mxu0 0.0
    %6941 = vmatprep.subr.mxu0 0.0
    %6942 = vmatpush1.msra.mxu0 0.0
    %6943 = vmatprep.subr.mxu0 0.0
    %6944 = vmatpush1.msra.mxu0 0.0
    %6945 = vmatprep.subr.mxu0 0.0
    %6946 = vmatpush1.msra.mxu0 0.0
    %6947 = vmatprep.subr.mxu0 0.0
    %6948 = vmatpush1.msra.mxu0 0.0
    %6949 = vmatprep.subr.mxu0 0.0
    %6950 = vmatpush1.msra.mxu0 0.0
    %6951 = vmatprep.subr.mxu0 0.0
    %6952 = vmatpush1.msra.mxu0 0.0
    %6953 = vmatprep.subr.mxu0 0.0
    %6954 = vmatpush1.msra.mxu0 0.0
    %6955 = vmatprep.subr.mxu0 0.0
    %6956 = vmatpush1.msra.mxu0 0.0
    %6957 = vmatprep.subr.mxu0 0.0
    %6958 = vmatpush1.msra.mxu0 0.0
    %6959 = vmatprep.subr.mxu0 0.0
    %6960 = vmatpush1.msra.mxu0 0.0
    %6961 = vmatprep.subr.mxu0 0.0
    %6962 = vmatpush1.msra.mxu0 0.0
    %6963 = vmatprep.subr.mxu0 0.0
    %6964 = vmatpush1.msra.mxu0 0.0
    %6965 = vmatprep.subr.mxu0 0.0
    %6966 = vmatpush1.msra.mxu0 0.0
    %6967 = vmatprep.subr.mxu0 0.0
    %6968 = vmatpush1.msra.mxu0 0.0
    %6969 = vmatprep.subr.mxu0 0.0
    %6970 = vmatpush1.msra.mxu0 0.0
    %6971 = vmatprep.subr.mxu0 0.0
    %6972 = vmatpush1.msra.mxu0 0.0
    %6973 = vmatprep.subr.mxu0 0.0
    %6974 = vmatpush1.msra.mxu0 0.0
    %6975 = vmatprep.subr.mxu0 0.0
    %6976 = vmatpush1.msra.mxu0 0.0
    %6977 = vmatprep.subr.mxu0 0.0
    %6978 = vmatpush1.msra.mxu0 0.0
    %6979 = vmatprep.mubr.f32.mxu0 0.0
    %6980 = vmatmul.mubr.f32.gmra.mrb[0].mxu0 %v6904
    %v6981 = vpop.f32.mrb[0].mxu0
    %v6982 = vadd.f32 0.0, %v6981
    %v6983 = vpop.f32.mrb[0].mxu0
    %6984 = vmatprep.mubr.f32.mxu0 0.0
    %6985 = vmatmul.mubr.f32.gmra.mrb[0].mxu0 %v6907
    %v6986 = vpop.f32.mrb[0].mxu0
    %v6987 = vadd.f32 0.0, %v6986
    %v6988 = vpop.f32.mrb[0].mxu0
    %6989 = vmatprep.mubr.f32.mxu0 0.0
    %6990 = vmatmul.mubr.f32.gmra.mrb[0].mxu0 %v6910
    %v6991 = vpop.f32.mrb[0].mxu0
    %v6992 = vadd.f32 0.0, %v6991
    %v6993 = vpop.f32.mrb[0].mxu0
    %6994 = vdwg.mxu0
    %v6995 = vld [vmem:[#allocation30] sm:$0xff]
    %v6996 = vld [vmem:[#allocation30 + $0x8] sm:$0xff]
    %v6997 = vld [vmem:[#allocation30 + $0x10] sm:$0xff]
    %v6998 = vld [vmem:[#allocation30 + $0x18] sm:$0xff]
    %v6999 = vld [vmem:[#allocation30 + $0x20] sm:$0xff]
    %v7000 = vld [vmem:[#allocation30 + $0x28] sm:$0xff]
    %v7001 = vld [vmem:[#allocation30 + $0x30] sm:$0xff]
    %v7002 = vld [vmem:[#allocation30 + $0x38] sm:$0xff]
    %v7003 = vld [vmem:[#allocation30 + $0x40] sm:$0xff]
    %v7004 = vld [vmem:[#allocation30 + $0x48] sm:$0xff]
    %v7005 = vld [vmem:[#allocation30 + $0x50] sm:$0xff]
    %v7006 = vld [vmem:[#allocation30 + $0x58] sm:$0xff]
    %v7007 = vld [vmem:[#allocation30 + $0x60] sm:$0xff]
    %v7008 = vld [vmem:[#allocation30 + $0x68] sm:$0xff]
    %v7009 = vld [vmem:[#allocation30 + $0x70] sm:$0xff]
    %v7010 = vld [vmem:[#allocation30 + $0x78] sm:$0xff]
    %v7011 = vld [vmem:[#allocation30 + $0x80] sm:$0xff]
    %v7012 = vld [vmem:[#allocation30 + $0x88] sm:$0xff]
    %v7013 = vld [vmem:[#allocation30 + $0x90] sm:$0xff]
    %v7014 = vld [vmem:[#allocation30 + $0x98] sm:$0xff]
    %v7015 = vld [vmem:[#allocation30 + $0xa0] sm:$0xff]
    %v7016 = vld [vmem:[#allocation30 + $0xa8] sm:$0xff]
    %v7017 = vld [vmem:[#allocation30 + $0xb0] sm:$0xff]
    %v7018 = vld [vmem:[#allocation30 + $0xb8] sm:$0xff]
    %v7019 = vld [vmem:[#allocation30 + $0xc0] sm:$0xff]
    %v7020 = vld [vmem:[#allocation30 + $0xc8] sm:$0xff]
    %v7021 = vld [vmem:[#allocation30 + $0xd0] sm:$0xff]
    %v7022 = vld [vmem:[#allocation30 + $0xd8] sm:$0xff]
    %v7023 = vld [vmem:[#allocation30 + $0xe0] sm:$0xff]
    %v7024 = vld [vmem:[#allocation30 + $0xe8] sm:$0xff]
    %v7025 = vld [vmem:[#allocation30 + $0xf0] sm:$0xff]
    %v7026 = vld [vmem:[#allocation30 + $0xf8] sm:$0xff]
    %v7027 = vld [vmem:[#allocation30 + $0x100] sm:$0xff]
    %v7028 = vld [vmem:[#allocation30 + $0x108] sm:$0xff]
    %v7029 = vld [vmem:[#allocation30 + $0x110] sm:$0xff]
    %v7030 = vld [vmem:[#allocation30 + $0x118] sm:$0xff]
    %v7031 = vld [vmem:[#allocation30 + $0x120] sm:$0xff]
    %v7032 = vld [vmem:[#allocation30 + $0x128] sm:$0xff]
    %v7033 = vld [vmem:[#allocation30 + $0x130] sm:$0xff]
    %v7034 = vld [vmem:[#allocation30 + $0x138] sm:$0xff]
    %v7035 = vld [vmem:[#allocation30 + $0x140] sm:$0xff]
    %v7036 = vld [vmem:[#allocation30 + $0x148] sm:$0xff]
    %v7037 = vld [vmem:[#allocation30 + $0x150] sm:$0xff]
    %v7038 = vld [vmem:[#allocation30 + $0x158] sm:$0xff]
    %v7039 = vld [vmem:[#allocation30 + $0x160] sm:$0xff]
    %v7040 = vld [vmem:[#allocation30 + $0x168] sm:$0xff]
    %v7041 = vld [vmem:[#allocation30 + $0x170] sm:$0xff]
    %v7042 = vld [vmem:[#allocation30 + $0x178] sm:$0xff]
    %v7043 = vld [vmem:[#allocation33] sm:$0x7]
    %v7045 = vlaneseq
    %v7046 = vshrl.u32 %v7045, 7
    %v7047 = vsub.s32 0, %v7046
    %v7048 = vrot.slane %v7043, %v7047
    %v7049 = vlaneseq
    %v7050 = vshrl.u32 %v7049, 7
    %v7051 = vsub.s32 1, %v7050
    %v7052 = vrot.slane %v7043, %v7051
    %v7053 = vlaneseq
    %v7054 = vshrl.u32 %v7053, 7
    %v7055 = vsub.s32 2, %v7054
    %v7056 = vrot.slane %v7043, %v7055
    %7060 = vmatprep.subr.mxu0 %v6996
    %7061 = vmatpush1.msra.mxu0 %v6995
    %7062 = vmatprep.subr.mxu0 %v6999
    %7063 = vmatpush1.msra.mxu0 %v6998
    %7064 = vmatprep.subr.mxu0 %v7002
    %7065 = vmatpush1.msra.mxu0 %v7001
    %7066 = vmatprep.subr.mxu0 %v7005
    %7067 = vmatpush1.msra.mxu0 %v7004
    %7068 = vmatprep.subr.mxu0 %v7008
    %7069 = vmatpush1.msra.mxu0 %v7007
    %7070 = vmatprep.subr.mxu0 %v7011
    %7071 = vmatpush1.msra.mxu0 %v7010
    %7072 = vmatprep.subr.mxu0 %v7014
    %7073 = vmatpush1.msra.mxu0 %v7013
    %7074 = vmatprep.subr.mxu0 %v7017
    %7075 = vmatpush1.msra.mxu0 %v7016
    %7076 = vmatprep.subr.mxu0 %v7020
    %7077 = vmatpush1.msra.mxu0 %v7019
    %7078 = vmatprep.subr.mxu0 %v7023
    %7079 = vmatpush1.msra.mxu0 %v7022
    %7080 = vmatprep.subr.mxu0 %v7026
    %7081 = vmatpush1.msra.mxu0 %v7025
    %7082 = vmatprep.subr.mxu0 %v7029
    %7083 = vmatpush1.msra.mxu0 %v7028
    %7084 = vmatprep.subr.mxu0 %v7032
    %7085 = vmatpush1.msra.mxu0 %v7031
    %7086 = vmatprep.subr.mxu0 %v7035
    %7087 = vmatpush1.msra.mxu0 %v7034
    %7088 = vmatprep.subr.mxu0 %v7038
    %7089 = vmatpush1.msra.mxu0 %v7037
    %7090 = vmatprep.subr.mxu0 %v7041
    %7091 = vmatpush1.msra.mxu0 %v7040
    %7092 = vmatprep.subr.mxu0 0.0
    %7093 = vmatpush1.msra.mxu0 0.0
    %7094 = vmatprep.subr.mxu0 0.0
    %7095 = vmatpush1.msra.mxu0 0.0
    %7096 = vmatprep.subr.mxu0 0.0
    %7097 = vmatpush1.msra.mxu0 0.0
    %7098 = vmatprep.subr.mxu0 0.0
    %7099 = vmatpush1.msra.mxu0 0.0
    %7100 = vmatprep.subr.mxu0 0.0
    %7101 = vmatpush1.msra.mxu0 0.0
    %7102 = vmatprep.subr.mxu0 0.0
    %7103 = vmatpush1.msra.mxu0 0.0
    %7104 = vmatprep.subr.mxu0 0.0
    %7105 = vmatpush1.msra.mxu0 0.0
    %7106 = vmatprep.subr.mxu0 0.0
    %7107 = vmatpush1.msra.mxu0 0.0
    %7108 = vmatprep.subr.mxu0 0.0
    %7109 = vmatpush1.msra.mxu0 0.0
    %7110 = vmatprep.subr.mxu0 0.0
    %7111 = vmatpush1.msra.mxu0 0.0
    %7112 = vmatprep.subr.mxu0 0.0
    %7113 = vmatpush1.msra.mxu0 0.0
    %7114 = vmatprep.subr.mxu0 0.0
    %7115 = vmatpush1.msra.mxu0 0.0
    %7116 = vmatprep.subr.mxu0 0.0
    %7117 = vmatpush1.msra.mxu0 0.0
    %7118 = vmatprep.subr.mxu0 0.0
    %7119 = vmatpush1.msra.mxu0 0.0
    %7120 = vmatprep.subr.mxu0 0.0
    %7121 = vmatpush1.msra.mxu0 0.0
    %7122 = vmatprep.subr.mxu0 0.0
    %7123 = vmatpush1.msra.mxu0 0.0
    %7124 = vmatprep.mubr.f32.mxu0 0.0
    %7125 = vmatmul.mubr.f32.gmra.mrb[0].mxu0 %v6982
    %v7126 = vpop.f32.mrb[0].mxu0
    %v7127 = vadd.f32 %v7048, %v7126
    %v7128 = vpop.f32.mrb[0].mxu0
    %v7129 = vadd.f32 %v7052, %v7128
    %7130 = vmatprep.mubr.f32.mxu0 0.0
    %7131 = vmatmul.mubr.f32.gmra.mrb[0].mxu0 %v6987
    %v7132 = vpop.f32.mrb[0].mxu0
    %v7133 = vadd.f32 %v7048, %v7132
    %v7134 = vpop.f32.mrb[0].mxu0
    %v7135 = vadd.f32 %v7052, %v7134
    %7136 = vmatprep.mubr.f32.mxu0 0.0
    %7137 = vmatmul.mubr.f32.gmra.mrb[0].mxu0 %v6992
    %v7138 = vpop.f32.mrb[0].mxu0
    %v7139 = vadd.f32 %v7048, %v7138
    %v7140 = vpop.f32.mrb[0].mxu0
    %v7141 = vadd.f32 %v7052, %v7140
    %7142 = vdwg.mxu0
    %7143 = vmatprep.subr.mxu0 0.0
    %7144 = vmatpush1.msra.mxu0 %v6997
    %7145 = vmatprep.subr.mxu0 0.0
    %7146 = vmatpush1.msra.mxu0 %v7000
    %7147 = vmatprep.subr.mxu0 0.0
    %7148 = vmatpush1.msra.mxu0 %v7003
    %7149 = vmatprep.subr.mxu0 0.0
    %7150 = vmatpush1.msra.mxu0 %v7006
    %7151 = vmatprep.subr.mxu0 0.0
    %7152 = vmatpush1.msra.mxu0 %v7009
    %7153 = vmatprep.subr.mxu0 0.0
    %7154 = vmatpush1.msra.mxu0 %v7012
    %7155 = vmatprep.subr.mxu0 0.0
    %7156 = vmatpush1.msra.mxu0 %v7015
    %7157 = vmatprep.subr.mxu0 0.0
    %7158 = vmatpush1.msra.mxu0 %v7018
    %7159 = vmatprep.subr.mxu0 0.0
    %7160 = vmatpush1.msra.mxu0 %v7021
    %7161 = vmatprep.subr.mxu0 0.0
    %7162 = vmatpush1.msra.mxu0 %v7024
    %7163 = vmatprep.subr.mxu0 0.0
    %7164 = vmatpush1.msra.mxu0 %v7027
    %7165 = vmatprep.subr.mxu0 0.0
    %7166 = vmatpush1.msra.mxu0 %v7030
    %7167 = vmatprep.subr.mxu0 0.0
    %7168 = vmatpush1.msra.mxu0 %v7033
    %7169 = vmatprep.subr.mxu0 0.0
    %7170 = vmatpush1.msra.mxu0 %v7036
    %7171 = vmatprep.subr.mxu0 0.0
    %7172 = vmatpush1.msra.mxu0 %v7039
    %7173 = vmatprep.subr.mxu0 0.0
    %7174 = vmatpush1.msra.mxu0 %v7042
    %7175 = vmatprep.subr.mxu0 0.0
    %7176 = vmatpush1.msra.mxu0 0.0
    %7177 = vmatprep.subr.mxu0 0.0
    %7178 = vmatpush1.msra.mxu0 0.0
    %7179 = vmatprep.subr.mxu0 0.0
    %7180 = vmatpush1.msra.mxu0 0.0
    %7181 = vmatprep.subr.mxu0 0.0
    %7182 = vmatpush1.msra.mxu0 0.0
    %7183 = vmatprep.subr.mxu0 0.0
    %7184 = vmatpush1.msra.mxu0 0.0
    %7185 = vmatprep.subr.mxu0 0.0
    %7186 = vmatpush1.msra.mxu0 0.0
    %7187 = vmatprep.subr.mxu0 0.0
    %7188 = vmatpush1.msra.mxu0 0.0
    %7189 = vmatprep.subr.mxu0 0.0
    %7190 = vmatpush1.msra.mxu0 0.0
    %7191 = vmatprep.subr.mxu0 0.0
    %7192 = vmatpush1.msra.mxu0 0.0
    %7193 = vmatprep.subr.mxu0 0.0
    %7194 = vmatpush1.msra.mxu0 0.0
    %7195 = vmatprep.subr.mxu0 0.0
    %7196 = vmatpush1.msra.mxu0 0.0
    %7197 = vmatprep.subr.mxu0 0.0
    %7198 = vmatpush1.msra.mxu0 0.0
    %7199 = vmatprep.subr.mxu0 0.0
    %7200 = vmatpush1.msra.mxu0 0.0
    %7201 = vmatprep.subr.mxu0 0.0
    %7202 = vmatpush1.msra.mxu0 0.0
    %7203 = vmatprep.subr.mxu0 0.0
    %7204 = vmatpush1.msra.mxu0 0.0
    %7205 = vmatprep.subr.mxu0 0.0
    %7206 = vmatpush1.msra.mxu0 0.0
    %7207 = vmatprep.mubr.f32.mxu0 0.0
    %7208 = vmatmul.mubr.f32.gmra.mrb[0].mxu0 %v6982
    %v7209 = vpop.f32.mrb[0].mxu0
    %v7210 = vadd.f32 %v7056, %v7209
    %v7211 = vpop.f32.mrb[0].mxu0
    %7212 = vmatprep.mubr.f32.mxu0 0.0
    %7213 = vmatmul.mubr.f32.gmra.mrb[0].mxu0 %v6987
    %v7214 = vpop.f32.mrb[0].mxu0
    %v7215 = vadd.f32 %v7056, %v7214
    %v7216 = vpop.f32.mrb[0].mxu0
    %7217 = vmatprep.mubr.f32.mxu0 0.0
    %7218 = vmatmul.mubr.f32.gmra.mrb[0].mxu0 %v6992
    %v7219 = vpop.f32.mrb[0].mxu0
    %v7220 = vadd.f32 %v7056, %v7219
    %v7221 = vpop.f32.mrb[0].mxu0
    %7222 = vdwg.mxu0
    %v7223 = vld [vmem:[#allocation31] sm:$0xff]
    %v7224 = vld [vmem:[#allocation31 + $0x8] sm:$0xff]
    %v7225 = vld [vmem:[#allocation31 + $0x10] sm:$0xff]
    %v7226 = vld [vmem:[#allocation31 + $0x18] sm:$0xff]
    %v7227 = vld [vmem:[#allocation31 + $0x20] sm:$0xff]
    %v7228 = vld [vmem:[#allocation31 + $0x28] sm:$0xff]
    %v7229 = vld [vmem:[#allocation31 + $0x30] sm:$0xff]
    %v7230 = vld [vmem:[#allocation31 + $0x38] sm:$0xff]
    %v7231 = vld [vmem:[#allocation31 + $0x40] sm:$0xff]
    %v7232 = vld [vmem:[#allocation31 + $0x48] sm:$0xff]
    %v7233 = vld [vmem:[#allocation31 + $0x50] sm:$0xff]
    %v7234 = vld [vmem:[#allocation31 + $0x58] sm:$0xff]
    %v7235 = vld [vmem:[#allocation31 + $0x60] sm:$0xff]
    %v7236 = vld [vmem:[#allocation31 + $0x68] sm:$0xff]
    %v7237 = vld [vmem:[#allocation31 + $0x70] sm:$0xff]
    %v7238 = vld [vmem:[#allocation31 + $0x78] sm:$0xff]
    %v7239 = vld [vmem:[#allocation31 + $0x80] sm:$0xff]
    %v7240 = vld [vmem:[#allocation31 + $0x88] sm:$0xff]
    %v7241 = vld [vmem:[#allocation31 + $0x90] sm:$0xff]
    %v7242 = vld [vmem:[#allocation31 + $0x98] sm:$0xff]
    %v7243 = vld [vmem:[#allocation31 + $0xa0] sm:$0xff]
    %v7244 = vld [vmem:[#allocation31 + $0xa8] sm:$0xff]
    %v7245 = vld [vmem:[#allocation31 + $0xb0] sm:$0xff]
    %v7246 = vld [vmem:[#allocation31 + $0xb8] sm:$0xff]
    %v7247 = vld [vmem:[#allocation31 + $0xc0] sm:$0xff]
    %v7248 = vld [vmem:[#allocation31 + $0xc8] sm:$0xff]
    %v7249 = vld [vmem:[#allocation31 + $0xd0] sm:$0xff]
    %v7250 = vld [vmem:[#allocation31 + $0xd8] sm:$0xff]
    %v7251 = vld [vmem:[#allocation31 + $0xe0] sm:$0xff]
    %v7252 = vld [vmem:[#allocation31 + $0xe8] sm:$0xff]
    %v7253 = vld [vmem:[#allocation31 + $0xf0] sm:$0xff]
    %v7254 = vld [vmem:[#allocation31 + $0xf8] sm:$0xff]
    %v7255 = vld [vmem:[#allocation31 + $0x100] sm:$0xff]
    %v7256 = vld [vmem:[#allocation31 + $0x108] sm:$0xff]
    %v7257 = vld [vmem:[#allocation31 + $0x110] sm:$0xff]
    %v7258 = vld [vmem:[#allocation31 + $0x118] sm:$0xff]
    %v7259 = vld [vmem:[#allocation31 + $0x120] sm:$0xff]
    %v7260 = vld [vmem:[#allocation31 + $0x128] sm:$0xff]
    %v7261 = vld [vmem:[#allocation31 + $0x130] sm:$0xff]
    %v7262 = vld [vmem:[#allocation31 + $0x138] sm:$0xff]
    %v7263 = vld [vmem:[#allocation31 + $0x140] sm:$0xff]
    %v7264 = vld [vmem:[#allocation31 + $0x148] sm:$0xff]
    %v7265 = vld [vmem:[#allocation31 + $0x150] sm:$0xff]
    %v7266 = vld [vmem:[#allocation31 + $0x158] sm:$0xff]
    %v7267 = vld [vmem:[#allocation31 + $0x160] sm:$0xff]
    %v7268 = vld [vmem:[#allocation31 + $0x168] sm:$0xff]
    %v7269 = vld [vmem:[#allocation31 + $0x170] sm:$0xff]
    %v7270 = vld [vmem:[#allocation31 + $0x178] sm:$0xff]
    %v7271 = vld [vmem:[#allocation34] sm:$0x7]
    %v7273 = vlaneseq
    %v7274 = vshrl.u32 %v7273, 7
    %v7275 = vsub.s32 0, %v7274
    %v7276 = vrot.slane %v7271, %v7275
    %v7277 = vlaneseq
    %v7278 = vshrl.u32 %v7277, 7
    %v7279 = vsub.s32 1, %v7278
    %v7280 = vrot.slane %v7271, %v7279
    %v7281 = vlaneseq
    %v7282 = vshrl.u32 %v7281, 7
    %v7283 = vsub.s32 2, %v7282
    %v7284 = vrot.slane %v7271, %v7283
    %7288 = vmatprep.subr.mxu0 %v7224
    %7289 = vmatpush1.msra.mxu0 %v7223
    %7290 = vmatprep.subr.mxu0 %v7227
    %7291 = vmatpush1.msra.mxu0 %v7226
    %7292 = vmatprep.subr.mxu0 %v7230
    %7293 = vmatpush1.msra.mxu0 %v7229
    %7294 = vmatprep.subr.mxu0 %v7233
    %7295 = vmatpush1.msra.mxu0 %v7232
    %7296 = vmatprep.subr.mxu0 %v7236
    %7297 = vmatpush1.msra.mxu0 %v7235
    %7298 = vmatprep.subr.mxu0 %v7239
    %7299 = vmatpush1.msra.mxu0 %v7238
    %7300 = vmatprep.subr.mxu0 %v7242
    %7301 = vmatpush1.msra.mxu0 %v7241
    %7302 = vmatprep.subr.mxu0 %v7245
    %7303 = vmatpush1.msra.mxu0 %v7244
    %7304 = vmatprep.subr.mxu0 %v7248
    %7305 = vmatpush1.msra.mxu0 %v7247
    %7306 = vmatprep.subr.mxu0 %v7251
    %7307 = vmatpush1.msra.mxu0 %v7250
    %7308 = vmatprep.subr.mxu0 %v7254
    %7309 = vmatpush1.msra.mxu0 %v7253
    %7310 = vmatprep.subr.mxu0 %v7257
    %7311 = vmatpush1.msra.mxu0 %v7256
    %7312 = vmatprep.subr.mxu0 %v7260
    %7313 = vmatpush1.msra.mxu0 %v7259
    %7314 = vmatprep.subr.mxu0 %v7263
    %7315 = vmatpush1.msra.mxu0 %v7262
    %7316 = vmatprep.subr.mxu0 %v7266
    %7317 = vmatpush1.msra.mxu0 %v7265
    %7318 = vmatprep.subr.mxu0 %v7269
    %7319 = vmatpush1.msra.mxu0 %v7268
    %7320 = vmatprep.subr.mxu0 0.0
    %7321 = vmatpush1.msra.mxu0 0.0
    %7322 = vmatprep.subr.mxu0 0.0
    %7323 = vmatpush1.msra.mxu0 0.0
    %7324 = vmatprep.subr.mxu0 0.0
    %7325 = vmatpush1.msra.mxu0 0.0
    %7326 = vmatprep.subr.mxu0 0.0
    %7327 = vmatpush1.msra.mxu0 0.0
    %7328 = vmatprep.subr.mxu0 0.0
    %7329 = vmatpush1.msra.mxu0 0.0
    %7330 = vmatprep.subr.mxu0 0.0
    %7331 = vmatpush1.msra.mxu0 0.0
    %7332 = vmatprep.subr.mxu0 0.0
    %7333 = vmatpush1.msra.mxu0 0.0
    %7334 = vmatprep.subr.mxu0 0.0
    %7335 = vmatpush1.msra.mxu0 0.0
    %7336 = vmatprep.subr.mxu0 0.0
    %7337 = vmatpush1.msra.mxu0 0.0
    %7338 = vmatprep.subr.mxu0 0.0
    %7339 = vmatpush1.msra.mxu0 0.0
    %7340 = vmatprep.subr.mxu0 0.0
    %7341 = vmatpush1.msra.mxu0 0.0
    %7342 = vmatprep.subr.mxu0 0.0
    %7343 = vmatpush1.msra.mxu0 0.0
    %7344 = vmatprep.subr.mxu0 0.0
    %7345 = vmatpush1.msra.mxu0 0.0
    %7346 = vmatprep.subr.mxu0 0.0
    %7347 = vmatpush1.msra.mxu0 0.0
    %7348 = vmatprep.subr.mxu0 0.0
    %7349 = vmatpush1.msra.mxu0 0.0
    %7350 = vmatprep.subr.mxu0 0.0
    %7351 = vmatpush1.msra.mxu0 0.0
    %7352 = vmatprep.mubr.f32.mxu0 0.0
    %7353 = vmatmul.mubr.f32.gmra.mrb[0].mxu0 0.0
    %v7354 = vpop.f32.mrb[0].mxu0
    %v7355 = vadd.f32 %v7276, %v7354
    %v7356 = vpop.f32.mrb[0].mxu0
    %v7357 = vadd.f32 %v7280, %v7356
    %7358 = vdwg.mxu0
    %7359 = vmatprep.subr.mxu0 0.0
    %7360 = vmatpush1.msra.mxu0 %v7225
    %7361 = vmatprep.subr.mxu0 0.0
    %7362 = vmatpush1.msra.mxu0 %v7228
    %7363 = vmatprep.subr.mxu0 0.0
    %7364 = vmatpush1.msra.mxu0 %v7231
    %7365 = vmatprep.subr.mxu0 0.0
    %7366 = vmatpush1.msra.mxu0 %v7234
    %7367 = vmatprep.subr.mxu0 0.0
    %7368 = vmatpush1.msra.mxu0 %v7237
    %7369 = vmatprep.subr.mxu0 0.0
    %7370 = vmatpush1.msra.mxu0 %v7240
    %7371 = vmatprep.subr.mxu0 0.0
    %7372 = vmatpush1.msra.mxu0 %v7243
    %7373 = vmatprep.subr.mxu0 0.0
    %7374 = vmatpush1.msra.mxu0 %v7246
    %7375 = vmatprep.subr.mxu0 0.0
    %7376 = vmatpush1.msra.mxu0 %v7249
    %7377 = vmatprep.subr.mxu0 0.0
    %7378 = vmatpush1.msra.mxu0 %v7252
    %7379 = vmatprep.subr.mxu0 0.0
    %7380 = vmatpush1.msra.mxu0 %v7255
    %7381 = vmatprep.subr.mxu0 0.0
    %7382 = vmatpush1.msra.mxu0 %v7258
    %7383 = vmatprep.subr.mxu0 0.0
    %7384 = vmatpush1.msra.mxu0 %v7261
    %7385 = vmatprep.subr.mxu0 0.0
    %7386 = vmatpush1.msra.mxu0 %v7264
    %7387 = vmatprep.subr.mxu0 0.0
    %7388 = vmatpush1.msra.mxu0 %v7267
    %7389 = vmatprep.subr.mxu0 0.0
    %7390 = vmatpush1.msra.mxu0 %v7270
    %7391 = vmatprep.subr.mxu0 0.0
    %7392 = vmatpush1.msra.mxu0 0.0
    %7393 = vmatprep.subr.mxu0 0.0
    %7394 = vmatpush1.msra.mxu0 0.0
    %7395 = vmatprep.subr.mxu0 0.0
    %7396 = vmatpush1.msra.mxu0 0.0
    %7397 = vmatprep.subr.mxu0 0.0
    %7398 = vmatpush1.msra.mxu0 0.0
    %7399 = vmatprep.subr.mxu0 0.0
    %7400 = vmatpush1.msra.mxu0 0.0
    %7401 = vmatprep.subr.mxu0 0.0
    %7402 = vmatpush1.msra.mxu0 0.0
    %7403 = vmatprep.subr.mxu0 0.0
    %7404 = vmatpush1.msra.mxu0 0.0
    %7405 = vmatprep.subr.mxu0 0.0
    %7406 = vmatpush1.msra.mxu0 0.0
    %7407 = vmatprep.subr.mxu0 0.0
    %7408 = vmatpush1.msra.mxu0 0.0
    %7409 = vmatprep.subr.mxu0 0.0
    %7410 = vmatpush1.msra.mxu0 0.0
    %7411 = vmatprep.subr.mxu0 0.0
    %7412 = vmatpush1.msra.mxu0 0.0
    %7413 = vmatprep.subr.mxu0 0.0
    %7414 = vmatpush1.msra.mxu0 0.0
    %7415 = vmatprep.subr.mxu0 0.0
    %7416 = vmatpush1.msra.mxu0 0.0
    %7417 = vmatprep.subr.mxu0 0.0
    %7418 = vmatpush1.msra.mxu0 0.0
    %7419 = vmatprep.subr.mxu0 0.0
    %7420 = vmatpush1.msra.mxu0 0.0
    %7421 = vmatprep.subr.mxu0 0.0
    %7422 = vmatpush1.msra.mxu0 0.0
    %7423 = vmatprep.mubr.f32.mxu0 0.0
    %7424 = vmatmul.mubr.f32.gmra.mrb[0].mxu0 0.0
    %v7425 = vpop.f32.mrb[0].mxu0
    %v7426 = vadd.f32 %v7284, %v7425
    %v7427 = vpop.f32.mrb[0].mxu0
    %7428 = vdwg.mxu0
    %v7429 = vadd.f32 %v7127, %v7355
    %v7430 = vsub.f32 0.0, %v7429
    %v7431 = vmul.f32 %v7430, 1.442695
    %v7432 = vpow.pop %v7431
    %v7433 = vadd.f32 %v7432, 1.0
    %v7434 = vrcp.pop %v7433
    %v7435 = vmul.f32 1.0, %v7434
    %v7436 = vadd.f32 %v7129, %v7357
    %v7437 = vsub.f32 0.0, %v7436
    %v7438 = vmul.f32 %v7437, 1.442695
    %v7439 = vpow.pop %v7438
    %v7440 = vadd.f32 %v7439, 1.0
    %v7441 = vrcp.pop %v7440
    %v7442 = vmul.f32 1.0, %v7441
    %v7443 = vmul.f32 %v7435, %v7426
    %v7444 = vadd.f32 %v7210, %v7443
    %v7445 = vtanh.pop %v7444
    %v7446 = vsub.f32 1.0, %v7442
    %v7447 = vmul.f32 %v7446, %v7445
    %v7448 = vmul.f32 %v7442, 0.0
    %v7449 = vadd.f32 %v7447, %v7448
    %7450 = vmatprep.subr.mxu0 %v7224
    %7451 = vmatpush1.msra.mxu0 %v7223
    %7452 = vmatprep.subr.mxu0 %v7227
    %7453 = vmatpush1.msra.mxu0 %v7226
    %7454 = vmatprep.subr.mxu0 %v7230
    %7455 = vmatpush1.msra.mxu0 %v7229
    %7456 = vmatprep.subr.mxu0 %v7233
    %7457 = vmatpush1.msra.mxu0 %v7232
    %7458 = vmatprep.subr.mxu0 %v7236
    %7459 = vmatpush1.msra.mxu0 %v7235
    %7460 = vmatprep.subr.mxu0 %v7239
    %7461 = vmatpush1.msra.mxu0 %v7238
    %7462 = vmatprep.subr.mxu0 %v7242
    %7463 = vmatpush1.msra.mxu0 %v7241
    %7464 = vmatprep.subr.mxu0 %v7245
    %7465 = vmatpush1.msra.mxu0 %v7244
    %7466 = vmatprep.subr.mxu0 %v7248
    %7467 = vmatpush1.msra.mxu0 %v7247
    %7468 = vmatprep.subr.mxu0 %v7251
    %7469 = vmatpush1.msra.mxu0 %v7250
    %7470 = vmatprep.subr.mxu0 %v7254
    %7471 = vmatpush1.msra.mxu0 %v7253
    %7472 = vmatprep.subr.mxu0 %v7257
    %7473 = vmatpush1.msra.mxu0 %v7256
    %7474 = vmatprep.subr.mxu0 %v7260
    %7475 = vmatpush1.msra.mxu0 %v7259
    %7476 = vmatprep.subr.mxu0 %v7263
    %7477 = vmatpush1.msra.mxu0 %v7262
    %7478 = vmatprep.subr.mxu0 %v7266
    %7479 = vmatpush1.msra.mxu0 %v7265
    %7480 = vmatprep.subr.mxu0 %v7269
    %7481 = vmatpush1.msra.mxu0 %v7268
    %7482 = vmatprep.subr.mxu0 0.0
    %7483 = vmatpush1.msra.mxu0 0.0
    %7484 = vmatprep.subr.mxu0 0.0
    %7485 = vmatpush1.msra.mxu0 0.0
    %7486 = vmatprep.subr.mxu0 0.0
    %7487 = vmatpush1.msra.mxu0 0.0
    %7488 = vmatprep.subr.mxu0 0.0
    %7489 = vmatpush1.msra.mxu0 0.0
    %7490 = vmatprep.subr.mxu0 0.0
    %7491 = vmatpush1.msra.mxu0 0.0
    %7492 = vmatprep.subr.mxu0 0.0
    %7493 = vmatpush1.msra.mxu0 0.0
    %7494 = vmatprep.subr.mxu0 0.0
    %7495 = vmatpush1.msra.mxu0 0.0
    %7496 = vmatprep.subr.mxu0 0.0
    %7497 = vmatpush1.msra.mxu0 0.0
    %7498 = vmatprep.subr.mxu0 0.0
    %7499 = vmatpush1.msra.mxu0 0.0
    %7500 = vmatprep.subr.mxu0 0.0
    %7501 = vmatpush1.msra.mxu0 0.0
    %7502 = vmatprep.subr.mxu0 0.0
    %7503 = vmatpush1.msra.mxu0 0.0
    %7504 = vmatprep.subr.mxu0 0.0
    %7505 = vmatpush1.msra.mxu0 0.0
    %7506 = vmatprep.subr.mxu0 0.0
    %7507 = vmatpush1.msra.mxu0 0.0
    %7508 = vmatprep.subr.mxu0 0.0
    %7509 = vmatpush1.msra.mxu0 0.0
    %7510 = vmatprep.subr.mxu0 0.0
    %7511 = vmatpush1.msra.mxu0 0.0
    %7512 = vmatprep.subr.mxu0 0.0
    %7513 = vmatpush1.msra.mxu0 0.0
    %7514 = vmatprep.mubr.f32.mxu0 0.0
    %7515 = vmatmul.mubr.f32.gmra.mrb[0].mxu0 %v7449
    %v7516 = vpop.f32.mrb[0].mxu0
    %v7517 = vadd.f32 %v7276, %v7516
    %v7518 = vpop.f32.mrb[0].mxu0
    %v7519 = vadd.f32 %v7280, %v7518
    %7520 = vdwg.mxu0
    %7521 = vmatprep.subr.mxu0 0.0
    %7522 = vmatpush1.msra.mxu0 %v7225
    %7523 = vmatprep.subr.mxu0 0.0
    %7524 = vmatpush1.msra.mxu0 %v7228
    %7525 = vmatprep.subr.mxu0 0.0
    %7526 = vmatpush1.msra.mxu0 %v7231
    %7527 = vmatprep.subr.mxu0 0.0
    %7528 = vmatpush1.msra.mxu0 %v7234
    %7529 = vmatprep.subr.mxu0 0.0
    %7530 = vmatpush1.msra.mxu0 %v7237
    %7531 = vmatprep.subr.mxu0 0.0
    %7532 = vmatpush1.msra.mxu0 %v7240
    %7533 = vmatprep.subr.mxu0 0.0
    %7534 = vmatpush1.msra.mxu0 %v7243
    %7535 = vmatprep.subr.mxu0 0.0
    %7536 = vmatpush1.msra.mxu0 %v7246
    %7537 = vmatprep.subr.mxu0 0.0
    %7538 = vmatpush1.msra.mxu0 %v7249
    %7539 = vmatprep.subr.mxu0 0.0
    %7540 = vmatpush1.msra.mxu0 %v7252
    %7541 = vmatprep.subr.mxu0 0.0
    %7542 = vmatpush1.msra.mxu0 %v7255
    %7543 = vmatprep.subr.mxu0 0.0
    %7544 = vmatpush1.msra.mxu0 %v7258
    %7545 = vmatprep.subr.mxu0 0.0
    %7546 = vmatpush1.msra.mxu0 %v7261
    %7547 = vmatprep.subr.mxu0 0.0
    %7548 = vmatpush1.msra.mxu0 %v7264
    %7549 = vmatprep.subr.mxu0 0.0
    %7550 = vmatpush1.msra.mxu0 %v7267
    %7551 = vmatprep.subr.mxu0 0.0
    %7552 = vmatpush1.msra.mxu0 %v7270
    %7553 = vmatprep.subr.mxu0 0.0
    %7554 = vmatpush1.msra.mxu0 0.0
    %7555 = vmatprep.subr.mxu0 0.0
    %7556 = vmatpush1.msra.mxu0 0.0
    %7557 = vmatprep.subr.mxu0 0.0
    %7558 = vmatpush1.msra.mxu0 0.0
    %7559 = vmatprep.subr.mxu0 0.0
    %7560 = vmatpush1.msra.mxu0 0.0
    %7561 = vmatprep.subr.mxu0 0.0
    %7562 = vmatpush1.msra.mxu0 0.0
    %7563 = vmatprep.subr.mxu0 0.0
    %7564 = vmatpush1.msra.mxu0 0.0
    %7565 = vmatprep.subr.mxu0 0.0
    %7566 = vmatpush1.msra.mxu0 0.0
    %7567 = vmatprep.subr.mxu0 0.0
    %7568 = vmatpush1.msra.mxu0 0.0
    %7569 = vmatprep.subr.mxu0 0.0
    %7570 = vmatpush1.msra.mxu0 0.0
    %7571 = vmatprep.subr.mxu0 0.0
    %7572 = vmatpush1.msra.mxu0 0.0
    %7573 = vmatprep.subr.mxu0 0.0
    %7574 = vmatpush1.msra.mxu0 0.0
    %7575 = vmatprep.subr.mxu0 0.0
    %7576 = vmatpush1.msra.mxu0 0.0
    %7577 = vmatprep.subr.mxu0 0.0
    %7578 = vmatpush1.msra.mxu0 0.0
    %7579 = vmatprep.subr.mxu0 0.0
    %7580 = vmatpush1.msra.mxu0 0.0
    %7581 = vmatprep.subr.mxu0 0.0
    %7582 = vmatpush1.msra.mxu0 0.0
    %7583 = vmatprep.subr.mxu0 0.0
    %7584 = vmatpush1.msra.mxu0 0.0
    %7585 = vmatprep.mubr.f32.mxu0 0.0
    %7586 = vmatmul.mubr.f32.gmra.mrb[0].mxu0 %v7449
    %v7587 = vpop.f32.mrb[0].mxu0
    %v7588 = vadd.f32 %v7284, %v7587
    %v7589 = vpop.f32.mrb[0].mxu0
    %7590 = vdwg.mxu0
    %v7591 = vadd.f32 %v7133, %v7517
    %v7592 = vsub.f32 0.0, %v7591
    %v7593 = vmul.f32 %v7592, 1.442695
    %v7594 = vpow.pop %v7593
    %v7595 = vadd.f32 %v7594, 1.0
    %v7596 = vrcp.pop %v7595
    %v7597 = vmul.f32 1.0, %v7596
    %v7598 = vadd.f32 %v7135, %v7519
    %v7599 = vsub.f32 0.0, %v7598
    %v7600 = vmul.f32 %v7599, 1.442695
    %v7601 = vpow.pop %v7600
    %v7602 = vadd.f32 %v7601, 1.0
    %v7603 = vrcp.pop %v7602
    %v7604 = vmul.f32 1.0, %v7603
    %v7605 = vmul.f32 %v7597, %v7588
    %v7606 = vadd.f32 %v7215, %v7605
    %v7607 = vtanh.pop %v7606
    %v7608 = vsub.f32 1.0, %v7604
    %v7609 = vmul.f32 %v7608, %v7607
    %v7610 = vmul.f32 %v7604, %v7449
    %v7611 = vadd.f32 %v7609, %v7610
    %7612 = vmatprep.subr.mxu0 %v7224
    %7613 = vmatpush1.msra.mxu0 %v7223
    %7614 = vmatprep.subr.mxu0 %v7227
    %7615 = vmatpush1.msra.mxu0 %v7226
    %7616 = vmatprep.subr.mxu0 %v7230
    %7617 = vmatpush1.msra.mxu0 %v7229
    %7618 = vmatprep.subr.mxu0 %v7233
    %7619 = vmatpush1.msra.mxu0 %v7232
    %7620 = vmatprep.subr.mxu0 %v7236
    %7621 = vmatpush1.msra.mxu0 %v7235
    %7622 = vmatprep.subr.mxu0 %v7239
    %7623 = vmatpush1.msra.mxu0 %v7238
    %7624 = vmatprep.subr.mxu0 %v7242
    %7625 = vmatpush1.msra.mxu0 %v7241
    %7626 = vmatprep.subr.mxu0 %v7245
    %7627 = vmatpush1.msra.mxu0 %v7244
    %7628 = vmatprep.subr.mxu0 %v7248
    %7629 = vmatpush1.msra.mxu0 %v7247
    %7630 = vmatprep.subr.mxu0 %v7251
    %7631 = vmatpush1.msra.mxu0 %v7250
    %7632 = vmatprep.subr.mxu0 %v7254
    %7633 = vmatpush1.msra.mxu0 %v7253
    %7634 = vmatprep.subr.mxu0 %v7257
    %7635 = vmatpush1.msra.mxu0 %v7256
    %7636 = vmatprep.subr.mxu0 %v7260
    %7637 = vmatpush1.msra.mxu0 %v7259
    %7638 = vmatprep.subr.mxu0 %v7263
    %7639 = vmatpush1.msra.mxu0 %v7262
    %7640 = vmatprep.subr.mxu0 %v7266
    %7641 = vmatpush1.msra.mxu0 %v7265
    %7642 = vmatprep.subr.mxu0 %v7269
    %7643 = vmatpush1.msra.mxu0 %v7268
    %7644 = vmatprep.subr.mxu0 0.0
    %7645 = vmatpush1.msra.mxu0 0.0
    %7646 = vmatprep.subr.mxu0 0.0
    %7647 = vmatpush1.msra.mxu0 0.0
    %7648 = vmatprep.subr.mxu0 0.0
    %7649 = vmatpush1.msra.mxu0 0.0
    %7650 = vmatprep.subr.mxu0 0.0
    %7651 = vmatpush1.msra.mxu0 0.0
    %7652 = vmatprep.subr.mxu0 0.0
    %7653 = vmatpush1.msra.mxu0 0.0
    %7654 = vmatprep.subr.mxu0 0.0
    %7655 = vmatpush1.msra.mxu0 0.0
    %7656 = vmatprep.subr.mxu0 0.0
    %7657 = vmatpush1.msra.mxu0 0.0
    %7658 = vmatprep.subr.mxu0 0.0
    %7659 = vmatpush1.msra.mxu0 0.0
    %7660 = vmatprep.subr.mxu0 0.0
    %7661 = vmatpush1.msra.mxu0 0.0
    %7662 = vmatprep.subr.mxu0 0.0
    %7663 = vmatpush1.msra.mxu0 0.0
    %7664 = vmatprep.subr.mxu0 0.0
    %7665 = vmatpush1.msra.mxu0 0.0
    %7666 = vmatprep.subr.mxu0 0.0
    %7667 = vmatpush1.msra.mxu0 0.0
    %7668 = vmatprep.subr.mxu0 0.0
    %7669 = vmatpush1.msra.mxu0 0.0
    %7670 = vmatprep.subr.mxu0 0.0
    %7671 = vmatpush1.msra.mxu0 0.0
    %7672 = vmatprep.subr.mxu0 0.0
    %7673 = vmatpush1.msra.mxu0 0.0
    %7674 = vmatprep.subr.mxu0 0.0
    %7675 = vmatpush1.msra.mxu0 0.0
    %7676 = vmatprep.mubr.f32.mxu0 0.0
    %7677 = vmatmul.mubr.f32.gmra.mrb[0].mxu0 %v7611
    %v7678 = vpop.f32.mrb[0].mxu0
    %v7679 = vadd.f32 %v7276, %v7678
    %v7680 = vpop.f32.mrb[0].mxu0
    %v7681 = vadd.f32 %v7280, %v7680
    %7682 = vdwg.mxu0
    %7683 = vmatprep.subr.mxu0 0.0
    %7684 = vmatpush1.msra.mxu0 %v7225
    %7685 = vmatprep.subr.mxu0 0.0
    %7686 = vmatpush1.msra.mxu0 %v7228
    %7687 = vmatprep.subr.mxu0 0.0
    %7688 = vmatpush1.msra.mxu0 %v7231
    %7689 = vmatprep.subr.mxu0 0.0
    %7690 = vmatpush1.msra.mxu0 %v7234
    %7691 = vmatprep.subr.mxu0 0.0
    %7692 = vmatpush1.msra.mxu0 %v7237
    %7693 = vmatprep.subr.mxu0 0.0
    %7694 = vmatpush1.msra.mxu0 %v7240
    %7695 = vmatprep.subr.mxu0 0.0
    %7696 = vmatpush1.msra.mxu0 %v7243
    %7697 = vmatprep.subr.mxu0 0.0
    %7698 = vmatpush1.msra.mxu0 %v7246
    %7699 = vmatprep.subr.mxu0 0.0
    %7700 = vmatpush1.msra.mxu0 %v7249
    %7701 = vmatprep.subr.mxu0 0.0
    %7702 = vmatpush1.msra.mxu0 %v7252
    %7703 = vmatprep.subr.mxu0 0.0
    %7704 = vmatpush1.msra.mxu0 %v7255
    %7705 = vmatprep.subr.mxu0 0.0
    %7706 = vmatpush1.msra.mxu0 %v7258
    %7707 = vmatprep.subr.mxu0 0.0
    %7708 = vmatpush1.msra.mxu0 %v7261
    %7709 = vmatprep.subr.mxu0 0.0
    %7710 = vmatpush1.msra.mxu0 %v7264
    %7711 = vmatprep.subr.mxu0 0.0
    %7712 = vmatpush1.msra.mxu0 %v7267
    %7713 = vmatprep.subr.mxu0 0.0
    %7714 = vmatpush1.msra.mxu0 %v7270
    %7715 = vmatprep.subr.mxu0 0.0
    %7716 = vmatpush1.msra.mxu0 0.0
    %7717 = vmatprep.subr.mxu0 0.0
    %7718 = vmatpush1.msra.mxu0 0.0
    %7719 = vmatprep.subr.mxu0 0.0
    %7720 = vmatpush1.msra.mxu0 0.0
    %7721 = vmatprep.subr.mxu0 0.0
    %7722 = vmatpush1.msra.mxu0 0.0
    %7723 = vmatprep.subr.mxu0 0.0
    %7724 = vmatpush1.msra.mxu0 0.0
    %7725 = vmatprep.subr.mxu0 0.0
    %7726 = vmatpush1.msra.mxu0 0.0
    %7727 = vmatprep.subr.mxu0 0.0
    %7728 = vmatpush1.msra.mxu0 0.0
    %7729 = vmatprep.subr.mxu0 0.0
    %7730 = vmatpush1.msra.mxu0 0.0
    %7731 = vmatprep.subr.mxu0 0.0
    %7732 = vmatpush1.msra.mxu0 0.0
    %7733 = vmatprep.subr.mxu0 0.0
    %7734 = vmatpush1.msra.mxu0 0.0
    %7735 = vmatprep.subr.mxu0 0.0
    %7736 = vmatpush1.msra.mxu0 0.0
    %7737 = vmatprep.subr.mxu0 0.0
    %7738 = vmatpush1.msra.mxu0 0.0
    %7739 = vmatprep.subr.mxu0 0.0
    %7740 = vmatpush1.msra.mxu0 0.0
    %7741 = vmatprep.subr.mxu0 0.0
    %7742 = vmatpush1.msra.mxu0 0.0
    %7743 = vmatprep.subr.mxu0 0.0
    %7744 = vmatpush1.msra.mxu0 0.0
    %7745 = vmatprep.subr.mxu0 0.0
    %7746 = vmatpush1.msra.mxu0 0.0
    %7747 = vmatprep.mubr.f32.mxu0 0.0
    %7748 = vmatmul.mubr.f32.gmra.mrb[0].mxu0 %v7611
    %v7749 = vpop.f32.mrb[0].mxu0
    %v7750 = vadd.f32 %v7284, %v7749
    %v7751 = vpop.f32.mrb[0].mxu0
    %7752 = vdwg.mxu0
    %v7753 = vadd.f32 %v7139, %v7679
    %v7754 = vsub.f32 0.0, %v7753
    %v7755 = vmul.f32 %v7754, 1.442695
    %v7756 = vpow.pop %v7755
    %v7757 = vadd.f32 %v7756, 1.0
    %v7758 = vrcp.pop %v7757
    %v7759 = vmul.f32 1.0, %v7758
    %v7760 = vadd.f32 %v7141, %v7681
    %v7761 = vsub.f32 0.0, %v7760
    %v7762 = vmul.f32 %v7761, 1.442695
    %v7763 = vpow.pop %v7762
    %v7764 = vadd.f32 %v7763, 1.0
    %v7765 = vrcp.pop %v7764
    %v7766 = vmul.f32 1.0, %v7765
    %v7767 = vmul.f32 %v7759, %v7750
    %v7768 = vadd.f32 %v7220, %v7767
    %v7769 = vtanh.pop %v7768
    %v7770 = vsub.f32 1.0, %v7766
    %v7771 = vmul.f32 %v7770, %v7769
    %v7772 = vmul.f32 %v7766, %v7611
    %v7773 = vadd.f32 %v7771, %v7772
    %v7774 = vld [vmem:[#allocation36] sm:$0xff]
    %v7776 = vsel %vm2694, %v7774, 0
    %7778 = vmatprep.subr.mxu0 0.0
    %7779 = vmatpush1.msra.mxu0 %v7773
    %7780 = vmatprep.subr.mxu0 0.0
    %7781 = vmatpush1.msra.mxu0 0.0
    %7782 = vmatprep.subr.mxu0 0.0
    %7783 = vmatpush1.msra.mxu0 0.0
    %7784 = vmatprep.subr.mxu0 0.0
    %7785 = vmatpush1.msra.mxu0 0.0
    %7786 = vmatprep.subr.mxu0 0.0
    %7787 = vmatpush1.msra.mxu0 0.0
    %7788 = vmatprep.subr.mxu0 0.0
    %7789 = vmatpush1.msra.mxu0 0.0
    %7790 = vmatprep.subr.mxu0 0.0
    %7791 = vmatpush1.msra.mxu0 0.0
    %7792 = vmatprep.subr.mxu0 0.0
    %7793 = vmatpush1.msra.mxu0 0.0
    %7794 = vmatprep.subr.mxu0 0.0
    %7795 = vmatpush1.msra.mxu0 0.0
    %7796 = vmatprep.subr.mxu0 0.0
    %7797 = vmatpush1.msra.mxu0 0.0
    %7798 = vmatprep.subr.mxu0 0.0
    %7799 = vmatpush1.msra.mxu0 0.0
    %7800 = vmatprep.subr.mxu0 0.0
    %7801 = vmatpush1.msra.mxu0 0.0
    %7802 = vmatprep.subr.mxu0 0.0
    %7803 = vmatpush1.msra.mxu0 0.0
    %7804 = vmatprep.subr.mxu0 0.0
    %7805 = vmatpush1.msra.mxu0 0.0
    %7806 = vmatprep.subr.mxu0 0.0
    %7807 = vmatpush1.msra.mxu0 0.0
    %7808 = vmatprep.subr.mxu0 0.0
    %7809 = vmatpush1.msra.mxu0 0.0
    %7810 = vmatprep.subr.mxu0 0.0
    %7811 = vmatpush1.msra.mxu0 0.0
    %7812 = vmatprep.subr.mxu0 0.0
    %7813 = vmatpush1.msra.mxu0 0.0
    %7814 = vmatprep.subr.mxu0 0.0
    %7815 = vmatpush1.msra.mxu0 0.0
    %7816 = vmatprep.subr.mxu0 0.0
    %7817 = vmatpush1.msra.mxu0 0.0
    %7818 = vmatprep.subr.mxu0 0.0
    %7819 = vmatpush1.msra.mxu0 0.0
    %7820 = vmatprep.subr.mxu0 0.0
    %7821 = vmatpush1.msra.mxu0 0.0
    %7822 = vmatprep.subr.mxu0 0.0
    %7823 = vmatpush1.msra.mxu0 0.0
    %7824 = vmatprep.subr.mxu0 0.0
    %7825 = vmatpush1.msra.mxu0 0.0
    %7826 = vmatprep.subr.mxu0 0.0
    %7827 = vmatpush1.msra.mxu0 0.0
    %7828 = vmatprep.subr.mxu0 0.0
    %7829 = vmatpush1.msra.mxu0 0.0
    %7830 = vmatprep.subr.mxu0 0.0
    %7831 = vmatpush1.msra.mxu0 0.0
    %7832 = vmatprep.subr.mxu0 0.0
    %7833 = vmatpush1.msra.mxu0 0.0
    %7834 = vmatprep.subr.mxu0 0.0
    %7835 = vmatpush1.msra.mxu0 0.0
    %7836 = vmatprep.subr.mxu0 0.0
    %7837 = vmatpush1.msra.mxu0 0.0
    %7838 = vmatprep.subr.mxu0 0.0
    %7839 = vmatpush1.msra.mxu0 0.0
    %7840 = vmatprep.subr.mxu0 0.0
    %7841 = vmatpush1.msra.mxu0 0.0
    %7842 = vmatprep.mubr.f32.mxu0 0.0
    %7843 = vmatmul.mubr.f32.gmra.mrb[0].mxu0 %v7776
    %v7844 = vpop.f32.mrb[0].mxu0
    %v7845 = vadd.f32 0.0, %v7844
    %v7846 = vpop.f32.mrb[0].mxu0
    %7847 = vdwg.mxu0
    %v7848 = vld [vmem:[#allocation37] sm:$0xff]
    %v7850 = vsel %vm2694, %v7848, 0
    %7852 = vmatprep.subr.mxu0 0.0
    %7853 = vmatpush1.msra.mxu0 %v7773
    %7854 = vmatprep.subr.mxu0 0.0
    %7855 = vmatpush1.msra.mxu0 0.0
    %7856 = vmatprep.subr.mxu0 0.0
    %7857 = vmatpush1.msra.mxu0 0.0
    %7858 = vmatprep.subr.mxu0 0.0
    %7859 = vmatpush1.msra.mxu0 0.0
    %7860 = vmatprep.subr.mxu0 0.0
    %7861 = vmatpush1.msra.mxu0 0.0
    %7862 = vmatprep.subr.mxu0 0.0
    %7863 = vmatpush1.msra.mxu0 0.0
    %7864 = vmatprep.subr.mxu0 0.0
    %7865 = vmatpush1.msra.mxu0 0.0
    %7866 = vmatprep.subr.mxu0 0.0
    %7867 = vmatpush1.msra.mxu0 0.0
    %7868 = vmatprep.subr.mxu0 0.0
    %7869 = vmatpush1.msra.mxu0 0.0
    %7870 = vmatprep.subr.mxu0 0.0
    %7871 = vmatpush1.msra.mxu0 0.0
    %7872 = vmatprep.subr.mxu0 0.0
    %7873 = vmatpush1.msra.mxu0 0.0
    %7874 = vmatprep.subr.mxu0 0.0
    %7875 = vmatpush1.msra.mxu0 0.0
    %7876 = vmatprep.subr.mxu0 0.0
    %7877 = vmatpush1.msra.mxu0 0.0
    %7878 = vmatprep.subr.mxu0 0.0
    %7879 = vmatpush1.msra.mxu0 0.0
    %7880 = vmatprep.subr.mxu0 0.0
    %7881 = vmatpush1.msra.mxu0 0.0
    %7882 = vmatprep.subr.mxu0 0.0
    %7883 = vmatpush1.msra.mxu0 0.0
    %7884 = vmatprep.subr.mxu0 0.0
    %7885 = vmatpush1.msra.mxu0 0.0
    %7886 = vmatprep.subr.mxu0 0.0
    %7887 = vmatpush1.msra.mxu0 0.0
    %7888 = vmatprep.subr.mxu0 0.0
    %7889 = vmatpush1.msra.mxu0 0.0
    %7890 = vmatprep.subr.mxu0 0.0
    %7891 = vmatpush1.msra.mxu0 0.0
    %7892 = vmatprep.subr.mxu0 0.0
    %7893 = vmatpush1.msra.mxu0 0.0
    %7894 = vmatprep.subr.mxu0 0.0
    %7895 = vmatpush1.msra.mxu0 0.0
    %7896 = vmatprep.subr.mxu0 0.0
    %7897 = vmatpush1.msra.mxu0 0.0
    %7898 = vmatprep.subr.mxu0 0.0
    %7899 = vmatpush1.msra.mxu0 0.0
    %7900 = vmatprep.subr.mxu0 0.0
    %7901 = vmatpush1.msra.mxu0 0.0
    %7902 = vmatprep.subr.mxu0 0.0
    %7903 = vmatpush1.msra.mxu0 0.0
    %7904 = vmatprep.subr.mxu0 0.0
    %7905 = vmatpush1.msra.mxu0 0.0
    %7906 = vmatprep.subr.mxu0 0.0
    %7907 = vmatpush1.msra.mxu0 0.0
    %7908 = vmatprep.subr.mxu0 0.0
    %7909 = vmatpush1.msra.mxu0 0.0
    %7910 = vmatprep.subr.mxu0 0.0
    %7911 = vmatpush1.msra.mxu0 0.0
    %7912 = vmatprep.subr.mxu0 0.0
    %7913 = vmatpush1.msra.mxu0 0.0
    %7914 = vmatprep.subr.mxu0 0.0
    %7915 = vmatpush1.msra.mxu0 0.0
    %7916 = vmatprep.mubr.f32.mxu0 0.0
    %7917 = vmatmul.mubr.f32.gmra.mrb[0].mxu0 %v7850
    %v7918 = vpop.f32.mrb[0].mxu0
    %v7919 = vadd.f32 0.0, %v7918
    %v7920 = vpop.f32.mrb[0].mxu0
    %7921 = vdwg.mxu0
    %v7922 = vld [vmem:[%s43] sm:$0xff]
    %v7923 = vld [vmem:[%s43 + $0x8] sm:$0xff]
    %v7924 = vld [vmem:[%s43 + $0x10] sm:$0xff]
    %v7925 = vld [vmem:[%s43 + $0x18] sm:$0xff]
    %v7926 = vld [vmem:[%s43 + $0x20] sm:$0xff]
    %v7927 = vld [vmem:[%s43 + $0x28] sm:$0xff]
    %v7928 = vld [vmem:[%s43 + $0x30] sm:$0xff]
    %v7929 = vld [vmem:[%s43 + $0x38] sm:$0xff]
    %v7930 = vld [vmem:[%s43 + $0x40] sm:$0xff]
    %v7931 = vld [vmem:[%s43 + $0x48] sm:$0xff]
    %v7932 = vld [vmem:[%s43 + $0x50] sm:$0xff]
    %v7933 = vld [vmem:[%s43 + $0x58] sm:$0xff]
    %v7934 = vld [vmem:[%s43 + $0x60] sm:$0xff]
    %v7935 = vld [vmem:[%s43 + $0x68] sm:$0xff]
    %v7936 = vld [vmem:[%s43 + $0x70] sm:$0xff]
    %v7937 = vld [vmem:[%s43 + $0x78] sm:$0xff]
    %v7938 = vld [vmem:[#allocation39] sm:$0x1]
    %v7940 = vlaneseq
    %v7941 = vshrl.u32 %v7940, 7
    %v7942 = vsub.s32 0, %v7941
    %v7943 = vrot.slane %v7938, %v7942
    %7945 = vmatprep.subr.mxu0 0.0
    %7946 = vmatpush1.msra.mxu0 %v7922
    %7947 = vmatprep.subr.mxu0 0.0
    %7948 = vmatpush1.msra.mxu0 %v7923
    %7949 = vmatprep.subr.mxu0 0.0
    %7950 = vmatpush1.msra.mxu0 %v7924
    %7951 = vmatprep.subr.mxu0 0.0
    %7952 = vmatpush1.msra.mxu0 %v7925
    %7953 = vmatprep.subr.mxu0 0.0
    %7954 = vmatpush1.msra.mxu0 %v7926
    %7955 = vmatprep.subr.mxu0 0.0
    %7956 = vmatpush1.msra.mxu0 %v7927
    %7957 = vmatprep.subr.mxu0 0.0
    %7958 = vmatpush1.msra.mxu0 %v7928
    %7959 = vmatprep.subr.mxu0 0.0
    %7960 = vmatpush1.msra.mxu0 %v7929
    %7961 = vmatprep.subr.mxu0 0.0
    %7962 = vmatpush1.msra.mxu0 %v7930
    %7963 = vmatprep.subr.mxu0 0.0
    %7964 = vmatpush1.msra.mxu0 %v7931
    %7965 = vmatprep.subr.mxu0 0.0
    %7966 = vmatpush1.msra.mxu0 %v7932
    %7967 = vmatprep.subr.mxu0 0.0
    %7968 = vmatpush1.msra.mxu0 %v7933
    %7969 = vmatprep.subr.mxu0 0.0
    %7970 = vmatpush1.msra.mxu0 %v7934
    %7971 = vmatprep.subr.mxu0 0.0
    %7972 = vmatpush1.msra.mxu0 %v7935
    %7973 = vmatprep.subr.mxu0 0.0
    %7974 = vmatpush1.msra.mxu0 %v7936
    %7975 = vmatprep.subr.mxu0 0.0
    %7976 = vmatpush1.msra.mxu0 %v7937
    %7977 = vmatprep.subr.mxu0 0.0
    %7978 = vmatpush1.msra.mxu0 0.0
    %7979 = vmatprep.subr.mxu0 0.0
    %7980 = vmatpush1.msra.mxu0 0.0
    %7981 = vmatprep.subr.mxu0 0.0
    %7982 = vmatpush1.msra.mxu0 0.0
    %7983 = vmatprep.subr.mxu0 0.0
    %7984 = vmatpush1.msra.mxu0 0.0
    %7985 = vmatprep.subr.mxu0 0.0
    %7986 = vmatpush1.msra.mxu0 0.0
    %7987 = vmatprep.subr.mxu0 0.0
    %7988 = vmatpush1.msra.mxu0 0.0
    %7989 = vmatprep.subr.mxu0 0.0
    %7990 = vmatpush1.msra.mxu0 0.0
    %7991 = vmatprep.subr.mxu0 0.0
    %7992 = vmatpush1.msra.mxu0 0.0
    %7993 = vmatprep.subr.mxu0 0.0
    %7994 = vmatpush1.msra.mxu0 0.0
    %7995 = vmatprep.subr.mxu0 0.0
    %7996 = vmatpush1.msra.mxu0 0.0
    %7997 = vmatprep.subr.mxu0 0.0
    %7998 = vmatpush1.msra.mxu0 0.0
    %7999 = vmatprep.subr.mxu0 0.0
    %8000 = vmatpush1.msra.mxu0 0.0
    %8001 = vmatprep.subr.mxu0 0.0
    %8002 = vmatpush1.msra.mxu0 0.0
    %8003 = vmatprep.subr.mxu0 0.0
    %8004 = vmatpush1.msra.mxu0 0.0
    %8005 = vmatprep.subr.mxu0 0.0
    %8006 = vmatpush1.msra.mxu0 0.0
    %8007 = vmatprep.subr.mxu0 0.0
    %8008 = vmatpush1.msra.mxu0 0.0
    %8009 = vmatprep.mubr.f32.mxu0 0.0
    %8010 = vmatmul.mubr.f32.gmra.mrb[0].mxu0 %v7845
    %v8011 = vpop.f32.mrb[0].mxu0
    %v8012 = vadd.f32 %v7943, %v8011
    %v8013 = vpop.f32.mrb[0].mxu0
    %8014 = vdwg.mxu0
    %v8015 = vmax.f32 %v8012, 0.0
    %v8016 = vld [vmem:[%s47] sm:$0xff]
    %v8017 = vld [vmem:[%s47 + $0x8] sm:$0xff]
    %v8018 = vld [vmem:[%s47 + $0x10] sm:$0xff]
    %v8019 = vld [vmem:[%s47 + $0x18] sm:$0xff]
    %v8020 = vld [vmem:[#allocation40] sm:$0x1]
    %v8022 = vlaneseq
    %v8023 = vshrl.u32 %v8022, 7
    %v8024 = vsub.s32 0, %v8023
    %v8025 = vrot.slane %v8020, %v8024
    %vm8027 = vcmask 261120
    %v8029 = vsel %vm8027, %v8015, 0
    %8031 = vmatprep.subr.mxu0 0.0
    %8032 = vmatpush1.msra.mxu0 %v8016
    %8033 = vmatprep.subr.mxu0 0.0
    %8034 = vmatpush1.msra.mxu0 %v8017
    %8035 = vmatprep.subr.mxu0 0.0
    %8036 = vmatpush1.msra.mxu0 %v8018
    %8037 = vmatprep.subr.mxu0 0.0
    %8038 = vmatpush1.msra.mxu0 %v8019
    %8039 = vmatprep.subr.mxu0 0.0
    %8040 = vmatpush1.msra.mxu0 0.0
    %8041 = vmatprep.subr.mxu0 0.0
    %8042 = vmatpush1.msra.mxu0 0.0
    %8043 = vmatprep.subr.mxu0 0.0
    %8044 = vmatpush1.msra.mxu0 0.0
    %8045 = vmatprep.subr.mxu0 0.0
    %8046 = vmatpush1.msra.mxu0 0.0
    %8047 = vmatprep.subr.mxu0 0.0
    %8048 = vmatpush1.msra.mxu0 0.0
    %8049 = vmatprep.subr.mxu0 0.0
    %8050 = vmatpush1.msra.mxu0 0.0
    %8051 = vmatprep.subr.mxu0 0.0
    %8052 = vmatpush1.msra.mxu0 0.0
    %8053 = vmatprep.subr.mxu0 0.0
    %8054 = vmatpush1.msra.mxu0 0.0
    %8055 = vmatprep.subr.mxu0 0.0
    %8056 = vmatpush1.msra.mxu0 0.0
    %8057 = vmatprep.subr.mxu0 0.0
    %8058 = vmatpush1.msra.mxu0 0.0
    %8059 = vmatprep.subr.mxu0 0.0
    %8060 = vmatpush1.msra.mxu0 0.0
    %8061 = vmatprep.subr.mxu0 0.0
    %8062 = vmatpush1.msra.mxu0 0.0
    %8063 = vmatprep.subr.mxu0 0.0
    %8064 = vmatpush1.msra.mxu0 0.0
    %8065 = vmatprep.subr.mxu0 0.0
    %8066 = vmatpush1.msra.mxu0 0.0
    %8067 = vmatprep.subr.mxu0 0.0
    %8068 = vmatpush1.msra.mxu0 0.0
    %8069 = vmatprep.subr.mxu0 0.0
    %8070 = vmatpush1.msra.mxu0 0.0
    %8071 = vmatprep.subr.mxu0 0.0
    %8072 = vmatpush1.msra.mxu0 0.0
    %8073 = vmatprep.subr.mxu0 0.0
    %8074 = vmatpush1.msra.mxu0 0.0
    %8075 = vmatprep.subr.mxu0 0.0
    %8076 = vmatpush1.msra.mxu0 0.0
    %8077 = vmatprep.subr.mxu0 0.0
    %8078 = vmatpush1.msra.mxu0 0.0
    %8079 = vmatprep.subr.mxu0 0.0
    %8080 = vmatpush1.msra.mxu0 0.0
    %8081 = vmatprep.subr.mxu0 0.0
    %8082 = vmatpush1.msra.mxu0 0.0
    %8083 = vmatprep.subr.mxu0 0.0
    %8084 = vmatpush1.msra.mxu0 0.0
    %8085 = vmatprep.subr.mxu0 0.0
    %8086 = vmatpush1.msra.mxu0 0.0
    %8087 = vmatprep.subr.mxu0 0.0
    %8088 = vmatpush1.msra.mxu0 0.0
    %8089 = vmatprep.subr.mxu0 0.0
    %8090 = vmatpush1.msra.mxu0 0.0
    %8091 = vmatprep.subr.mxu0 0.0
    %8092 = vmatpush1.msra.mxu0 0.0
    %8093 = vmatprep.subr.mxu0 0.0
    %8094 = vmatpush1.msra.mxu0 0.0
    %8095 = vmatprep.mubr.f32.mxu0 0.0
    %8096 = vmatmul.mubr.f32.gmra.mrb[0].mxu0 %v8029
    %v8097 = vpop.f32.mrb[0].mxu0
    %v8098 = vadd.f32 %v8025, %v8097
    %v8099 = vpop.f32.mrb[0].mxu0
    %8100 = vdwg.mxu0
    %v8101 = vmax.f32 %v8098, 0.0
    %v8102 = vld [vmem:[%s51] sm:$0xff]
    %v8103 = vld [vmem:[#allocation42] sm:$0x1]
    %v8105 = vlaneseq
    %v8106 = vshrl.u32 %v8105, 7
    %v8107 = vsub.s32 0, %v8106
    %v8108 = vrot.slane %v8103, %v8107
    %v8111 = vsel %vm2694, %v8101, 0
    %8113 = vmatprep.subr.mxu0 0.0
    %8114 = vmatpush1.msra.mxu0 %v8102
    %8115 = vmatprep.subr.mxu0 0.0
    %8116 = vmatpush1.msra.mxu0 0.0
    %8117 = vmatprep.subr.mxu0 0.0
    %8118 = vmatpush1.msra.mxu0 0.0
    %8119 = vmatprep.subr.mxu0 0.0
    %8120 = vmatpush1.msra.mxu0 0.0
    %8121 = vmatprep.subr.mxu0 0.0
    %8122 = vmatpush1.msra.mxu0 0.0
    %8123 = vmatprep.subr.mxu0 0.0
    %8124 = vmatpush1.msra.mxu0 0.0
    %8125 = vmatprep.subr.mxu0 0.0
    %8126 = vmatpush1.msra.mxu0 0.0
    %8127 = vmatprep.subr.mxu0 0.0
    %8128 = vmatpush1.msra.mxu0 0.0
    %8129 = vmatprep.subr.mxu0 0.0
    %8130 = vmatpush1.msra.mxu0 0.0
    %8131 = vmatprep.subr.mxu0 0.0
    %8132 = vmatpush1.msra.mxu0 0.0
    %8133 = vmatprep.subr.mxu0 0.0
    %8134 = vmatpush1.msra.mxu0 0.0
    %8135 = vmatprep.subr.mxu0 0.0
    %8136 = vmatpush1.msra.mxu0 0.0
    %8137 = vmatprep.subr.mxu0 0.0
    %8138 = vmatpush1.msra.mxu0 0.0
    %8139 = vmatprep.subr.mxu0 0.0
    %8140 = vmatpush1.msra.mxu0 0.0
    %8141 = vmatprep.subr.mxu0 0.0
    %8142 = vmatpush1.msra.mxu0 0.0
    %8143 = vmatprep.subr.mxu0 0.0
    %8144 = vmatpush1.msra.mxu0 0.0
    %8145 = vmatprep.subr.mxu0 0.0
    %8146 = vmatpush1.msra.mxu0 0.0
    %8147 = vmatprep.subr.mxu0 0.0
    %8148 = vmatpush1.msra.mxu0 0.0
    %8149 = vmatprep.subr.mxu0 0.0
    %8150 = vmatpush1.msra.mxu0 0.0
    %8151 = vmatprep.subr.mxu0 0.0
    %8152 = vmatpush1.msra.mxu0 0.0
    %8153 = vmatprep.subr.mxu0 0.0
    %8154 = vmatpush1.msra.mxu0 0.0
    %8155 = vmatprep.subr.mxu0 0.0
    %8156 = vmatpush1.msra.mxu0 0.0
    %8157 = vmatprep.subr.mxu0 0.0
    %8158 = vmatpush1.msra.mxu0 0.0
    %8159 = vmatprep.subr.mxu0 0.0
    %8160 = vmatpush1.msra.mxu0 0.0
    %8161 = vmatprep.subr.mxu0 0.0
    %8162 = vmatpush1.msra.mxu0 0.0
    %8163 = vmatprep.subr.mxu0 0.0
    %8164 = vmatpush1.msra.mxu0 0.0
    %8165 = vmatprep.subr.mxu0 0.0
    %8166 = vmatpush1.msra.mxu0 0.0
    %8167 = vmatprep.subr.mxu0 0.0
    %8168 = vmatpush1.msra.mxu0 0.0
    %8169 = vmatprep.subr.mxu0 0.0
    %8170 = vmatpush1.msra.mxu0 0.0
    %8171 = vmatprep.subr.mxu0 0.0
    %8172 = vmatpush1.msra.mxu0 0.0
    %8173 = vmatprep.subr.mxu0 0.0
    %8174 = vmatpush1.msra.mxu0 0.0
    %8175 = vmatprep.subr.mxu0 0.0
    %8176 = vmatpush1.msra.mxu0 0.0
    %8177 = vmatprep.mubr.f32.mxu0 0.0
    %8178 = vmatmul.mubr.f32.gmra.mrb[0].mxu0 %v8111
    %v8179 = vpop.f32.mrb[0].mxu0
    %v8180 = vadd.f32 %v8108, %v8179
    %v8181 = vpop.f32.mrb[0].mxu0
    %8182 = vdwg.mxu0
    %v8183 = vmax.f32 %v8180, 0.0
    %v8184 = vld [vmem:[%s55] sm:$0xf]
    %v8185 = vld [vmem:[#allocation43] sm:$0x1]
    %v8187 = vlaneseq
    %v8188 = vshrl.u32 %v8187, 7
    %v8189 = vsub.s32 0, %v8188
    %v8190 = vrot.slane %v8185, %v8189
    %vm8192 = vcmask 31744
    %v8194 = vsel %vm8192, %v8183, 0
    %vm8196 = vcmask 1043456
    %v8198 = vsel %vm8196, %v8184, 0
    %8200 = vmatprep.subr.mxu0 0.0
    %8201 = vmatpush1.msra.mxu0 %v8198
    %8202 = vmatprep.subr.mxu0 0.0
    %8203 = vmatpush1.msra.mxu0 0.0
    %8204 = vmatprep.subr.mxu0 0.0
    %8205 = vmatpush1.msra.mxu0 0.0
    %8206 = vmatprep.subr.mxu0 0.0
    %8207 = vmatpush1.msra.mxu0 0.0
    %8208 = vmatprep.subr.mxu0 0.0
    %8209 = vmatpush1.msra.mxu0 0.0
    %8210 = vmatprep.subr.mxu0 0.0
    %8211 = vmatpush1.msra.mxu0 0.0
    %8212 = vmatprep.subr.mxu0 0.0
    %8213 = vmatpush1.msra.mxu0 0.0
    %8214 = vmatprep.subr.mxu0 0.0
    %8215 = vmatpush1.msra.mxu0 0.0
    %8216 = vmatprep.subr.mxu0 0.0
    %8217 = vmatpush1.msra.mxu0 0.0
    %8218 = vmatprep.subr.mxu0 0.0
    %8219 = vmatpush1.msra.mxu0 0.0
    %8220 = vmatprep.subr.mxu0 0.0
    %8221 = vmatpush1.msra.mxu0 0.0
    %8222 = vmatprep.subr.mxu0 0.0
    %8223 = vmatpush1.msra.mxu0 0.0
    %8224 = vmatprep.subr.mxu0 0.0
    %8225 = vmatpush1.msra.mxu0 0.0
    %8226 = vmatprep.subr.mxu0 0.0
    %8227 = vmatpush1.msra.mxu0 0.0
    %8228 = vmatprep.subr.mxu0 0.0
    %8229 = vmatpush1.msra.mxu0 0.0
    %8230 = vmatprep.subr.mxu0 0.0
    %8231 = vmatpush1.msra.mxu0 0.0
    %8232 = vmatprep.subr.mxu0 0.0
    %8233 = vmatpush1.msra.mxu0 0.0
    %8234 = vmatprep.subr.mxu0 0.0
    %8235 = vmatpush1.msra.mxu0 0.0
    %8236 = vmatprep.subr.mxu0 0.0
    %8237 = vmatpush1.msra.mxu0 0.0
    %8238 = vmatprep.subr.mxu0 0.0
    %8239 = vmatpush1.msra.mxu0 0.0
    %8240 = vmatprep.subr.mxu0 0.0
    %8241 = vmatpush1.msra.mxu0 0.0
    %8242 = vmatprep.subr.mxu0 0.0
    %8243 = vmatpush1.msra.mxu0 0.0
    %8244 = vmatprep.subr.mxu0 0.0
    %8245 = vmatpush1.msra.mxu0 0.0
    %8246 = vmatprep.subr.mxu0 0.0
    %8247 = vmatpush1.msra.mxu0 0.0
    %8248 = vmatprep.subr.mxu0 0.0
    %8249 = vmatpush1.msra.mxu0 0.0
    %8250 = vmatprep.subr.mxu0 0.0
    %8251 = vmatpush1.msra.mxu0 0.0
    %8252 = vmatprep.subr.mxu0 0.0
    %8253 = vmatpush1.msra.mxu0 0.0
    %8254 = vmatprep.subr.mxu0 0.0
    %8255 = vmatpush1.msra.mxu0 0.0
    %8256 = vmatprep.subr.mxu0 0.0
    %8257 = vmatpush1.msra.mxu0 0.0
    %8258 = vmatprep.subr.mxu0 0.0
    %8259 = vmatpush1.msra.mxu0 0.0
    %8260 = vmatprep.subr.mxu0 0.0
    %8261 = vmatpush1.msra.mxu0 0.0
    %8262 = vmatprep.subr.mxu0 0.0
    %8263 = vmatpush1.msra.mxu0 0.0
    %8264 = vmatprep.mubr.f32.mxu0 0.0
    %8265 = vmatmul.mubr.f32.gmra.mrb[0].mxu0 %v8194
    %v8266 = vpop.f32.mrb[0].mxu0
    %v8267 = vadd.f32 %v8190, %v8266
    %v8268 = vpop.f32.mrb[0].mxu0
    %8269 = vdwg.mxu0
    %v8270 = vmax.f32 %v8267, 0.0
    %v8271 = vld [vmem:[#allocation45] sm:$0x1]
    %v8273 = vlaneseq
    %v8274 = vshrl.u32 %v8273, 7
    %v8275 = vsub.s32 0, %v8274
    %v8276 = vrot.slane %v8271, %v8275
    %v8278 = vmul.f32 %v8270, %v8276
    %v8279 = vsel %vm1449, %v8278, 0.0
    %8280 = vadd.xlane.f32.xlu0 %v8279
    %v8281 = vpop.xlane.xlu0 %8280
    %v8282 = vld [vmem:[#allocation2] sm:$0x1]
    %v8284 = vlaneseq
    %v8285 = vshrl.u32 %v8284, 7
    %v8286 = vsub.s32 0, %v8285
    %v8287 = vrot.slane %v8282, %v8286
    %v8289 = vadd.f32 %v8281, %v8287
    %v8290 = vmax.f32 %v8289, 0.0
    %v8291 = vld [vmem:[#allocation3] sm:$0x1]
    %v8293 = vlaneseq
    %v8294 = vshrl.u32 %v8293, 7
    %v8295 = vsub.s32 0, %v8294
    %v8296 = vrot.slane %v8291, %v8295
    %v8298 = vmul.f32 %v8290, %v8296
    %v8299 = vadd.f32 %v8298, 0.0
    %v8300 = vld [vmem:[#allocation4] sm:$0x1]
    %v8302 = vlaneseq
    %v8303 = vshrl.u32 %v8302, 7
    %v8304 = vsub.s32 0, %v8303
    %v8305 = vrot.slane %v8300, %v8304
    %v8307 = vadd.f32 %v8299, %v8305
    %v8308 = vsub.f32 0.0, %v8307
    %v8309 = vmul.f32 %v8308, 1.442695
    %v8310 = vpow.pop %v8309
    %v8311 = vadd.f32 %v8310, 1.0
    %v8312 = vrcp.pop %v8311
    %v8313 = vmul.f32 1.0, %v8312
    %v8314 = vld [vmem:[%s67] sm:$0xf]
    %v8315 = vld [vmem:[#allocation46] sm:$0x1]
    %v8317 = vlaneseq
    %v8318 = vshrl.u32 %v8317, 7
    %v8319 = vsub.s32 0, %v8318
    %v8320 = vrot.slane %v8315, %v8319
    %v8323 = vsel %vm8196, %v8314, 0
    %8325 = vmatprep.subr.mxu0 0.0
    %8326 = vmatpush1.msra.mxu0 %v8323
    %8327 = vmatprep.subr.mxu0 0.0
    %8328 = vmatpush1.msra.mxu0 0.0
    %8329 = vmatprep.subr.mxu0 0.0
    %8330 = vmatpush1.msra.mxu0 0.0
    %8331 = vmatprep.subr.mxu0 0.0
    %8332 = vmatpush1.msra.mxu0 0.0
    %8333 = vmatprep.subr.mxu0 0.0
    %8334 = vmatpush1.msra.mxu0 0.0
    %8335 = vmatprep.subr.mxu0 0.0
    %8336 = vmatpush1.msra.mxu0 0.0
    %8337 = vmatprep.subr.mxu0 0.0
    %8338 = vmatpush1.msra.mxu0 0.0
    %8339 = vmatprep.subr.mxu0 0.0
    %8340 = vmatpush1.msra.mxu0 0.0
    %8341 = vmatprep.subr.mxu0 0.0
    %8342 = vmatpush1.msra.mxu0 0.0
    %8343 = vmatprep.subr.mxu0 0.0
    %8344 = vmatpush1.msra.mxu0 0.0
    %8345 = vmatprep.subr.mxu0 0.0
    %8346 = vmatpush1.msra.mxu0 0.0
    %8347 = vmatprep.subr.mxu0 0.0
    %8348 = vmatpush1.msra.mxu0 0.0
    %8349 = vmatprep.subr.mxu0 0.0
    %8350 = vmatpush1.msra.mxu0 0.0
    %8351 = vmatprep.subr.mxu0 0.0
    %8352 = vmatpush1.msra.mxu0 0.0
    %8353 = vmatprep.subr.mxu0 0.0
    %8354 = vmatpush1.msra.mxu0 0.0
    %8355 = vmatprep.subr.mxu0 0.0
    %8356 = vmatpush1.msra.mxu0 0.0
    %8357 = vmatprep.subr.mxu0 0.0
    %8358 = vmatpush1.msra.mxu0 0.0
    %8359 = vmatprep.subr.mxu0 0.0
    %8360 = vmatpush1.msra.mxu0 0.0
    %8361 = vmatprep.subr.mxu0 0.0
    %8362 = vmatpush1.msra.mxu0 0.0
    %8363 = vmatprep.subr.mxu0 0.0
    %8364 = vmatpush1.msra.mxu0 0.0
    %8365 = vmatprep.subr.mxu0 0.0
    %8366 = vmatpush1.msra.mxu0 0.0
    %8367 = vmatprep.subr.mxu0 0.0
    %8368 = vmatpush1.msra.mxu0 0.0
    %8369 = vmatprep.subr.mxu0 0.0
    %8370 = vmatpush1.msra.mxu0 0.0
    %8371 = vmatprep.subr.mxu0 0.0
    %8372 = vmatpush1.msra.mxu0 0.0
    %8373 = vmatprep.subr.mxu0 0.0
    %8374 = vmatpush1.msra.mxu0 0.0
    %8375 = vmatprep.subr.mxu0 0.0
    %8376 = vmatpush1.msra.mxu0 0.0
    %8377 = vmatprep.subr.mxu0 0.0
    %8378 = vmatpush1.msra.mxu0 0.0
    %8379 = vmatprep.subr.mxu0 0.0
    %8380 = vmatpush1.msra.mxu0 0.0
    %8381 = vmatprep.subr.mxu0 0.0
    %8382 = vmatpush1.msra.mxu0 0.0
    %8383 = vmatprep.subr.mxu0 0.0
    %8384 = vmatpush1.msra.mxu0 0.0
    %8385 = vmatprep.subr.mxu0 0.0
    %8386 = vmatpush1.msra.mxu0 0.0
    %8387 = vmatprep.subr.mxu0 0.0
    %8388 = vmatpush1.msra.mxu0 0.0
    %8389 = vmatprep.mubr.f32.mxu0 0.0
    %8390 = vmatmul.mubr.f32.gmra.mrb[0].mxu0 %v8194
    %v8391 = vpop.f32.mrb[0].mxu0
    %v8392 = vadd.f32 %v8320, %v8391
    %v8393 = vpop.f32.mrb[0].mxu0
    %8394 = vdwg.mxu0
    %v8395 = vmax.f32 %v8392, 0.0
    %v8396 = vld [vmem:[#allocation48] sm:$0x1]
    %v8398 = vlaneseq
    %v8399 = vshrl.u32 %v8398, 7
    %v8400 = vsub.s32 0, %v8399
    %v8401 = vrot.slane %v8396, %v8400
    %v8403 = vmul.f32 %v8395, %v8401
    %v8404 = vsel %vm1449, %v8403, 0.0
    %8405 = vadd.xlane.f32.xlu0 %v8404
    %v8406 = vpop.xlane.xlu0 %8405
    %v8407 = vld [vmem:[#allocation5] sm:$0x1]
    %v8409 = vlaneseq
    %v8410 = vshrl.u32 %v8409, 7
    %v8411 = vsub.s32 0, %v8410
    %v8412 = vrot.slane %v8407, %v8411
    %v8414 = vadd.f32 %v8406, %v8412
    %v8415 = vmax.f32 %v8414, 0.0
    %v8416 = vld [vmem:[#allocation6] sm:$0x1]
    %v8418 = vlaneseq
    %v8419 = vshrl.u32 %v8418, 7
    %v8420 = vsub.s32 0, %v8419
    %v8421 = vrot.slane %v8416, %v8420
    %v8423 = vmul.f32 %v8415, %v8421
    %v8424 = vadd.f32 %v8423, 0.0
    %v8425 = vld [vmem:[#allocation7] sm:$0x1]
    %v8427 = vlaneseq
    %v8428 = vshrl.u32 %v8427, 7
    %v8429 = vsub.s32 0, %v8428
    %v8430 = vrot.slane %v8425, %v8429
    %v8432 = vadd.f32 %v8424, %v8430
    %v8433 = vmax.f32 %v8432, 0.0
    %v8434 = vand.u32 2147483647, %v8432
    %v8435 = vsub.f32 0.0, %v8434
    %v8436 = vmul.f32 %v8435, 1.442695
    %v8437 = vpow.pop %v8436
    %v8438 = vadd.f32 %v8437, 1.0
    %v8439 = vlog2.pop %v8438
    %v8440 = vmul.f32 %v8439, 0.6931472
    %v8441 = vadd.f32 %v8433, %v8440
    %vm8442 = vcmp.gt.f32.partialorder %v8432, 20.0
    %v8443 = vsel %vm8442, %v8432, %v8441
    %v8444 = vld [vmem:[%s79] sm:$0x1]
    %8446 = vset.pattern.permute.xlu0 0
    %8447 = vperm.xlu0 %8446, %v8313
    %v8448 = vpop.permute.xlu0 %8447
    %v8450 = vlaneseq
    %v8451 = vshrl.u32 %v8450, 7
    %v8452 = vsub.s32 0, %v8451
    %v8453 = vrot.slane %v8444, %v8452
    %v8454 = vmul.f32 %v8448, %v8453
    %v8455 = vld [vmem:[%s79 + $0x1] sm:$0x1]
    %8457 = vset.pattern.permute.xlu0 0
    %8458 = vperm.xlu0 %8457, %v8443
    %v8459 = vpop.permute.xlu0 %8458
    %v8461 = vlaneseq
    %v8462 = vshrl.u32 %v8461, 7
    %v8463 = vsub.s32 0, %v8462
    %v8464 = vrot.slane %v8455, %v8463
    %v8465 = vmul.f32 %v8459, %v8464
    %v8466 = vadd.f32 %v8454, %v8465
    %v8467 = vld [vmem:[#allocation49] sm:$0x1]
    %v8469 = vlaneseq
    %v8470 = vshrl.u32 %v8469, 7
    %v8471 = vsub.s32 0, %v8470
    %v8472 = vrot.slane %v8467, %v8471
    %v8474 = vadd.f32 %v8466, %v8472
    %v8475 = vld [vmem:[#allocation51] sm:$0x1]
    %v8477 = vlaneseq
    %v8478 = vshrl.u32 %v8477, 7
    %v8479 = vsub.s32 0, %v8478
    %v8480 = vrot.slane %v8475, %v8479
    %v8482 = vmul.f32 %v8474, %v8480
    %v8483 = vsel %vm2694, %v8482, 0.0
    %8484 = vadd.xlane.f32.xlu0 %v8483
    %v8485 = vpop.xlane.xlu0 %8484
    %v8486 = vld [vmem:[#allocation8] sm:$0x1]
    %v8488 = vlaneseq
    %v8489 = vshrl.u32 %v8488, 7
    %v8490 = vsub.s32 0, %v8489
    %v8491 = vrot.slane %v8486, %v8490
    %v8493 = vadd.f32 %v8485, %v8491
    %v8494 = vsub.f32 0.0, %v8493
    %v8495 = vmul.f32 %v8494, 1.442695
    %v8496 = vpow.pop %v8495
    %v8497 = vadd.f32 %v8496, 1.0
    %v8498 = vrcp.pop %v8497
    %v8499 = vmul.f32 1.0, %v8498
    %v8500 = vlaneseq
    %v8501 = vand.u32 %v8500, 127
    %vm8502 = vcmp.eq.s32.totalorder %v8501, 0
    %v8503 = vsel %vm8502, 1, 0
    %v8504 = vcvt.s32.f32 %v8503
    %vm8505 = vcmp.eq.s32.totalorder %v8501, 1
    %v8506 = vsel %vm8505, 1, 0
    %v8507 = vcvt.s32.f32 %v8506
    %vm8508 = vcmp.eq.s32.totalorder %v8501, 2
    %v8509 = vsel %vm8508, 1, 0
    %v8510 = vcvt.s32.f32 %v8509
    %v8511 = vmul.f32 %v8448, %v8504
    %v8512 = vmul.f32 %v8459, %v8507
    %v8513 = vadd.f32 %v8511, %v8512
    %8515 = vset.pattern.permute.xlu0 0
    %8516 = vperm.xlu0 %8515, %v8499
    %v8517 = vpop.permute.xlu0 %8516
    %v8519 = vmul.f32 %v8517, %v8510
    %v8520 = vadd.f32 %v8513, %v8519
    %8521 = vst [vmem:[#allocation52] sm:$0xff] %v8520
    %v8522 = vld [vmem:[%s87] sm:$0xff]
    %v8523 = vld [vmem:[%s87 + $0x8] sm:$0xff]
    %v8524 = vld [vmem:[%s87 + $0x10] sm:$0xff]
    %v8525 = vld [vmem:[%s87 + $0x18] sm:$0xff]
    %v8526 = vld [vmem:[%s87 + $0x20] sm:$0xff]
    %v8527 = vld [vmem:[%s87 + $0x28] sm:$0xff]
    %v8528 = vld [vmem:[%s87 + $0x30] sm:$0xff]
    %v8529 = vld [vmem:[%s87 + $0x38] sm:$0xff]
    %v8530 = vld [vmem:[%s87 + $0x40] sm:$0xff]
    %v8531 = vld [vmem:[%s87 + $0x48] sm:$0xff]
    %v8532 = vld [vmem:[%s87 + $0x50] sm:$0xff]
    %v8533 = vld [vmem:[%s87 + $0x58] sm:$0xff]
    %v8534 = vld [vmem:[%s87 + $0x60] sm:$0xff]
    %v8535 = vld [vmem:[%s87 + $0x68] sm:$0xff]
    %v8536 = vld [vmem:[%s87 + $0x70] sm:$0xff]
    %v8537 = vld [vmem:[%s87 + $0x78] sm:$0xff]
    %v8538 = vld [vmem:[%s89] sm:$0xff]
    %v8539 = vld [vmem:[%s89 + $0x8] sm:$0xff]
    %v8540 = vld [vmem:[%s89 + $0x10] sm:$0xff]
    %v8541 = vld [vmem:[%s89 + $0x18] sm:$0xff]
    %v8542 = vld [vmem:[%s89 + $0x20] sm:$0xff]
    %v8543 = vld [vmem:[%s89 + $0x28] sm:$0xff]
    %v8544 = vld [vmem:[%s89 + $0x30] sm:$0xff]
    %v8545 = vld [vmem:[%s89 + $0x38] sm:$0xff]
    %v8546 = vld [vmem:[%s89 + $0x40] sm:$0xff]
    %v8547 = vld [vmem:[%s89 + $0x48] sm:$0xff]
    %v8548 = vld [vmem:[%s89 + $0x50] sm:$0xff]
    %v8549 = vld [vmem:[%s89 + $0x58] sm:$0xff]
    %v8550 = vld [vmem:[%s89 + $0x60] sm:$0xff]
    %v8551 = vld [vmem:[%s89 + $0x68] sm:$0xff]
    %v8552 = vld [vmem:[%s89 + $0x70] sm:$0xff]
    %v8553 = vld [vmem:[%s89 + $0x78] sm:$0xff]
    %8554 = vmatprep.subr.mxu0 0.0
    %8555 = vmatpush1.msra.mxu0 %v8538
    %8556 = vmatprep.subr.mxu0 0.0
    %8557 = vmatpush1.msra.mxu0 %v8539
    %8558 = vmatprep.subr.mxu0 0.0
    %8559 = vmatpush1.msra.mxu0 %v8540
    %8560 = vmatprep.subr.mxu0 0.0
    %8561 = vmatpush1.msra.mxu0 %v8541
    %8562 = vmatprep.subr.mxu0 0.0
    %8563 = vmatpush1.msra.mxu0 %v8542
    %8564 = vmatprep.subr.mxu0 0.0
    %8565 = vmatpush1.msra.mxu0 %v8543
    %8566 = vmatprep.subr.mxu0 0.0
    %8567 = vmatpush1.msra.mxu0 %v8544
    %8568 = vmatprep.subr.mxu0 0.0
    %8569 = vmatpush1.msra.mxu0 %v8545
    %8570 = vmatprep.subr.mxu0 0.0
    %8571 = vmatpush1.msra.mxu0 %v8546
    %8572 = vmatprep.subr.mxu0 0.0
    %8573 = vmatpush1.msra.mxu0 %v8547
    %8574 = vmatprep.subr.mxu0 0.0
    %8575 = vmatpush1.msra.mxu0 %v8548
    %8576 = vmatprep.subr.mxu0 0.0
    %8577 = vmatpush1.msra.mxu0 %v8549
    %8578 = vmatprep.subr.mxu0 0.0
    %8579 = vmatpush1.msra.mxu0 %v8550
    %8580 = vmatprep.subr.mxu0 0.0
    %8581 = vmatpush1.msra.mxu0 %v8551
    %8582 = vmatprep.subr.mxu0 0.0
    %8583 = vmatpush1.msra.mxu0 %v8552
    %8584 = vmatprep.subr.mxu0 0.0
    %8585 = vmatpush1.msra.mxu0 %v8553
    %8586 = vmatprep.subr.mxu0 0.0
    %8587 = vmatpush1.msra.mxu0 0.0
    %8588 = vmatprep.subr.mxu0 0.0
    %8589 = vmatpush1.msra.mxu0 0.0
    %8590 = vmatprep.subr.mxu0 0.0
    %8591 = vmatpush1.msra.mxu0 0.0
    %8592 = vmatprep.subr.mxu0 0.0
    %8593 = vmatpush1.msra.mxu0 0.0
    %8594 = vmatprep.subr.mxu0 0.0
    %8595 = vmatpush1.msra.mxu0 0.0
    %8596 = vmatprep.subr.mxu0 0.0
    %8597 = vmatpush1.msra.mxu0 0.0
    %8598 = vmatprep.subr.mxu0 0.0
    %8599 = vmatpush1.msra.mxu0 0.0
    %8600 = vmatprep.subr.mxu0 0.0
    %8601 = vmatpush1.msra.mxu0 0.0
    %8602 = vmatprep.subr.mxu0 0.0
    %8603 = vmatpush1.msra.mxu0 0.0
    %8604 = vmatprep.subr.mxu0 0.0
    %8605 = vmatpush1.msra.mxu0 0.0
    %8606 = vmatprep.subr.mxu0 0.0
    %8607 = vmatpush1.msra.mxu0 0.0
    %8608 = vmatprep.subr.mxu0 0.0
    %8609 = vmatpush1.msra.mxu0 0.0
    %8610 = vmatprep.subr.mxu0 0.0
    %8611 = vmatpush1.msra.mxu0 0.0
    %8612 = vmatprep.subr.mxu0 0.0
    %8613 = vmatpush1.msra.mxu0 0.0
    %8614 = vmatprep.subr.mxu0 0.0
    %8615 = vmatpush1.msra.mxu0 0.0
    %8616 = vmatprep.subr.mxu0 0.0
    %8617 = vmatpush1.msra.mxu0 0.0
    %8618 = vmatprep.mubr.f32.mxu0 0.0
    %8619 = vmatmul.mubr.f32.gmra.mrb[0].mxu0 %v7919
    %v8620 = vpop.f32.mrb[0].mxu0
    %v8621 = vadd.f32 0.0, %v8620
    %v8622 = vpop.f32.mrb[0].mxu0
    %8623 = vdwg.mxu0
    %8624 = vmatprep.subr.mxu0 0.0
    %8625 = vmatpush1.msra.mxu0 %v8522
    %8626 = vmatprep.subr.mxu0 0.0
    %8627 = vmatpush1.msra.mxu0 %v8523
    %8628 = vmatprep.subr.mxu0 0.0
    %8629 = vmatpush1.msra.mxu0 %v8524
    %8630 = vmatprep.subr.mxu0 0.0
    %8631 = vmatpush1.msra.mxu0 %v8525
    %8632 = vmatprep.subr.mxu0 0.0
    %8633 = vmatpush1.msra.mxu0 %v8526
    %8634 = vmatprep.subr.mxu0 0.0
    %8635 = vmatpush1.msra.mxu0 %v8527
    %8636 = vmatprep.subr.mxu0 0.0
    %8637 = vmatpush1.msra.mxu0 %v8528
    %8638 = vmatprep.subr.mxu0 0.0
    %8639 = vmatpush1.msra.mxu0 %v8529
    %8640 = vmatprep.subr.mxu0 0.0
    %8641 = vmatpush1.msra.mxu0 %v8530
    %8642 = vmatprep.subr.mxu0 0.0
    %8643 = vmatpush1.msra.mxu0 %v8531
    %8644 = vmatprep.subr.mxu0 0.0
    %8645 = vmatpush1.msra.mxu0 %v8532
    %8646 = vmatprep.subr.mxu0 0.0
    %8647 = vmatpush1.msra.mxu0 %v8533
    %8648 = vmatprep.subr.mxu0 0.0
    %8649 = vmatpush1.msra.mxu0 %v8534
    %8650 = vmatprep.subr.mxu0 0.0
    %8651 = vmatpush1.msra.mxu0 %v8535
    %8652 = vmatprep.subr.mxu0 0.0
    %8653 = vmatpush1.msra.mxu0 %v8536
    %8654 = vmatprep.subr.mxu0 0.0
    %8655 = vmatpush1.msra.mxu0 %v8537
    %8656 = vmatprep.subr.mxu0 0.0
    %8657 = vmatpush1.msra.mxu0 0.0
    %8658 = vmatprep.subr.mxu0 0.0
    %8659 = vmatpush1.msra.mxu0 0.0
    %8660 = vmatprep.subr.mxu0 0.0
    %8661 = vmatpush1.msra.mxu0 0.0
    %8662 = vmatprep.subr.mxu0 0.0
    %8663 = vmatpush1.msra.mxu0 0.0
    %8664 = vmatprep.subr.mxu0 0.0
    %8665 = vmatpush1.msra.mxu0 0.0
    %8666 = vmatprep.subr.mxu0 0.0
    %8667 = vmatpush1.msra.mxu0 0.0
    %8668 = vmatprep.subr.mxu0 0.0
    %8669 = vmatpush1.msra.mxu0 0.0
    %8670 = vmatprep.subr.mxu0 0.0
    %8671 = vmatpush1.msra.mxu0 0.0
    %8672 = vmatprep.subr.mxu0 0.0
    %8673 = vmatpush1.msra.mxu0 0.0
    %8674 = vmatprep.subr.mxu0 0.0
    %8675 = vmatpush1.msra.mxu0 0.0
    %8676 = vmatprep.subr.mxu0 0.0
    %8677 = vmatpush1.msra.mxu0 0.0
    %8678 = vmatprep.subr.mxu0 0.0
    %8679 = vmatpush1.msra.mxu0 0.0
    %8680 = vmatprep.subr.mxu0 0.0
    %8681 = vmatpush1.msra.mxu0 0.0
    %8682 = vmatprep.subr.mxu0 0.0
    %8683 = vmatpush1.msra.mxu0 0.0
    %8684 = vmatprep.subr.mxu0 0.0
    %8685 = vmatpush1.msra.mxu0 0.0
    %8686 = vmatprep.subr.mxu0 0.0
    %8687 = vmatpush1.msra.mxu0 0.0
    %8688 = vmatprep.mubr.f32.mxu0 0.0
    %8689 = vmatmul.mubr.f32.gmra.mrb[0].mxu0 %v7773
    %v8690 = vpop.f32.mrb[0].mxu0
    %v8691 = vadd.f32 %v8621, %v8690
    %v8692 = vpop.f32.mrb[0].mxu0
    %8693 = vdwg.mxu0
    %v8694 = vld [vmem:[%s91] sm:$0x1]
    %v8696 = vlaneseq
    %v8697 = vshrl.u32 %v8696, 7
    %v8698 = vsub.s32 0, %v8697
    %v8699 = vrot.slane %v8694, %v8698
    %v8701 = vadd.f32 %v8691, %v8699
    %v8702 = vmax.f32 %v8701, 0.0
    %v8703 = vld [vmem:[%s93] sm:$0xff]
    %v8704 = vld [vmem:[%s93 + $0x8] sm:$0xff]
    %v8705 = vld [vmem:[%s93 + $0x10] sm:$0xff]
    %v8706 = vld [vmem:[%s93 + $0x18] sm:$0xff]
    %v8707 = vld [vmem:[%s95] sm:$0x1]
    %v8709 = vlaneseq
    %v8710 = vshrl.u32 %v8709, 7
    %v8711 = vsub.s32 0, %v8710
    %v8712 = vrot.slane %v8707, %v8711
    %v8715 = vsel %vm8027, %v8702, 0
    %8717 = vmatprep.subr.mxu0 0.0
    %8718 = vmatpush1.msra.mxu0 %v8703
    %8719 = vmatprep.subr.mxu0 0.0
    %8720 = vmatpush1.msra.mxu0 %v8704
    %8721 = vmatprep.subr.mxu0 0.0
    %8722 = vmatpush1.msra.mxu0 %v8705
    %8723 = vmatprep.subr.mxu0 0.0
    %8724 = vmatpush1.msra.mxu0 %v8706
    %8725 = vmatprep.subr.mxu0 0.0
    %8726 = vmatpush1.msra.mxu0 0.0
    %8727 = vmatprep.subr.mxu0 0.0
    %8728 = vmatpush1.msra.mxu0 0.0
    %8729 = vmatprep.subr.mxu0 0.0
    %8730 = vmatpush1.msra.mxu0 0.0
    %8731 = vmatprep.subr.mxu0 0.0
    %8732 = vmatpush1.msra.mxu0 0.0
    %8733 = vmatprep.subr.mxu0 0.0
    %8734 = vmatpush1.msra.mxu0 0.0
    %8735 = vmatprep.subr.mxu0 0.0
    %8736 = vmatpush1.msra.mxu0 0.0
    %8737 = vmatprep.subr.mxu0 0.0
    %8738 = vmatpush1.msra.mxu0 0.0
    %8739 = vmatprep.subr.mxu0 0.0
    %8740 = vmatpush1.msra.mxu0 0.0
    %8741 = vmatprep.subr.mxu0 0.0
    %8742 = vmatpush1.msra.mxu0 0.0
    %8743 = vmatprep.subr.mxu0 0.0
    %8744 = vmatpush1.msra.mxu0 0.0
    %8745 = vmatprep.subr.mxu0 0.0
    %8746 = vmatpush1.msra.mxu0 0.0
    %8747 = vmatprep.subr.mxu0 0.0
    %8748 = vmatpush1.msra.mxu0 0.0
    %8749 = vmatprep.subr.mxu0 0.0
    %8750 = vmatpush1.msra.mxu0 0.0
    %8751 = vmatprep.subr.mxu0 0.0
    %8752 = vmatpush1.msra.mxu0 0.0
    %8753 = vmatprep.subr.mxu0 0.0
    %8754 = vmatpush1.msra.mxu0 0.0
    %8755 = vmatprep.subr.mxu0 0.0
    %8756 = vmatpush1.msra.mxu0 0.0
    %8757 = vmatprep.subr.mxu0 0.0
    %8758 = vmatpush1.msra.mxu0 0.0
    %8759 = vmatprep.subr.mxu0 0.0
    %8760 = vmatpush1.msra.mxu0 0.0
    %8761 = vmatprep.subr.mxu0 0.0
    %8762 = vmatpush1.msra.mxu0 0.0
    %8763 = vmatprep.subr.mxu0 0.0
    %8764 = vmatpush1.msra.mxu0 0.0
    %8765 = vmatprep.subr.mxu0 0.0
    %8766 = vmatpush1.msra.mxu0 0.0
    %8767 = vmatprep.subr.mxu0 0.0
    %8768 = vmatpush1.msra.mxu0 0.0
    %8769 = vmatprep.subr.mxu0 0.0
    %8770 = vmatpush1.msra.mxu0 0.0
    %8771 = vmatprep.subr.mxu0 0.0
    %8772 = vmatpush1.msra.mxu0 0.0
    %8773 = vmatprep.subr.mxu0 0.0
    %8774 = vmatpush1.msra.mxu0 0.0
    %8775 = vmatprep.subr.mxu0 0.0
    %8776 = vmatpush1.msra.mxu0 0.0
    %8777 = vmatprep.subr.mxu0 0.0
    %8778 = vmatpush1.msra.mxu0 0.0
    %8779 = vmatprep.subr.mxu0 0.0
    %8780 = vmatpush1.msra.mxu0 0.0
    %8781 = vmatprep.mubr.f32.mxu0 0.0
    %8782 = vmatmul.mubr.f32.gmra.mrb[0].mxu0 %v8715
    %v8783 = vpop.f32.mrb[0].mxu0
    %v8784 = vadd.f32 %v8712, %v8783
    %v8785 = vpop.f32.mrb[0].mxu0
    %8786 = vdwg.mxu0
    %v8787 = vmax.f32 %v8784, 0.0
    %v8788 = vld [vmem:[%s97] sm:$0x1]
    %v8790 = vlaneseq
    %v8791 = vshrl.u32 %v8790, 7
    %v8792 = vsub.s32 0, %v8791
    %v8793 = vrot.slane %v8788, %v8792
    %v8795 = vmul.f32 %v8787, %v8793
    %v8796 = vsel %vm795, %v8795, 0.0
    %8797 = vadd.xlane.f32.xlu0 %v8796
    %v8798 = vpop.xlane.xlu0 %8797
    %v8799 = vld [vmem:[#allocation9] sm:$0x1]
    %v8801 = vlaneseq
    %v8802 = vshrl.u32 %v8801, 7
    %v8803 = vsub.s32 0, %v8802
    %v8804 = vrot.slane %v8799, %v8803
    %v8806 = vadd.f32 %v8798, %v8804
    %v8807 = vsub.f32 0.0, %v8806
    %v8808 = vmul.f32 %v8807, 1.442695
    %v8809 = vpow.pop %v8808
    %v8810 = vadd.f32 %v8809, 1.0
    %v8811 = vrcp.pop %v8810
    %v8812 = vmul.f32 1.0, %v8811
    %8814 = vset.pattern.permute.xlu0 0
    %8815 = vperm.xlu0 %8814, %v8812
    %v8816 = vpop.permute.xlu0 %8815
    %v8818 = vmul.f32 %v8816, %v8504
    %8819 = vst [vmem:[#allocation53] sm:$0xff] %v8818
    // Predicated region
    $region310: #{tpu_custom_call.1} parent=1 // pred_check
      _
    $region311: #{tpu_custom_call.1} parent=1 // pred_check_branch
      %8821 = sbr.rel (0) target = $region313
    $region312: #{tpu_custom_call.1} parent=1 // pred_region
      %s8823 = ssub.s32 128, 128
      %8824 = vsyncadd [#allocation12], %s8823
      %s8826 = sshll.u32 [#allocation52], 4
      %s8827 = int_to_ptr.vmem [resolvable:$true] %s8826
      %8829 = dma.vmem_to_hbm [thread:$0]  %s8827, 128, %s101, [#allocation12]
    $region313: #{tpu_custom_call.1} parent=1 // pred_fallthru
      _
    // Predicated region
    $region314: #{tpu_custom_call.1} parent=1 // pred_check
      _
    $region315: #{tpu_custom_call.1} parent=1 // pred_check_branch
      %8831 = sbr.rel (0) target = $region317
    $region316: #{tpu_custom_call.1} parent=1 // pred_region
      %s8833 = ssub.s32 128, 128
      %8834 = vsyncadd [#allocation54], %s8833
      %s8836 = sshll.u32 [#allocation53], 4
      %s8837 = int_to_ptr.vmem [resolvable:$true] %s8836
      %8839 = dma.vmem_to_hbm [thread:$0]  %s8837, 128, %s103, [#allocation54]
    $region317: #{tpu_custom_call.1} parent=1 // pred_fallthru
      _
    // Predicated region
    $region318: #{tpu_custom_call.1} parent=1 // pred_check
      _
    $region319: #{tpu_custom_call.1} parent=1 // pred_check_branch
      %8841 = sbr.rel (0) target = $region321
    $region320: #{tpu_custom_call.1} parent=1 // pred_region
      %8842 = dma.done [#allocation12], 128
    $region321: #{tpu_custom_call.1} parent=1 // pred_fallthru
      _
    // Predicated region
    $region322: #{tpu_custom_call.1} parent=1 // pred_check
      _
    $region323: #{tpu_custom_call.1} parent=1 // pred_check_branch
      %8844 = sbr.rel (0) target = $region325
    $region324: #{tpu_custom_call.1} parent=1 // pred_region
      %8845 = dma.done [#allocation54], 128
    $region325: #{tpu_custom_call.1} parent=1 // pred_fallthru
      _
    %8846 = vsyncpa [#allocation11], 1
    %8847 = vsyncpa [#allocation14], 1
    %8848 = vsyncpa [#allocation17], 1
    %8849 = vsyncpa [#allocation20], 1
    %8850 = vsyncpa [#allocation23], 1
    %8851 = vsyncpa [#allocation26], 1
    %8852 = vsyncpa [#allocation29], 1
    %8853 = vsyncpa [#allocation32], 1
    %8854 = vsyncpa [#allocation35], 1
    %8855 = vsyncpa [#allocation38], 1
    %8856 = vsyncpa [#allocation41], 1
    %8857 = vsyncpa [#allocation44], 1
    %8858 = vsyncpa [#allocation47], 1
    %8859 = vsyncpa [#allocation50], 1
    %8860 = vsyncpa [#allocation12], 1
    %8861 = vsyncpa [#allocation54], 1

</llo_original>
